<compile_context>
chip_gen: v7x
topology: tpu7x:2x2x1
jax: 0.10.0
libtpu: 0.0.40
codegen_flags: <defaults>
</compile_context>

<pallas_src>
import jax
import jax.numpy as jnp
from jax import lax
from jax.experimental import pallas as pl
from jax.experimental.pallas import tpu as pltpu

# ----------------------------- hyper-parameters -----------------------------
INPUT_DIM = 8
MODEL_DIM = 32
NUM_HEADS = 4           # heads for MultiheadAttention and GAT
NUM_LAYERS = 2          # LSTM layers
NUM_CLASSES = 5
GAT_HEADS = NUM_HEADS
GAT_HID = MODEL_DIM
HF = GAT_HEADS * GAT_HID        # 128 lanes: GAT heads concatenated along the lane axis
CLS_PAD = 128                   # classifier output padded to a full 128-lane slab
NEG_INF = -1e30

B = 2                   # batch (number of sequences == number of graphs)
S = 8                   # sequence length
N = 8                   # nodes per graph


# ----------------------------- the fused kernel -------------------------------
def _fused_kernel(x_ref, gf_ref, adjb_ref,
                  g1w_ref, g23w_ref, gattn_ref, gatb_ref, hmask_ref,
                  mat32_ref, vec32_ref, lstm_ref, pool_ref, cls_ref,
                  o_ref, lstm_buf):
    NT = B * N                      # total nodes in the block-diagonal batched graph
    D = MODEL_DIM

    # ---------------- GAT stack (block-diagonal batched graph) ----------------
    adjb = adjb_ref[...]            # (NT, NT): 0 on edges j->i, -1e30 elsewhere (incl. cross-graph)
    hmask = hmask_ref[...]          # (H, 1, HF): indicator of head h's 32-lane block

    def gat_layer(feat, w, attn_mat, bias):
        wh = jnp.dot(feat, w, preferred_element_type=jnp.float32)            # (NT, HF)
        # el/er for ALL heads with one matmul: col h = el_h (attn_l), col H+h = er_h (attn_r)
        m = jnp.dot(wh, attn_mat, preferred_element_type=jnp.float32)        # (NT, 2H)
        alphas = []
        for h in range(GAT_HEADS):
            # e[i, j] = er_h[i] + el_h[j]  (edge j -> i), same orientation as DGL GATConv
            e = m[:, GAT_HEADS + h:GAT_HEADS + h + 1] + m[:, h:h + 1].T
            e = jnp.where(e > 0, e, 0.2 * e) + adjb                          # LeakyReLU(0.2) + mask
            p = jnp.exp(e - jnp.max(e, axis=1, keepdims=True))               # masked entries -> 0
            alphas.append(p / jnp.sum(p, axis=1, keepdims=True))             # (NT, NT)
        # one aggregation matmul for all heads: alphas stacked along sublanes
        alpha_stack = jnp.stack(alphas).reshape(GAT_HEADS * NT, NT)          # (H*NT, NT)
        agg = jnp.dot(alpha_stack, wh, preferred_element_type=jnp.float32)   # (H*NT, HF)
        out = bias                                                           # (1, HF) broadcast
        for h in range(GAT_HEADS):
            out = out + agg[h * NT:(h + 1) * NT, :] * hmask[h]               # keep head-h lanes
        return out                                                           # (NT, HF)

    h1 = gat_layer(gf_ref[...], g1w_ref[...], gattn_ref[0], gatb_ref[0])     # conv1.flatten(1)
    h2 = gat_layer(h1, g23w_ref[0], gattn_ref[1], gatb_ref[1])               # conv2.flatten(1)
    h3 = gat_layer(h2, g23w_ref[1], gattn_ref[2], gatb_ref[2])               # (NT, HF)

    # per-graph node mean (dgl.mean_nodes) + folded [head-mean @ Wv @ Wo] cross-attention.
    # kv length is 1 so the attention softmax == 1 exactly; Q/K projections cancel out.
    node_mean = jnp.dot(pool_ref[...], h3, preferred_element_type=jnp.float32)        # (B, HF)
    attn = jnp.dot(node_mean, mat32_ref[INPUT_DIM:INPUT_DIM + HF, :],
                   preferred_element_type=jnp.float32) + vec32_ref[1:2, :]             # (B, D)

    # ---------------- embedding + 2 interleaved LSTM layers ----------------
    x = jnp.dot(x_ref[...], mat32_ref[0:INPUT_DIM, :],
                preferred_element_type=jnp.float32) + vec32_ref[0:1, :]                # (S*B, D)

    wih1 = lstm_ref[0, 0:D, :]
    whh1 = lstm_ref[0, D:2 * D, :]
    b1 = lstm_ref[0, 2 * D:2 * D + 1, :]
    wih2 = lstm_ref[1, 0:D, :]
    whh2 = lstm_ref[1, D:2 * D, :]
    b2 = lstm_ref[1, 2 * D:2 * D + 1, :]

    # hoisted layer-1 input projection: one (S*B, D) @ (D, 4D) matmul
    gx1 = jnp.dot(x, wih1, preferred_element_type=jnp.float32) + b1                    # (S*B, 4D)

    h1s = jnp.zeros((B, D), jnp.float32)
    c1s = jnp.zeros((B, D), jnp.float32)
    h2s = jnp.zeros((B, D), jnp.float32)
    c2s = jnp.zeros((B, D), jnp.float32)

    def split_gates(g):             # PyTorch gate order (i, f, g, o) in 32-lane blocks
        i = jax.nn.sigmoid(g[:, 0:D])
        f = jax.nn.sigmoid(g[:, D:2 * D])
        gg = jnp.tanh(g[:, 2 * D:3 * D])
        o = jax.nn.sigmoid(g[:, 3 * D:4 * D])
        return i, f, gg, o

    for t in range(S):              # static unroll; layer 2 step t interleaved with layer 1
        g1 = gx1[t * B:(t + 1) * B, :] + jnp.dot(h1s, whh1, preferred_element_type=jnp.float32)
        i1, f1, gg1, o1 = split_gates(g1)
        c1s = f1 * c1s + i1 * gg1
        h1s = o1 * jnp.tanh(c1s)

        g2 = (jnp.dot(h1s, wih2, preferred_element_type=jnp.float32)
              + jnp.dot(h2s, whh2, preferred_element_type=jnp.float32) + b2)
        i2, f2, gg2, o2 = split_gates(g2)
        c2s = f2 * c2s + i2 * gg2
        h2s = o2 * jnp.tanh(c2s)

        lstm_buf[t * B:(t + 1) * B, :] = h2s                                  # (B, D) row store

    lstm_out = lstm_buf[...]                                                  # (S*B, D)

    # ---------------- residual + LayerNorm + classifier ----------------
    attn_rows = jnp.broadcast_to(attn[None], (S, B, D)).reshape(S * B, D)     # row t*B+b -> attn[b]
    xres = lstm_out + attn_rows                                               # dropout = identity
    mu = jnp.mean(xres, axis=1, keepdims=True)
    var = jnp.mean((xres - mu) ** 2, axis=1, keepdims=True)
    xn = (xres - mu) * lax.rsqrt(var + 1e-5)
    xn = xn * vec32_ref[2:3, :] + vec32_ref[3:4, :]

    y = jnp.dot(xn, cls_ref[0:D, :], preferred_element_type=jnp.float32) + cls_ref[D:D + 1, :]
    o_ref[...] = y.astype(o_ref.dtype)                                        # lane-dense (S*B, 128)


# ----------------------------- parameters ------------------------------------
def init_params(key):
    keys = iter(jax.random.split(key, 64))

    def nrm(shape, scale=0.1):
        return scale * jax.random.normal(next(keys), shape, dtype=jnp.float32)

    p = {}
    p['emb_w'] = nrm((INPUT_DIM, MODEL_DIM))
    p['emb_b'] = nrm((MODEL_DIM,))

    gat_fin = [INPUT_DIM, HF, HF]
    p['gat'] = [{'w': nrm((fin, HF)),
                 'al': nrm((GAT_HEADS, GAT_HID)),
                 'ar': nrm((GAT_HEADS, GAT_HID)),
                 'b': nrm((HF,))} for fin in gat_fin]

    # LSTM weights pre-transposed for right-multiplication, stacked per gate (i, f, g, o);
    # b = b_ih + b_hh fused.
    p['lstm'] = [{'w_ih': nrm((4, MODEL_DIM, MODEL_DIM)),
                  'w_hh': nrm((4, MODEL_DIM, MODEL_DIM)),
                  'b': nrm((4, MODEL_DIM))} for _ in range(NUM_LAYERS)]

    # wq/wk/bq/bk exist in the PyTorch module but never affect the output when the key/value
    # length is 1 (softmax of a single score == 1); kept only for parameter parity.
    p['attn'] = {'wq': nrm((MODEL_DIM, MODEL_DIM)), 'bq': nrm((MODEL_DIM,)),
                 'wk': nrm((MODEL_DIM, MODEL_DIM)), 'bk': nrm((MODEL_DIM,)),
                 'wv': nrm((MODEL_DIM, MODEL_DIM)), 'bv': nrm((MODEL_DIM,)),
                 'wo': nrm((MODEL_DIM, MODEL_DIM)), 'bo': nrm((MODEL_DIM,)),
                 'ln_g': jnp.ones((MODEL_DIM,), jnp.float32),
                 'ln_b': jnp.zeros((MODEL_DIM,), jnp.float32)}

    p['cls_w'] = nrm((MODEL_DIM, NUM_CLASSES))
    p['cls_b'] = nrm((NUM_CLASSES,))
    return p


def prepare_params(p):
    """One-time host-side re-layout / fold of the weights into the fused kernel's packed shapes."""
    q = {}

    # ---- GAT ----
    q['g1w'] = p['gat'][0]['w']                                              # (INPUT_DIM, HF)
    q['g23w'] = jnp.stack([p['gat'][1]['w'], p['gat'][2]['w']])              # (2, HF, HF)
    q['gat_b'] = jnp.stack([g['b'].reshape(1, HF) for g in p['gat']])        # (3, 1, HF)

    def attn_mat(g):
        # (HF, 2H): col h = attn_l of head h placed in head-h's lane block, col H+h = attn_r
        A = jnp.zeros((HF, 2 * GAT_HEADS), jnp.float32)
        for h in range(GAT_HEADS):
            A = A.at[h * GAT_HID:(h + 1) * GAT_HID, h].set(g['al'][h])
            A = A.at[h * GAT_HID:(h + 1) * GAT_HID, GAT_HEADS + h].set(g['ar'][h])
        return A
    q['gat_attn'] = jnp.stack([attn_mat(g) for g in p['gat']])               # (3, HF, 2H)

    hm = jnp.zeros((GAT_HEADS, 1, HF), jnp.float32)
    for h in range(GAT_HEADS):
        hm = hm.at[h, 0, h * GAT_HID:(h + 1) * GAT_HID].set(1.0)
    q['head_mask'] = hm                                                      # (H, 1, HF)

    # ---- fold conv3 head-mean + cross-attn V-proj + out-proj (kv length 1 => softmax == 1) ----
    a = p['attn']
    r = jnp.arange(HF)[:, None]
    c = jnp.arange(GAT_HID)[None, :]
    head_mean = jnp.where((r % GAT_HID) == c, 1.0 / GAT_HEADS, 0.0)          # (HF, D)
    w_attn = head_mean @ a['wv'] @ a['wo']                                   # (HF, D)
    b_attn = a['bv'].reshape(1, -1) @ a['wo'] + a['bo'].reshape(1, -1)       # (1, D)

    q['mat32'] = jnp.concatenate([p['emb_w'], w_attn], axis=0)               # (INPUT_DIM+HF, D)
    q['vec32'] = jnp.concatenate([p['emb_b'].reshape(1, -1), b_attn,
                                  a['ln_g'].reshape(1, -1),
                                  a['ln_b'].reshape(1, -1)], axis=0)         # (4, D)

    # ---- LSTM: gate weights lane-stacked to (D, 4D); per layer rows [w_ih; w_hh; b] ----
    def lstm_mat(l):
        wih = jnp.transpose(l['w_ih'], (1, 0, 2)).reshape(MODEL_DIM, 4 * MODEL_DIM)
        whh = jnp.transpose(l['w_hh'], (1, 0, 2)).reshape(MODEL_DIM, 4 * MODEL_DIM)
        b = l['b'].reshape(1, 4 * MODEL_DIM)
        return jnp.concatenate([wih, whh, b], axis=0)                        # (2D+1, 4D)
    q['lstm_p'] = jnp.stack([lstm_mat(l) for l in p['lstm']])                # (2, 2D+1, 4D)

    # ---- classifier padded to a lane-dense 128-wide slab, bias as last row ----
    cls_w = jnp.zeros((MODEL_DIM, CLS_PAD), jnp.float32).at[:, :NUM_CLASSES].set(p['cls_w'])
    cls_b = jnp.zeros((1, CLS_PAD), jnp.float32).at[0, :NUM_CLASSES].set(p['cls_b'])
    q['cls_wb'] = jnp.concatenate([cls_w, cls_b], axis=0)                    # (D+1, CLS_PAD)

    # ---- per-graph node-mean pooling matrix (dgl.mean_nodes on the batched graph) ----
    pool = jnp.zeros((B, B * N), jnp.float32)
    for b in range(B):
        pool = pool.at[b, b * N:(b + 1) * N].set(1.0 / N)
    q['pool'] = pool                                                         # (B, B*N)
    return q


# ----------------------------- full forward ----------------------------------
def custom_graph_lstm_forward(prep, src, src_mask, adj, graph_feat):
    """src: (B, S, INPUT_DIM); src_mask unused (matches the PyTorch forward);
    adj: (B, N, N) dense adjacency, adj[b,i,j]=1 <=> edge j->i (self loops included);
    graph_feat: (B, N, INPUT_DIM)."""
    del src_mask  # not used by the reference forward either
    Bc, Sc, _ = src.shape
    _, Nc, _ = graph_feat.shape
    NT = Bc * Nc

    # (S*B, INPUT_DIM) with row index t*B + b (so each timestep's batch rows are contiguous)
    x_sb = jnp.transpose(src, (1, 0, 2)).reshape(Sc * Bc, INPUT_DIM)
    gfeat = graph_feat.reshape(NT, INPUT_DIM)

    # block-diagonal additive edge mask for the batched graph
    adjb = jnp.full((NT, NT), NEG_INF, dtype=jnp.float32)
    for b in range(Bc):
        blk = jnp.where(adj[b] > 0, 0.0, NEG_INF).astype(jnp.float32)
        adjb = adjb.at[b * Nc:(b + 1) * Nc, b * Nc:(b + 1) * Nc].set(blk)

    args = [x_sb, gfeat, adjb,
            prep['g1w'], prep['g23w'], prep['gat_attn'], prep['gat_b'], prep['head_mask'],
            prep['mat32'], prep['vec32'], prep['lstm_p'], prep['pool'], prep['cls_wb']]

    in_specs = [pl.BlockSpec(tuple(a.shape), (lambda i, nd=a.ndim: (0,) * nd)) for a in args]

    out_pad = pl.pallas_call(
        _fused_kernel,
        out_shape=jax.ShapeDtypeStruct((Sc * Bc, CLS_PAD), jnp.float32),
        grid=(1,),
        in_specs=in_specs,
        out_specs=pl.BlockSpec((Sc * Bc, CLS_PAD), lambda i: (0, 0)),
        scratch_shapes=[pltpu.VMEM((Sc * Bc, MODEL_DIM), jnp.float32)],
        compiler_params=pltpu.CompilerParams(dimension_semantics=("arbitrary",)),
    )(*args)

    # rows are in t*B + b order -> (S, B, ·) -> (B, S, ·); drop the lane padding
    return out_pad.reshape(Sc, Bc, CLS_PAD).transpose(1, 0, 2)[:, :, :NUM_CLASSES]


# ----------------------------- main -------------------------------------------
if __name__ == "__main__":
    root = jax.random.PRNGKey(0)
    k_param, k_src, k_gf = jax.random.split(root, 3)

    params = init_params(k_param)
    prep = prepare_params(params)

    src = jax.random.normal(k_src, (B, S, INPUT_DIM), dtype=jnp.float32)
    graph_feat = jax.random.normal(k_gf, (B, N, INPUT_DIM), dtype=jnp.float32)
    src_mask = jnp.zeros((S, S), jnp.float32)   # unused, present for signature parity

    # deterministic ring graph with self loops; adj[b, i, j] = 1 <=> edge j -> i
    idx = jnp.arange(N)
    ring = ((idx[:, None] == idx[None, :])
            | (idx[:, None] == (idx[None, :] + 1) % N)
            | (idx[:, None] == (idx[None, :] - 1) % N)).astype(jnp.float32)
    adj = jnp.tile(ring[None], (B, 1, 1))

    fwd = jax.jit(custom_graph_lstm_forward)
    out = fwd(prep, src, src_mask, adj, graph_feat)
    jax.block_until_ready(out)
    assert out.shape == (B, S, NUM_CLASSES)
    assert bool(jnp.all(jnp.isfinite(out)))
    print("KERNEL_OK")
</pallas_src>

<mosaic_0001>
module attributes {stable_mosaic.version = 11 : i64} {
  func.func @_fused_kernel(%arg0: i32, %arg1: memref<16x8xf32, #tpu.memory_space<vmem>>, %arg2: memref<16x8xf32, #tpu.memory_space<vmem>>, %arg3: memref<16x16xf32, #tpu.memory_space<vmem>>, %arg4: memref<8x128xf32, #tpu.memory_space<vmem>>, %arg5: memref<2x128x128xf32, #tpu.memory_space<vmem>>, %arg6: memref<3x128x8xf32, #tpu.memory_space<vmem>>, %arg7: memref<3x1x128xf32, #tpu.memory_space<vmem>>, %arg8: memref<4x1x128xf32, #tpu.memory_space<vmem>>, %arg9: memref<136x32xf32, #tpu.memory_space<vmem>>, %arg10: memref<4x32xf32, #tpu.memory_space<vmem>>, %arg11: memref<2x65x128xf32, #tpu.memory_space<vmem>>, %arg12: memref<2x16xf32, #tpu.memory_space<vmem>>, %arg13: memref<33x128xf32, #tpu.memory_space<vmem>>, %arg14: memref<16x128xf32, #tpu.memory_space<vmem>>, %arg15: memref<16x32xf32, #tpu.memory_space<vmem>>) attributes {dimension_semantics = [#tpu.dimension_semantics<arbitrary>], iteration_bounds = array<i64: 1>, scalar_prefetch = 0 : i64, scratch_operands = 1 : i64, tpu.core_type = #tpu.core_type<tc>, window_params = [{pipeline_mode = #tpu.pipeline_mode<synchronous>, transform_indices = @transform_0, window_bounds = array<i64: 16, 8>}, {pipeline_mode = #tpu.pipeline_mode<synchronous>, transform_indices = @transform_1, window_bounds = array<i64: 16, 8>}, {pipeline_mode = #tpu.pipeline_mode<synchronous>, transform_indices = @transform_2, window_bounds = array<i64: 16, 16>}, {pipeline_mode = #tpu.pipeline_mode<synchronous>, transform_indices = @transform_3, window_bounds = array<i64: 8, 128>}, {pipeline_mode = #tpu.pipeline_mode<synchronous>, transform_indices = @transform_4, window_bounds = array<i64: 2, 128, 128>}, {pipeline_mode = #tpu.pipeline_mode<synchronous>, transform_indices = @transform_5, window_bounds = array<i64: 3, 128, 8>}, {pipeline_mode = #tpu.pipeline_mode<synchronous>, transform_indices = @transform_6, window_bounds = array<i64: 3, 1, 128>}, {pipeline_mode = #tpu.pipeline_mode<synchronous>, transform_indices = @transform_7, window_bounds = array<i64: 4, 1, 128>}, {pipeline_mode = #tpu.pipeline_mode<synchronous>, transform_indices = @transform_8, window_bounds = array<i64: 136, 32>}, {pipeline_mode = #tpu.pipeline_mode<synchronous>, transform_indices = @transform_9, window_bounds = array<i64: 4, 32>}, {pipeline_mode = #tpu.pipeline_mode<synchronous>, transform_indices = @transform_10, window_bounds = array<i64: 2, 65, 128>}, {pipeline_mode = #tpu.pipeline_mode<synchronous>, transform_indices = @transform_11, window_bounds = array<i64: 2, 16>}, {pipeline_mode = #tpu.pipeline_mode<synchronous>, transform_indices = @transform_12, window_bounds = array<i64: 33, 128>}, {pipeline_mode = #tpu.pipeline_mode<synchronous>, transform_indices = @transform_13, window_bounds = array<i64: 16, 128>}]} {
    %c0 = arith.constant 0 : index
    %c0_0 = arith.constant 0 : index
    %0 = vector.load %arg3[%c0, %c0_0] : memref<16x16xf32, #tpu.memory_space<vmem>>, vector<16x16xf32>
    %c0_1 = arith.constant 0 : index
    %c0_2 = arith.constant 0 : index
    %c0_3 = arith.constant 0 : index
    %1 = vector.load %arg8[%c0_1, %c0_2, %c0_3] : memref<4x1x128xf32, #tpu.memory_space<vmem>>, vector<4x1x128xf32>
    %c0_4 = arith.constant 0 : index
    %c0_5 = arith.constant 0 : index
    %2 = vector.load %arg2[%c0_4, %c0_5] : memref<16x8xf32, #tpu.memory_space<vmem>>, vector<16x8xf32>
    %c0_6 = arith.constant 0 : index
    %c0_7 = arith.constant 0 : index
    %3 = vector.load %arg4[%c0_6, %c0_7] : memref<8x128xf32, #tpu.memory_space<vmem>>, vector<8x128xf32>
    %c0_8 = arith.constant 0 : index
    %c0_9 = arith.constant 0 : index
    %c0_10 = arith.constant 0 : index
    %4 = vector.load %arg6[%c0_8, %c0_9, %c0_10] : memref<3x128x8xf32, #tpu.memory_space<vmem>>, vector<1x128x8xf32>
    %5 = vector.shape_cast %4 : vector<1x128x8xf32> to vector<128x8xf32>
    %c0_11 = arith.constant 0 : index
    %c0_12 = arith.constant 0 : index
    %c0_13 = arith.constant 0 : index
    %6 = vector.load %arg7[%c0_11, %c0_12, %c0_13] : memref<3x1x128xf32, #tpu.memory_space<vmem>>, vector<1x1x128xf32>
    %7 = vector.shape_cast %6 : vector<1x1x128xf32> to vector<1x128xf32>
    %cst = arith.constant dense<0.000000e+00> : vector<16x128xf32>
    %8 = tpu.matmul %2, %3, %cst {dimension_numbers = #tpu.dot_dimension_numbers<[1], [0], [0], [1], [0, 0, 1, 1], [], []>} : vector<16x8xf32>, vector<8x128xf32>, vector<16x128xf32> -> vector<16x128xf32>
    %cst_14 = arith.constant dense<0.000000e+00> : vector<16x8xf32>
    %9 = tpu.matmul %8, %5, %cst_14 {dimension_numbers = #tpu.dot_dimension_numbers<[1], [0], [0], [1], [0, 0, 1, 1], [], []>} : vector<16x128xf32>, vector<128x8xf32>, vector<16x8xf32> -> vector<16x8xf32>
    %10 = vector.extract_strided_slice %9 {offsets = [0, 4], sizes = [16, 1], strides = [1, 1]} : vector<16x8xf32> to vector<16x1xf32>
    %11 = vector.extract_strided_slice %9 {offsets = [0, 0], sizes = [16, 1], strides = [1, 1]} : vector<16x8xf32> to vector<16x1xf32>
    %12 = tpu.transpose %11, [1, 0] : vector<16x1xf32> -> vector<1x16xf32>
    %13 = vector.broadcast %10 : vector<16x1xf32> to vector<16x16xf32>
    %14 = vector.broadcast %12 : vector<1x16xf32> to vector<16x16xf32>
    %15 = arith.addf %13, %14 : vector<16x16xf32>
    %cst_15 = arith.constant 0.000000e+00 : f32
    %16 = vector.broadcast %cst_15 : f32 to vector<16x16xf32>
    %17 = arith.cmpf ogt, %15, %16 : vector<16x16xf32>
    %cst_16 = arith.constant 2.000000e-01 : f32
    %18 = vector.broadcast %cst_16 : f32 to vector<16x16xf32>
    %19 = arith.mulf %18, %15 : vector<16x16xf32>
    %20 = arith.select %17, %15, %19 : vector<16x16xi1>, vector<16x16xf32>
    %21 = arith.addf %20, %0 : vector<16x16xf32>
    %cst_17 = arith.constant dense<0xFF800000> : vector<16xf32>
    %22 = vector.multi_reduction <maximumf>, %21, %cst_17 [1] : vector<16x16xf32> to vector<16xf32>
    %23 = vector.shape_cast %22 : vector<16xf32> to vector<16x1xf32>
    %24 = vector.broadcast %23 : vector<16x1xf32> to vector<16x16xf32>
    %25 = arith.subf %21, %24 : vector<16x16xf32>
    %26 = math.exp %25 : vector<16x16xf32>
    %cst_18 = arith.constant dense<0.000000e+00> : vector<16xf32>
    %27 = vector.multi_reduction <add>, %26, %cst_18 [1] : vector<16x16xf32> to vector<16xf32>
    %28 = vector.shape_cast %27 : vector<16xf32> to vector<16x1xf32>
    %29 = vector.broadcast %28 : vector<16x1xf32> to vector<16x16xf32>
    %30 = arith.divf %26, %29 : vector<16x16xf32>
    %31 = vector.extract_strided_slice %9 {offsets = [0, 5], sizes = [16, 1], strides = [1, 1]} : vector<16x8xf32> to vector<16x1xf32>
    %32 = vector.extract_strided_slice %9 {offsets = [0, 1], sizes = [16, 1], strides = [1, 1]} : vector<16x8xf32> to vector<16x1xf32>
    %33 = tpu.transpose %32, [1, 0] : vector<16x1xf32> -> vector<1x16xf32>
    %34 = vector.broadcast %31 : vector<16x1xf32> to vector<16x16xf32>
    %35 = vector.broadcast %33 : vector<1x16xf32> to vector<16x16xf32>
    %36 = arith.addf %34, %35 : vector<16x16xf32>
    %cst_19 = arith.constant 0.000000e+00 : f32
    %37 = vector.broadcast %cst_19 : f32 to vector<16x16xf32>
    %38 = arith.cmpf ogt, %36, %37 : vector<16x16xf32>
    %cst_20 = arith.constant 2.000000e-01 : f32
    %39 = vector.broadcast %cst_20 : f32 to vector<16x16xf32>
    %40 = arith.mulf %39, %36 : vector<16x16xf32>
    %41 = arith.select %38, %36, %40 : vector<16x16xi1>, vector<16x16xf32>
    %42 = arith.addf %41, %0 : vector<16x16xf32>
    %cst_21 = arith.constant dense<0xFF800000> : vector<16xf32>
    %43 = vector.multi_reduction <maximumf>, %42, %cst_21 [1] : vector<16x16xf32> to vector<16xf32>
    %44 = vector.shape_cast %43 : vector<16xf32> to vector<16x1xf32>
    %45 = vector.broadcast %44 : vector<16x1xf32> to vector<16x16xf32>
    %46 = arith.subf %42, %45 : vector<16x16xf32>
    %47 = math.exp %46 : vector<16x16xf32>
    %cst_22 = arith.constant dense<0.000000e+00> : vector<16xf32>
    %48 = vector.multi_reduction <add>, %47, %cst_22 [1] : vector<16x16xf32> to vector<16xf32>
    %49 = vector.shape_cast %48 : vector<16xf32> to vector<16x1xf32>
    %50 = vector.broadcast %49 : vector<16x1xf32> to vector<16x16xf32>
    %51 = arith.divf %47, %50 : vector<16x16xf32>
    %52 = vector.extract_strided_slice %9 {offsets = [0, 6], sizes = [16, 1], strides = [1, 1]} : vector<16x8xf32> to vector<16x1xf32>
    %53 = vector.extract_strided_slice %9 {offsets = [0, 2], sizes = [16, 1], strides = [1, 1]} : vector<16x8xf32> to vector<16x1xf32>
    %54 = tpu.transpose %53, [1, 0] : vector<16x1xf32> -> vector<1x16xf32>
    %55 = vector.broadcast %52 : vector<16x1xf32> to vector<16x16xf32>
    %56 = vector.broadcast %54 : vector<1x16xf32> to vector<16x16xf32>
    %57 = arith.addf %55, %56 : vector<16x16xf32>
    %cst_23 = arith.constant 0.000000e+00 : f32
    %58 = vector.broadcast %cst_23 : f32 to vector<16x16xf32>
    %59 = arith.cmpf ogt, %57, %58 : vector<16x16xf32>
    %cst_24 = arith.constant 2.000000e-01 : f32
    %60 = vector.broadcast %cst_24 : f32 to vector<16x16xf32>
    %61 = arith.mulf %60, %57 : vector<16x16xf32>
    %62 = arith.select %59, %57, %61 : vector<16x16xi1>, vector<16x16xf32>
    %63 = arith.addf %62, %0 : vector<16x16xf32>
    %cst_25 = arith.constant dense<0xFF800000> : vector<16xf32>
    %64 = vector.multi_reduction <maximumf>, %63, %cst_25 [1] : vector<16x16xf32> to vector<16xf32>
    %65 = vector.shape_cast %64 : vector<16xf32> to vector<16x1xf32>
    %66 = vector.broadcast %65 : vector<16x1xf32> to vector<16x16xf32>
    %67 = arith.subf %63, %66 : vector<16x16xf32>
    %68 = math.exp %67 : vector<16x16xf32>
    %cst_26 = arith.constant dense<0.000000e+00> : vector<16xf32>
    %69 = vector.multi_reduction <add>, %68, %cst_26 [1] : vector<16x16xf32> to vector<16xf32>
    %70 = vector.shape_cast %69 : vector<16xf32> to vector<16x1xf32>
    %71 = vector.broadcast %70 : vector<16x1xf32> to vector<16x16xf32>
    %72 = arith.divf %68, %71 : vector<16x16xf32>
    %73 = vector.extract_strided_slice %9 {offsets = [0, 7], sizes = [16, 1], strides = [1, 1]} : vector<16x8xf32> to vector<16x1xf32>
    %74 = vector.extract_strided_slice %9 {offsets = [0, 3], sizes = [16, 1], strides = [1, 1]} : vector<16x8xf32> to vector<16x1xf32>
    %75 = tpu.transpose %74, [1, 0] : vector<16x1xf32> -> vector<1x16xf32>
    %76 = vector.broadcast %73 : vector<16x1xf32> to vector<16x16xf32>
    %77 = vector.broadcast %75 : vector<1x16xf32> to vector<16x16xf32>
    %78 = arith.addf %76, %77 : vector<16x16xf32>
    %cst_27 = arith.constant 0.000000e+00 : f32
    %79 = vector.broadcast %cst_27 : f32 to vector<16x16xf32>
    %80 = arith.cmpf ogt, %78, %79 : vector<16x16xf32>
    %cst_28 = arith.constant 2.000000e-01 : f32
    %81 = vector.broadcast %cst_28 : f32 to vector<16x16xf32>
    %82 = arith.mulf %81, %78 : vector<16x16xf32>
    %83 = arith.select %80, %78, %82 : vector<16x16xi1>, vector<16x16xf32>
    %84 = arith.addf %83, %0 : vector<16x16xf32>
    %cst_29 = arith.constant dense<0xFF800000> : vector<16xf32>
    %85 = vector.multi_reduction <maximumf>, %84, %cst_29 [1] : vector<16x16xf32> to vector<16xf32>
    %86 = vector.shape_cast %85 : vector<16xf32> to vector<16x1xf32>
    %87 = vector.broadcast %86 : vector<16x1xf32> to vector<16x16xf32>
    %88 = arith.subf %84, %87 : vector<16x16xf32>
    %89 = math.exp %88 : vector<16x16xf32>
    %cst_30 = arith.constant dense<0.000000e+00> : vector<16xf32>
    %90 = vector.multi_reduction <add>, %89, %cst_30 [1] : vector<16x16xf32> to vector<16xf32>
    %91 = vector.shape_cast %90 : vector<16xf32> to vector<16x1xf32>
    %92 = vector.broadcast %91 : vector<16x1xf32> to vector<16x16xf32>
    %93 = arith.divf %89, %92 : vector<16x16xf32>
    %94 = vector.shape_cast %30 : vector<16x16xf32> to vector<1x16x16xf32>
    %95 = vector.shape_cast %51 : vector<16x16xf32> to vector<1x16x16xf32>
    %96 = vector.shape_cast %72 : vector<16x16xf32> to vector<1x16x16xf32>
    %97 = vector.shape_cast %93 : vector<16x16xf32> to vector<1x16x16xf32>
    %98 = tpu.concatenate %94, %95, %96, %97 in 0 : vector<1x16x16xf32>, vector<1x16x16xf32>, vector<1x16x16xf32>, vector<1x16x16xf32> -> vector<4x16x16xf32>
    %99 = vector.shape_cast %98 : vector<4x16x16xf32> to vector<64x16xf32>
    %cst_31 = arith.constant dense<0.000000e+00> : vector<64x128xf32>
    %100 = tpu.matmul %99, %8, %cst_31 {dimension_numbers = #tpu.dot_dimension_numbers<[1], [0], [0], [1], [0, 0, 1, 1], [], []>} : vector<64x16xf32>, vector<16x128xf32>, vector<64x128xf32> -> vector<64x128xf32>
    %101 = vector.extract_strided_slice %100 {offsets = [0, 0], sizes = [16, 128], strides = [1, 1]} : vector<64x128xf32> to vector<16x128xf32>
    %102 = vector.extract_strided_slice %1 {offsets = [0, 0, 0], sizes = [1, 1, 128], strides = [1, 1, 1]} : vector<4x1x128xf32> to vector<1x1x128xf32>
    %103 = vector.shape_cast %102 : vector<1x1x128xf32> to vector<1x128xf32>
    %104 = vector.broadcast %103 : vector<1x128xf32> to vector<16x128xf32>
    %105 = arith.mulf %101, %104 : vector<16x128xf32>
    %106 = vector.broadcast %7 : vector<1x128xf32> to vector<16x128xf32>
    %107 = arith.addf %106, %105 : vector<16x128xf32>
    %108 = vector.extract_strided_slice %100 {offsets = [16, 0], sizes = [16, 128], strides = [1, 1]} : vector<64x128xf32> to vector<16x128xf32>
    %109 = vector.extract_strided_slice %1 {offsets = [1, 0, 0], sizes = [1, 1, 128], strides = [1, 1, 1]} : vector<4x1x128xf32> to vector<1x1x128xf32>
    %110 = vector.shape_cast %109 : vector<1x1x128xf32> to vector<1x128xf32>
    %111 = vector.broadcast %110 : vector<1x128xf32> to vector<16x128xf32>
    %112 = arith.mulf %108, %111 : vector<16x128xf32>
    %113 = arith.addf %107, %112 : vector<16x128xf32>
    %114 = vector.extract_strided_slice %100 {offsets = [32, 0], sizes = [16, 128], strides = [1, 1]} : vector<64x128xf32> to vector<16x128xf32>
    %115 = vector.extract_strided_slice %1 {offsets = [2, 0, 0], sizes = [1, 1, 128], strides = [1, 1, 1]} : vector<4x1x128xf32> to vector<1x1x128xf32>
    %116 = vector.shape_cast %115 : vector<1x1x128xf32> to vector<1x128xf32>
    %117 = vector.broadcast %116 : vector<1x128xf32> to vector<16x128xf32>
    %118 = arith.mulf %114, %117 : vector<16x128xf32>
    %119 = arith.addf %113, %118 : vector<16x128xf32>
    %120 = vector.extract_strided_slice %100 {offsets = [48, 0], sizes = [16, 128], strides = [1, 1]} : vector<64x128xf32> to vector<16x128xf32>
    %121 = vector.extract_strided_slice %1 {offsets = [3, 0, 0], sizes = [1, 1, 128], strides = [1, 1, 1]} : vector<4x1x128xf32> to vector<1x1x128xf32>
    %122 = vector.shape_cast %121 : vector<1x1x128xf32> to vector<1x128xf32>
    %123 = vector.broadcast %122 : vector<1x128xf32> to vector<16x128xf32>
    %124 = arith.mulf %120, %123 : vector<16x128xf32>
    %125 = arith.addf %119, %124 : vector<16x128xf32>
    %c0_32 = arith.constant 0 : index
    %c0_33 = arith.constant 0 : index
    %c0_34 = arith.constant 0 : index
    %126 = vector.load %arg5[%c0_32, %c0_33, %c0_34] : memref<2x128x128xf32, #tpu.memory_space<vmem>>, vector<1x128x128xf32>
    %127 = vector.shape_cast %126 : vector<1x128x128xf32> to vector<128x128xf32>
    %c1 = arith.constant 1 : index
    %c0_35 = arith.constant 0 : index
    %c0_36 = arith.constant 0 : index
    %128 = vector.load %arg6[%c1, %c0_35, %c0_36] : memref<3x128x8xf32, #tpu.memory_space<vmem>>, vector<1x128x8xf32>
    %129 = vector.shape_cast %128 : vector<1x128x8xf32> to vector<128x8xf32>
    %c1_37 = arith.constant 1 : index
    %c0_38 = arith.constant 0 : index
    %c0_39 = arith.constant 0 : index
    %130 = vector.load %arg7[%c1_37, %c0_38, %c0_39] : memref<3x1x128xf32, #tpu.memory_space<vmem>>, vector<1x1x128xf32>
    %131 = vector.shape_cast %130 : vector<1x1x128xf32> to vector<1x128xf32>
    %cst_40 = arith.constant dense<0.000000e+00> : vector<16x128xf32>
    %132 = tpu.matmul %125, %127, %cst_40 {dimension_numbers = #tpu.dot_dimension_numbers<[1], [0], [0], [1], [0, 0, 1, 1], [], []>} : vector<16x128xf32>, vector<128x128xf32>, vector<16x128xf32> -> vector<16x128xf32>
    %cst_41 = arith.constant dense<0.000000e+00> : vector<16x8xf32>
    %133 = tpu.matmul %132, %129, %cst_41 {dimension_numbers = #tpu.dot_dimension_numbers<[1], [0], [0], [1], [0, 0, 1, 1], [], []>} : vector<16x128xf32>, vector<128x8xf32>, vector<16x8xf32> -> vector<16x8xf32>
    %134 = vector.extract_strided_slice %133 {offsets = [0, 4], sizes = [16, 1], strides = [1, 1]} : vector<16x8xf32> to vector<16x1xf32>
    %135 = vector.extract_strided_slice %133 {offsets = [0, 0], sizes = [16, 1], strides = [1, 1]} : vector<16x8xf32> to vector<16x1xf32>
    %136 = tpu.transpose %135, [1, 0] : vector<16x1xf32> -> vector<1x16xf32>
    %137 = vector.broadcast %134 : vector<16x1xf32> to vector<16x16xf32>
    %138 = vector.broadcast %136 : vector<1x16xf32> to vector<16x16xf32>
    %139 = arith.addf %137, %138 : vector<16x16xf32>
    %cst_42 = arith.constant 0.000000e+00 : f32
    %140 = vector.broadcast %cst_42 : f32 to vector<16x16xf32>
    %141 = arith.cmpf ogt, %139, %140 : vector<16x16xf32>
    %cst_43 = arith.constant 2.000000e-01 : f32
    %142 = vector.broadcast %cst_43 : f32 to vector<16x16xf32>
    %143 = arith.mulf %142, %139 : vector<16x16xf32>
    %144 = arith.select %141, %139, %143 : vector<16x16xi1>, vector<16x16xf32>
    %145 = arith.addf %144, %0 : vector<16x16xf32>
    %cst_44 = arith.constant dense<0xFF800000> : vector<16xf32>
    %146 = vector.multi_reduction <maximumf>, %145, %cst_44 [1] : vector<16x16xf32> to vector<16xf32>
    %147 = vector.shape_cast %146 : vector<16xf32> to vector<16x1xf32>
    %148 = vector.broadcast %147 : vector<16x1xf32> to vector<16x16xf32>
    %149 = arith.subf %145, %148 : vector<16x16xf32>
    %150 = math.exp %149 : vector<16x16xf32>
    %cst_45 = arith.constant dense<0.000000e+00> : vector<16xf32>
    %151 = vector.multi_reduction <add>, %150, %cst_45 [1] : vector<16x16xf32> to vector<16xf32>
    %152 = vector.shape_cast %151 : vector<16xf32> to vector<16x1xf32>
    %153 = vector.broadcast %152 : vector<16x1xf32> to vector<16x16xf32>
    %154 = arith.divf %150, %153 : vector<16x16xf32>
    %155 = vector.extract_strided_slice %133 {offsets = [0, 5], sizes = [16, 1], strides = [1, 1]} : vector<16x8xf32> to vector<16x1xf32>
    %156 = vector.extract_strided_slice %133 {offsets = [0, 1], sizes = [16, 1], strides = [1, 1]} : vector<16x8xf32> to vector<16x1xf32>
    %157 = tpu.transpose %156, [1, 0] : vector<16x1xf32> -> vector<1x16xf32>
    %158 = vector.broadcast %155 : vector<16x1xf32> to vector<16x16xf32>
    %159 = vector.broadcast %157 : vector<1x16xf32> to vector<16x16xf32>
    %160 = arith.addf %158, %159 : vector<16x16xf32>
    %cst_46 = arith.constant 0.000000e+00 : f32
    %161 = vector.broadcast %cst_46 : f32 to vector<16x16xf32>
    %162 = arith.cmpf ogt, %160, %161 : vector<16x16xf32>
    %cst_47 = arith.constant 2.000000e-01 : f32
    %163 = vector.broadcast %cst_47 : f32 to vector<16x16xf32>
    %164 = arith.mulf %163, %160 : vector<16x16xf32>
    %165 = arith.select %162, %160, %164 : vector<16x16xi1>, vector<16x16xf32>
    %166 = arith.addf %165, %0 : vector<16x16xf32>
    %cst_48 = arith.constant dense<0xFF800000> : vector<16xf32>
    %167 = vector.multi_reduction <maximumf>, %166, %cst_48 [1] : vector<16x16xf32> to vector<16xf32>
    %168 = vector.shape_cast %167 : vector<16xf32> to vector<16x1xf32>
    %169 = vector.broadcast %168 : vector<16x1xf32> to vector<16x16xf32>
    %170 = arith.subf %166, %169 : vector<16x16xf32>
    %171 = math.exp %170 : vector<16x16xf32>
    %cst_49 = arith.constant dense<0.000000e+00> : vector<16xf32>
    %172 = vector.multi_reduction <add>, %171, %cst_49 [1] : vector<16x16xf32> to vector<16xf32>
    %173 = vector.shape_cast %172 : vector<16xf32> to vector<16x1xf32>
    %174 = vector.broadcast %173 : vector<16x1xf32> to vector<16x16xf32>
    %175 = arith.divf %171, %174 : vector<16x16xf32>
    %176 = vector.extract_strided_slice %133 {offsets = [0, 6], sizes = [16, 1], strides = [1, 1]} : vector<16x8xf32> to vector<16x1xf32>
    %177 = vector.extract_strided_slice %133 {offsets = [0, 2], sizes = [16, 1], strides = [1, 1]} : vector<16x8xf32> to vector<16x1xf32>
    %178 = tpu.transpose %177, [1, 0] : vector<16x1xf32> -> vector<1x16xf32>
    %179 = vector.broadcast %176 : vector<16x1xf32> to vector<16x16xf32>
    %180 = vector.broadcast %178 : vector<1x16xf32> to vector<16x16xf32>
    %181 = arith.addf %179, %180 : vector<16x16xf32>
    %cst_50 = arith.constant 0.000000e+00 : f32
    %182 = vector.broadcast %cst_50 : f32 to vector<16x16xf32>
    %183 = arith.cmpf ogt, %181, %182 : vector<16x16xf32>
    %cst_51 = arith.constant 2.000000e-01 : f32
    %184 = vector.broadcast %cst_51 : f32 to vector<16x16xf32>
    %185 = arith.mulf %184, %181 : vector<16x16xf32>
    %186 = arith.select %183, %181, %185 : vector<16x16xi1>, vector<16x16xf32>
    %187 = arith.addf %186, %0 : vector<16x16xf32>
    %cst_52 = arith.constant dense<0xFF800000> : vector<16xf32>
    %188 = vector.multi_reduction <maximumf>, %187, %cst_52 [1] : vector<16x16xf32> to vector<16xf32>
    %189 = vector.shape_cast %188 : vector<16xf32> to vector<16x1xf32>
    %190 = vector.broadcast %189 : vector<16x1xf32> to vector<16x16xf32>
    %191 = arith.subf %187, %190 : vector<16x16xf32>
    %192 = math.exp %191 : vector<16x16xf32>
    %cst_53 = arith.constant dense<0.000000e+00> : vector<16xf32>
    %193 = vector.multi_reduction <add>, %192, %cst_53 [1] : vector<16x16xf32> to vector<16xf32>
    %194 = vector.shape_cast %193 : vector<16xf32> to vector<16x1xf32>
    %195 = vector.broadcast %194 : vector<16x1xf32> to vector<16x16xf32>
    %196 = arith.divf %192, %195 : vector<16x16xf32>
    %197 = vector.extract_strided_slice %133 {offsets = [0, 7], sizes = [16, 1], strides = [1, 1]} : vector<16x8xf32> to vector<16x1xf32>
    %198 = vector.extract_strided_slice %133 {offsets = [0, 3], sizes = [16, 1], strides = [1, 1]} : vector<16x8xf32> to vector<16x1xf32>
    %199 = tpu.transpose %198, [1, 0] : vector<16x1xf32> -> vector<1x16xf32>
    %200 = vector.broadcast %197 : vector<16x1xf32> to vector<16x16xf32>
    %201 = vector.broadcast %199 : vector<1x16xf32> to vector<16x16xf32>
    %202 = arith.addf %200, %201 : vector<16x16xf32>
    %cst_54 = arith.constant 0.000000e+00 : f32
    %203 = vector.broadcast %cst_54 : f32 to vector<16x16xf32>
    %204 = arith.cmpf ogt, %202, %203 : vector<16x16xf32>
    %cst_55 = arith.constant 2.000000e-01 : f32
    %205 = vector.broadcast %cst_55 : f32 to vector<16x16xf32>
    %206 = arith.mulf %205, %202 : vector<16x16xf32>
    %207 = arith.select %204, %202, %206 : vector<16x16xi1>, vector<16x16xf32>
    %208 = arith.addf %207, %0 : vector<16x16xf32>
    %cst_56 = arith.constant dense<0xFF800000> : vector<16xf32>
    %209 = vector.multi_reduction <maximumf>, %208, %cst_56 [1] : vector<16x16xf32> to vector<16xf32>
    %210 = vector.shape_cast %209 : vector<16xf32> to vector<16x1xf32>
    %211 = vector.broadcast %210 : vector<16x1xf32> to vector<16x16xf32>
    %212 = arith.subf %208, %211 : vector<16x16xf32>
    %213 = math.exp %212 : vector<16x16xf32>
    %cst_57 = arith.constant dense<0.000000e+00> : vector<16xf32>
    %214 = vector.multi_reduction <add>, %213, %cst_57 [1] : vector<16x16xf32> to vector<16xf32>
    %215 = vector.shape_cast %214 : vector<16xf32> to vector<16x1xf32>
    %216 = vector.broadcast %215 : vector<16x1xf32> to vector<16x16xf32>
    %217 = arith.divf %213, %216 : vector<16x16xf32>
    %218 = vector.shape_cast %154 : vector<16x16xf32> to vector<1x16x16xf32>
    %219 = vector.shape_cast %175 : vector<16x16xf32> to vector<1x16x16xf32>
    %220 = vector.shape_cast %196 : vector<16x16xf32> to vector<1x16x16xf32>
    %221 = vector.shape_cast %217 : vector<16x16xf32> to vector<1x16x16xf32>
    %222 = tpu.concatenate %218, %219, %220, %221 in 0 : vector<1x16x16xf32>, vector<1x16x16xf32>, vector<1x16x16xf32>, vector<1x16x16xf32> -> vector<4x16x16xf32>
    %223 = vector.shape_cast %222 : vector<4x16x16xf32> to vector<64x16xf32>
    %cst_58 = arith.constant dense<0.000000e+00> : vector<64x128xf32>
    %224 = tpu.matmul %223, %132, %cst_58 {dimension_numbers = #tpu.dot_dimension_numbers<[1], [0], [0], [1], [0, 0, 1, 1], [], []>} : vector<64x16xf32>, vector<16x128xf32>, vector<64x128xf32> -> vector<64x128xf32>
    %225 = vector.extract_strided_slice %224 {offsets = [0, 0], sizes = [16, 128], strides = [1, 1]} : vector<64x128xf32> to vector<16x128xf32>
    %226 = vector.extract_strided_slice %1 {offsets = [0, 0, 0], sizes = [1, 1, 128], strides = [1, 1, 1]} : vector<4x1x128xf32> to vector<1x1x128xf32>
    %227 = vector.shape_cast %226 : vector<1x1x128xf32> to vector<1x128xf32>
    %228 = vector.broadcast %227 : vector<1x128xf32> to vector<16x128xf32>
    %229 = arith.mulf %225, %228 : vector<16x128xf32>
    %230 = vector.broadcast %131 : vector<1x128xf32> to vector<16x128xf32>
    %231 = arith.addf %230, %229 : vector<16x128xf32>
    %232 = vector.extract_strided_slice %224 {offsets = [16, 0], sizes = [16, 128], strides = [1, 1]} : vector<64x128xf32> to vector<16x128xf32>
    %233 = vector.extract_strided_slice %1 {offsets = [1, 0, 0], sizes = [1, 1, 128], strides = [1, 1, 1]} : vector<4x1x128xf32> to vector<1x1x128xf32>
    %234 = vector.shape_cast %233 : vector<1x1x128xf32> to vector<1x128xf32>
    %235 = vector.broadcast %234 : vector<1x128xf32> to vector<16x128xf32>
    %236 = arith.mulf %232, %235 : vector<16x128xf32>
    %237 = arith.addf %231, %236 : vector<16x128xf32>
    %238 = vector.extract_strided_slice %224 {offsets = [32, 0], sizes = [16, 128], strides = [1, 1]} : vector<64x128xf32> to vector<16x128xf32>
    %239 = vector.extract_strided_slice %1 {offsets = [2, 0, 0], sizes = [1, 1, 128], strides = [1, 1, 1]} : vector<4x1x128xf32> to vector<1x1x128xf32>
    %240 = vector.shape_cast %239 : vector<1x1x128xf32> to vector<1x128xf32>
    %241 = vector.broadcast %240 : vector<1x128xf32> to vector<16x128xf32>
    %242 = arith.mulf %238, %241 : vector<16x128xf32>
    %243 = arith.addf %237, %242 : vector<16x128xf32>
    %244 = vector.extract_strided_slice %224 {offsets = [48, 0], sizes = [16, 128], strides = [1, 1]} : vector<64x128xf32> to vector<16x128xf32>
    %245 = vector.extract_strided_slice %1 {offsets = [3, 0, 0], sizes = [1, 1, 128], strides = [1, 1, 1]} : vector<4x1x128xf32> to vector<1x1x128xf32>
    %246 = vector.shape_cast %245 : vector<1x1x128xf32> to vector<1x128xf32>
    %247 = vector.broadcast %246 : vector<1x128xf32> to vector<16x128xf32>
    %248 = arith.mulf %244, %247 : vector<16x128xf32>
    %249 = arith.addf %243, %248 : vector<16x128xf32>
    %c1_59 = arith.constant 1 : index
    %c0_60 = arith.constant 0 : index
    %c0_61 = arith.constant 0 : index
    %250 = vector.load %arg5[%c1_59, %c0_60, %c0_61] : memref<2x128x128xf32, #tpu.memory_space<vmem>>, vector<1x128x128xf32>
    %251 = vector.shape_cast %250 : vector<1x128x128xf32> to vector<128x128xf32>
    %c2 = arith.constant 2 : index
    %c0_62 = arith.constant 0 : index
    %c0_63 = arith.constant 0 : index
    %252 = vector.load %arg6[%c2, %c0_62, %c0_63] : memref<3x128x8xf32, #tpu.memory_space<vmem>>, vector<1x128x8xf32>
    %253 = vector.shape_cast %252 : vector<1x128x8xf32> to vector<128x8xf32>
    %c2_64 = arith.constant 2 : index
    %c0_65 = arith.constant 0 : index
    %c0_66 = arith.constant 0 : index
    %254 = vector.load %arg7[%c2_64, %c0_65, %c0_66] : memref<3x1x128xf32, #tpu.memory_space<vmem>>, vector<1x1x128xf32>
    %255 = vector.shape_cast %254 : vector<1x1x128xf32> to vector<1x128xf32>
    %cst_67 = arith.constant dense<0.000000e+00> : vector<16x128xf32>
    %256 = tpu.matmul %249, %251, %cst_67 {dimension_numbers = #tpu.dot_dimension_numbers<[1], [0], [0], [1], [0, 0, 1, 1], [], []>} : vector<16x128xf32>, vector<128x128xf32>, vector<16x128xf32> -> vector<16x128xf32>
    %cst_68 = arith.constant dense<0.000000e+00> : vector<16x8xf32>
    %257 = tpu.matmul %256, %253, %cst_68 {dimension_numbers = #tpu.dot_dimension_numbers<[1], [0], [0], [1], [0, 0, 1, 1], [], []>} : vector<16x128xf32>, vector<128x8xf32>, vector<16x8xf32> -> vector<16x8xf32>
    %258 = vector.extract_strided_slice %257 {offsets = [0, 4], sizes = [16, 1], strides = [1, 1]} : vector<16x8xf32> to vector<16x1xf32>
    %259 = vector.extract_strided_slice %257 {offsets = [0, 0], sizes = [16, 1], strides = [1, 1]} : vector<16x8xf32> to vector<16x1xf32>
    %260 = tpu.transpose %259, [1, 0] : vector<16x1xf32> -> vector<1x16xf32>
    %261 = vector.broadcast %258 : vector<16x1xf32> to vector<16x16xf32>
    %262 = vector.broadcast %260 : vector<1x16xf32> to vector<16x16xf32>
    %263 = arith.addf %261, %262 : vector<16x16xf32>
    %cst_69 = arith.constant 0.000000e+00 : f32
    %264 = vector.broadcast %cst_69 : f32 to vector<16x16xf32>
    %265 = arith.cmpf ogt, %263, %264 : vector<16x16xf32>
    %cst_70 = arith.constant 2.000000e-01 : f32
    %266 = vector.broadcast %cst_70 : f32 to vector<16x16xf32>
    %267 = arith.mulf %266, %263 : vector<16x16xf32>
    %268 = arith.select %265, %263, %267 : vector<16x16xi1>, vector<16x16xf32>
    %269 = arith.addf %268, %0 : vector<16x16xf32>
    %cst_71 = arith.constant dense<0xFF800000> : vector<16xf32>
    %270 = vector.multi_reduction <maximumf>, %269, %cst_71 [1] : vector<16x16xf32> to vector<16xf32>
    %271 = vector.shape_cast %270 : vector<16xf32> to vector<16x1xf32>
    %272 = vector.broadcast %271 : vector<16x1xf32> to vector<16x16xf32>
    %273 = arith.subf %269, %272 : vector<16x16xf32>
    %274 = math.exp %273 : vector<16x16xf32>
    %cst_72 = arith.constant dense<0.000000e+00> : vector<16xf32>
    %275 = vector.multi_reduction <add>, %274, %cst_72 [1] : vector<16x16xf32> to vector<16xf32>
    %276 = vector.shape_cast %275 : vector<16xf32> to vector<16x1xf32>
    %277 = vector.broadcast %276 : vector<16x1xf32> to vector<16x16xf32>
    %278 = arith.divf %274, %277 : vector<16x16xf32>
    %279 = vector.extract_strided_slice %257 {offsets = [0, 5], sizes = [16, 1], strides = [1, 1]} : vector<16x8xf32> to vector<16x1xf32>
    %280 = vector.extract_strided_slice %257 {offsets = [0, 1], sizes = [16, 1], strides = [1, 1]} : vector<16x8xf32> to vector<16x1xf32>
    %281 = tpu.transpose %280, [1, 0] : vector<16x1xf32> -> vector<1x16xf32>
    %282 = vector.broadcast %279 : vector<16x1xf32> to vector<16x16xf32>
    %283 = vector.broadcast %281 : vector<1x16xf32> to vector<16x16xf32>
    %284 = arith.addf %282, %283 : vector<16x16xf32>
    %cst_73 = arith.constant 0.000000e+00 : f32
    %285 = vector.broadcast %cst_73 : f32 to vector<16x16xf32>
    %286 = arith.cmpf ogt, %284, %285 : vector<16x16xf32>
    %cst_74 = arith.constant 2.000000e-01 : f32
    %287 = vector.broadcast %cst_74 : f32 to vector<16x16xf32>
    %288 = arith.mulf %287, %284 : vector<16x16xf32>
    %289 = arith.select %286, %284, %288 : vector<16x16xi1>, vector<16x16xf32>
    %290 = arith.addf %289, %0 : vector<16x16xf32>
    %cst_75 = arith.constant dense<0xFF800000> : vector<16xf32>
    %291 = vector.multi_reduction <maximumf>, %290, %cst_75 [1] : vector<16x16xf32> to vector<16xf32>
    %292 = vector.shape_cast %291 : vector<16xf32> to vector<16x1xf32>
    %293 = vector.broadcast %292 : vector<16x1xf32> to vector<16x16xf32>
    %294 = arith.subf %290, %293 : vector<16x16xf32>
    %295 = math.exp %294 : vector<16x16xf32>
    %cst_76 = arith.constant dense<0.000000e+00> : vector<16xf32>
    %296 = vector.multi_reduction <add>, %295, %cst_76 [1] : vector<16x16xf32> to vector<16xf32>
    %297 = vector.shape_cast %296 : vector<16xf32> to vector<16x1xf32>
    %298 = vector.broadcast %297 : vector<16x1xf32> to vector<16x16xf32>
    %299 = arith.divf %295, %298 : vector<16x16xf32>
    %300 = vector.extract_strided_slice %257 {offsets = [0, 6], sizes = [16, 1], strides = [1, 1]} : vector<16x8xf32> to vector<16x1xf32>
    %301 = vector.extract_strided_slice %257 {offsets = [0, 2], sizes = [16, 1], strides = [1, 1]} : vector<16x8xf32> to vector<16x1xf32>
    %302 = tpu.transpose %301, [1, 0] : vector<16x1xf32> -> vector<1x16xf32>
    %303 = vector.broadcast %300 : vector<16x1xf32> to vector<16x16xf32>
    %304 = vector.broadcast %302 : vector<1x16xf32> to vector<16x16xf32>
    %305 = arith.addf %303, %304 : vector<16x16xf32>
    %cst_77 = arith.constant 0.000000e+00 : f32
    %306 = vector.broadcast %cst_77 : f32 to vector<16x16xf32>
    %307 = arith.cmpf ogt, %305, %306 : vector<16x16xf32>
    %cst_78 = arith.constant 2.000000e-01 : f32
    %308 = vector.broadcast %cst_78 : f32 to vector<16x16xf32>
    %309 = arith.mulf %308, %305 : vector<16x16xf32>
    %310 = arith.select %307, %305, %309 : vector<16x16xi1>, vector<16x16xf32>
    %311 = arith.addf %310, %0 : vector<16x16xf32>
    %cst_79 = arith.constant dense<0xFF800000> : vector<16xf32>
    %312 = vector.multi_reduction <maximumf>, %311, %cst_79 [1] : vector<16x16xf32> to vector<16xf32>
    %313 = vector.shape_cast %312 : vector<16xf32> to vector<16x1xf32>
    %314 = vector.broadcast %313 : vector<16x1xf32> to vector<16x16xf32>
    %315 = arith.subf %311, %314 : vector<16x16xf32>
    %316 = math.exp %315 : vector<16x16xf32>
    %cst_80 = arith.constant dense<0.000000e+00> : vector<16xf32>
    %317 = vector.multi_reduction <add>, %316, %cst_80 [1] : vector<16x16xf32> to vector<16xf32>
    %318 = vector.shape_cast %317 : vector<16xf32> to vector<16x1xf32>
    %319 = vector.broadcast %318 : vector<16x1xf32> to vector<16x16xf32>
    %320 = arith.divf %316, %319 : vector<16x16xf32>
    %321 = vector.extract_strided_slice %257 {offsets = [0, 7], sizes = [16, 1], strides = [1, 1]} : vector<16x8xf32> to vector<16x1xf32>
    %322 = vector.extract_strided_slice %257 {offsets = [0, 3], sizes = [16, 1], strides = [1, 1]} : vector<16x8xf32> to vector<16x1xf32>
    %323 = tpu.transpose %322, [1, 0] : vector<16x1xf32> -> vector<1x16xf32>
    %324 = vector.broadcast %321 : vector<16x1xf32> to vector<16x16xf32>
    %325 = vector.broadcast %323 : vector<1x16xf32> to vector<16x16xf32>
    %326 = arith.addf %324, %325 : vector<16x16xf32>
    %cst_81 = arith.constant 0.000000e+00 : f32
    %327 = vector.broadcast %cst_81 : f32 to vector<16x16xf32>
    %328 = arith.cmpf ogt, %326, %327 : vector<16x16xf32>
    %cst_82 = arith.constant 2.000000e-01 : f32
    %329 = vector.broadcast %cst_82 : f32 to vector<16x16xf32>
    %330 = arith.mulf %329, %326 : vector<16x16xf32>
    %331 = arith.select %328, %326, %330 : vector<16x16xi1>, vector<16x16xf32>
    %332 = arith.addf %331, %0 : vector<16x16xf32>
    %cst_83 = arith.constant dense<0xFF800000> : vector<16xf32>
    %333 = vector.multi_reduction <maximumf>, %332, %cst_83 [1] : vector<16x16xf32> to vector<16xf32>
    %334 = vector.shape_cast %333 : vector<16xf32> to vector<16x1xf32>
    %335 = vector.broadcast %334 : vector<16x1xf32> to vector<16x16xf32>
    %336 = arith.subf %332, %335 : vector<16x16xf32>
    %337 = math.exp %336 : vector<16x16xf32>
    %cst_84 = arith.constant dense<0.000000e+00> : vector<16xf32>
    %338 = vector.multi_reduction <add>, %337, %cst_84 [1] : vector<16x16xf32> to vector<16xf32>
    %339 = vector.shape_cast %338 : vector<16xf32> to vector<16x1xf32>
    %340 = vector.broadcast %339 : vector<16x1xf32> to vector<16x16xf32>
    %341 = arith.divf %337, %340 : vector<16x16xf32>
    %342 = vector.shape_cast %278 : vector<16x16xf32> to vector<1x16x16xf32>
    %343 = vector.shape_cast %299 : vector<16x16xf32> to vector<1x16x16xf32>
    %344 = vector.shape_cast %320 : vector<16x16xf32> to vector<1x16x16xf32>
    %345 = vector.shape_cast %341 : vector<16x16xf32> to vector<1x16x16xf32>
    %346 = tpu.concatenate %342, %343, %344, %345 in 0 : vector<1x16x16xf32>, vector<1x16x16xf32>, vector<1x16x16xf32>, vector<1x16x16xf32> -> vector<4x16x16xf32>
    %347 = vector.shape_cast %346 : vector<4x16x16xf32> to vector<64x16xf32>
    %cst_85 = arith.constant dense<0.000000e+00> : vector<64x128xf32>
    %348 = tpu.matmul %347, %256, %cst_85 {dimension_numbers = #tpu.dot_dimension_numbers<[1], [0], [0], [1], [0, 0, 1, 1], [], []>} : vector<64x16xf32>, vector<16x128xf32>, vector<64x128xf32> -> vector<64x128xf32>
    %349 = vector.extract_strided_slice %348 {offsets = [0, 0], sizes = [16, 128], strides = [1, 1]} : vector<64x128xf32> to vector<16x128xf32>
    %350 = vector.extract_strided_slice %1 {offsets = [0, 0, 0], sizes = [1, 1, 128], strides = [1, 1, 1]} : vector<4x1x128xf32> to vector<1x1x128xf32>
    %351 = vector.shape_cast %350 : vector<1x1x128xf32> to vector<1x128xf32>
    %352 = vector.broadcast %351 : vector<1x128xf32> to vector<16x128xf32>
    %353 = arith.mulf %349, %352 : vector<16x128xf32>
    %354 = vector.broadcast %255 : vector<1x128xf32> to vector<16x128xf32>
    %355 = arith.addf %354, %353 : vector<16x128xf32>
    %356 = vector.extract_strided_slice %348 {offsets = [16, 0], sizes = [16, 128], strides = [1, 1]} : vector<64x128xf32> to vector<16x128xf32>
    %357 = vector.extract_strided_slice %1 {offsets = [1, 0, 0], sizes = [1, 1, 128], strides = [1, 1, 1]} : vector<4x1x128xf32> to vector<1x1x128xf32>
    %358 = vector.shape_cast %357 : vector<1x1x128xf32> to vector<1x128xf32>
    %359 = vector.broadcast %358 : vector<1x128xf32> to vector<16x128xf32>
    %360 = arith.mulf %356, %359 : vector<16x128xf32>
    %361 = arith.addf %355, %360 : vector<16x128xf32>
    %362 = vector.extract_strided_slice %348 {offsets = [32, 0], sizes = [16, 128], strides = [1, 1]} : vector<64x128xf32> to vector<16x128xf32>
    %363 = vector.extract_strided_slice %1 {offsets = [2, 0, 0], sizes = [1, 1, 128], strides = [1, 1, 1]} : vector<4x1x128xf32> to vector<1x1x128xf32>
    %364 = vector.shape_cast %363 : vector<1x1x128xf32> to vector<1x128xf32>
    %365 = vector.broadcast %364 : vector<1x128xf32> to vector<16x128xf32>
    %366 = arith.mulf %362, %365 : vector<16x128xf32>
    %367 = arith.addf %361, %366 : vector<16x128xf32>
    %368 = vector.extract_strided_slice %348 {offsets = [48, 0], sizes = [16, 128], strides = [1, 1]} : vector<64x128xf32> to vector<16x128xf32>
    %369 = vector.extract_strided_slice %1 {offsets = [3, 0, 0], sizes = [1, 1, 128], strides = [1, 1, 1]} : vector<4x1x128xf32> to vector<1x1x128xf32>
    %370 = vector.shape_cast %369 : vector<1x1x128xf32> to vector<1x128xf32>
    %371 = vector.broadcast %370 : vector<1x128xf32> to vector<16x128xf32>
    %372 = arith.mulf %368, %371 : vector<16x128xf32>
    %373 = arith.addf %367, %372 : vector<16x128xf32>
    %c0_86 = arith.constant 0 : index
    %c0_87 = arith.constant 0 : index
    %374 = vector.load %arg12[%c0_86, %c0_87] : memref<2x16xf32, #tpu.memory_space<vmem>>, vector<2x16xf32>
    %cst_88 = arith.constant dense<0.000000e+00> : vector<2x128xf32>
    %375 = tpu.matmul %374, %373, %cst_88 {dimension_numbers = #tpu.dot_dimension_numbers<[1], [0], [0], [1], [0, 0, 1, 1], [], []>} : vector<2x16xf32>, vector<16x128xf32>, vector<2x128xf32> -> vector<2x128xf32>
    %c8 = arith.constant 8 : index
    %c0_89 = arith.constant 0 : index
    %376 = vector.load %arg9[%c8, %c0_89] : memref<136x32xf32, #tpu.memory_space<vmem>>, vector<128x32xf32>
    %cst_90 = arith.constant dense<0.000000e+00> : vector<2x32xf32>
    %377 = tpu.matmul %375, %376, %cst_90 {dimension_numbers = #tpu.dot_dimension_numbers<[1], [0], [0], [1], [0, 0, 1, 1], [], []>} : vector<2x128xf32>, vector<128x32xf32>, vector<2x32xf32> -> vector<2x32xf32>
    %c1_91 = arith.constant 1 : index
    %c0_92 = arith.constant 0 : index
    %378 = vector.load %arg10[%c1_91, %c0_92] : memref<4x32xf32, #tpu.memory_space<vmem>>, vector<1x32xf32>
    %379 = vector.broadcast %378 : vector<1x32xf32> to vector<2x32xf32>
    %380 = arith.addf %377, %379 : vector<2x32xf32>
    %c0_93 = arith.constant 0 : index
    %c0_94 = arith.constant 0 : index
    %381 = vector.load %arg1[%c0_93, %c0_94] : memref<16x8xf32, #tpu.memory_space<vmem>>, vector<16x8xf32>
    %c0_95 = arith.constant 0 : index
    %c0_96 = arith.constant 0 : index
    %382 = vector.load %arg9[%c0_95, %c0_96] : memref<136x32xf32, #tpu.memory_space<vmem>>, vector<8x32xf32>
    %cst_97 = arith.constant dense<0.000000e+00> : vector<16x32xf32>
    %383 = tpu.matmul %381, %382, %cst_97 {dimension_numbers = #tpu.dot_dimension_numbers<[1], [0], [0], [1], [0, 0, 1, 1], [], []>} : vector<16x8xf32>, vector<8x32xf32>, vector<16x32xf32> -> vector<16x32xf32>
    %c0_98 = arith.constant 0 : index
    %c0_99 = arith.constant 0 : index
    %384 = vector.load %arg10[%c0_98, %c0_99] : memref<4x32xf32, #tpu.memory_space<vmem>>, vector<1x32xf32>
    %385 = vector.broadcast %384 : vector<1x32xf32> to vector<16x32xf32>
    %386 = arith.addf %383, %385 : vector<16x32xf32>
    %c0_100 = arith.constant 0 : index
    %c0_101 = arith.constant 0 : index
    %c0_102 = arith.constant 0 : index
    %387 = vector.load %arg11[%c0_100, %c0_101, %c0_102] : memref<2x65x128xf32, #tpu.memory_space<vmem>>, vector<1x32x128xf32>
    %388 = vector.shape_cast %387 : vector<1x32x128xf32> to vector<32x128xf32>
    %c0_103 = arith.constant 0 : index
    %c32 = arith.constant 32 : index
    %c0_104 = arith.constant 0 : index
    %389 = vector.load %arg11[%c0_103, %c32, %c0_104] : memref<2x65x128xf32, #tpu.memory_space<vmem>>, vector<1x32x128xf32>
    %390 = vector.shape_cast %389 : vector<1x32x128xf32> to vector<32x128xf32>
    %c0_105 = arith.constant 0 : index
    %c64 = arith.constant 64 : index
    %c0_106 = arith.constant 0 : index
    %391 = vector.load %arg11[%c0_105, %c64, %c0_106] : memref<2x65x128xf32, #tpu.memory_space<vmem>>, vector<1x1x128xf32>
    %392 = vector.shape_cast %391 : vector<1x1x128xf32> to vector<1x128xf32>
    %c1_107 = arith.constant 1 : index
    %c0_108 = arith.constant 0 : index
    %c0_109 = arith.constant 0 : index
    %393 = vector.load %arg11[%c1_107, %c0_108, %c0_109] : memref<2x65x128xf32, #tpu.memory_space<vmem>>, vector<1x32x128xf32>
    %394 = vector.shape_cast %393 : vector<1x32x128xf32> to vector<32x128xf32>
    %c1_110 = arith.constant 1 : index
    %c32_111 = arith.constant 32 : index
    %c0_112 = arith.constant 0 : index
    %395 = vector.load %arg11[%c1_110, %c32_111, %c0_112] : memref<2x65x128xf32, #tpu.memory_space<vmem>>, vector<1x32x128xf32>
    %396 = vector.shape_cast %395 : vector<1x32x128xf32> to vector<32x128xf32>
    %c1_113 = arith.constant 1 : index
    %c64_114 = arith.constant 64 : index
    %c0_115 = arith.constant 0 : index
    %397 = vector.load %arg11[%c1_113, %c64_114, %c0_115] : memref<2x65x128xf32, #tpu.memory_space<vmem>>, vector<1x1x128xf32>
    %398 = vector.shape_cast %397 : vector<1x1x128xf32> to vector<1x128xf32>
    %cst_116 = arith.constant dense<0.000000e+00> : vector<16x128xf32>
    %399 = tpu.matmul %386, %388, %cst_116 {dimension_numbers = #tpu.dot_dimension_numbers<[1], [0], [0], [1], [0, 0, 1, 1], [], []>} : vector<16x32xf32>, vector<32x128xf32>, vector<16x128xf32> -> vector<16x128xf32>
    %400 = vector.broadcast %392 : vector<1x128xf32> to vector<16x128xf32>
    %401 = arith.addf %399, %400 : vector<16x128xf32>
    %cst_117 = arith.constant 0.000000e+00 : f32
    %402 = vector.broadcast %cst_117 : f32 to vector<2x32xf32>
    %cst_118 = arith.constant 0.000000e+00 : f32
    %403 = vector.broadcast %cst_118 : f32 to vector<2x32xf32>
    %cst_119 = arith.constant 0.000000e+00 : f32
    %404 = vector.broadcast %cst_119 : f32 to vector<2x32xf32>
    %cst_120 = arith.constant 0.000000e+00 : f32
    %405 = vector.broadcast %cst_120 : f32 to vector<2x32xf32>
    %406 = vector.extract_strided_slice %401 {offsets = [0, 0], sizes = [2, 128], strides = [1, 1]} : vector<16x128xf32> to vector<2x128xf32>
    %cst_121 = arith.constant dense<0.000000e+00> : vector<2x128xf32>
    %407 = tpu.matmul %402, %390, %cst_121 {dimension_numbers = #tpu.dot_dimension_numbers<[1], [0], [0], [1], [0, 0, 1, 1], [], []>} : vector<2x32xf32>, vector<32x128xf32>, vector<2x128xf32> -> vector<2x128xf32>
    %408 = arith.addf %406, %407 : vector<2x128xf32>
    %409 = vector.extract_strided_slice %408 {offsets = [0, 0], sizes = [2, 32], strides = [1, 1]} : vector<2x128xf32> to vector<2x32xf32>
    %410 = arith.negf %409 : vector<2x32xf32>
    %411 = math.exp %410 : vector<2x32xf32>
    %cst_122 = arith.constant 1.000000e+00 : f32
    %412 = vector.broadcast %cst_122 : f32 to vector<2x32xf32>
    %413 = arith.addf %412, %411 : vector<2x32xf32>
    %414 = arith.divf %412, %413 : vector<2x32xf32>
    %415 = vector.extract_strided_slice %408 {offsets = [0, 32], sizes = [2, 32], strides = [1, 1]} : vector<2x128xf32> to vector<2x32xf32>
    %416 = arith.negf %415 : vector<2x32xf32>
    %417 = math.exp %416 : vector<2x32xf32>
    %cst_123 = arith.constant 1.000000e+00 : f32
    %418 = vector.broadcast %cst_123 : f32 to vector<2x32xf32>
    %419 = arith.addf %418, %417 : vector<2x32xf32>
    %420 = arith.divf %418, %419 : vector<2x32xf32>
    %421 = vector.extract_strided_slice %408 {offsets = [0, 64], sizes = [2, 32], strides = [1, 1]} : vector<2x128xf32> to vector<2x32xf32>
    %422 = math.tanh %421 : vector<2x32xf32>
    %423 = vector.extract_strided_slice %408 {offsets = [0, 96], sizes = [2, 32], strides = [1, 1]} : vector<2x128xf32> to vector<2x32xf32>
    %424 = arith.negf %423 : vector<2x32xf32>
    %425 = math.exp %424 : vector<2x32xf32>
    %cst_124 = arith.constant 1.000000e+00 : f32
    %426 = vector.broadcast %cst_124 : f32 to vector<2x32xf32>
    %427 = arith.addf %426, %425 : vector<2x32xf32>
    %428 = arith.divf %426, %427 : vector<2x32xf32>
    %429 = arith.mulf %420, %403 : vector<2x32xf32>
    %430 = arith.mulf %414, %422 : vector<2x32xf32>
    %431 = arith.addf %429, %430 : vector<2x32xf32>
    %432 = math.tanh %431 : vector<2x32xf32>
    %433 = arith.mulf %428, %432 : vector<2x32xf32>
    %cst_125 = arith.constant dense<0.000000e+00> : vector<2x128xf32>
    %434 = tpu.matmul %433, %394, %cst_125 {dimension_numbers = #tpu.dot_dimension_numbers<[1], [0], [0], [1], [0, 0, 1, 1], [], []>} : vector<2x32xf32>, vector<32x128xf32>, vector<2x128xf32> -> vector<2x128xf32>
    %cst_126 = arith.constant dense<0.000000e+00> : vector<2x128xf32>
    %435 = tpu.matmul %404, %396, %cst_126 {dimension_numbers = #tpu.dot_dimension_numbers<[1], [0], [0], [1], [0, 0, 1, 1], [], []>} : vector<2x32xf32>, vector<32x128xf32>, vector<2x128xf32> -> vector<2x128xf32>
    %436 = arith.addf %434, %435 : vector<2x128xf32>
    %437 = vector.broadcast %398 : vector<1x128xf32> to vector<2x128xf32>
    %438 = arith.addf %436, %437 : vector<2x128xf32>
    %439 = vector.extract_strided_slice %438 {offsets = [0, 0], sizes = [2, 32], strides = [1, 1]} : vector<2x128xf32> to vector<2x32xf32>
    %440 = arith.negf %439 : vector<2x32xf32>
    %441 = math.exp %440 : vector<2x32xf32>
    %cst_127 = arith.constant 1.000000e+00 : f32
    %442 = vector.broadcast %cst_127 : f32 to vector<2x32xf32>
    %443 = arith.addf %442, %441 : vector<2x32xf32>
    %444 = arith.divf %442, %443 : vector<2x32xf32>
    %445 = vector.extract_strided_slice %438 {offsets = [0, 32], sizes = [2, 32], strides = [1, 1]} : vector<2x128xf32> to vector<2x32xf32>
    %446 = arith.negf %445 : vector<2x32xf32>
    %447 = math.exp %446 : vector<2x32xf32>
    %cst_128 = arith.constant 1.000000e+00 : f32
    %448 = vector.broadcast %cst_128 : f32 to vector<2x32xf32>
    %449 = arith.addf %448, %447 : vector<2x32xf32>
    %450 = arith.divf %448, %449 : vector<2x32xf32>
    %451 = vector.extract_strided_slice %438 {offsets = [0, 64], sizes = [2, 32], strides = [1, 1]} : vector<2x128xf32> to vector<2x32xf32>
    %452 = math.tanh %451 : vector<2x32xf32>
    %453 = vector.extract_strided_slice %438 {offsets = [0, 96], sizes = [2, 32], strides = [1, 1]} : vector<2x128xf32> to vector<2x32xf32>
    %454 = arith.negf %453 : vector<2x32xf32>
    %455 = math.exp %454 : vector<2x32xf32>
    %cst_129 = arith.constant 1.000000e+00 : f32
    %456 = vector.broadcast %cst_129 : f32 to vector<2x32xf32>
    %457 = arith.addf %456, %455 : vector<2x32xf32>
    %458 = arith.divf %456, %457 : vector<2x32xf32>
    %459 = arith.mulf %450, %405 : vector<2x32xf32>
    %460 = arith.mulf %444, %452 : vector<2x32xf32>
    %461 = arith.addf %459, %460 : vector<2x32xf32>
    %462 = math.tanh %461 : vector<2x32xf32>
    %463 = arith.mulf %458, %462 : vector<2x32xf32>
    %c0_130 = arith.constant 0 : index
    %c0_131 = arith.constant 0 : index
    %464 = vector.load %arg15[%c0_130, %c0_131] : memref<16x32xf32, #tpu.memory_space<vmem>>, vector<2x32xf32>
    tpu.vector_store %arg15[%c0_130, %c0_131], %463 {strides = array<i32>} : memref<16x32xf32, #tpu.memory_space<vmem>>, vector<2x32xf32>,
    %465 = vector.extract_strided_slice %401 {offsets = [2, 0], sizes = [2, 128], strides = [1, 1]} : vector<16x128xf32> to vector<2x128xf32>
    %cst_132 = arith.constant dense<0.000000e+00> : vector<2x128xf32>
    %466 = tpu.matmul %433, %390, %cst_132 {dimension_numbers = #tpu.dot_dimension_numbers<[1], [0], [0], [1], [0, 0, 1, 1], [], []>} : vector<2x32xf32>, vector<32x128xf32>, vector<2x128xf32> -> vector<2x128xf32>
    %467 = arith.addf %465, %466 : vector<2x128xf32>
    %468 = vector.extract_strided_slice %467 {offsets = [0, 0], sizes = [2, 32], strides = [1, 1]} : vector<2x128xf32> to vector<2x32xf32>
    %469 = arith.negf %468 : vector<2x32xf32>
    %470 = math.exp %469 : vector<2x32xf32>
    %cst_133 = arith.constant 1.000000e+00 : f32
    %471 = vector.broadcast %cst_133 : f32 to vector<2x32xf32>
    %472 = arith.addf %471, %470 : vector<2x32xf32>
    %473 = arith.divf %471, %472 : vector<2x32xf32>
    %474 = vector.extract_strided_slice %467 {offsets = [0, 32], sizes = [2, 32], strides = [1, 1]} : vector<2x128xf32> to vector<2x32xf32>
    %475 = arith.negf %474 : vector<2x32xf32>
    %476 = math.exp %475 : vector<2x32xf32>
    %cst_134 = arith.constant 1.000000e+00 : f32
    %477 = vector.broadcast %cst_134 : f32 to vector<2x32xf32>
    %478 = arith.addf %477, %476 : vector<2x32xf32>
    %479 = arith.divf %477, %478 : vector<2x32xf32>
    %480 = vector.extract_strided_slice %467 {offsets = [0, 64], sizes = [2, 32], strides = [1, 1]} : vector<2x128xf32> to vector<2x32xf32>
    %481 = math.tanh %480 : vector<2x32xf32>
    %482 = vector.extract_strided_slice %467 {offsets = [0, 96], sizes = [2, 32], strides = [1, 1]} : vector<2x128xf32> to vector<2x32xf32>
    %483 = arith.negf %482 : vector<2x32xf32>
    %484 = math.exp %483 : vector<2x32xf32>
    %cst_135 = arith.constant 1.000000e+00 : f32
    %485 = vector.broadcast %cst_135 : f32 to vector<2x32xf32>
    %486 = arith.addf %485, %484 : vector<2x32xf32>
    %487 = arith.divf %485, %486 : vector<2x32xf32>
    %488 = arith.mulf %479, %431 : vector<2x32xf32>
    %489 = arith.mulf %473, %481 : vector<2x32xf32>
    %490 = arith.addf %488, %489 : vector<2x32xf32>
    %491 = math.tanh %490 : vector<2x32xf32>
    %492 = arith.mulf %487, %491 : vector<2x32xf32>
    %cst_136 = arith.constant dense<0.000000e+00> : vector<2x128xf32>
    %493 = tpu.matmul %492, %394, %cst_136 {dimension_numbers = #tpu.dot_dimension_numbers<[1], [0], [0], [1], [0, 0, 1, 1], [], []>} : vector<2x32xf32>, vector<32x128xf32>, vector<2x128xf32> -> vector<2x128xf32>
    %cst_137 = arith.constant dense<0.000000e+00> : vector<2x128xf32>
    %494 = tpu.matmul %463, %396, %cst_137 {dimension_numbers = #tpu.dot_dimension_numbers<[1], [0], [0], [1], [0, 0, 1, 1], [], []>} : vector<2x32xf32>, vector<32x128xf32>, vector<2x128xf32> -> vector<2x128xf32>
    %495 = arith.addf %493, %494 : vector<2x128xf32>
    %496 = vector.broadcast %398 : vector<1x128xf32> to vector<2x128xf32>
    %497 = arith.addf %495, %496 : vector<2x128xf32>
    %498 = vector.extract_strided_slice %497 {offsets = [0, 0], sizes = [2, 32], strides = [1, 1]} : vector<2x128xf32> to vector<2x32xf32>
    %499 = arith.negf %498 : vector<2x32xf32>
    %500 = math.exp %499 : vector<2x32xf32>
    %cst_138 = arith.constant 1.000000e+00 : f32
    %501 = vector.broadcast %cst_138 : f32 to vector<2x32xf32>
    %502 = arith.addf %501, %500 : vector<2x32xf32>
    %503 = arith.divf %501, %502 : vector<2x32xf32>
    %504 = vector.extract_strided_slice %497 {offsets = [0, 32], sizes = [2, 32], strides = [1, 1]} : vector<2x128xf32> to vector<2x32xf32>
    %505 = arith.negf %504 : vector<2x32xf32>
    %506 = math.exp %505 : vector<2x32xf32>
    %cst_139 = arith.constant 1.000000e+00 : f32
    %507 = vector.broadcast %cst_139 : f32 to vector<2x32xf32>
    %508 = arith.addf %507, %506 : vector<2x32xf32>
    %509 = arith.divf %507, %508 : vector<2x32xf32>
    %510 = vector.extract_strided_slice %497 {offsets = [0, 64], sizes = [2, 32], strides = [1, 1]} : vector<2x128xf32> to vector<2x32xf32>
    %511 = math.tanh %510 : vector<2x32xf32>
    %512 = vector.extract_strided_slice %497 {offsets = [0, 96], sizes = [2, 32], strides = [1, 1]} : vector<2x128xf32> to vector<2x32xf32>
    %513 = arith.negf %512 : vector<2x32xf32>
    %514 = math.exp %513 : vector<2x32xf32>
    %cst_140 = arith.constant 1.000000e+00 : f32
    %515 = vector.broadcast %cst_140 : f32 to vector<2x32xf32>
    %516 = arith.addf %515, %514 : vector<2x32xf32>
    %517 = arith.divf %515, %516 : vector<2x32xf32>
    %518 = arith.mulf %509, %461 : vector<2x32xf32>
    %519 = arith.mulf %503, %511 : vector<2x32xf32>
    %520 = arith.addf %518, %519 : vector<2x32xf32>
    %521 = math.tanh %520 : vector<2x32xf32>
    %522 = arith.mulf %517, %521 : vector<2x32xf32>
    %c2_141 = arith.constant 2 : index
    %c0_142 = arith.constant 0 : index
    %523 = vector.load %arg15[%c2_141, %c0_142] : memref<16x32xf32, #tpu.memory_space<vmem>>, vector<2x32xf32>
    tpu.vector_store %arg15[%c2_141, %c0_142], %522 {strides = array<i32>} : memref<16x32xf32, #tpu.memory_space<vmem>>, vector<2x32xf32>,
    %524 = vector.extract_strided_slice %401 {offsets = [4, 0], sizes = [2, 128], strides = [1, 1]} : vector<16x128xf32> to vector<2x128xf32>
    %cst_143 = arith.constant dense<0.000000e+00> : vector<2x128xf32>
    %525 = tpu.matmul %492, %390, %cst_143 {dimension_numbers = #tpu.dot_dimension_numbers<[1], [0], [0], [1], [0, 0, 1, 1], [], []>} : vector<2x32xf32>, vector<32x128xf32>, vector<2x128xf32> -> vector<2x128xf32>
    %526 = arith.addf %524, %525 : vector<2x128xf32>
    %527 = vector.extract_strided_slice %526 {offsets = [0, 0], sizes = [2, 32], strides = [1, 1]} : vector<2x128xf32> to vector<2x32xf32>
    %528 = arith.negf %527 : vector<2x32xf32>
    %529 = math.exp %528 : vector<2x32xf32>
    %cst_144 = arith.constant 1.000000e+00 : f32
    %530 = vector.broadcast %cst_144 : f32 to vector<2x32xf32>
    %531 = arith.addf %530, %529 : vector<2x32xf32>
    %532 = arith.divf %530, %531 : vector<2x32xf32>
    %533 = vector.extract_strided_slice %526 {offsets = [0, 32], sizes = [2, 32], strides = [1, 1]} : vector<2x128xf32> to vector<2x32xf32>
    %534 = arith.negf %533 : vector<2x32xf32>
    %535 = math.exp %534 : vector<2x32xf32>
    %cst_145 = arith.constant 1.000000e+00 : f32
    %536 = vector.broadcast %cst_145 : f32 to vector<2x32xf32>
    %537 = arith.addf %536, %535 : vector<2x32xf32>
    %538 = arith.divf %536, %537 : vector<2x32xf32>
    %539 = vector.extract_strided_slice %526 {offsets = [0, 64], sizes = [2, 32], strides = [1, 1]} : vector<2x128xf32> to vector<2x32xf32>
    %540 = math.tanh %539 : vector<2x32xf32>
    %541 = vector.extract_strided_slice %526 {offsets = [0, 96], sizes = [2, 32], strides = [1, 1]} : vector<2x128xf32> to vector<2x32xf32>
    %542 = arith.negf %541 : vector<2x32xf32>
    %543 = math.exp %542 : vector<2x32xf32>
    %cst_146 = arith.constant 1.000000e+00 : f32
    %544 = vector.broadcast %cst_146 : f32 to vector<2x32xf32>
    %545 = arith.addf %544, %543 : vector<2x32xf32>
    %546 = arith.divf %544, %545 : vector<2x32xf32>
    %547 = arith.mulf %538, %490 : vector<2x32xf32>
    %548 = arith.mulf %532, %540 : vector<2x32xf32>
    %549 = arith.addf %547, %548 : vector<2x32xf32>
    %550 = math.tanh %549 : vector<2x32xf32>
    %551 = arith.mulf %546, %550 : vector<2x32xf32>
    %cst_147 = arith.constant dense<0.000000e+00> : vector<2x128xf32>
    %552 = tpu.matmul %551, %394, %cst_147 {dimension_numbers = #tpu.dot_dimension_numbers<[1], [0], [0], [1], [0, 0, 1, 1], [], []>} : vector<2x32xf32>, vector<32x128xf32>, vector<2x128xf32> -> vector<2x128xf32>
    %cst_148 = arith.constant dense<0.000000e+00> : vector<2x128xf32>
    %553 = tpu.matmul %522, %396, %cst_148 {dimension_numbers = #tpu.dot_dimension_numbers<[1], [0], [0], [1], [0, 0, 1, 1], [], []>} : vector<2x32xf32>, vector<32x128xf32>, vector<2x128xf32> -> vector<2x128xf32>
    %554 = arith.addf %552, %553 : vector<2x128xf32>
    %555 = vector.broadcast %398 : vector<1x128xf32> to vector<2x128xf32>
    %556 = arith.addf %554, %555 : vector<2x128xf32>
    %557 = vector.extract_strided_slice %556 {offsets = [0, 0], sizes = [2, 32], strides = [1, 1]} : vector<2x128xf32> to vector<2x32xf32>
    %558 = arith.negf %557 : vector<2x32xf32>
    %559 = math.exp %558 : vector<2x32xf32>
    %cst_149 = arith.constant 1.000000e+00 : f32
    %560 = vector.broadcast %cst_149 : f32 to vector<2x32xf32>
    %561 = arith.addf %560, %559 : vector<2x32xf32>
    %562 = arith.divf %560, %561 : vector<2x32xf32>
    %563 = vector.extract_strided_slice %556 {offsets = [0, 32], sizes = [2, 32], strides = [1, 1]} : vector<2x128xf32> to vector<2x32xf32>
    %564 = arith.negf %563 : vector<2x32xf32>
    %565 = math.exp %564 : vector<2x32xf32>
    %cst_150 = arith.constant 1.000000e+00 : f32
    %566 = vector.broadcast %cst_150 : f32 to vector<2x32xf32>
    %567 = arith.addf %566, %565 : vector<2x32xf32>
    %568 = arith.divf %566, %567 : vector<2x32xf32>
    %569 = vector.extract_strided_slice %556 {offsets = [0, 64], sizes = [2, 32], strides = [1, 1]} : vector<2x128xf32> to vector<2x32xf32>
    %570 = math.tanh %569 : vector<2x32xf32>
    %571 = vector.extract_strided_slice %556 {offsets = [0, 96], sizes = [2, 32], strides = [1, 1]} : vector<2x128xf32> to vector<2x32xf32>
    %572 = arith.negf %571 : vector<2x32xf32>
    %573 = math.exp %572 : vector<2x32xf32>
    %cst_151 = arith.constant 1.000000e+00 : f32
    %574 = vector.broadcast %cst_151 : f32 to vector<2x32xf32>
    %575 = arith.addf %574, %573 : vector<2x32xf32>
    %576 = arith.divf %574, %575 : vector<2x32xf32>
    %577 = arith.mulf %568, %520 : vector<2x32xf32>
    %578 = arith.mulf %562, %570 : vector<2x32xf32>
    %579 = arith.addf %577, %578 : vector<2x32xf32>
    %580 = math.tanh %579 : vector<2x32xf32>
    %581 = arith.mulf %576, %580 : vector<2x32xf32>
    %c4 = arith.constant 4 : index
    %c0_152 = arith.constant 0 : index
    %582 = vector.load %arg15[%c4, %c0_152] : memref<16x32xf32, #tpu.memory_space<vmem>>, vector<2x32xf32>
    tpu.vector_store %arg15[%c4, %c0_152], %581 {strides = array<i32>} : memref<16x32xf32, #tpu.memory_space<vmem>>, vector<2x32xf32>,
    %583 = vector.extract_strided_slice %401 {offsets = [6, 0], sizes = [2, 128], strides = [1, 1]} : vector<16x128xf32> to vector<2x128xf32>
    %cst_153 = arith.constant dense<0.000000e+00> : vector<2x128xf32>
    %584 = tpu.matmul %551, %390, %cst_153 {dimension_numbers = #tpu.dot_dimension_numbers<[1], [0], [0], [1], [0, 0, 1, 1], [], []>} : vector<2x32xf32>, vector<32x128xf32>, vector<2x128xf32> -> vector<2x128xf32>
    %585 = arith.addf %583, %584 : vector<2x128xf32>
    %586 = vector.extract_strided_slice %585 {offsets = [0, 0], sizes = [2, 32], strides = [1, 1]} : vector<2x128xf32> to vector<2x32xf32>
    %587 = arith.negf %586 : vector<2x32xf32>
    %588 = math.exp %587 : vector<2x32xf32>
    %cst_154 = arith.constant 1.000000e+00 : f32
    %589 = vector.broadcast %cst_154 : f32 to vector<2x32xf32>
    %590 = arith.addf %589, %588 : vector<2x32xf32>
    %591 = arith.divf %589, %590 : vector<2x32xf32>
    %592 = vector.extract_strided_slice %585 {offsets = [0, 32], sizes = [2, 32], strides = [1, 1]} : vector<2x128xf32> to vector<2x32xf32>
    %593 = arith.negf %592 : vector<2x32xf32>
    %594 = math.exp %593 : vector<2x32xf32>
    %cst_155 = arith.constant 1.000000e+00 : f32
    %595 = vector.broadcast %cst_155 : f32 to vector<2x32xf32>
    %596 = arith.addf %595, %594 : vector<2x32xf32>
    %597 = arith.divf %595, %596 : vector<2x32xf32>
    %598 = vector.extract_strided_slice %585 {offsets = [0, 64], sizes = [2, 32], strides = [1, 1]} : vector<2x128xf32> to vector<2x32xf32>
    %599 = math.tanh %598 : vector<2x32xf32>
    %600 = vector.extract_strided_slice %585 {offsets = [0, 96], sizes = [2, 32], strides = [1, 1]} : vector<2x128xf32> to vector<2x32xf32>
    %601 = arith.negf %600 : vector<2x32xf32>
    %602 = math.exp %601 : vector<2x32xf32>
    %cst_156 = arith.constant 1.000000e+00 : f32
    %603 = vector.broadcast %cst_156 : f32 to vector<2x32xf32>
    %604 = arith.addf %603, %602 : vector<2x32xf32>
    %605 = arith.divf %603, %604 : vector<2x32xf32>
    %606 = arith.mulf %597, %549 : vector<2x32xf32>
    %607 = arith.mulf %591, %599 : vector<2x32xf32>
    %608 = arith.addf %606, %607 : vector<2x32xf32>
    %609 = math.tanh %608 : vector<2x32xf32>
    %610 = arith.mulf %605, %609 : vector<2x32xf32>
    %cst_157 = arith.constant dense<0.000000e+00> : vector<2x128xf32>
    %611 = tpu.matmul %610, %394, %cst_157 {dimension_numbers = #tpu.dot_dimension_numbers<[1], [0], [0], [1], [0, 0, 1, 1], [], []>} : vector<2x32xf32>, vector<32x128xf32>, vector<2x128xf32> -> vector<2x128xf32>
    %cst_158 = arith.constant dense<0.000000e+00> : vector<2x128xf32>
    %612 = tpu.matmul %581, %396, %cst_158 {dimension_numbers = #tpu.dot_dimension_numbers<[1], [0], [0], [1], [0, 0, 1, 1], [], []>} : vector<2x32xf32>, vector<32x128xf32>, vector<2x128xf32> -> vector<2x128xf32>
    %613 = arith.addf %611, %612 : vector<2x128xf32>
    %614 = vector.broadcast %398 : vector<1x128xf32> to vector<2x128xf32>
    %615 = arith.addf %613, %614 : vector<2x128xf32>
    %616 = vector.extract_strided_slice %615 {offsets = [0, 0], sizes = [2, 32], strides = [1, 1]} : vector<2x128xf32> to vector<2x32xf32>
    %617 = arith.negf %616 : vector<2x32xf32>
    %618 = math.exp %617 : vector<2x32xf32>
    %cst_159 = arith.constant 1.000000e+00 : f32
    %619 = vector.broadcast %cst_159 : f32 to vector<2x32xf32>
    %620 = arith.addf %619, %618 : vector<2x32xf32>
    %621 = arith.divf %619, %620 : vector<2x32xf32>
    %622 = vector.extract_strided_slice %615 {offsets = [0, 32], sizes = [2, 32], strides = [1, 1]} : vector<2x128xf32> to vector<2x32xf32>
    %623 = arith.negf %622 : vector<2x32xf32>
    %624 = math.exp %623 : vector<2x32xf32>
    %cst_160 = arith.constant 1.000000e+00 : f32
    %625 = vector.broadcast %cst_160 : f32 to vector<2x32xf32>
    %626 = arith.addf %625, %624 : vector<2x32xf32>
    %627 = arith.divf %625, %626 : vector<2x32xf32>
    %628 = vector.extract_strided_slice %615 {offsets = [0, 64], sizes = [2, 32], strides = [1, 1]} : vector<2x128xf32> to vector<2x32xf32>
    %629 = math.tanh %628 : vector<2x32xf32>
    %630 = vector.extract_strided_slice %615 {offsets = [0, 96], sizes = [2, 32], strides = [1, 1]} : vector<2x128xf32> to vector<2x32xf32>
    %631 = arith.negf %630 : vector<2x32xf32>
    %632 = math.exp %631 : vector<2x32xf32>
    %cst_161 = arith.constant 1.000000e+00 : f32
    %633 = vector.broadcast %cst_161 : f32 to vector<2x32xf32>
    %634 = arith.addf %633, %632 : vector<2x32xf32>
    %635 = arith.divf %633, %634 : vector<2x32xf32>
    %636 = arith.mulf %627, %579 : vector<2x32xf32>
    %637 = arith.mulf %621, %629 : vector<2x32xf32>
    %638 = arith.addf %636, %637 : vector<2x32xf32>
    %639 = math.tanh %638 : vector<2x32xf32>
    %640 = arith.mulf %635, %639 : vector<2x32xf32>
    %c6 = arith.constant 6 : index
    %c0_162 = arith.constant 0 : index
    %641 = vector.load %arg15[%c6, %c0_162] : memref<16x32xf32, #tpu.memory_space<vmem>>, vector<2x32xf32>
    tpu.vector_store %arg15[%c6, %c0_162], %640 {strides = array<i32>} : memref<16x32xf32, #tpu.memory_space<vmem>>, vector<2x32xf32>,
    %642 = vector.extract_strided_slice %401 {offsets = [8, 0], sizes = [2, 128], strides = [1, 1]} : vector<16x128xf32> to vector<2x128xf32>
    %cst_163 = arith.constant dense<0.000000e+00> : vector<2x128xf32>
    %643 = tpu.matmul %610, %390, %cst_163 {dimension_numbers = #tpu.dot_dimension_numbers<[1], [0], [0], [1], [0, 0, 1, 1], [], []>} : vector<2x32xf32>, vector<32x128xf32>, vector<2x128xf32> -> vector<2x128xf32>
    %644 = arith.addf %642, %643 : vector<2x128xf32>
    %645 = vector.extract_strided_slice %644 {offsets = [0, 0], sizes = [2, 32], strides = [1, 1]} : vector<2x128xf32> to vector<2x32xf32>
    %646 = arith.negf %645 : vector<2x32xf32>
    %647 = math.exp %646 : vector<2x32xf32>
    %cst_164 = arith.constant 1.000000e+00 : f32
    %648 = vector.broadcast %cst_164 : f32 to vector<2x32xf32>
    %649 = arith.addf %648, %647 : vector<2x32xf32>
    %650 = arith.divf %648, %649 : vector<2x32xf32>
    %651 = vector.extract_strided_slice %644 {offsets = [0, 32], sizes = [2, 32], strides = [1, 1]} : vector<2x128xf32> to vector<2x32xf32>
    %652 = arith.negf %651 : vector<2x32xf32>
    %653 = math.exp %652 : vector<2x32xf32>
    %cst_165 = arith.constant 1.000000e+00 : f32
    %654 = vector.broadcast %cst_165 : f32 to vector<2x32xf32>
    %655 = arith.addf %654, %653 : vector<2x32xf32>
    %656 = arith.divf %654, %655 : vector<2x32xf32>
    %657 = vector.extract_strided_slice %644 {offsets = [0, 64], sizes = [2, 32], strides = [1, 1]} : vector<2x128xf32> to vector<2x32xf32>
    %658 = math.tanh %657 : vector<2x32xf32>
    %659 = vector.extract_strided_slice %644 {offsets = [0, 96], sizes = [2, 32], strides = [1, 1]} : vector<2x128xf32> to vector<2x32xf32>
    %660 = arith.negf %659 : vector<2x32xf32>
    %661 = math.exp %660 : vector<2x32xf32>
    %cst_166 = arith.constant 1.000000e+00 : f32
    %662 = vector.broadcast %cst_166 : f32 to vector<2x32xf32>
    %663 = arith.addf %662, %661 : vector<2x32xf32>
    %664 = arith.divf %662, %663 : vector<2x32xf32>
    %665 = arith.mulf %656, %608 : vector<2x32xf32>
    %666 = arith.mulf %650, %658 : vector<2x32xf32>
    %667 = arith.addf %665, %666 : vector<2x32xf32>
    %668 = math.tanh %667 : vector<2x32xf32>
    %669 = arith.mulf %664, %668 : vector<2x32xf32>
    %cst_167 = arith.constant dense<0.000000e+00> : vector<2x128xf32>
    %670 = tpu.matmul %669, %394, %cst_167 {dimension_numbers = #tpu.dot_dimension_numbers<[1], [0], [0], [1], [0, 0, 1, 1], [], []>} : vector<2x32xf32>, vector<32x128xf32>, vector<2x128xf32> -> vector<2x128xf32>
    %cst_168 = arith.constant dense<0.000000e+00> : vector<2x128xf32>
    %671 = tpu.matmul %640, %396, %cst_168 {dimension_numbers = #tpu.dot_dimension_numbers<[1], [0], [0], [1], [0, 0, 1, 1], [], []>} : vector<2x32xf32>, vector<32x128xf32>, vector<2x128xf32> -> vector<2x128xf32>
    %672 = arith.addf %670, %671 : vector<2x128xf32>
    %673 = vector.broadcast %398 : vector<1x128xf32> to vector<2x128xf32>
    %674 = arith.addf %672, %673 : vector<2x128xf32>
    %675 = vector.extract_strided_slice %674 {offsets = [0, 0], sizes = [2, 32], strides = [1, 1]} : vector<2x128xf32> to vector<2x32xf32>
    %676 = arith.negf %675 : vector<2x32xf32>
    %677 = math.exp %676 : vector<2x32xf32>
    %cst_169 = arith.constant 1.000000e+00 : f32
    %678 = vector.broadcast %cst_169 : f32 to vector<2x32xf32>
    %679 = arith.addf %678, %677 : vector<2x32xf32>
    %680 = arith.divf %678, %679 : vector<2x32xf32>
    %681 = vector.extract_strided_slice %674 {offsets = [0, 32], sizes = [2, 32], strides = [1, 1]} : vector<2x128xf32> to vector<2x32xf32>
    %682 = arith.negf %681 : vector<2x32xf32>
    %683 = math.exp %682 : vector<2x32xf32>
    %cst_170 = arith.constant 1.000000e+00 : f32
    %684 = vector.broadcast %cst_170 : f32 to vector<2x32xf32>
    %685 = arith.addf %684, %683 : vector<2x32xf32>
    %686 = arith.divf %684, %685 : vector<2x32xf32>
    %687 = vector.extract_strided_slice %674 {offsets = [0, 64], sizes = [2, 32], strides = [1, 1]} : vector<2x128xf32> to vector<2x32xf32>
    %688 = math.tanh %687 : vector<2x32xf32>
    %689 = vector.extract_strided_slice %674 {offsets = [0, 96], sizes = [2, 32], strides = [1, 1]} : vector<2x128xf32> to vector<2x32xf32>
    %690 = arith.negf %689 : vector<2x32xf32>
    %691 = math.exp %690 : vector<2x32xf32>
    %cst_171 = arith.constant 1.000000e+00 : f32
    %692 = vector.broadcast %cst_171 : f32 to vector<2x32xf32>
    %693 = arith.addf %692, %691 : vector<2x32xf32>
    %694 = arith.divf %692, %693 : vector<2x32xf32>
    %695 = arith.mulf %686, %638 : vector<2x32xf32>
    %696 = arith.mulf %680, %688 : vector<2x32xf32>
    %697 = arith.addf %695, %696 : vector<2x32xf32>
    %698 = math.tanh %697 : vector<2x32xf32>
    %699 = arith.mulf %694, %698 : vector<2x32xf32>
    %c8_172 = arith.constant 8 : index
    %c0_173 = arith.constant 0 : index
    %700 = vector.load %arg15[%c8_172, %c0_173] : memref<16x32xf32, #tpu.memory_space<vmem>>, vector<2x32xf32>
    tpu.vector_store %arg15[%c8_172, %c0_173], %699 {strides = array<i32>} : memref<16x32xf32, #tpu.memory_space<vmem>>, vector<2x32xf32>,
    %701 = vector.extract_strided_slice %401 {offsets = [10, 0], sizes = [2, 128], strides = [1, 1]} : vector<16x128xf32> to vector<2x128xf32>
    %cst_174 = arith.constant dense<0.000000e+00> : vector<2x128xf32>
    %702 = tpu.matmul %669, %390, %cst_174 {dimension_numbers = #tpu.dot_dimension_numbers<[1], [0], [0], [1], [0, 0, 1, 1], [], []>} : vector<2x32xf32>, vector<32x128xf32>, vector<2x128xf32> -> vector<2x128xf32>
    %703 = arith.addf %701, %702 : vector<2x128xf32>
    %704 = vector.extract_strided_slice %703 {offsets = [0, 0], sizes = [2, 32], strides = [1, 1]} : vector<2x128xf32> to vector<2x32xf32>
    %705 = arith.negf %704 : vector<2x32xf32>
    %706 = math.exp %705 : vector<2x32xf32>
    %cst_175 = arith.constant 1.000000e+00 : f32
    %707 = vector.broadcast %cst_175 : f32 to vector<2x32xf32>
    %708 = arith.addf %707, %706 : vector<2x32xf32>
    %709 = arith.divf %707, %708 : vector<2x32xf32>
    %710 = vector.extract_strided_slice %703 {offsets = [0, 32], sizes = [2, 32], strides = [1, 1]} : vector<2x128xf32> to vector<2x32xf32>
    %711 = arith.negf %710 : vector<2x32xf32>
    %712 = math.exp %711 : vector<2x32xf32>
    %cst_176 = arith.constant 1.000000e+00 : f32
    %713 = vector.broadcast %cst_176 : f32 to vector<2x32xf32>
    %714 = arith.addf %713, %712 : vector<2x32xf32>
    %715 = arith.divf %713, %714 : vector<2x32xf32>
    %716 = vector.extract_strided_slice %703 {offsets = [0, 64], sizes = [2, 32], strides = [1, 1]} : vector<2x128xf32> to vector<2x32xf32>
    %717 = math.tanh %716 : vector<2x32xf32>
    %718 = vector.extract_strided_slice %703 {offsets = [0, 96], sizes = [2, 32], strides = [1, 1]} : vector<2x128xf32> to vector<2x32xf32>
    %719 = arith.negf %718 : vector<2x32xf32>
    %720 = math.exp %719 : vector<2x32xf32>
    %cst_177 = arith.constant 1.000000e+00 : f32
    %721 = vector.broadcast %cst_177 : f32 to vector<2x32xf32>
    %722 = arith.addf %721, %720 : vector<2x32xf32>
    %723 = arith.divf %721, %722 : vector<2x32xf32>
    %724 = arith.mulf %715, %667 : vector<2x32xf32>
    %725 = arith.mulf %709, %717 : vector<2x32xf32>
    %726 = arith.addf %724, %725 : vector<2x32xf32>
    %727 = math.tanh %726 : vector<2x32xf32>
    %728 = arith.mulf %723, %727 : vector<2x32xf32>
    %cst_178 = arith.constant dense<0.000000e+00> : vector<2x128xf32>
    %729 = tpu.matmul %728, %394, %cst_178 {dimension_numbers = #tpu.dot_dimension_numbers<[1], [0], [0], [1], [0, 0, 1, 1], [], []>} : vector<2x32xf32>, vector<32x128xf32>, vector<2x128xf32> -> vector<2x128xf32>
    %cst_179 = arith.constant dense<0.000000e+00> : vector<2x128xf32>
    %730 = tpu.matmul %699, %396, %cst_179 {dimension_numbers = #tpu.dot_dimension_numbers<[1], [0], [0], [1], [0, 0, 1, 1], [], []>} : vector<2x32xf32>, vector<32x128xf32>, vector<2x128xf32> -> vector<2x128xf32>
    %731 = arith.addf %729, %730 : vector<2x128xf32>
    %732 = vector.broadcast %398 : vector<1x128xf32> to vector<2x128xf32>
    %733 = arith.addf %731, %732 : vector<2x128xf32>
    %734 = vector.extract_strided_slice %733 {offsets = [0, 0], sizes = [2, 32], strides = [1, 1]} : vector<2x128xf32> to vector<2x32xf32>
    %735 = arith.negf %734 : vector<2x32xf32>
    %736 = math.exp %735 : vector<2x32xf32>
    %cst_180 = arith.constant 1.000000e+00 : f32
    %737 = vector.broadcast %cst_180 : f32 to vector<2x32xf32>
    %738 = arith.addf %737, %736 : vector<2x32xf32>
    %739 = arith.divf %737, %738 : vector<2x32xf32>
    %740 = vector.extract_strided_slice %733 {offsets = [0, 32], sizes = [2, 32], strides = [1, 1]} : vector<2x128xf32> to vector<2x32xf32>
    %741 = arith.negf %740 : vector<2x32xf32>
    %742 = math.exp %741 : vector<2x32xf32>
    %cst_181 = arith.constant 1.000000e+00 : f32
    %743 = vector.broadcast %cst_181 : f32 to vector<2x32xf32>
    %744 = arith.addf %743, %742 : vector<2x32xf32>
    %745 = arith.divf %743, %744 : vector<2x32xf32>
    %746 = vector.extract_strided_slice %733 {offsets = [0, 64], sizes = [2, 32], strides = [1, 1]} : vector<2x128xf32> to vector<2x32xf32>
    %747 = math.tanh %746 : vector<2x32xf32>
    %748 = vector.extract_strided_slice %733 {offsets = [0, 96], sizes = [2, 32], strides = [1, 1]} : vector<2x128xf32> to vector<2x32xf32>
    %749 = arith.negf %748 : vector<2x32xf32>
    %750 = math.exp %749 : vector<2x32xf32>
    %cst_182 = arith.constant 1.000000e+00 : f32
    %751 = vector.broadcast %cst_182 : f32 to vector<2x32xf32>
    %752 = arith.addf %751, %750 : vector<2x32xf32>
    %753 = arith.divf %751, %752 : vector<2x32xf32>
    %754 = arith.mulf %745, %697 : vector<2x32xf32>
    %755 = arith.mulf %739, %747 : vector<2x32xf32>
    %756 = arith.addf %754, %755 : vector<2x32xf32>
    %757 = math.tanh %756 : vector<2x32xf32>
    %758 = arith.mulf %753, %757 : vector<2x32xf32>
    %c10 = arith.constant 10 : index
    %c0_183 = arith.constant 0 : index
    %759 = vector.load %arg15[%c10, %c0_183] : memref<16x32xf32, #tpu.memory_space<vmem>>, vector<2x32xf32>
    tpu.vector_store %arg15[%c10, %c0_183], %758 {strides = array<i32>} : memref<16x32xf32, #tpu.memory_space<vmem>>, vector<2x32xf32>,
    %760 = vector.extract_strided_slice %401 {offsets = [12, 0], sizes = [2, 128], strides = [1, 1]} : vector<16x128xf32> to vector<2x128xf32>
    %cst_184 = arith.constant dense<0.000000e+00> : vector<2x128xf32>
    %761 = tpu.matmul %728, %390, %cst_184 {dimension_numbers = #tpu.dot_dimension_numbers<[1], [0], [0], [1], [0, 0, 1, 1], [], []>} : vector<2x32xf32>, vector<32x128xf32>, vector<2x128xf32> -> vector<2x128xf32>
    %762 = arith.addf %760, %761 : vector<2x128xf32>
    %763 = vector.extract_strided_slice %762 {offsets = [0, 0], sizes = [2, 32], strides = [1, 1]} : vector<2x128xf32> to vector<2x32xf32>
    %764 = arith.negf %763 : vector<2x32xf32>
    %765 = math.exp %764 : vector<2x32xf32>
    %cst_185 = arith.constant 1.000000e+00 : f32
    %766 = vector.broadcast %cst_185 : f32 to vector<2x32xf32>
    %767 = arith.addf %766, %765 : vector<2x32xf32>
    %768 = arith.divf %766, %767 : vector<2x32xf32>
    %769 = vector.extract_strided_slice %762 {offsets = [0, 32], sizes = [2, 32], strides = [1, 1]} : vector<2x128xf32> to vector<2x32xf32>
    %770 = arith.negf %769 : vector<2x32xf32>
    %771 = math.exp %770 : vector<2x32xf32>
    %cst_186 = arith.constant 1.000000e+00 : f32
    %772 = vector.broadcast %cst_186 : f32 to vector<2x32xf32>
    %773 = arith.addf %772, %771 : vector<2x32xf32>
    %774 = arith.divf %772, %773 : vector<2x32xf32>
    %775 = vector.extract_strided_slice %762 {offsets = [0, 64], sizes = [2, 32], strides = [1, 1]} : vector<2x128xf32> to vector<2x32xf32>
    %776 = math.tanh %775 : vector<2x32xf32>
    %777 = vector.extract_strided_slice %762 {offsets = [0, 96], sizes = [2, 32], strides = [1, 1]} : vector<2x128xf32> to vector<2x32xf32>
    %778 = arith.negf %777 : vector<2x32xf32>
    %779 = math.exp %778 : vector<2x32xf32>
    %cst_187 = arith.constant 1.000000e+00 : f32
    %780 = vector.broadcast %cst_187 : f32 to vector<2x32xf32>
    %781 = arith.addf %780, %779 : vector<2x32xf32>
    %782 = arith.divf %780, %781 : vector<2x32xf32>
    %783 = arith.mulf %774, %726 : vector<2x32xf32>
    %784 = arith.mulf %768, %776 : vector<2x32xf32>
    %785 = arith.addf %783, %784 : vector<2x32xf32>
    %786 = math.tanh %785 : vector<2x32xf32>
    %787 = arith.mulf %782, %786 : vector<2x32xf32>
    %cst_188 = arith.constant dense<0.000000e+00> : vector<2x128xf32>
    %788 = tpu.matmul %787, %394, %cst_188 {dimension_numbers = #tpu.dot_dimension_numbers<[1], [0], [0], [1], [0, 0, 1, 1], [], []>} : vector<2x32xf32>, vector<32x128xf32>, vector<2x128xf32> -> vector<2x128xf32>
    %cst_189 = arith.constant dense<0.000000e+00> : vector<2x128xf32>
    %789 = tpu.matmul %758, %396, %cst_189 {dimension_numbers = #tpu.dot_dimension_numbers<[1], [0], [0], [1], [0, 0, 1, 1], [], []>} : vector<2x32xf32>, vector<32x128xf32>, vector<2x128xf32> -> vector<2x128xf32>
    %790 = arith.addf %788, %789 : vector<2x128xf32>
    %791 = vector.broadcast %398 : vector<1x128xf32> to vector<2x128xf32>
    %792 = arith.addf %790, %791 : vector<2x128xf32>
    %793 = vector.extract_strided_slice %792 {offsets = [0, 0], sizes = [2, 32], strides = [1, 1]} : vector<2x128xf32> to vector<2x32xf32>
    %794 = arith.negf %793 : vector<2x32xf32>
    %795 = math.exp %794 : vector<2x32xf32>
    %cst_190 = arith.constant 1.000000e+00 : f32
    %796 = vector.broadcast %cst_190 : f32 to vector<2x32xf32>
    %797 = arith.addf %796, %795 : vector<2x32xf32>
    %798 = arith.divf %796, %797 : vector<2x32xf32>
    %799 = vector.extract_strided_slice %792 {offsets = [0, 32], sizes = [2, 32], strides = [1, 1]} : vector<2x128xf32> to vector<2x32xf32>
    %800 = arith.negf %799 : vector<2x32xf32>
    %801 = math.exp %800 : vector<2x32xf32>
    %cst_191 = arith.constant 1.000000e+00 : f32
    %802 = vector.broadcast %cst_191 : f32 to vector<2x32xf32>
    %803 = arith.addf %802, %801 : vector<2x32xf32>
    %804 = arith.divf %802, %803 : vector<2x32xf32>
    %805 = vector.extract_strided_slice %792 {offsets = [0, 64], sizes = [2, 32], strides = [1, 1]} : vector<2x128xf32> to vector<2x32xf32>
    %806 = math.tanh %805 : vector<2x32xf32>
    %807 = vector.extract_strided_slice %792 {offsets = [0, 96], sizes = [2, 32], strides = [1, 1]} : vector<2x128xf32> to vector<2x32xf32>
    %808 = arith.negf %807 : vector<2x32xf32>
    %809 = math.exp %808 : vector<2x32xf32>
    %cst_192 = arith.constant 1.000000e+00 : f32
    %810 = vector.broadcast %cst_192 : f32 to vector<2x32xf32>
    %811 = arith.addf %810, %809 : vector<2x32xf32>
    %812 = arith.divf %810, %811 : vector<2x32xf32>
    %813 = arith.mulf %804, %756 : vector<2x32xf32>
    %814 = arith.mulf %798, %806 : vector<2x32xf32>
    %815 = arith.addf %813, %814 : vector<2x32xf32>
    %816 = math.tanh %815 : vector<2x32xf32>
    %817 = arith.mulf %812, %816 : vector<2x32xf32>
    %c12 = arith.constant 12 : index
    %c0_193 = arith.constant 0 : index
    %818 = vector.load %arg15[%c12, %c0_193] : memref<16x32xf32, #tpu.memory_space<vmem>>, vector<2x32xf32>
    tpu.vector_store %arg15[%c12, %c0_193], %817 {strides = array<i32>} : memref<16x32xf32, #tpu.memory_space<vmem>>, vector<2x32xf32>,
    %819 = vector.extract_strided_slice %401 {offsets = [14, 0], sizes = [2, 128], strides = [1, 1]} : vector<16x128xf32> to vector<2x128xf32>
    %cst_194 = arith.constant dense<0.000000e+00> : vector<2x128xf32>
    %820 = tpu.matmul %787, %390, %cst_194 {dimension_numbers = #tpu.dot_dimension_numbers<[1], [0], [0], [1], [0, 0, 1, 1], [], []>} : vector<2x32xf32>, vector<32x128xf32>, vector<2x128xf32> -> vector<2x128xf32>
    %821 = arith.addf %819, %820 : vector<2x128xf32>
    %822 = vector.extract_strided_slice %821 {offsets = [0, 0], sizes = [2, 32], strides = [1, 1]} : vector<2x128xf32> to vector<2x32xf32>
    %823 = arith.negf %822 : vector<2x32xf32>
    %824 = math.exp %823 : vector<2x32xf32>
    %cst_195 = arith.constant 1.000000e+00 : f32
    %825 = vector.broadcast %cst_195 : f32 to vector<2x32xf32>
    %826 = arith.addf %825, %824 : vector<2x32xf32>
    %827 = arith.divf %825, %826 : vector<2x32xf32>
    %828 = vector.extract_strided_slice %821 {offsets = [0, 32], sizes = [2, 32], strides = [1, 1]} : vector<2x128xf32> to vector<2x32xf32>
    %829 = arith.negf %828 : vector<2x32xf32>
    %830 = math.exp %829 : vector<2x32xf32>
    %cst_196 = arith.constant 1.000000e+00 : f32
    %831 = vector.broadcast %cst_196 : f32 to vector<2x32xf32>
    %832 = arith.addf %831, %830 : vector<2x32xf32>
    %833 = arith.divf %831, %832 : vector<2x32xf32>
    %834 = vector.extract_strided_slice %821 {offsets = [0, 64], sizes = [2, 32], strides = [1, 1]} : vector<2x128xf32> to vector<2x32xf32>
    %835 = math.tanh %834 : vector<2x32xf32>
    %836 = vector.extract_strided_slice %821 {offsets = [0, 96], sizes = [2, 32], strides = [1, 1]} : vector<2x128xf32> to vector<2x32xf32>
    %837 = arith.negf %836 : vector<2x32xf32>
    %838 = math.exp %837 : vector<2x32xf32>
    %cst_197 = arith.constant 1.000000e+00 : f32
    %839 = vector.broadcast %cst_197 : f32 to vector<2x32xf32>
    %840 = arith.addf %839, %838 : vector<2x32xf32>
    %841 = arith.divf %839, %840 : vector<2x32xf32>
    %842 = arith.mulf %833, %785 : vector<2x32xf32>
    %843 = arith.mulf %827, %835 : vector<2x32xf32>
    %844 = arith.addf %842, %843 : vector<2x32xf32>
    %845 = math.tanh %844 : vector<2x32xf32>
    %846 = arith.mulf %841, %845 : vector<2x32xf32>
    %cst_198 = arith.constant dense<0.000000e+00> : vector<2x128xf32>
    %847 = tpu.matmul %846, %394, %cst_198 {dimension_numbers = #tpu.dot_dimension_numbers<[1], [0], [0], [1], [0, 0, 1, 1], [], []>} : vector<2x32xf32>, vector<32x128xf32>, vector<2x128xf32> -> vector<2x128xf32>
    %cst_199 = arith.constant dense<0.000000e+00> : vector<2x128xf32>
    %848 = tpu.matmul %817, %396, %cst_199 {dimension_numbers = #tpu.dot_dimension_numbers<[1], [0], [0], [1], [0, 0, 1, 1], [], []>} : vector<2x32xf32>, vector<32x128xf32>, vector<2x128xf32> -> vector<2x128xf32>
    %849 = arith.addf %847, %848 : vector<2x128xf32>
    %850 = vector.broadcast %398 : vector<1x128xf32> to vector<2x128xf32>
    %851 = arith.addf %849, %850 : vector<2x128xf32>
    %852 = vector.extract_strided_slice %851 {offsets = [0, 0], sizes = [2, 32], strides = [1, 1]} : vector<2x128xf32> to vector<2x32xf32>
    %853 = arith.negf %852 : vector<2x32xf32>
    %854 = math.exp %853 : vector<2x32xf32>
    %cst_200 = arith.constant 1.000000e+00 : f32
    %855 = vector.broadcast %cst_200 : f32 to vector<2x32xf32>
    %856 = arith.addf %855, %854 : vector<2x32xf32>
    %857 = arith.divf %855, %856 : vector<2x32xf32>
    %858 = vector.extract_strided_slice %851 {offsets = [0, 32], sizes = [2, 32], strides = [1, 1]} : vector<2x128xf32> to vector<2x32xf32>
    %859 = arith.negf %858 : vector<2x32xf32>
    %860 = math.exp %859 : vector<2x32xf32>
    %cst_201 = arith.constant 1.000000e+00 : f32
    %861 = vector.broadcast %cst_201 : f32 to vector<2x32xf32>
    %862 = arith.addf %861, %860 : vector<2x32xf32>
    %863 = arith.divf %861, %862 : vector<2x32xf32>
    %864 = vector.extract_strided_slice %851 {offsets = [0, 64], sizes = [2, 32], strides = [1, 1]} : vector<2x128xf32> to vector<2x32xf32>
    %865 = math.tanh %864 : vector<2x32xf32>
    %866 = vector.extract_strided_slice %851 {offsets = [0, 96], sizes = [2, 32], strides = [1, 1]} : vector<2x128xf32> to vector<2x32xf32>
    %867 = arith.negf %866 : vector<2x32xf32>
    %868 = math.exp %867 : vector<2x32xf32>
    %cst_202 = arith.constant 1.000000e+00 : f32
    %869 = vector.broadcast %cst_202 : f32 to vector<2x32xf32>
    %870 = arith.addf %869, %868 : vector<2x32xf32>
    %871 = arith.divf %869, %870 : vector<2x32xf32>
    %872 = arith.mulf %863, %815 : vector<2x32xf32>
    %873 = arith.mulf %857, %865 : vector<2x32xf32>
    %874 = arith.addf %872, %873 : vector<2x32xf32>
    %875 = math.tanh %874 : vector<2x32xf32>
    %876 = arith.mulf %871, %875 : vector<2x32xf32>
    %c14 = arith.constant 14 : index
    %c0_203 = arith.constant 0 : index
    %877 = vector.load %arg15[%c14, %c0_203] : memref<16x32xf32, #tpu.memory_space<vmem>>, vector<2x32xf32>
    tpu.vector_store %arg15[%c14, %c0_203], %876 {strides = array<i32>} : memref<16x32xf32, #tpu.memory_space<vmem>>, vector<2x32xf32>,
    %c0_204 = arith.constant 0 : index
    %c0_205 = arith.constant 0 : index
    %878 = vector.load %arg15[%c0_204, %c0_205] : memref<16x32xf32, #tpu.memory_space<vmem>>, vector<16x32xf32>
    %879 = vector.shape_cast %380 : vector<2x32xf32> to vector<1x2x32xf32>
    %880 = vector.shape_cast %879 : vector<1x2x32xf32> to vector<1x2x32xf32>
    %881 = vector.broadcast %880 : vector<1x2x32xf32> to vector<8x2x32xf32>
    %882 = vector.shape_cast %881 : vector<8x2x32xf32> to vector<16x32xf32>
    %883 = arith.addf %878, %882 : vector<16x32xf32>
    %cst_206 = arith.constant dense<0.000000e+00> : vector<16xf32>
    %884 = vector.multi_reduction <add>, %883, %cst_206 [1] : vector<16x32xf32> to vector<16xf32>
    %885 = vector.shape_cast %884 : vector<16xf32> to vector<16x1xf32>
    %cst_207 = arith.constant 3.200000e+01 : f32
    %886 = vector.broadcast %cst_207 : f32 to vector<16x1xf32>
    %887 = arith.divf %885, %886 : vector<16x1xf32>
    %888 = vector.broadcast %887 : vector<16x1xf32> to vector<16x32xf32>
    %889 = arith.subf %883, %888 : vector<16x32xf32>
    %890 = arith.mulf %889, %889 : vector<16x32xf32>
    %cst_208 = arith.constant dense<0.000000e+00> : vector<16xf32>
    %891 = vector.multi_reduction <add>, %890, %cst_208 [1] : vector<16x32xf32> to vector<16xf32>
    %892 = vector.shape_cast %891 : vector<16xf32> to vector<16x1xf32>
    %cst_209 = arith.constant 3.200000e+01 : f32
    %893 = vector.broadcast %cst_209 : f32 to vector<16x1xf32>
    %894 = arith.divf %892, %893 : vector<16x1xf32>
    %895 = vector.broadcast %887 : vector<16x1xf32> to vector<16x32xf32>
    %896 = arith.subf %883, %895 : vector<16x32xf32>
    %cst_210 = arith.constant 9.99999974E-6 : f32
    %897 = vector.broadcast %cst_210 : f32 to vector<16x1xf32>
    %898 = arith.addf %894, %897 : vector<16x1xf32>
    %899 = math.rsqrt %898 : vector<16x1xf32>
    %900 = vector.broadcast %899 : vector<16x1xf32> to vector<16x32xf32>
    %901 = arith.mulf %896, %900 : vector<16x32xf32>
    %c2_211 = arith.constant 2 : index
    %c0_212 = arith.constant 0 : index
    %902 = vector.load %arg10[%c2_211, %c0_212] : memref<4x32xf32, #tpu.memory_space<vmem>>, vector<1x32xf32>
    %903 = vector.broadcast %902 : vector<1x32xf32> to vector<16x32xf32>
    %904 = arith.mulf %901, %903 : vector<16x32xf32>
    %c3 = arith.constant 3 : index
    %c0_213 = arith.constant 0 : index
    %905 = vector.load %arg10[%c3, %c0_213] : memref<4x32xf32, #tpu.memory_space<vmem>>, vector<1x32xf32>
    %906 = vector.broadcast %905 : vector<1x32xf32> to vector<16x32xf32>
    %907 = arith.addf %904, %906 : vector<16x32xf32>
    %c0_214 = arith.constant 0 : index
    %c0_215 = arith.constant 0 : index
    %908 = vector.load %arg13[%c0_214, %c0_215] : memref<33x128xf32, #tpu.memory_space<vmem>>, vector<32x128xf32>
    %cst_216 = arith.constant dense<0.000000e+00> : vector<16x128xf32>
    %909 = tpu.matmul %907, %908, %cst_216 {dimension_numbers = #tpu.dot_dimension_numbers<[1], [0], [0], [1], [0, 0, 1, 1], [], []>} : vector<16x32xf32>, vector<32x128xf32>, vector<16x128xf32> -> vector<16x128xf32>
    %c32_217 = arith.constant 32 : index
    %c0_218 = arith.constant 0 : index
    %910 = vector.load %arg13[%c32_217, %c0_218] : memref<33x128xf32, #tpu.memory_space<vmem>>, vector<1x128xf32>
    %911 = vector.broadcast %910 : vector<1x128xf32> to vector<16x128xf32>
    %912 = arith.addf %909, %911 : vector<16x128xf32>
    %c0_219 = arith.constant 0 : index
    %c0_220 = arith.constant 0 : index
    %913 = vector.load %arg14[%c0_219, %c0_220] : memref<16x128xf32, #tpu.memory_space<vmem>>, vector<16x128xf32>
    tpu.vector_store %arg14[%c0_219, %c0_220], %912 {strides = array<i32>} : memref<16x128xf32, #tpu.memory_space<vmem>>, vector<16x128xf32>,
    return
  }
  func.func @transform_0(%arg0: i32) -> (i32, i32) {
    %c0_i32 = arith.constant 0 : i32
    %c0_i32_0 = arith.constant 0 : i32
    %c0_i32_1 = arith.constant 0 : i32
    return %c0_i32, %c0_i32_0 : i32, i32
  }
  func.func @transform_1(%arg0: i32) -> (i32, i32) {
    %c0_i32 = arith.constant 0 : i32
    %c0_i32_0 = arith.constant 0 : i32
    %c0_i32_1 = arith.constant 0 : i32
    return %c0_i32, %c0_i32_0 : i32, i32
  }
  func.func @transform_2(%arg0: i32) -> (i32, i32) {
    %c0_i32 = arith.constant 0 : i32
    %c0_i32_0 = arith.constant 0 : i32
    %c0_i32_1 = arith.constant 0 : i32
    return %c0_i32, %c0_i32_0 : i32, i32
  }
  func.func @transform_3(%arg0: i32) -> (i32, i32) {
    %c0_i32 = arith.constant 0 : i32
    %c0_i32_0 = arith.constant 0 : i32
    %c0_i32_1 = arith.constant 0 : i32
    return %c0_i32, %c0_i32_0 : i32, i32
  }
  func.func @transform_4(%arg0: i32) -> (i32, i32, i32) {
    %c0_i32 = arith.constant 0 : i32
    %c0_i32_0 = arith.constant 0 : i32
    %c0_i32_1 = arith.constant 0 : i32
    %c0_i32_2 = arith.constant 0 : i32
    return %c0_i32, %c0_i32_0, %c0_i32_1 : i32, i32, i32
  }
  func.func @transform_5(%arg0: i32) -> (i32, i32, i32) {
    %c0_i32 = arith.constant 0 : i32
    %c0_i32_0 = arith.constant 0 : i32
    %c0_i32_1 = arith.constant 0 : i32
    %c0_i32_2 = arith.constant 0 : i32
    return %c0_i32, %c0_i32_0, %c0_i32_1 : i32, i32, i32
  }
  func.func @transform_6(%arg0: i32) -> (i32, i32, i32) {
    %c0_i32 = arith.constant 0 : i32
    %c0_i32_0 = arith.constant 0 : i32
    %c0_i32_1 = arith.constant 0 : i32
    %c0_i32_2 = arith.constant 0 : i32
    return %c0_i32, %c0_i32_0, %c0_i32_1 : i32, i32, i32
  }
  func.func @transform_7(%arg0: i32) -> (i32, i32, i32) {
    %c0_i32 = arith.constant 0 : i32
    %c0_i32_0 = arith.constant 0 : i32
    %c0_i32_1 = arith.constant 0 : i32
    %c0_i32_2 = arith.constant 0 : i32
    return %c0_i32, %c0_i32_0, %c0_i32_1 : i32, i32, i32
  }
  func.func @transform_8(%arg0: i32) -> (i32, i32) {
    %c0_i32 = arith.constant 0 : i32
    %c0_i32_0 = arith.constant 0 : i32
    %c0_i32_1 = arith.constant 0 : i32
    return %c0_i32, %c0_i32_0 : i32, i32
  }
  func.func @transform_9(%arg0: i32) -> (i32, i32) {
    %c0_i32 = arith.constant 0 : i32
    %c0_i32_0 = arith.constant 0 : i32
    %c0_i32_1 = arith.constant 0 : i32
    return %c0_i32, %c0_i32_0 : i32, i32
  }
  func.func @transform_10(%arg0: i32) -> (i32, i32, i32) {
    %c0_i32 = arith.constant 0 : i32
    %c0_i32_0 = arith.constant 0 : i32
    %c0_i32_1 = arith.constant 0 : i32
    %c0_i32_2 = arith.constant 0 : i32
    return %c0_i32, %c0_i32_0, %c0_i32_1 : i32, i32, i32
  }
  func.func @transform_11(%arg0: i32) -> (i32, i32) {
    %c0_i32 = arith.constant 0 : i32
    %c0_i32_0 = arith.constant 0 : i32
    %c0_i32_1 = arith.constant 0 : i32
    return %c0_i32, %c0_i32_0 : i32, i32
  }
  func.func @transform_12(%arg0: i32) -> (i32, i32) {
    %c0_i32 = arith.constant 0 : i32
    %c0_i32_0 = arith.constant 0 : i32
    %c0_i32_1 = arith.constant 0 : i32
    return %c0_i32, %c0_i32_0 : i32, i32
  }
  func.func @transform_13(%arg0: i32) -> (i32, i32) {
    %c0_i32 = arith.constant 0 : i32
    %c0_i32_0 = arith.constant 0 : i32
    %c0_i32_1 = arith.constant 0 : i32
    return %c0_i32, %c0_i32_0 : i32, i32
  }
}

</mosaic_0001>

<llo_original>
// kernel: custom_graph_lstm_forward.1
$region0: #{custom_graph_lstm_forward.1}
  #allocation0 [shape = 'u32[]', space=smem, size = 0x4, offset = 0x4, fixed_abs, tag = 'smem constant byte address 0x4 - core index']
  #allocation1 [shape = 'u32[144,128]{1,0:T(1,128)}', space=vmem, size = 0x12000, scoped, tag = 'internal scratch']
  #allocation2 [shape = 'f32[16,32]{1,0:T(8,128)}', space=vmem, size = 0x2000, scoped, tag = 'scratch operand']
  %s0 = inlined_call_operand.vmem [shape: f32[16,8], index: 0, kind: input, shape index: {}]
  %s1 = inlined_call_operand.vmem [shape: f32[16,8], index: 1, kind: input, shape index: {}]
  %s2 = inlined_call_operand.vmem [shape: f32[16,16], index: 2, kind: input, shape index: {}]
  %s3 = inlined_call_operand.vmem [shape: f32[8,128], index: 3, kind: input, shape index: {}]
  %s4 = inlined_call_operand.vmem [shape: f32[2,128,128], index: 4, kind: input, shape index: {}]
  %s5 = inlined_call_operand.vmem [shape: f32[3,128,8], index: 5, kind: input, shape index: {}]
  %s6 = inlined_call_operand.vmem [shape: f32[3,1,128], index: 6, kind: input, shape index: {}]
  %s7 = inlined_call_operand.vmem [shape: f32[4,1,128], index: 7, kind: input, shape index: {}]
  %s8 = inlined_call_operand.vmem [shape: f32[136,32], index: 8, kind: input, shape index: {}]
  %s9 = inlined_call_operand.vmem [shape: f32[4,32], index: 9, kind: input, shape index: {}]
  %s10 = inlined_call_operand.vmem [shape: f32[2,65,128], index: 10, kind: input, shape index: {}]
  %s11 = inlined_call_operand.vmem [shape: f32[2,16], index: 11, kind: input, shape index: {}]
  %s12 = inlined_call_operand.vmem [shape: f32[33,128], index: 12, kind: input, shape index: {}]
  %s13 = inlined_call_operand.vmem [shape: f32[16,128], index: 13, kind: output, shape index: {}]
  %s14 = sld [smem:[#allocation0]]
  $region62: #{custom_graph_lstm_forward.1} parent=0
    _
  %s16 = ssub.s32 1, %s14
  %s17 = scalar_select 0, %s16, %s14
  // Predicated region
  $region2: #{custom_graph_lstm_forward.1} parent=0 // pred_check
    _
  $region3: #{custom_graph_lstm_forward.1} parent=0 // pred_check_branch
    %19 = sbr.rel (0) target = $region5
  $region4: #{custom_graph_lstm_forward.1} parent=0 // pred_region
    _
  $region5: #{custom_graph_lstm_forward.1} parent=0 // pred_fallthru
    _
  // Predicated region
  $region6: #{custom_graph_lstm_forward.1} parent=0 // pred_check
    _
  $region7: #{custom_graph_lstm_forward.1} parent=0 // pred_check_branch
    %21 = sbr.rel (0) target = $region9
  $region8: #{custom_graph_lstm_forward.1} parent=0 // pred_region
    _
  $region9: #{custom_graph_lstm_forward.1} parent=0 // pred_fallthru
    _
  // Predicated region
  $region10: #{custom_graph_lstm_forward.1} parent=0 // pred_check
    _
  $region11: #{custom_graph_lstm_forward.1} parent=0 // pred_check_branch
    %23 = sbr.rel (0) target = $region13
  $region12: #{custom_graph_lstm_forward.1} parent=0 // pred_region
    _
  $region13: #{custom_graph_lstm_forward.1} parent=0 // pred_fallthru
    _
  // Predicated region
  $region14: #{custom_graph_lstm_forward.1} parent=0 // pred_check
    _
  $region15: #{custom_graph_lstm_forward.1} parent=0 // pred_check_branch
    %25 = sbr.rel (0) target = $region17
  $region16: #{custom_graph_lstm_forward.1} parent=0 // pred_region
    _
  $region17: #{custom_graph_lstm_forward.1} parent=0 // pred_fallthru
    _
  // Predicated region
  $region18: #{custom_graph_lstm_forward.1} parent=0 // pred_check
    _
  $region19: #{custom_graph_lstm_forward.1} parent=0 // pred_check_branch
    %27 = sbr.rel (0) target = $region21
  $region20: #{custom_graph_lstm_forward.1} parent=0 // pred_region
    _
  $region21: #{custom_graph_lstm_forward.1} parent=0 // pred_fallthru
    _
  // Predicated region
  $region22: #{custom_graph_lstm_forward.1} parent=0 // pred_check
    _
  $region23: #{custom_graph_lstm_forward.1} parent=0 // pred_check_branch
    %29 = sbr.rel (0) target = $region25
  $region24: #{custom_graph_lstm_forward.1} parent=0 // pred_region
    _
  $region25: #{custom_graph_lstm_forward.1} parent=0 // pred_fallthru
    _
  // Predicated region
  $region26: #{custom_graph_lstm_forward.1} parent=0 // pred_check
    _
  $region27: #{custom_graph_lstm_forward.1} parent=0 // pred_check_branch
    %31 = sbr.rel (0) target = $region29
  $region28: #{custom_graph_lstm_forward.1} parent=0 // pred_region
    _
  $region29: #{custom_graph_lstm_forward.1} parent=0 // pred_fallthru
    _
  // Predicated region
  $region30: #{custom_graph_lstm_forward.1} parent=0 // pred_check
    _
  $region31: #{custom_graph_lstm_forward.1} parent=0 // pred_check_branch
    %33 = sbr.rel (0) target = $region33
  $region32: #{custom_graph_lstm_forward.1} parent=0 // pred_region
    _
  $region33: #{custom_graph_lstm_forward.1} parent=0 // pred_fallthru
    _
  // Predicated region
  $region34: #{custom_graph_lstm_forward.1} parent=0 // pred_check
    _
  $region35: #{custom_graph_lstm_forward.1} parent=0 // pred_check_branch
    %35 = sbr.rel (0) target = $region37
  $region36: #{custom_graph_lstm_forward.1} parent=0 // pred_region
    _
  $region37: #{custom_graph_lstm_forward.1} parent=0 // pred_fallthru
    _
  // Predicated region
  $region38: #{custom_graph_lstm_forward.1} parent=0 // pred_check
    _
  $region39: #{custom_graph_lstm_forward.1} parent=0 // pred_check_branch
    %37 = sbr.rel (0) target = $region41
  $region40: #{custom_graph_lstm_forward.1} parent=0 // pred_region
    _
  $region41: #{custom_graph_lstm_forward.1} parent=0 // pred_fallthru
    _
  // Predicated region
  $region42: #{custom_graph_lstm_forward.1} parent=0 // pred_check
    _
  $region43: #{custom_graph_lstm_forward.1} parent=0 // pred_check_branch
    %39 = sbr.rel (0) target = $region45
  $region44: #{custom_graph_lstm_forward.1} parent=0 // pred_region
    _
  $region45: #{custom_graph_lstm_forward.1} parent=0 // pred_fallthru
    _
  // Predicated region
  $region46: #{custom_graph_lstm_forward.1} parent=0 // pred_check
    _
  $region47: #{custom_graph_lstm_forward.1} parent=0 // pred_check_branch
    %41 = sbr.rel (0) target = $region49
  $region48: #{custom_graph_lstm_forward.1} parent=0 // pred_region
    _
  $region49: #{custom_graph_lstm_forward.1} parent=0 // pred_fallthru
    _
  // Predicated region
  $region50: #{custom_graph_lstm_forward.1} parent=0 // pred_check
    _
  $region51: #{custom_graph_lstm_forward.1} parent=0 // pred_check_branch
    %43 = sbr.rel (0) target = $region53
  $region52: #{custom_graph_lstm_forward.1} parent=0 // pred_region
    _
  $region53: #{custom_graph_lstm_forward.1} parent=0 // pred_fallthru
    _
  %v44 = vld [vmem:[%s2] sm:$0xff]
  %v45 = vld [vmem:[%s2 + $0x8] sm:$0xff]
  %v46 = vld [vmem:[%s7] sm:$0x1]
  %v47 = vld [vmem:[%s7 + $0x1] sm:$0x1]
  %v48 = vld [vmem:[%s7 + $0x2] sm:$0x1]
  %v49 = vld [vmem:[%s7 + $0x3] sm:$0x1]
  %v50 = vld [vmem:[%s1] sm:$0xff]
  %v51 = vld [vmem:[%s1 + $0x8] sm:$0xff]
  %v52 = vld [vmem:[%s3] sm:$0xff]
  %v53 = vld [vmem:[%s5] sm:$0xff]
  %v54 = vld [vmem:[%s5 + $0x8] sm:$0xff]
  %v55 = vld [vmem:[%s5 + $0x10] sm:$0xff]
  %v56 = vld [vmem:[%s5 + $0x18] sm:$0xff]
  %v57 = vld [vmem:[%s5 + $0x20] sm:$0xff]
  %v58 = vld [vmem:[%s5 + $0x28] sm:$0xff]
  %v59 = vld [vmem:[%s5 + $0x30] sm:$0xff]
  %v60 = vld [vmem:[%s5 + $0x38] sm:$0xff]
  %v61 = vld [vmem:[%s5 + $0x40] sm:$0xff]
  %v62 = vld [vmem:[%s5 + $0x48] sm:$0xff]
  %v63 = vld [vmem:[%s5 + $0x50] sm:$0xff]
  %v64 = vld [vmem:[%s5 + $0x58] sm:$0xff]
  %v65 = vld [vmem:[%s5 + $0x60] sm:$0xff]
  %v66 = vld [vmem:[%s5 + $0x68] sm:$0xff]
  %v67 = vld [vmem:[%s5 + $0x70] sm:$0xff]
  %v68 = vld [vmem:[%s5 + $0x78] sm:$0xff]
  %v69 = vld [vmem:[%s6] sm:$0x1]
  %vm70 = vcmask 64512
  %v72 = vsel %vm70, %v50, 0
  %v75 = vsel %vm70, %v51, 0
  %77 = vmatprep.subr.mxu0 0.0
  %78 = vmatpush1.msra.mxu0 %v52
  %79 = vmatprep.subr.mxu0 0.0
  %80 = vmatpush1.msra.mxu0 0.0
  %81 = vmatprep.subr.mxu0 0.0
  %82 = vmatpush1.msra.mxu0 0.0
  %83 = vmatprep.subr.mxu0 0.0
  %84 = vmatpush1.msra.mxu0 0.0
  %85 = vmatprep.subr.mxu0 0.0
  %86 = vmatpush1.msra.mxu0 0.0
  %87 = vmatprep.subr.mxu0 0.0
  %88 = vmatpush1.msra.mxu0 0.0
  %89 = vmatprep.subr.mxu0 0.0
  %90 = vmatpush1.msra.mxu0 0.0
  %91 = vmatprep.subr.mxu0 0.0
  %92 = vmatpush1.msra.mxu0 0.0
  %93 = vmatprep.subr.mxu0 0.0
  %94 = vmatpush1.msra.mxu0 0.0
  %95 = vmatprep.subr.mxu0 0.0
  %96 = vmatpush1.msra.mxu0 0.0
  %97 = vmatprep.subr.mxu0 0.0
  %98 = vmatpush1.msra.mxu0 0.0
  %99 = vmatprep.subr.mxu0 0.0
  %100 = vmatpush1.msra.mxu0 0.0
  %101 = vmatprep.subr.mxu0 0.0
  %102 = vmatpush1.msra.mxu0 0.0
  %103 = vmatprep.subr.mxu0 0.0
  %104 = vmatpush1.msra.mxu0 0.0
  %105 = vmatprep.subr.mxu0 0.0
  %106 = vmatpush1.msra.mxu0 0.0
  %107 = vmatprep.subr.mxu0 0.0
  %108 = vmatpush1.msra.mxu0 0.0
  %109 = vmatprep.subr.mxu0 0.0
  %110 = vmatpush1.msra.mxu0 0.0
  %111 = vmatprep.subr.mxu0 0.0
  %112 = vmatpush1.msra.mxu0 0.0
  %113 = vmatprep.subr.mxu0 0.0
  %114 = vmatpush1.msra.mxu0 0.0
  %115 = vmatprep.subr.mxu0 0.0
  %116 = vmatpush1.msra.mxu0 0.0
  %117 = vmatprep.subr.mxu0 0.0
  %118 = vmatpush1.msra.mxu0 0.0
  %119 = vmatprep.subr.mxu0 0.0
  %120 = vmatpush1.msra.mxu0 0.0
  %121 = vmatprep.subr.mxu0 0.0
  %122 = vmatpush1.msra.mxu0 0.0
  %123 = vmatprep.subr.mxu0 0.0
  %124 = vmatpush1.msra.mxu0 0.0
  %125 = vmatprep.subr.mxu0 0.0
  %126 = vmatpush1.msra.mxu0 0.0
  %127 = vmatprep.subr.mxu0 0.0
  %128 = vmatpush1.msra.mxu0 0.0
  %129 = vmatprep.subr.mxu0 0.0
  %130 = vmatpush1.msra.mxu0 0.0
  %131 = vmatprep.subr.mxu0 0.0
  %132 = vmatpush1.msra.mxu0 0.0
  %133 = vmatprep.subr.mxu0 0.0
  %134 = vmatpush1.msra.mxu0 0.0
  %135 = vmatprep.subr.mxu0 0.0
  %136 = vmatpush1.msra.mxu0 0.0
  %137 = vmatprep.subr.mxu0 0.0
  %138 = vmatpush1.msra.mxu0 0.0
  %139 = vmatprep.subr.mxu0 0.0
  %140 = vmatpush1.msra.mxu0 0.0
  %141 = vmatprep.mubr.f32.mxu0 0.0
  %142 = vmatmul.mubr.f32.gmra.mrb[0].mxu0 %v72
  %v143 = vpop.f32.mrb[0].mxu0
  %v144 = vadd.f32 0.0, %v143
  %v145 = vpop.f32.mrb[0].mxu0
  %146 = vmatprep.mubr.f32.mxu0 0.0
  %147 = vmatmul.mubr.f32.gmra.mrb[0].mxu0 %v75
  %v148 = vpop.f32.mrb[0].mxu0
  %v149 = vadd.f32 0.0, %v148
  %v150 = vpop.f32.mrb[0].mxu0
  %151 = vdwg.mxu0
  %152 = vmatprep.subr.mxu0 0.0
  %153 = vmatpush1.msra.mxu0 %v53
  %154 = vmatprep.subr.mxu0 0.0
  %155 = vmatpush1.msra.mxu0 %v54
  %156 = vmatprep.subr.mxu0 0.0
  %157 = vmatpush1.msra.mxu0 %v55
  %158 = vmatprep.subr.mxu0 0.0
  %159 = vmatpush1.msra.mxu0 %v56
  %160 = vmatprep.subr.mxu0 0.0
  %161 = vmatpush1.msra.mxu0 %v57
  %162 = vmatprep.subr.mxu0 0.0
  %163 = vmatpush1.msra.mxu0 %v58
  %164 = vmatprep.subr.mxu0 0.0
  %165 = vmatpush1.msra.mxu0 %v59
  %166 = vmatprep.subr.mxu0 0.0
  %167 = vmatpush1.msra.mxu0 %v60
  %168 = vmatprep.subr.mxu0 0.0
  %169 = vmatpush1.msra.mxu0 %v61
  %170 = vmatprep.subr.mxu0 0.0
  %171 = vmatpush1.msra.mxu0 %v62
  %172 = vmatprep.subr.mxu0 0.0
  %173 = vmatpush1.msra.mxu0 %v63
  %174 = vmatprep.subr.mxu0 0.0
  %175 = vmatpush1.msra.mxu0 %v64
  %176 = vmatprep.subr.mxu0 0.0
  %177 = vmatpush1.msra.mxu0 %v65
  %178 = vmatprep.subr.mxu0 0.0
  %179 = vmatpush1.msra.mxu0 %v66
  %180 = vmatprep.subr.mxu0 0.0
  %181 = vmatpush1.msra.mxu0 %v67
  %182 = vmatprep.subr.mxu0 0.0
  %183 = vmatpush1.msra.mxu0 %v68
  %184 = vmatprep.subr.mxu0 0.0
  %185 = vmatpush1.msra.mxu0 0.0
  %186 = vmatprep.subr.mxu0 0.0
  %187 = vmatpush1.msra.mxu0 0.0
  %188 = vmatprep.subr.mxu0 0.0
  %189 = vmatpush1.msra.mxu0 0.0
  %190 = vmatprep.subr.mxu0 0.0
  %191 = vmatpush1.msra.mxu0 0.0
  %192 = vmatprep.subr.mxu0 0.0
  %193 = vmatpush1.msra.mxu0 0.0
  %194 = vmatprep.subr.mxu0 0.0
  %195 = vmatpush1.msra.mxu0 0.0
  %196 = vmatprep.subr.mxu0 0.0
  %197 = vmatpush1.msra.mxu0 0.0
  %198 = vmatprep.subr.mxu0 0.0
  %199 = vmatpush1.msra.mxu0 0.0
  %200 = vmatprep.subr.mxu0 0.0
  %201 = vmatpush1.msra.mxu0 0.0
  %202 = vmatprep.subr.mxu0 0.0
  %203 = vmatpush1.msra.mxu0 0.0
  %204 = vmatprep.subr.mxu0 0.0
  %205 = vmatpush1.msra.mxu0 0.0
  %206 = vmatprep.subr.mxu0 0.0
  %207 = vmatpush1.msra.mxu0 0.0
  %208 = vmatprep.subr.mxu0 0.0
  %209 = vmatpush1.msra.mxu0 0.0
  %210 = vmatprep.subr.mxu0 0.0
  %211 = vmatpush1.msra.mxu0 0.0
  %212 = vmatprep.subr.mxu0 0.0
  %213 = vmatpush1.msra.mxu0 0.0
  %214 = vmatprep.subr.mxu0 0.0
  %215 = vmatpush1.msra.mxu0 0.0
  %216 = vmatprep.mubr.f32.mxu0 0.0
  %217 = vmatmul.mubr.f32.gmra.mrb[0].mxu0 %v144
  %v218 = vpop.f32.mrb[0].mxu0
  %v219 = vadd.f32 0.0, %v218
  %v220 = vpop.f32.mrb[0].mxu0
  %221 = vmatprep.mubr.f32.mxu0 0.0
  %222 = vmatmul.mubr.f32.gmra.mrb[0].mxu0 %v149
  %v223 = vpop.f32.mrb[0].mxu0
  %v224 = vadd.f32 0.0, %v223
  %v225 = vpop.f32.mrb[0].mxu0
  %226 = vdwg.mxu0
  %227 = vxpose.xlu0.b32.start [1/16] %v219, 128
  %228 = vxpose.xlu0.b32.cont [2/16] %v224, 128
  %229 = vxpose.xlu0.b32.cont [3/16] 0.0, 128
  %230 = vxpose.xlu0.b32.cont [4/16] 0.0, 128
  %231 = vxpose.xlu0.b32.cont [5/16] 0.0, 128
  %232 = vxpose.xlu0.b32.cont [6/16] 0.0, 128
  %233 = vxpose.xlu0.b32.cont [7/16] 0.0, 128
  %234 = vxpose.xlu0.b32.cont [8/16] 0.0, 128
  %235 = vxpose.xlu0.b32.cont [9/16] 0.0, 128
  %236 = vxpose.xlu0.b32.cont [10/16] 0.0, 128
  %237 = vxpose.xlu0.b32.cont [11/16] 0.0, 128
  %238 = vxpose.xlu0.b32.cont [12/16] 0.0, 128
  %239 = vxpose.xlu0.b32.cont [13/16] 0.0, 128
  %240 = vxpose.xlu0.b32.cont [14/16] 0.0, 128
  %241 = vxpose.xlu0.b32.cont [15/16] 0.0, 128
  %242 = vxpose.xlu0.b32.end [16/16] 0.0, 128
  %v243 = vpop.trf.xlu0
  %v244 = vpop.trf.xlu0
  %v245 = vpop.trf.xlu0
  %v246 = vpop.trf.xlu0
  %v247 = vpop.trf.xlu0
  %v248 = vpop.trf.xlu0
  %v249 = vpop.trf.xlu0
  %v250 = vpop.trf.xlu0
  %v251 = vpop.trf.xlu0
  %v252 = vpop.trf.xlu0
  %v253 = vpop.trf.xlu0
  %v254 = vpop.trf.xlu0
  %v255 = vpop.trf.xlu0
  %v256 = vpop.trf.xlu0
  %v257 = vpop.trf.xlu0
  %v258 = vpop.trf.xlu0
  %260 = vset.pattern.permute.xlu0 4
  %261 = vperm.xlu0 %260, %v219
  %v262 = vpop.permute.xlu0 %261
  %265 = vset.pattern.permute.xlu0 4
  %266 = vperm.xlu0 %265, %v224
  %v267 = vpop.permute.xlu0 %266
  %v269 = vlaneseq
  %v270 = vshrl.u32 %v269, 7
  %v271 = vsub.s32 0, %v270
  %v272 = vrot.slane %v243, %v271
  %v273 = vadd.f32 %v262, %v272
  %v274 = vadd.f32 %v267, %v272
  %vm275 = vcmp.gt.f32.partialorder %v273, 0.0
  %vm276 = vcmp.gt.f32.partialorder %v274, 0.0
  %v277 = vmul.f32 %v273, 0.2
  %v278 = vmul.f32 %v274, 0.2
  %v279 = vsel %vm275, %v273, %v277
  %v280 = vsel %vm276, %v274, %v278
  %v281 = vadd.f32 %v279, %v44
  %v282 = vadd.f32 %v280, %v45
  %vm283 = vcmask 130048
  %v284 = vsel %vm283, %v281, -inf
  %285 = vmax.xlane.f32.xlu0 %v284
  %v286 = vpop.xlane.xlu0 %285
  %v287 = vsel %vm283, %v282, -inf
  %288 = vmax.xlane.f32.xlu0 %v287
  %v289 = vpop.xlane.xlu0 %288
  %v290 = vsub.f32 %v281, %v286
  %v291 = vsub.f32 %v282, %v289
  %v292 = vmul.f32 %v290, 1.442695
  %v293 = vpow.pop %v292
  %v294 = vmul.f32 %v291, 1.442695
  %v295 = vpow.pop %v294
  %v296 = vsel %vm283, %v293, 0.0
  %297 = vadd.xlane.f32.xlu0 %v296
  %v298 = vpop.xlane.xlu0 %297
  %v299 = vsel %vm283, %v295, 0.0
  %300 = vadd.xlane.f32.xlu0 %v299
  %v301 = vpop.xlane.xlu0 %300
  %v302 = vrcp.pop %v298
  %v303 = vmul.f32 %v293, %v302
  %v304 = vrcp.pop %v301
  %v305 = vmul.f32 %v295, %v304
  %306 = vrot.lane.b32.xlu0 %v219, 127
  %v307 = vpop.permute.xlu0 %306
  %308 = vrot.lane.b32.xlu0 %v224, 127
  %v309 = vpop.permute.xlu0 %308
  %312 = vxpose.xlu0.b32.start [1/16] %v307, 128
  %313 = vxpose.xlu0.b32.cont [2/16] %v309, 128
  %314 = vxpose.xlu0.b32.cont [3/16] 0.0, 128
  %315 = vxpose.xlu0.b32.cont [4/16] 0.0, 128
  %316 = vxpose.xlu0.b32.cont [5/16] 0.0, 128
  %317 = vxpose.xlu0.b32.cont [6/16] 0.0, 128
  %318 = vxpose.xlu0.b32.cont [7/16] 0.0, 128
  %319 = vxpose.xlu0.b32.cont [8/16] 0.0, 128
  %320 = vxpose.xlu0.b32.cont [9/16] 0.0, 128
  %321 = vxpose.xlu0.b32.cont [10/16] 0.0, 128
  %322 = vxpose.xlu0.b32.cont [11/16] 0.0, 128
  %323 = vxpose.xlu0.b32.cont [12/16] 0.0, 128
  %324 = vxpose.xlu0.b32.cont [13/16] 0.0, 128
  %325 = vxpose.xlu0.b32.cont [14/16] 0.0, 128
  %326 = vxpose.xlu0.b32.cont [15/16] 0.0, 128
  %327 = vxpose.xlu0.b32.end [16/16] 0.0, 128
  %v328 = vpop.trf.xlu0
  %v329 = vpop.trf.xlu0
  %v330 = vpop.trf.xlu0
  %v331 = vpop.trf.xlu0
  %v332 = vpop.trf.xlu0
  %v333 = vpop.trf.xlu0
  %v334 = vpop.trf.xlu0
  %v335 = vpop.trf.xlu0
  %v336 = vpop.trf.xlu0
  %v337 = vpop.trf.xlu0
  %v338 = vpop.trf.xlu0
  %v339 = vpop.trf.xlu0
  %v340 = vpop.trf.xlu0
  %v341 = vpop.trf.xlu0
  %v342 = vpop.trf.xlu0
  %v343 = vpop.trf.xlu0
  %344 = vset.pattern.permute.xlu0 5
  %345 = vperm.xlu0 %344, %v219
  %v346 = vpop.permute.xlu0 %345
  %348 = vset.pattern.permute.xlu0 5
  %349 = vperm.xlu0 %348, %v224
  %v350 = vpop.permute.xlu0 %349
  %v352 = vlaneseq
  %v353 = vshrl.u32 %v352, 7
  %v354 = vsub.s32 0, %v353
  %v355 = vrot.slane %v328, %v354
  %v356 = vadd.f32 %v346, %v355
  %v357 = vadd.f32 %v350, %v355
  %vm358 = vcmp.gt.f32.partialorder %v356, 0.0
  %vm359 = vcmp.gt.f32.partialorder %v357, 0.0
  %v360 = vmul.f32 %v356, 0.2
  %v361 = vmul.f32 %v357, 0.2
  %v362 = vsel %vm358, %v356, %v360
  %v363 = vsel %vm359, %v357, %v361
  %v364 = vadd.f32 %v362, %v44
  %v365 = vadd.f32 %v363, %v45
  %v366 = vsel %vm283, %v364, -inf
  %367 = vmax.xlane.f32.xlu0 %v366
  %v368 = vpop.xlane.xlu0 %367
  %v369 = vsel %vm283, %v365, -inf
  %370 = vmax.xlane.f32.xlu0 %v369
  %v371 = vpop.xlane.xlu0 %370
  %v372 = vsub.f32 %v364, %v368
  %v373 = vsub.f32 %v365, %v371
  %v374 = vmul.f32 %v372, 1.442695
  %v375 = vpow.pop %v374
  %v376 = vmul.f32 %v373, 1.442695
  %v377 = vpow.pop %v376
  %v378 = vsel %vm283, %v375, 0.0
  %379 = vadd.xlane.f32.xlu0 %v378
  %v380 = vpop.xlane.xlu0 %379
  %v381 = vsel %vm283, %v377, 0.0
  %382 = vadd.xlane.f32.xlu0 %v381
  %v383 = vpop.xlane.xlu0 %382
  %v384 = vrcp.pop %v380
  %v385 = vmul.f32 %v375, %v384
  %v386 = vrcp.pop %v383
  %v387 = vmul.f32 %v377, %v386
  %388 = vrot.lane.b32.xlu0 %v219, 126
  %v389 = vpop.permute.xlu0 %388
  %390 = vrot.lane.b32.xlu0 %v224, 126
  %v391 = vpop.permute.xlu0 %390
  %394 = vxpose.xlu0.b32.start [1/16] %v389, 128
  %395 = vxpose.xlu0.b32.cont [2/16] %v391, 128
  %396 = vxpose.xlu0.b32.cont [3/16] 0.0, 128
  %397 = vxpose.xlu0.b32.cont [4/16] 0.0, 128
  %398 = vxpose.xlu0.b32.cont [5/16] 0.0, 128
  %399 = vxpose.xlu0.b32.cont [6/16] 0.0, 128
  %400 = vxpose.xlu0.b32.cont [7/16] 0.0, 128
  %401 = vxpose.xlu0.b32.cont [8/16] 0.0, 128
  %402 = vxpose.xlu0.b32.cont [9/16] 0.0, 128
  %403 = vxpose.xlu0.b32.cont [10/16] 0.0, 128
  %404 = vxpose.xlu0.b32.cont [11/16] 0.0, 128
  %405 = vxpose.xlu0.b32.cont [12/16] 0.0, 128
  %406 = vxpose.xlu0.b32.cont [13/16] 0.0, 128
  %407 = vxpose.xlu0.b32.cont [14/16] 0.0, 128
  %408 = vxpose.xlu0.b32.cont [15/16] 0.0, 128
  %409 = vxpose.xlu0.b32.end [16/16] 0.0, 128
  %v410 = vpop.trf.xlu0
  %v411 = vpop.trf.xlu0
  %v412 = vpop.trf.xlu0
  %v413 = vpop.trf.xlu0
  %v414 = vpop.trf.xlu0
  %v415 = vpop.trf.xlu0
  %v416 = vpop.trf.xlu0
  %v417 = vpop.trf.xlu0
  %v418 = vpop.trf.xlu0
  %v419 = vpop.trf.xlu0
  %v420 = vpop.trf.xlu0
  %v421 = vpop.trf.xlu0
  %v422 = vpop.trf.xlu0
  %v423 = vpop.trf.xlu0
  %v424 = vpop.trf.xlu0
  %v425 = vpop.trf.xlu0
  %426 = vset.pattern.permute.xlu0 6
  %427 = vperm.xlu0 %426, %v219
  %v428 = vpop.permute.xlu0 %427
  %430 = vset.pattern.permute.xlu0 6
  %431 = vperm.xlu0 %430, %v224
  %v432 = vpop.permute.xlu0 %431
  %v434 = vlaneseq
  %v435 = vshrl.u32 %v434, 7
  %v436 = vsub.s32 0, %v435
  %v437 = vrot.slane %v410, %v436
  %v438 = vadd.f32 %v428, %v437
  %v439 = vadd.f32 %v432, %v437
  %vm440 = vcmp.gt.f32.partialorder %v438, 0.0
  %vm441 = vcmp.gt.f32.partialorder %v439, 0.0
  %v442 = vmul.f32 %v438, 0.2
  %v443 = vmul.f32 %v439, 0.2
  %v444 = vsel %vm440, %v438, %v442
  %v445 = vsel %vm441, %v439, %v443
  %v446 = vadd.f32 %v444, %v44
  %v447 = vadd.f32 %v445, %v45
  %v448 = vsel %vm283, %v446, -inf
  %449 = vmax.xlane.f32.xlu0 %v448
  %v450 = vpop.xlane.xlu0 %449
  %v451 = vsel %vm283, %v447, -inf
  %452 = vmax.xlane.f32.xlu0 %v451
  %v453 = vpop.xlane.xlu0 %452
  %v454 = vsub.f32 %v446, %v450
  %v455 = vsub.f32 %v447, %v453
  %v456 = vmul.f32 %v454, 1.442695
  %v457 = vpow.pop %v456
  %v458 = vmul.f32 %v455, 1.442695
  %v459 = vpow.pop %v458
  %v460 = vsel %vm283, %v457, 0.0
  %461 = vadd.xlane.f32.xlu0 %v460
  %v462 = vpop.xlane.xlu0 %461
  %v463 = vsel %vm283, %v459, 0.0
  %464 = vadd.xlane.f32.xlu0 %v463
  %v465 = vpop.xlane.xlu0 %464
  %v466 = vrcp.pop %v462
  %v467 = vmul.f32 %v457, %v466
  %v468 = vrcp.pop %v465
  %v469 = vmul.f32 %v459, %v468
  %470 = vrot.lane.b32.xlu0 %v219, 125
  %v471 = vpop.permute.xlu0 %470
  %472 = vrot.lane.b32.xlu0 %v224, 125
  %v473 = vpop.permute.xlu0 %472
  %476 = vxpose.xlu0.b32.start [1/16] %v471, 128
  %477 = vxpose.xlu0.b32.cont [2/16] %v473, 128
  %478 = vxpose.xlu0.b32.cont [3/16] 0.0, 128
  %479 = vxpose.xlu0.b32.cont [4/16] 0.0, 128
  %480 = vxpose.xlu0.b32.cont [5/16] 0.0, 128
  %481 = vxpose.xlu0.b32.cont [6/16] 0.0, 128
  %482 = vxpose.xlu0.b32.cont [7/16] 0.0, 128
  %483 = vxpose.xlu0.b32.cont [8/16] 0.0, 128
  %484 = vxpose.xlu0.b32.cont [9/16] 0.0, 128
  %485 = vxpose.xlu0.b32.cont [10/16] 0.0, 128
  %486 = vxpose.xlu0.b32.cont [11/16] 0.0, 128
  %487 = vxpose.xlu0.b32.cont [12/16] 0.0, 128
  %488 = vxpose.xlu0.b32.cont [13/16] 0.0, 128
  %489 = vxpose.xlu0.b32.cont [14/16] 0.0, 128
  %490 = vxpose.xlu0.b32.cont [15/16] 0.0, 128
  %491 = vxpose.xlu0.b32.end [16/16] 0.0, 128
  %v492 = vpop.trf.xlu0
  %v493 = vpop.trf.xlu0
  %v494 = vpop.trf.xlu0
  %v495 = vpop.trf.xlu0
  %v496 = vpop.trf.xlu0
  %v497 = vpop.trf.xlu0
  %v498 = vpop.trf.xlu0
  %v499 = vpop.trf.xlu0
  %v500 = vpop.trf.xlu0
  %v501 = vpop.trf.xlu0
  %v502 = vpop.trf.xlu0
  %v503 = vpop.trf.xlu0
  %v504 = vpop.trf.xlu0
  %v505 = vpop.trf.xlu0
  %v506 = vpop.trf.xlu0
  %v507 = vpop.trf.xlu0
  %508 = vset.pattern.permute.xlu0 7
  %509 = vperm.xlu0 %508, %v219
  %v510 = vpop.permute.xlu0 %509
  %512 = vset.pattern.permute.xlu0 7
  %513 = vperm.xlu0 %512, %v224
  %v514 = vpop.permute.xlu0 %513
  %v516 = vlaneseq
  %v517 = vshrl.u32 %v516, 7
  %v518 = vsub.s32 0, %v517
  %v519 = vrot.slane %v492, %v518
  %v520 = vadd.f32 %v510, %v519
  %v521 = vadd.f32 %v514, %v519
  %vm522 = vcmp.gt.f32.partialorder %v520, 0.0
  %vm523 = vcmp.gt.f32.partialorder %v521, 0.0
  %v524 = vmul.f32 %v520, 0.2
  %v525 = vmul.f32 %v521, 0.2
  %v526 = vsel %vm522, %v520, %v524
  %v527 = vsel %vm523, %v521, %v525
  %v528 = vadd.f32 %v526, %v44
  %v529 = vadd.f32 %v527, %v45
  %v530 = vsel %vm283, %v528, -inf
  %531 = vmax.xlane.f32.xlu0 %v530
  %v532 = vpop.xlane.xlu0 %531
  %v533 = vsel %vm283, %v529, -inf
  %534 = vmax.xlane.f32.xlu0 %v533
  %v535 = vpop.xlane.xlu0 %534
  %v536 = vsub.f32 %v528, %v532
  %v537 = vsub.f32 %v529, %v535
  %v538 = vmul.f32 %v536, 1.442695
  %v539 = vpow.pop %v538
  %v540 = vmul.f32 %v537, 1.442695
  %v541 = vpow.pop %v540
  %v542 = vsel %vm283, %v539, 0.0
  %543 = vadd.xlane.f32.xlu0 %v542
  %v544 = vpop.xlane.xlu0 %543
  %v545 = vsel %vm283, %v541, 0.0
  %546 = vadd.xlane.f32.xlu0 %v545
  %v547 = vpop.xlane.xlu0 %546
  %v548 = vrcp.pop %v544
  %v549 = vmul.f32 %v539, %v548
  %v550 = vrcp.pop %v547
  %v551 = vmul.f32 %v541, %v550
  %v553 = vsel %vm283, %v303, 0
  %v556 = vsel %vm283, %v305, 0
  %v559 = vsel %vm283, %v385, 0
  %v562 = vsel %vm283, %v387, 0
  %v565 = vsel %vm283, %v467, 0
  %v568 = vsel %vm283, %v469, 0
  %v571 = vsel %vm283, %v549, 0
  %v574 = vsel %vm283, %v551, 0
  %576 = vmatprep.subr.mxu0 0.0
  %577 = vmatpush1.msra.mxu0 %v144
  %578 = vmatprep.subr.mxu0 0.0
  %579 = vmatpush1.msra.mxu0 %v149
  %580 = vmatprep.subr.mxu0 0.0
  %581 = vmatpush1.msra.mxu0 0.0
  %582 = vmatprep.subr.mxu0 0.0
  %583 = vmatpush1.msra.mxu0 0.0
  %584 = vmatprep.subr.mxu0 0.0
  %585 = vmatpush1.msra.mxu0 0.0
  %586 = vmatprep.subr.mxu0 0.0
  %587 = vmatpush1.msra.mxu0 0.0
  %588 = vmatprep.subr.mxu0 0.0
  %589 = vmatpush1.msra.mxu0 0.0
  %590 = vmatprep.subr.mxu0 0.0
  %591 = vmatpush1.msra.mxu0 0.0
  %592 = vmatprep.subr.mxu0 0.0
  %593 = vmatpush1.msra.mxu0 0.0
  %594 = vmatprep.subr.mxu0 0.0
  %595 = vmatpush1.msra.mxu0 0.0
  %596 = vmatprep.subr.mxu0 0.0
  %597 = vmatpush1.msra.mxu0 0.0
  %598 = vmatprep.subr.mxu0 0.0
  %599 = vmatpush1.msra.mxu0 0.0
  %600 = vmatprep.subr.mxu0 0.0
  %601 = vmatpush1.msra.mxu0 0.0
  %602 = vmatprep.subr.mxu0 0.0
  %603 = vmatpush1.msra.mxu0 0.0
  %604 = vmatprep.subr.mxu0 0.0
  %605 = vmatpush1.msra.mxu0 0.0
  %606 = vmatprep.subr.mxu0 0.0
  %607 = vmatpush1.msra.mxu0 0.0
  %608 = vmatprep.subr.mxu0 0.0
  %609 = vmatpush1.msra.mxu0 0.0
  %610 = vmatprep.subr.mxu0 0.0
  %611 = vmatpush1.msra.mxu0 0.0
  %612 = vmatprep.subr.mxu0 0.0
  %613 = vmatpush1.msra.mxu0 0.0
  %614 = vmatprep.subr.mxu0 0.0
  %615 = vmatpush1.msra.mxu0 0.0
  %616 = vmatprep.subr.mxu0 0.0
  %617 = vmatpush1.msra.mxu0 0.0
  %618 = vmatprep.subr.mxu0 0.0
  %619 = vmatpush1.msra.mxu0 0.0
  %620 = vmatprep.subr.mxu0 0.0
  %621 = vmatpush1.msra.mxu0 0.0
  %622 = vmatprep.subr.mxu0 0.0
  %623 = vmatpush1.msra.mxu0 0.0
  %624 = vmatprep.subr.mxu0 0.0
  %625 = vmatpush1.msra.mxu0 0.0
  %626 = vmatprep.subr.mxu0 0.0
  %627 = vmatpush1.msra.mxu0 0.0
  %628 = vmatprep.subr.mxu0 0.0
  %629 = vmatpush1.msra.mxu0 0.0
  %630 = vmatprep.subr.mxu0 0.0
  %631 = vmatpush1.msra.mxu0 0.0
  %632 = vmatprep.subr.mxu0 0.0
  %633 = vmatpush1.msra.mxu0 0.0
  %634 = vmatprep.subr.mxu0 0.0
  %635 = vmatpush1.msra.mxu0 0.0
  %636 = vmatprep.subr.mxu0 0.0
  %637 = vmatpush1.msra.mxu0 0.0
  %638 = vmatprep.subr.mxu0 0.0
  %639 = vmatpush1.msra.mxu0 0.0
  %640 = vmatprep.mubr.f32.mxu0 0.0
  %641 = vmatmul.mubr.f32.gmra.mrb[0].mxu0 %v553
  %v642 = vpop.f32.mrb[0].mxu0
  %v643 = vadd.f32 0.0, %v642
  %v644 = vpop.f32.mrb[0].mxu0
  %645 = vmatprep.mubr.f32.mxu0 0.0
  %646 = vmatmul.mubr.f32.gmra.mrb[0].mxu0 %v556
  %v647 = vpop.f32.mrb[0].mxu0
  %v648 = vadd.f32 0.0, %v647
  %v649 = vpop.f32.mrb[0].mxu0
  %650 = vmatprep.mubr.f32.mxu0 0.0
  %651 = vmatmul.mubr.f32.gmra.mrb[0].mxu0 %v559
  %v652 = vpop.f32.mrb[0].mxu0
  %v653 = vadd.f32 0.0, %v652
  %v654 = vpop.f32.mrb[0].mxu0
  %655 = vmatprep.mubr.f32.mxu0 0.0
  %656 = vmatmul.mubr.f32.gmra.mrb[0].mxu0 %v562
  %v657 = vpop.f32.mrb[0].mxu0
  %v658 = vadd.f32 0.0, %v657
  %v659 = vpop.f32.mrb[0].mxu0
  %660 = vmatprep.mubr.f32.mxu0 0.0
  %661 = vmatmul.mubr.f32.gmra.mrb[0].mxu0 %v565
  %v662 = vpop.f32.mrb[0].mxu0
  %v663 = vadd.f32 0.0, %v662
  %v664 = vpop.f32.mrb[0].mxu0
  %665 = vmatprep.mubr.f32.mxu0 0.0
  %666 = vmatmul.mubr.f32.gmra.mrb[0].mxu0 %v568
  %v667 = vpop.f32.mrb[0].mxu0
  %v668 = vadd.f32 0.0, %v667
  %v669 = vpop.f32.mrb[0].mxu0
  %670 = vmatprep.mubr.f32.mxu0 0.0
  %671 = vmatmul.mubr.f32.gmra.mrb[0].mxu0 %v571
  %v672 = vpop.f32.mrb[0].mxu0
  %v673 = vadd.f32 0.0, %v672
  %v674 = vpop.f32.mrb[0].mxu0
  %675 = vmatprep.mubr.f32.mxu0 0.0
  %676 = vmatmul.mubr.f32.gmra.mrb[0].mxu0 %v574
  %v677 = vpop.f32.mrb[0].mxu0
  %v678 = vadd.f32 0.0, %v677
  %v679 = vpop.f32.mrb[0].mxu0
  %680 = vdwg.mxu0
  %v682 = vlaneseq
  %v683 = vshrl.u32 %v682, 7
  %v684 = vsub.s32 0, %v683
  %v685 = vrot.slane %v46, %v684
  %v687 = vmul.f32 %v643, %v685
  %v688 = vmul.f32 %v648, %v685
  %v690 = vlaneseq
  %v691 = vshrl.u32 %v690, 7
  %v692 = vsub.s32 0, %v691
  %v693 = vrot.slane %v69, %v692
  %v695 = vadd.f32 %v693, %v687
  %v696 = vadd.f32 %v693, %v688
  %v698 = vlaneseq
  %v699 = vshrl.u32 %v698, 7
  %v700 = vsub.s32 0, %v699
  %v701 = vrot.slane %v47, %v700
  %v703 = vmul.f32 %v653, %v701
  %v704 = vmul.f32 %v658, %v701
  %v705 = vadd.f32 %v695, %v703
  %v706 = vadd.f32 %v696, %v704
  %v708 = vlaneseq
  %v709 = vshrl.u32 %v708, 7
  %v710 = vsub.s32 0, %v709
  %v711 = vrot.slane %v48, %v710
  %v713 = vmul.f32 %v663, %v711
  %v714 = vmul.f32 %v668, %v711
  %v715 = vadd.f32 %v705, %v713
  %v716 = vadd.f32 %v706, %v714
  %v718 = vlaneseq
  %v719 = vshrl.u32 %v718, 7
  %v720 = vsub.s32 0, %v719
  %v721 = vrot.slane %v49, %v720
  %v723 = vmul.f32 %v673, %v721
  %v724 = vmul.f32 %v678, %v721
  %v725 = vadd.f32 %v715, %v723
  %v726 = vadd.f32 %v716, %v724
  %v727 = vld [vmem:[%s4] sm:$0xff]
  %v728 = vld [vmem:[%s4 + $0x8] sm:$0xff]
  %v729 = vld [vmem:[%s4 + $0x10] sm:$0xff]
  %v730 = vld [vmem:[%s4 + $0x18] sm:$0xff]
  %v731 = vld [vmem:[%s4 + $0x20] sm:$0xff]
  %v732 = vld [vmem:[%s4 + $0x28] sm:$0xff]
  %v733 = vld [vmem:[%s4 + $0x30] sm:$0xff]
  %v734 = vld [vmem:[%s4 + $0x38] sm:$0xff]
  %v735 = vld [vmem:[%s4 + $0x40] sm:$0xff]
  %v736 = vld [vmem:[%s4 + $0x48] sm:$0xff]
  %v737 = vld [vmem:[%s4 + $0x50] sm:$0xff]
  %v738 = vld [vmem:[%s4 + $0x58] sm:$0xff]
  %v739 = vld [vmem:[%s4 + $0x60] sm:$0xff]
  %v740 = vld [vmem:[%s4 + $0x68] sm:$0xff]
  %v741 = vld [vmem:[%s4 + $0x70] sm:$0xff]
  %v742 = vld [vmem:[%s4 + $0x78] sm:$0xff]
  %s743 = scalar_lea.vmem %s5, 128
  %v744 = vld [vmem:[%s743] sm:$0xff]
  %v745 = vld [vmem:[%s743 + $0x8] sm:$0xff]
  %v746 = vld [vmem:[%s743 + $0x10] sm:$0xff]
  %v747 = vld [vmem:[%s743 + $0x18] sm:$0xff]
  %v748 = vld [vmem:[%s743 + $0x20] sm:$0xff]
  %v749 = vld [vmem:[%s743 + $0x28] sm:$0xff]
  %v750 = vld [vmem:[%s743 + $0x30] sm:$0xff]
  %v751 = vld [vmem:[%s743 + $0x38] sm:$0xff]
  %v752 = vld [vmem:[%s743 + $0x40] sm:$0xff]
  %v753 = vld [vmem:[%s743 + $0x48] sm:$0xff]
  %v754 = vld [vmem:[%s743 + $0x50] sm:$0xff]
  %v755 = vld [vmem:[%s743 + $0x58] sm:$0xff]
  %v756 = vld [vmem:[%s743 + $0x60] sm:$0xff]
  %v757 = vld [vmem:[%s743 + $0x68] sm:$0xff]
  %v758 = vld [vmem:[%s743 + $0x70] sm:$0xff]
  %v759 = vld [vmem:[%s743 + $0x78] sm:$0xff]
  %s760 = scalar_lea.vmem %s6, 1
  %v761 = vld [vmem:[%s760] sm:$0x1]
  %762 = vmatprep.subr.mxu0 0.0
  %763 = vmatpush1.msra.mxu0 %v727
  %764 = vmatprep.subr.mxu0 0.0
  %765 = vmatpush1.msra.mxu0 %v728
  %766 = vmatprep.subr.mxu0 0.0
  %767 = vmatpush1.msra.mxu0 %v729
  %768 = vmatprep.subr.mxu0 0.0
  %769 = vmatpush1.msra.mxu0 %v730
  %770 = vmatprep.subr.mxu0 0.0
  %771 = vmatpush1.msra.mxu0 %v731
  %772 = vmatprep.subr.mxu0 0.0
  %773 = vmatpush1.msra.mxu0 %v732
  %774 = vmatprep.subr.mxu0 0.0
  %775 = vmatpush1.msra.mxu0 %v733
  %776 = vmatprep.subr.mxu0 0.0
  %777 = vmatpush1.msra.mxu0 %v734
  %778 = vmatprep.subr.mxu0 0.0
  %779 = vmatpush1.msra.mxu0 %v735
  %780 = vmatprep.subr.mxu0 0.0
  %781 = vmatpush1.msra.mxu0 %v736
  %782 = vmatprep.subr.mxu0 0.0
  %783 = vmatpush1.msra.mxu0 %v737
  %784 = vmatprep.subr.mxu0 0.0
  %785 = vmatpush1.msra.mxu0 %v738
  %786 = vmatprep.subr.mxu0 0.0
  %787 = vmatpush1.msra.mxu0 %v739
  %788 = vmatprep.subr.mxu0 0.0
  %789 = vmatpush1.msra.mxu0 %v740
  %790 = vmatprep.subr.mxu0 0.0
  %791 = vmatpush1.msra.mxu0 %v741
  %792 = vmatprep.subr.mxu0 0.0
  %793 = vmatpush1.msra.mxu0 %v742
  %794 = vmatprep.subr.mxu0 0.0
  %795 = vmatpush1.msra.mxu0 0.0
  %796 = vmatprep.subr.mxu0 0.0
  %797 = vmatpush1.msra.mxu0 0.0
  %798 = vmatprep.subr.mxu0 0.0
  %799 = vmatpush1.msra.mxu0 0.0
  %800 = vmatprep.subr.mxu0 0.0
  %801 = vmatpush1.msra.mxu0 0.0
  %802 = vmatprep.subr.mxu0 0.0
  %803 = vmatpush1.msra.mxu0 0.0
  %804 = vmatprep.subr.mxu0 0.0
  %805 = vmatpush1.msra.mxu0 0.0
  %806 = vmatprep.subr.mxu0 0.0
  %807 = vmatpush1.msra.mxu0 0.0
  %808 = vmatprep.subr.mxu0 0.0
  %809 = vmatpush1.msra.mxu0 0.0
  %810 = vmatprep.subr.mxu0 0.0
  %811 = vmatpush1.msra.mxu0 0.0
  %812 = vmatprep.subr.mxu0 0.0
  %813 = vmatpush1.msra.mxu0 0.0
  %814 = vmatprep.subr.mxu0 0.0
  %815 = vmatpush1.msra.mxu0 0.0
  %816 = vmatprep.subr.mxu0 0.0
  %817 = vmatpush1.msra.mxu0 0.0
  %818 = vmatprep.subr.mxu0 0.0
  %819 = vmatpush1.msra.mxu0 0.0
  %820 = vmatprep.subr.mxu0 0.0
  %821 = vmatpush1.msra.mxu0 0.0
  %822 = vmatprep.subr.mxu0 0.0
  %823 = vmatpush1.msra.mxu0 0.0
  %824 = vmatprep.subr.mxu0 0.0
  %825 = vmatpush1.msra.mxu0 0.0
  %826 = vmatprep.mubr.f32.mxu0 0.0
  %827 = vmatmul.mubr.f32.gmra.mrb[0].mxu0 %v725
  %v828 = vpop.f32.mrb[0].mxu0
  %v829 = vadd.f32 0.0, %v828
  %v830 = vpop.f32.mrb[0].mxu0
  %831 = vmatprep.mubr.f32.mxu0 0.0
  %832 = vmatmul.mubr.f32.gmra.mrb[0].mxu0 %v726
  %v833 = vpop.f32.mrb[0].mxu0
  %v834 = vadd.f32 0.0, %v833
  %v835 = vpop.f32.mrb[0].mxu0
  %836 = vdwg.mxu0
  %837 = vmatprep.subr.mxu0 0.0
  %838 = vmatpush1.msra.mxu0 %v744
  %839 = vmatprep.subr.mxu0 0.0
  %840 = vmatpush1.msra.mxu0 %v745
  %841 = vmatprep.subr.mxu0 0.0
  %842 = vmatpush1.msra.mxu0 %v746
  %843 = vmatprep.subr.mxu0 0.0
  %844 = vmatpush1.msra.mxu0 %v747
  %845 = vmatprep.subr.mxu0 0.0
  %846 = vmatpush1.msra.mxu0 %v748
  %847 = vmatprep.subr.mxu0 0.0
  %848 = vmatpush1.msra.mxu0 %v749
  %849 = vmatprep.subr.mxu0 0.0
  %850 = vmatpush1.msra.mxu0 %v750
  %851 = vmatprep.subr.mxu0 0.0
  %852 = vmatpush1.msra.mxu0 %v751
  %853 = vmatprep.subr.mxu0 0.0
  %854 = vmatpush1.msra.mxu0 %v752
  %855 = vmatprep.subr.mxu0 0.0
  %856 = vmatpush1.msra.mxu0 %v753
  %857 = vmatprep.subr.mxu0 0.0
  %858 = vmatpush1.msra.mxu0 %v754
  %859 = vmatprep.subr.mxu0 0.0
  %860 = vmatpush1.msra.mxu0 %v755
  %861 = vmatprep.subr.mxu0 0.0
  %862 = vmatpush1.msra.mxu0 %v756
  %863 = vmatprep.subr.mxu0 0.0
  %864 = vmatpush1.msra.mxu0 %v757
  %865 = vmatprep.subr.mxu0 0.0
  %866 = vmatpush1.msra.mxu0 %v758
  %867 = vmatprep.subr.mxu0 0.0
  %868 = vmatpush1.msra.mxu0 %v759
  %869 = vmatprep.subr.mxu0 0.0
  %870 = vmatpush1.msra.mxu0 0.0
  %871 = vmatprep.subr.mxu0 0.0
  %872 = vmatpush1.msra.mxu0 0.0
  %873 = vmatprep.subr.mxu0 0.0
  %874 = vmatpush1.msra.mxu0 0.0
  %875 = vmatprep.subr.mxu0 0.0
  %876 = vmatpush1.msra.mxu0 0.0
  %877 = vmatprep.subr.mxu0 0.0
  %878 = vmatpush1.msra.mxu0 0.0
  %879 = vmatprep.subr.mxu0 0.0
  %880 = vmatpush1.msra.mxu0 0.0
  %881 = vmatprep.subr.mxu0 0.0
  %882 = vmatpush1.msra.mxu0 0.0
  %883 = vmatprep.subr.mxu0 0.0
  %884 = vmatpush1.msra.mxu0 0.0
  %885 = vmatprep.subr.mxu0 0.0
  %886 = vmatpush1.msra.mxu0 0.0
  %887 = vmatprep.subr.mxu0 0.0
  %888 = vmatpush1.msra.mxu0 0.0
  %889 = vmatprep.subr.mxu0 0.0
  %890 = vmatpush1.msra.mxu0 0.0
  %891 = vmatprep.subr.mxu0 0.0
  %892 = vmatpush1.msra.mxu0 0.0
  %893 = vmatprep.subr.mxu0 0.0
  %894 = vmatpush1.msra.mxu0 0.0
  %895 = vmatprep.subr.mxu0 0.0
  %896 = vmatpush1.msra.mxu0 0.0
  %897 = vmatprep.subr.mxu0 0.0
  %898 = vmatpush1.msra.mxu0 0.0
  %899 = vmatprep.subr.mxu0 0.0
  %900 = vmatpush1.msra.mxu0 0.0
  %901 = vmatprep.mubr.f32.mxu0 0.0
  %902 = vmatmul.mubr.f32.gmra.mrb[0].mxu0 %v829
  %v903 = vpop.f32.mrb[0].mxu0
  %v904 = vadd.f32 0.0, %v903
  %v905 = vpop.f32.mrb[0].mxu0
  %906 = vmatprep.mubr.f32.mxu0 0.0
  %907 = vmatmul.mubr.f32.gmra.mrb[0].mxu0 %v834
  %v908 = vpop.f32.mrb[0].mxu0
  %v909 = vadd.f32 0.0, %v908
  %v910 = vpop.f32.mrb[0].mxu0
  %911 = vdwg.mxu0
  %912 = vxpose.xlu0.b32.start [1/16] %v904, 128
  %913 = vxpose.xlu0.b32.cont [2/16] %v909, 128
  %914 = vxpose.xlu0.b32.cont [3/16] 0.0, 128
  %915 = vxpose.xlu0.b32.cont [4/16] 0.0, 128
  %916 = vxpose.xlu0.b32.cont [5/16] 0.0, 128
  %917 = vxpose.xlu0.b32.cont [6/16] 0.0, 128
  %918 = vxpose.xlu0.b32.cont [7/16] 0.0, 128
  %919 = vxpose.xlu0.b32.cont [8/16] 0.0, 128
  %920 = vxpose.xlu0.b32.cont [9/16] 0.0, 128
  %921 = vxpose.xlu0.b32.cont [10/16] 0.0, 128
  %922 = vxpose.xlu0.b32.cont [11/16] 0.0, 128
  %923 = vxpose.xlu0.b32.cont [12/16] 0.0, 128
  %924 = vxpose.xlu0.b32.cont [13/16] 0.0, 128
  %925 = vxpose.xlu0.b32.cont [14/16] 0.0, 128
  %926 = vxpose.xlu0.b32.cont [15/16] 0.0, 128
  %927 = vxpose.xlu0.b32.end [16/16] 0.0, 128
  %v928 = vpop.trf.xlu0
  %v929 = vpop.trf.xlu0
  %v930 = vpop.trf.xlu0
  %v931 = vpop.trf.xlu0
  %v932 = vpop.trf.xlu0
  %v933 = vpop.trf.xlu0
  %v934 = vpop.trf.xlu0
  %v935 = vpop.trf.xlu0
  %v936 = vpop.trf.xlu0
  %v937 = vpop.trf.xlu0
  %v938 = vpop.trf.xlu0
  %v939 = vpop.trf.xlu0
  %v940 = vpop.trf.xlu0
  %v941 = vpop.trf.xlu0
  %v942 = vpop.trf.xlu0
  %v943 = vpop.trf.xlu0
  %945 = vset.pattern.permute.xlu0 4
  %946 = vperm.xlu0 %945, %v904
  %v947 = vpop.permute.xlu0 %946
  %950 = vset.pattern.permute.xlu0 4
  %951 = vperm.xlu0 %950, %v909
  %v952 = vpop.permute.xlu0 %951
  %v954 = vlaneseq
  %v955 = vshrl.u32 %v954, 7
  %v956 = vsub.s32 0, %v955
  %v957 = vrot.slane %v928, %v956
  %v958 = vadd.f32 %v947, %v957
  %v959 = vadd.f32 %v952, %v957
  %vm960 = vcmp.gt.f32.partialorder %v958, 0.0
  %vm961 = vcmp.gt.f32.partialorder %v959, 0.0
  %v962 = vmul.f32 %v958, 0.2
  %v963 = vmul.f32 %v959, 0.2
  %v964 = vsel %vm960, %v958, %v962
  %v965 = vsel %vm961, %v959, %v963
  %v966 = vadd.f32 %v964, %v44
  %v967 = vadd.f32 %v965, %v45
  %v968 = vsel %vm283, %v966, -inf
  %969 = vmax.xlane.f32.xlu0 %v968
  %v970 = vpop.xlane.xlu0 %969
  %v971 = vsel %vm283, %v967, -inf
  %972 = vmax.xlane.f32.xlu0 %v971
  %v973 = vpop.xlane.xlu0 %972
  %v974 = vsub.f32 %v966, %v970
  %v975 = vsub.f32 %v967, %v973
  %v976 = vmul.f32 %v974, 1.442695
  %v977 = vpow.pop %v976
  %v978 = vmul.f32 %v975, 1.442695
  %v979 = vpow.pop %v978
  %v980 = vsel %vm283, %v977, 0.0
  %981 = vadd.xlane.f32.xlu0 %v980
  %v982 = vpop.xlane.xlu0 %981
  %v983 = vsel %vm283, %v979, 0.0
  %984 = vadd.xlane.f32.xlu0 %v983
  %v985 = vpop.xlane.xlu0 %984
  %v986 = vrcp.pop %v982
  %v987 = vmul.f32 %v977, %v986
  %v988 = vrcp.pop %v985
  %v989 = vmul.f32 %v979, %v988
  %990 = vrot.lane.b32.xlu0 %v904, 127
  %v991 = vpop.permute.xlu0 %990
  %992 = vrot.lane.b32.xlu0 %v909, 127
  %v993 = vpop.permute.xlu0 %992
  %996 = vxpose.xlu0.b32.start [1/16] %v991, 128
  %997 = vxpose.xlu0.b32.cont [2/16] %v993, 128
  %998 = vxpose.xlu0.b32.cont [3/16] 0.0, 128
  %999 = vxpose.xlu0.b32.cont [4/16] 0.0, 128
  %1000 = vxpose.xlu0.b32.cont [5/16] 0.0, 128
  %1001 = vxpose.xlu0.b32.cont [6/16] 0.0, 128
  %1002 = vxpose.xlu0.b32.cont [7/16] 0.0, 128
  %1003 = vxpose.xlu0.b32.cont [8/16] 0.0, 128
  %1004 = vxpose.xlu0.b32.cont [9/16] 0.0, 128
  %1005 = vxpose.xlu0.b32.cont [10/16] 0.0, 128
  %1006 = vxpose.xlu0.b32.cont [11/16] 0.0, 128
  %1007 = vxpose.xlu0.b32.cont [12/16] 0.0, 128
  %1008 = vxpose.xlu0.b32.cont [13/16] 0.0, 128
  %1009 = vxpose.xlu0.b32.cont [14/16] 0.0, 128
  %1010 = vxpose.xlu0.b32.cont [15/16] 0.0, 128
  %1011 = vxpose.xlu0.b32.end [16/16] 0.0, 128
  %v1012 = vpop.trf.xlu0
  %v1013 = vpop.trf.xlu0
  %v1014 = vpop.trf.xlu0
  %v1015 = vpop.trf.xlu0
  %v1016 = vpop.trf.xlu0
  %v1017 = vpop.trf.xlu0
  %v1018 = vpop.trf.xlu0
  %v1019 = vpop.trf.xlu0
  %v1020 = vpop.trf.xlu0
  %v1021 = vpop.trf.xlu0
  %v1022 = vpop.trf.xlu0
  %v1023 = vpop.trf.xlu0
  %v1024 = vpop.trf.xlu0
  %v1025 = vpop.trf.xlu0
  %v1026 = vpop.trf.xlu0
  %v1027 = vpop.trf.xlu0
  %1028 = vset.pattern.permute.xlu0 5
  %1029 = vperm.xlu0 %1028, %v904
  %v1030 = vpop.permute.xlu0 %1029
  %1032 = vset.pattern.permute.xlu0 5
  %1033 = vperm.xlu0 %1032, %v909
  %v1034 = vpop.permute.xlu0 %1033
  %v1036 = vlaneseq
  %v1037 = vshrl.u32 %v1036, 7
  %v1038 = vsub.s32 0, %v1037
  %v1039 = vrot.slane %v1012, %v1038
  %v1040 = vadd.f32 %v1030, %v1039
  %v1041 = vadd.f32 %v1034, %v1039
  %vm1042 = vcmp.gt.f32.partialorder %v1040, 0.0
  %vm1043 = vcmp.gt.f32.partialorder %v1041, 0.0
  %v1044 = vmul.f32 %v1040, 0.2
  %v1045 = vmul.f32 %v1041, 0.2
  %v1046 = vsel %vm1042, %v1040, %v1044
  %v1047 = vsel %vm1043, %v1041, %v1045
  %v1048 = vadd.f32 %v1046, %v44
  %v1049 = vadd.f32 %v1047, %v45
  %v1050 = vsel %vm283, %v1048, -inf
  %1051 = vmax.xlane.f32.xlu0 %v1050
  %v1052 = vpop.xlane.xlu0 %1051
  %v1053 = vsel %vm283, %v1049, -inf
  %1054 = vmax.xlane.f32.xlu0 %v1053
  %v1055 = vpop.xlane.xlu0 %1054
  %v1056 = vsub.f32 %v1048, %v1052
  %v1057 = vsub.f32 %v1049, %v1055
  %v1058 = vmul.f32 %v1056, 1.442695
  %v1059 = vpow.pop %v1058
  %v1060 = vmul.f32 %v1057, 1.442695
  %v1061 = vpow.pop %v1060
  %v1062 = vsel %vm283, %v1059, 0.0
  %1063 = vadd.xlane.f32.xlu0 %v1062
  %v1064 = vpop.xlane.xlu0 %1063
  %v1065 = vsel %vm283, %v1061, 0.0
  %1066 = vadd.xlane.f32.xlu0 %v1065
  %v1067 = vpop.xlane.xlu0 %1066
  %v1068 = vrcp.pop %v1064
  %v1069 = vmul.f32 %v1059, %v1068
  %v1070 = vrcp.pop %v1067
  %v1071 = vmul.f32 %v1061, %v1070
  %1072 = vrot.lane.b32.xlu0 %v904, 126
  %v1073 = vpop.permute.xlu0 %1072
  %1074 = vrot.lane.b32.xlu0 %v909, 126
  %v1075 = vpop.permute.xlu0 %1074
  %1078 = vxpose.xlu0.b32.start [1/16] %v1073, 128
  %1079 = vxpose.xlu0.b32.cont [2/16] %v1075, 128
  %1080 = vxpose.xlu0.b32.cont [3/16] 0.0, 128
  %1081 = vxpose.xlu0.b32.cont [4/16] 0.0, 128
  %1082 = vxpose.xlu0.b32.cont [5/16] 0.0, 128
  %1083 = vxpose.xlu0.b32.cont [6/16] 0.0, 128
  %1084 = vxpose.xlu0.b32.cont [7/16] 0.0, 128
  %1085 = vxpose.xlu0.b32.cont [8/16] 0.0, 128
  %1086 = vxpose.xlu0.b32.cont [9/16] 0.0, 128
  %1087 = vxpose.xlu0.b32.cont [10/16] 0.0, 128
  %1088 = vxpose.xlu0.b32.cont [11/16] 0.0, 128
  %1089 = vxpose.xlu0.b32.cont [12/16] 0.0, 128
  %1090 = vxpose.xlu0.b32.cont [13/16] 0.0, 128
  %1091 = vxpose.xlu0.b32.cont [14/16] 0.0, 128
  %1092 = vxpose.xlu0.b32.cont [15/16] 0.0, 128
  %1093 = vxpose.xlu0.b32.end [16/16] 0.0, 128
  %v1094 = vpop.trf.xlu0
  %v1095 = vpop.trf.xlu0
  %v1096 = vpop.trf.xlu0
  %v1097 = vpop.trf.xlu0
  %v1098 = vpop.trf.xlu0
  %v1099 = vpop.trf.xlu0
  %v1100 = vpop.trf.xlu0
  %v1101 = vpop.trf.xlu0
  %v1102 = vpop.trf.xlu0
  %v1103 = vpop.trf.xlu0
  %v1104 = vpop.trf.xlu0
  %v1105 = vpop.trf.xlu0
  %v1106 = vpop.trf.xlu0
  %v1107 = vpop.trf.xlu0
  %v1108 = vpop.trf.xlu0
  %v1109 = vpop.trf.xlu0
  %1110 = vset.pattern.permute.xlu0 6
  %1111 = vperm.xlu0 %1110, %v904
  %v1112 = vpop.permute.xlu0 %1111
  %1114 = vset.pattern.permute.xlu0 6
  %1115 = vperm.xlu0 %1114, %v909
  %v1116 = vpop.permute.xlu0 %1115
  %v1118 = vlaneseq
  %v1119 = vshrl.u32 %v1118, 7
  %v1120 = vsub.s32 0, %v1119
  %v1121 = vrot.slane %v1094, %v1120
  %v1122 = vadd.f32 %v1112, %v1121
  %v1123 = vadd.f32 %v1116, %v1121
  %vm1124 = vcmp.gt.f32.partialorder %v1122, 0.0
  %vm1125 = vcmp.gt.f32.partialorder %v1123, 0.0
  %v1126 = vmul.f32 %v1122, 0.2
  %v1127 = vmul.f32 %v1123, 0.2
  %v1128 = vsel %vm1124, %v1122, %v1126
  %v1129 = vsel %vm1125, %v1123, %v1127
  %v1130 = vadd.f32 %v1128, %v44
  %v1131 = vadd.f32 %v1129, %v45
  %v1132 = vsel %vm283, %v1130, -inf
  %1133 = vmax.xlane.f32.xlu0 %v1132
  %v1134 = vpop.xlane.xlu0 %1133
  %v1135 = vsel %vm283, %v1131, -inf
  %1136 = vmax.xlane.f32.xlu0 %v1135
  %v1137 = vpop.xlane.xlu0 %1136
  %v1138 = vsub.f32 %v1130, %v1134
  %v1139 = vsub.f32 %v1131, %v1137
  %v1140 = vmul.f32 %v1138, 1.442695
  %v1141 = vpow.pop %v1140
  %v1142 = vmul.f32 %v1139, 1.442695
  %v1143 = vpow.pop %v1142
  %v1144 = vsel %vm283, %v1141, 0.0
  %1145 = vadd.xlane.f32.xlu0 %v1144
  %v1146 = vpop.xlane.xlu0 %1145
  %v1147 = vsel %vm283, %v1143, 0.0
  %1148 = vadd.xlane.f32.xlu0 %v1147
  %v1149 = vpop.xlane.xlu0 %1148
  %v1150 = vrcp.pop %v1146
  %v1151 = vmul.f32 %v1141, %v1150
  %v1152 = vrcp.pop %v1149
  %v1153 = vmul.f32 %v1143, %v1152
  %1154 = vrot.lane.b32.xlu0 %v904, 125
  %v1155 = vpop.permute.xlu0 %1154
  %1156 = vrot.lane.b32.xlu0 %v909, 125
  %v1157 = vpop.permute.xlu0 %1156
  %1160 = vxpose.xlu0.b32.start [1/16] %v1155, 128
  %1161 = vxpose.xlu0.b32.cont [2/16] %v1157, 128
  %1162 = vxpose.xlu0.b32.cont [3/16] 0.0, 128
  %1163 = vxpose.xlu0.b32.cont [4/16] 0.0, 128
  %1164 = vxpose.xlu0.b32.cont [5/16] 0.0, 128
  %1165 = vxpose.xlu0.b32.cont [6/16] 0.0, 128
  %1166 = vxpose.xlu0.b32.cont [7/16] 0.0, 128
  %1167 = vxpose.xlu0.b32.cont [8/16] 0.0, 128
  %1168 = vxpose.xlu0.b32.cont [9/16] 0.0, 128
  %1169 = vxpose.xlu0.b32.cont [10/16] 0.0, 128
  %1170 = vxpose.xlu0.b32.cont [11/16] 0.0, 128
  %1171 = vxpose.xlu0.b32.cont [12/16] 0.0, 128
  %1172 = vxpose.xlu0.b32.cont [13/16] 0.0, 128
  %1173 = vxpose.xlu0.b32.cont [14/16] 0.0, 128
  %1174 = vxpose.xlu0.b32.cont [15/16] 0.0, 128
  %1175 = vxpose.xlu0.b32.end [16/16] 0.0, 128
  %v1176 = vpop.trf.xlu0
  %v1177 = vpop.trf.xlu0
  %v1178 = vpop.trf.xlu0
  %v1179 = vpop.trf.xlu0
  %v1180 = vpop.trf.xlu0
  %v1181 = vpop.trf.xlu0
  %v1182 = vpop.trf.xlu0
  %v1183 = vpop.trf.xlu0
  %v1184 = vpop.trf.xlu0
  %v1185 = vpop.trf.xlu0
  %v1186 = vpop.trf.xlu0
  %v1187 = vpop.trf.xlu0
  %v1188 = vpop.trf.xlu0
  %v1189 = vpop.trf.xlu0
  %v1190 = vpop.trf.xlu0
  %v1191 = vpop.trf.xlu0
  %1192 = vset.pattern.permute.xlu0 7
  %1193 = vperm.xlu0 %1192, %v904
  %v1194 = vpop.permute.xlu0 %1193
  %1196 = vset.pattern.permute.xlu0 7
  %1197 = vperm.xlu0 %1196, %v909
  %v1198 = vpop.permute.xlu0 %1197
  %v1200 = vlaneseq
  %v1201 = vshrl.u32 %v1200, 7
  %v1202 = vsub.s32 0, %v1201
  %v1203 = vrot.slane %v1176, %v1202
  %v1204 = vadd.f32 %v1194, %v1203
  %v1205 = vadd.f32 %v1198, %v1203
  %vm1206 = vcmp.gt.f32.partialorder %v1204, 0.0
  %vm1207 = vcmp.gt.f32.partialorder %v1205, 0.0
  %v1208 = vmul.f32 %v1204, 0.2
  %v1209 = vmul.f32 %v1205, 0.2
  %v1210 = vsel %vm1206, %v1204, %v1208
  %v1211 = vsel %vm1207, %v1205, %v1209
  %v1212 = vadd.f32 %v1210, %v44
  %v1213 = vadd.f32 %v1211, %v45
  %v1214 = vsel %vm283, %v1212, -inf
  %1215 = vmax.xlane.f32.xlu0 %v1214
  %v1216 = vpop.xlane.xlu0 %1215
  %v1217 = vsel %vm283, %v1213, -inf
  %1218 = vmax.xlane.f32.xlu0 %v1217
  %v1219 = vpop.xlane.xlu0 %1218
  %v1220 = vsub.f32 %v1212, %v1216
  %v1221 = vsub.f32 %v1213, %v1219
  %v1222 = vmul.f32 %v1220, 1.442695
  %v1223 = vpow.pop %v1222
  %v1224 = vmul.f32 %v1221, 1.442695
  %v1225 = vpow.pop %v1224
  %v1226 = vsel %vm283, %v1223, 0.0
  %1227 = vadd.xlane.f32.xlu0 %v1226
  %v1228 = vpop.xlane.xlu0 %1227
  %v1229 = vsel %vm283, %v1225, 0.0
  %1230 = vadd.xlane.f32.xlu0 %v1229
  %v1231 = vpop.xlane.xlu0 %1230
  %v1232 = vrcp.pop %v1228
  %v1233 = vmul.f32 %v1223, %v1232
  %v1234 = vrcp.pop %v1231
  %v1235 = vmul.f32 %v1225, %v1234
  %v1237 = vsel %vm283, %v987, 0
  %v1240 = vsel %vm283, %v989, 0
  %v1243 = vsel %vm283, %v1069, 0
  %v1246 = vsel %vm283, %v1071, 0
  %v1249 = vsel %vm283, %v1151, 0
  %v1252 = vsel %vm283, %v1153, 0
  %v1255 = vsel %vm283, %v1233, 0
  %v1258 = vsel %vm283, %v1235, 0
  %1260 = vmatprep.subr.mxu0 0.0
  %1261 = vmatpush1.msra.mxu0 %v829
  %1262 = vmatprep.subr.mxu0 0.0
  %1263 = vmatpush1.msra.mxu0 %v834
  %1264 = vmatprep.subr.mxu0 0.0
  %1265 = vmatpush1.msra.mxu0 0.0
  %1266 = vmatprep.subr.mxu0 0.0
  %1267 = vmatpush1.msra.mxu0 0.0
  %1268 = vmatprep.subr.mxu0 0.0
  %1269 = vmatpush1.msra.mxu0 0.0
  %1270 = vmatprep.subr.mxu0 0.0
  %1271 = vmatpush1.msra.mxu0 0.0
  %1272 = vmatprep.subr.mxu0 0.0
  %1273 = vmatpush1.msra.mxu0 0.0
  %1274 = vmatprep.subr.mxu0 0.0
  %1275 = vmatpush1.msra.mxu0 0.0
  %1276 = vmatprep.subr.mxu0 0.0
  %1277 = vmatpush1.msra.mxu0 0.0
  %1278 = vmatprep.subr.mxu0 0.0
  %1279 = vmatpush1.msra.mxu0 0.0
  %1280 = vmatprep.subr.mxu0 0.0
  %1281 = vmatpush1.msra.mxu0 0.0
  %1282 = vmatprep.subr.mxu0 0.0
  %1283 = vmatpush1.msra.mxu0 0.0
  %1284 = vmatprep.subr.mxu0 0.0
  %1285 = vmatpush1.msra.mxu0 0.0
  %1286 = vmatprep.subr.mxu0 0.0
  %1287 = vmatpush1.msra.mxu0 0.0
  %1288 = vmatprep.subr.mxu0 0.0
  %1289 = vmatpush1.msra.mxu0 0.0
  %1290 = vmatprep.subr.mxu0 0.0
  %1291 = vmatpush1.msra.mxu0 0.0
  %1292 = vmatprep.subr.mxu0 0.0
  %1293 = vmatpush1.msra.mxu0 0.0
  %1294 = vmatprep.subr.mxu0 0.0
  %1295 = vmatpush1.msra.mxu0 0.0
  %1296 = vmatprep.subr.mxu0 0.0
  %1297 = vmatpush1.msra.mxu0 0.0
  %1298 = vmatprep.subr.mxu0 0.0
  %1299 = vmatpush1.msra.mxu0 0.0
  %1300 = vmatprep.subr.mxu0 0.0
  %1301 = vmatpush1.msra.mxu0 0.0
  %1302 = vmatprep.subr.mxu0 0.0
  %1303 = vmatpush1.msra.mxu0 0.0
  %1304 = vmatprep.subr.mxu0 0.0
  %1305 = vmatpush1.msra.mxu0 0.0
  %1306 = vmatprep.subr.mxu0 0.0
  %1307 = vmatpush1.msra.mxu0 0.0
  %1308 = vmatprep.subr.mxu0 0.0
  %1309 = vmatpush1.msra.mxu0 0.0
  %1310 = vmatprep.subr.mxu0 0.0
  %1311 = vmatpush1.msra.mxu0 0.0
  %1312 = vmatprep.subr.mxu0 0.0
  %1313 = vmatpush1.msra.mxu0 0.0
  %1314 = vmatprep.subr.mxu0 0.0
  %1315 = vmatpush1.msra.mxu0 0.0
  %1316 = vmatprep.subr.mxu0 0.0
  %1317 = vmatpush1.msra.mxu0 0.0
  %1318 = vmatprep.subr.mxu0 0.0
  %1319 = vmatpush1.msra.mxu0 0.0
  %1320 = vmatprep.subr.mxu0 0.0
  %1321 = vmatpush1.msra.mxu0 0.0
  %1322 = vmatprep.subr.mxu0 0.0
  %1323 = vmatpush1.msra.mxu0 0.0
  %1324 = vmatprep.mubr.f32.mxu0 0.0
  %1325 = vmatmul.mubr.f32.gmra.mrb[0].mxu0 %v1237
  %v1326 = vpop.f32.mrb[0].mxu0
  %v1327 = vadd.f32 0.0, %v1326
  %v1328 = vpop.f32.mrb[0].mxu0
  %1329 = vmatprep.mubr.f32.mxu0 0.0
  %1330 = vmatmul.mubr.f32.gmra.mrb[0].mxu0 %v1240
  %v1331 = vpop.f32.mrb[0].mxu0
  %v1332 = vadd.f32 0.0, %v1331
  %v1333 = vpop.f32.mrb[0].mxu0
  %1334 = vmatprep.mubr.f32.mxu0 0.0
  %1335 = vmatmul.mubr.f32.gmra.mrb[0].mxu0 %v1243
  %v1336 = vpop.f32.mrb[0].mxu0
  %v1337 = vadd.f32 0.0, %v1336
  %v1338 = vpop.f32.mrb[0].mxu0
  %1339 = vmatprep.mubr.f32.mxu0 0.0
  %1340 = vmatmul.mubr.f32.gmra.mrb[0].mxu0 %v1246
  %v1341 = vpop.f32.mrb[0].mxu0
  %v1342 = vadd.f32 0.0, %v1341
  %v1343 = vpop.f32.mrb[0].mxu0
  %1344 = vmatprep.mubr.f32.mxu0 0.0
  %1345 = vmatmul.mubr.f32.gmra.mrb[0].mxu0 %v1249
  %v1346 = vpop.f32.mrb[0].mxu0
  %v1347 = vadd.f32 0.0, %v1346
  %v1348 = vpop.f32.mrb[0].mxu0
  %1349 = vmatprep.mubr.f32.mxu0 0.0
  %1350 = vmatmul.mubr.f32.gmra.mrb[0].mxu0 %v1252
  %v1351 = vpop.f32.mrb[0].mxu0
  %v1352 = vadd.f32 0.0, %v1351
  %v1353 = vpop.f32.mrb[0].mxu0
  %1354 = vmatprep.mubr.f32.mxu0 0.0
  %1355 = vmatmul.mubr.f32.gmra.mrb[0].mxu0 %v1255
  %v1356 = vpop.f32.mrb[0].mxu0
  %v1357 = vadd.f32 0.0, %v1356
  %v1358 = vpop.f32.mrb[0].mxu0
  %1359 = vmatprep.mubr.f32.mxu0 0.0
  %1360 = vmatmul.mubr.f32.gmra.mrb[0].mxu0 %v1258
  %v1361 = vpop.f32.mrb[0].mxu0
  %v1362 = vadd.f32 0.0, %v1361
  %v1363 = vpop.f32.mrb[0].mxu0
  %1364 = vdwg.mxu0
  %v1365 = vmul.f32 %v1327, %v685
  %v1366 = vmul.f32 %v1332, %v685
  %v1368 = vlaneseq
  %v1369 = vshrl.u32 %v1368, 7
  %v1370 = vsub.s32 0, %v1369
  %v1371 = vrot.slane %v761, %v1370
  %v1373 = vadd.f32 %v1371, %v1365
  %v1374 = vadd.f32 %v1371, %v1366
  %v1375 = vmul.f32 %v1337, %v701
  %v1376 = vmul.f32 %v1342, %v701
  %v1377 = vadd.f32 %v1373, %v1375
  %v1378 = vadd.f32 %v1374, %v1376
  %v1379 = vmul.f32 %v1347, %v711
  %v1380 = vmul.f32 %v1352, %v711
  %v1381 = vadd.f32 %v1377, %v1379
  %v1382 = vadd.f32 %v1378, %v1380
  %v1383 = vmul.f32 %v1357, %v721
  %v1384 = vmul.f32 %v1362, %v721
  %v1385 = vadd.f32 %v1381, %v1383
  %v1386 = vadd.f32 %v1382, %v1384
  %s1387 = scalar_lea.vmem %s4, 128
  %v1388 = vld [vmem:[%s1387] sm:$0xff]
  %v1389 = vld [vmem:[%s1387 + $0x8] sm:$0xff]
  %v1390 = vld [vmem:[%s1387 + $0x10] sm:$0xff]
  %v1391 = vld [vmem:[%s1387 + $0x18] sm:$0xff]
  %v1392 = vld [vmem:[%s1387 + $0x20] sm:$0xff]
  %v1393 = vld [vmem:[%s1387 + $0x28] sm:$0xff]
  %v1394 = vld [vmem:[%s1387 + $0x30] sm:$0xff]
  %v1395 = vld [vmem:[%s1387 + $0x38] sm:$0xff]
  %v1396 = vld [vmem:[%s1387 + $0x40] sm:$0xff]
  %v1397 = vld [vmem:[%s1387 + $0x48] sm:$0xff]
  %v1398 = vld [vmem:[%s1387 + $0x50] sm:$0xff]
  %v1399 = vld [vmem:[%s1387 + $0x58] sm:$0xff]
  %v1400 = vld [vmem:[%s1387 + $0x60] sm:$0xff]
  %v1401 = vld [vmem:[%s1387 + $0x68] sm:$0xff]
  %v1402 = vld [vmem:[%s1387 + $0x70] sm:$0xff]
  %v1403 = vld [vmem:[%s1387 + $0x78] sm:$0xff]
  %s1404 = scalar_lea.vmem %s5, 256
  %v1405 = vld [vmem:[%s1404] sm:$0xff]
  %v1406 = vld [vmem:[%s1404 + $0x8] sm:$0xff]
  %v1407 = vld [vmem:[%s1404 + $0x10] sm:$0xff]
  %v1408 = vld [vmem:[%s1404 + $0x18] sm:$0xff]
  %v1409 = vld [vmem:[%s1404 + $0x20] sm:$0xff]
  %v1410 = vld [vmem:[%s1404 + $0x28] sm:$0xff]
  %v1411 = vld [vmem:[%s1404 + $0x30] sm:$0xff]
  %v1412 = vld [vmem:[%s1404 + $0x38] sm:$0xff]
  %v1413 = vld [vmem:[%s1404 + $0x40] sm:$0xff]
  %v1414 = vld [vmem:[%s1404 + $0x48] sm:$0xff]
  %v1415 = vld [vmem:[%s1404 + $0x50] sm:$0xff]
  %v1416 = vld [vmem:[%s1404 + $0x58] sm:$0xff]
  %v1417 = vld [vmem:[%s1404 + $0x60] sm:$0xff]
  %v1418 = vld [vmem:[%s1404 + $0x68] sm:$0xff]
  %v1419 = vld [vmem:[%s1404 + $0x70] sm:$0xff]
  %v1420 = vld [vmem:[%s1404 + $0x78] sm:$0xff]
  %s1421 = scalar_lea.vmem %s6, 2
  %v1422 = vld [vmem:[%s1421] sm:$0x1]
  %1423 = vmatprep.subr.mxu0 0.0
  %1424 = vmatpush1.msra.mxu0 %v1388
  %1425 = vmatprep.subr.mxu0 0.0
  %1426 = vmatpush1.msra.mxu0 %v1389
  %1427 = vmatprep.subr.mxu0 0.0
  %1428 = vmatpush1.msra.mxu0 %v1390
  %1429 = vmatprep.subr.mxu0 0.0
  %1430 = vmatpush1.msra.mxu0 %v1391
  %1431 = vmatprep.subr.mxu0 0.0
  %1432 = vmatpush1.msra.mxu0 %v1392
  %1433 = vmatprep.subr.mxu0 0.0
  %1434 = vmatpush1.msra.mxu0 %v1393
  %1435 = vmatprep.subr.mxu0 0.0
  %1436 = vmatpush1.msra.mxu0 %v1394
  %1437 = vmatprep.subr.mxu0 0.0
  %1438 = vmatpush1.msra.mxu0 %v1395
  %1439 = vmatprep.subr.mxu0 0.0
  %1440 = vmatpush1.msra.mxu0 %v1396
  %1441 = vmatprep.subr.mxu0 0.0
  %1442 = vmatpush1.msra.mxu0 %v1397
  %1443 = vmatprep.subr.mxu0 0.0
  %1444 = vmatpush1.msra.mxu0 %v1398
  %1445 = vmatprep.subr.mxu0 0.0
  %1446 = vmatpush1.msra.mxu0 %v1399
  %1447 = vmatprep.subr.mxu0 0.0
  %1448 = vmatpush1.msra.mxu0 %v1400
  %1449 = vmatprep.subr.mxu0 0.0
  %1450 = vmatpush1.msra.mxu0 %v1401
  %1451 = vmatprep.subr.mxu0 0.0
  %1452 = vmatpush1.msra.mxu0 %v1402
  %1453 = vmatprep.subr.mxu0 0.0
  %1454 = vmatpush1.msra.mxu0 %v1403
  %1455 = vmatprep.subr.mxu0 0.0
  %1456 = vmatpush1.msra.mxu0 0.0
  %1457 = vmatprep.subr.mxu0 0.0
  %1458 = vmatpush1.msra.mxu0 0.0
  %1459 = vmatprep.subr.mxu0 0.0
  %1460 = vmatpush1.msra.mxu0 0.0
  %1461 = vmatprep.subr.mxu0 0.0
  %1462 = vmatpush1.msra.mxu0 0.0
  %1463 = vmatprep.subr.mxu0 0.0
  %1464 = vmatpush1.msra.mxu0 0.0
  %1465 = vmatprep.subr.mxu0 0.0
  %1466 = vmatpush1.msra.mxu0 0.0
  %1467 = vmatprep.subr.mxu0 0.0
  %1468 = vmatpush1.msra.mxu0 0.0
  %1469 = vmatprep.subr.mxu0 0.0
  %1470 = vmatpush1.msra.mxu0 0.0
  %1471 = vmatprep.subr.mxu0 0.0
  %1472 = vmatpush1.msra.mxu0 0.0
  %1473 = vmatprep.subr.mxu0 0.0
  %1474 = vmatpush1.msra.mxu0 0.0
  %1475 = vmatprep.subr.mxu0 0.0
  %1476 = vmatpush1.msra.mxu0 0.0
  %1477 = vmatprep.subr.mxu0 0.0
  %1478 = vmatpush1.msra.mxu0 0.0
  %1479 = vmatprep.subr.mxu0 0.0
  %1480 = vmatpush1.msra.mxu0 0.0
  %1481 = vmatprep.subr.mxu0 0.0
  %1482 = vmatpush1.msra.mxu0 0.0
  %1483 = vmatprep.subr.mxu0 0.0
  %1484 = vmatpush1.msra.mxu0 0.0
  %1485 = vmatprep.subr.mxu0 0.0
  %1486 = vmatpush1.msra.mxu0 0.0
  %1487 = vmatprep.mubr.f32.mxu0 0.0
  %1488 = vmatmul.mubr.f32.gmra.mrb[0].mxu0 %v1385
  %v1489 = vpop.f32.mrb[0].mxu0
  %v1490 = vadd.f32 0.0, %v1489
  %v1491 = vpop.f32.mrb[0].mxu0
  %1492 = vmatprep.mubr.f32.mxu0 0.0
  %1493 = vmatmul.mubr.f32.gmra.mrb[0].mxu0 %v1386
  %v1494 = vpop.f32.mrb[0].mxu0
  %v1495 = vadd.f32 0.0, %v1494
  %v1496 = vpop.f32.mrb[0].mxu0
  %1497 = vdwg.mxu0
  %1498 = vmatprep.subr.mxu0 0.0
  %1499 = vmatpush1.msra.mxu0 %v1405
  %1500 = vmatprep.subr.mxu0 0.0
  %1501 = vmatpush1.msra.mxu0 %v1406
  %1502 = vmatprep.subr.mxu0 0.0
  %1503 = vmatpush1.msra.mxu0 %v1407
  %1504 = vmatprep.subr.mxu0 0.0
  %1505 = vmatpush1.msra.mxu0 %v1408
  %1506 = vmatprep.subr.mxu0 0.0
  %1507 = vmatpush1.msra.mxu0 %v1409
  %1508 = vmatprep.subr.mxu0 0.0
  %1509 = vmatpush1.msra.mxu0 %v1410
  %1510 = vmatprep.subr.mxu0 0.0
  %1511 = vmatpush1.msra.mxu0 %v1411
  %1512 = vmatprep.subr.mxu0 0.0
  %1513 = vmatpush1.msra.mxu0 %v1412
  %1514 = vmatprep.subr.mxu0 0.0
  %1515 = vmatpush1.msra.mxu0 %v1413
  %1516 = vmatprep.subr.mxu0 0.0
  %1517 = vmatpush1.msra.mxu0 %v1414
  %1518 = vmatprep.subr.mxu0 0.0
  %1519 = vmatpush1.msra.mxu0 %v1415
  %1520 = vmatprep.subr.mxu0 0.0
  %1521 = vmatpush1.msra.mxu0 %v1416
  %1522 = vmatprep.subr.mxu0 0.0
  %1523 = vmatpush1.msra.mxu0 %v1417
  %1524 = vmatprep.subr.mxu0 0.0
  %1525 = vmatpush1.msra.mxu0 %v1418
  %1526 = vmatprep.subr.mxu0 0.0
  %1527 = vmatpush1.msra.mxu0 %v1419
  %1528 = vmatprep.subr.mxu0 0.0
  %1529 = vmatpush1.msra.mxu0 %v1420
  %1530 = vmatprep.subr.mxu0 0.0
  %1531 = vmatpush1.msra.mxu0 0.0
  %1532 = vmatprep.subr.mxu0 0.0
  %1533 = vmatpush1.msra.mxu0 0.0
  %1534 = vmatprep.subr.mxu0 0.0
  %1535 = vmatpush1.msra.mxu0 0.0
  %1536 = vmatprep.subr.mxu0 0.0
  %1537 = vmatpush1.msra.mxu0 0.0
  %1538 = vmatprep.subr.mxu0 0.0
  %1539 = vmatpush1.msra.mxu0 0.0
  %1540 = vmatprep.subr.mxu0 0.0
  %1541 = vmatpush1.msra.mxu0 0.0
  %1542 = vmatprep.subr.mxu0 0.0
  %1543 = vmatpush1.msra.mxu0 0.0
  %1544 = vmatprep.subr.mxu0 0.0
  %1545 = vmatpush1.msra.mxu0 0.0
  %1546 = vmatprep.subr.mxu0 0.0
  %1547 = vmatpush1.msra.mxu0 0.0
  %1548 = vmatprep.subr.mxu0 0.0
  %1549 = vmatpush1.msra.mxu0 0.0
  %1550 = vmatprep.subr.mxu0 0.0
  %1551 = vmatpush1.msra.mxu0 0.0
  %1552 = vmatprep.subr.mxu0 0.0
  %1553 = vmatpush1.msra.mxu0 0.0
  %1554 = vmatprep.subr.mxu0 0.0
  %1555 = vmatpush1.msra.mxu0 0.0
  %1556 = vmatprep.subr.mxu0 0.0
  %1557 = vmatpush1.msra.mxu0 0.0
  %1558 = vmatprep.subr.mxu0 0.0
  %1559 = vmatpush1.msra.mxu0 0.0
  %1560 = vmatprep.subr.mxu0 0.0
  %1561 = vmatpush1.msra.mxu0 0.0
  %1562 = vmatprep.mubr.f32.mxu0 0.0
  %1563 = vmatmul.mubr.f32.gmra.mrb[0].mxu0 %v1490
  %v1564 = vpop.f32.mrb[0].mxu0
  %v1565 = vadd.f32 0.0, %v1564
  %v1566 = vpop.f32.mrb[0].mxu0
  %1567 = vmatprep.mubr.f32.mxu0 0.0
  %1568 = vmatmul.mubr.f32.gmra.mrb[0].mxu0 %v1495
  %v1569 = vpop.f32.mrb[0].mxu0
  %v1570 = vadd.f32 0.0, %v1569
  %v1571 = vpop.f32.mrb[0].mxu0
  %1572 = vdwg.mxu0
  %1573 = vxpose.xlu0.b32.start [1/16] %v1565, 128
  %1574 = vxpose.xlu0.b32.cont [2/16] %v1570, 128
  %1575 = vxpose.xlu0.b32.cont [3/16] 0.0, 128
  %1576 = vxpose.xlu0.b32.cont [4/16] 0.0, 128
  %1577 = vxpose.xlu0.b32.cont [5/16] 0.0, 128
  %1578 = vxpose.xlu0.b32.cont [6/16] 0.0, 128
  %1579 = vxpose.xlu0.b32.cont [7/16] 0.0, 128
  %1580 = vxpose.xlu0.b32.cont [8/16] 0.0, 128
  %1581 = vxpose.xlu0.b32.cont [9/16] 0.0, 128
  %1582 = vxpose.xlu0.b32.cont [10/16] 0.0, 128
  %1583 = vxpose.xlu0.b32.cont [11/16] 0.0, 128
  %1584 = vxpose.xlu0.b32.cont [12/16] 0.0, 128
  %1585 = vxpose.xlu0.b32.cont [13/16] 0.0, 128
  %1586 = vxpose.xlu0.b32.cont [14/16] 0.0, 128
  %1587 = vxpose.xlu0.b32.cont [15/16] 0.0, 128
  %1588 = vxpose.xlu0.b32.end [16/16] 0.0, 128
  %v1589 = vpop.trf.xlu0
  %v1590 = vpop.trf.xlu0
  %v1591 = vpop.trf.xlu0
  %v1592 = vpop.trf.xlu0
  %v1593 = vpop.trf.xlu0
  %v1594 = vpop.trf.xlu0
  %v1595 = vpop.trf.xlu0
  %v1596 = vpop.trf.xlu0
  %v1597 = vpop.trf.xlu0
  %v1598 = vpop.trf.xlu0
  %v1599 = vpop.trf.xlu0
  %v1600 = vpop.trf.xlu0
  %v1601 = vpop.trf.xlu0
  %v1602 = vpop.trf.xlu0
  %v1603 = vpop.trf.xlu0
  %v1604 = vpop.trf.xlu0
  %1606 = vset.pattern.permute.xlu0 4
  %1607 = vperm.xlu0 %1606, %v1565
  %v1608 = vpop.permute.xlu0 %1607
  %1611 = vset.pattern.permute.xlu0 4
  %1612 = vperm.xlu0 %1611, %v1570
  %v1613 = vpop.permute.xlu0 %1612
  %v1615 = vlaneseq
  %v1616 = vshrl.u32 %v1615, 7
  %v1617 = vsub.s32 0, %v1616
  %v1618 = vrot.slane %v1589, %v1617
  %v1619 = vadd.f32 %v1608, %v1618
  %v1620 = vadd.f32 %v1613, %v1618
  %vm1621 = vcmp.gt.f32.partialorder %v1619, 0.0
  %vm1622 = vcmp.gt.f32.partialorder %v1620, 0.0
  %v1623 = vmul.f32 %v1619, 0.2
  %v1624 = vmul.f32 %v1620, 0.2
  %v1625 = vsel %vm1621, %v1619, %v1623
  %v1626 = vsel %vm1622, %v1620, %v1624
  %v1627 = vadd.f32 %v1625, %v44
  %v1628 = vadd.f32 %v1626, %v45
  %v1629 = vsel %vm283, %v1627, -inf
  %1630 = vmax.xlane.f32.xlu0 %v1629
  %v1631 = vpop.xlane.xlu0 %1630
  %v1632 = vsel %vm283, %v1628, -inf
  %1633 = vmax.xlane.f32.xlu0 %v1632
  %v1634 = vpop.xlane.xlu0 %1633
  %v1635 = vsub.f32 %v1627, %v1631
  %v1636 = vsub.f32 %v1628, %v1634
  %v1637 = vmul.f32 %v1635, 1.442695
  %v1638 = vpow.pop %v1637
  %v1639 = vmul.f32 %v1636, 1.442695
  %v1640 = vpow.pop %v1639
  %v1641 = vsel %vm283, %v1638, 0.0
  %1642 = vadd.xlane.f32.xlu0 %v1641
  %v1643 = vpop.xlane.xlu0 %1642
  %v1644 = vsel %vm283, %v1640, 0.0
  %1645 = vadd.xlane.f32.xlu0 %v1644
  %v1646 = vpop.xlane.xlu0 %1645
  %v1647 = vrcp.pop %v1643
  %v1648 = vmul.f32 %v1638, %v1647
  %v1649 = vrcp.pop %v1646
  %v1650 = vmul.f32 %v1640, %v1649
  %1651 = vrot.lane.b32.xlu0 %v1565, 127
  %v1652 = vpop.permute.xlu0 %1651
  %1653 = vrot.lane.b32.xlu0 %v1570, 127
  %v1654 = vpop.permute.xlu0 %1653
  %1657 = vxpose.xlu0.b32.start [1/16] %v1652, 128
  %1658 = vxpose.xlu0.b32.cont [2/16] %v1654, 128
  %1659 = vxpose.xlu0.b32.cont [3/16] 0.0, 128
  %1660 = vxpose.xlu0.b32.cont [4/16] 0.0, 128
  %1661 = vxpose.xlu0.b32.cont [5/16] 0.0, 128
  %1662 = vxpose.xlu0.b32.cont [6/16] 0.0, 128
  %1663 = vxpose.xlu0.b32.cont [7/16] 0.0, 128
  %1664 = vxpose.xlu0.b32.cont [8/16] 0.0, 128
  %1665 = vxpose.xlu0.b32.cont [9/16] 0.0, 128
  %1666 = vxpose.xlu0.b32.cont [10/16] 0.0, 128
  %1667 = vxpose.xlu0.b32.cont [11/16] 0.0, 128
  %1668 = vxpose.xlu0.b32.cont [12/16] 0.0, 128
  %1669 = vxpose.xlu0.b32.cont [13/16] 0.0, 128
  %1670 = vxpose.xlu0.b32.cont [14/16] 0.0, 128
  %1671 = vxpose.xlu0.b32.cont [15/16] 0.0, 128
  %1672 = vxpose.xlu0.b32.end [16/16] 0.0, 128
  %v1673 = vpop.trf.xlu0
  %v1674 = vpop.trf.xlu0
  %v1675 = vpop.trf.xlu0
  %v1676 = vpop.trf.xlu0
  %v1677 = vpop.trf.xlu0
  %v1678 = vpop.trf.xlu0
  %v1679 = vpop.trf.xlu0
  %v1680 = vpop.trf.xlu0
  %v1681 = vpop.trf.xlu0
  %v1682 = vpop.trf.xlu0
  %v1683 = vpop.trf.xlu0
  %v1684 = vpop.trf.xlu0
  %v1685 = vpop.trf.xlu0
  %v1686 = vpop.trf.xlu0
  %v1687 = vpop.trf.xlu0
  %v1688 = vpop.trf.xlu0
  %1689 = vset.pattern.permute.xlu0 5
  %1690 = vperm.xlu0 %1689, %v1565
  %v1691 = vpop.permute.xlu0 %1690
  %1693 = vset.pattern.permute.xlu0 5
  %1694 = vperm.xlu0 %1693, %v1570
  %v1695 = vpop.permute.xlu0 %1694
  %v1697 = vlaneseq
  %v1698 = vshrl.u32 %v1697, 7
  %v1699 = vsub.s32 0, %v1698
  %v1700 = vrot.slane %v1673, %v1699
  %v1701 = vadd.f32 %v1691, %v1700
  %v1702 = vadd.f32 %v1695, %v1700
  %vm1703 = vcmp.gt.f32.partialorder %v1701, 0.0
  %vm1704 = vcmp.gt.f32.partialorder %v1702, 0.0
  %v1705 = vmul.f32 %v1701, 0.2
  %v1706 = vmul.f32 %v1702, 0.2
  %v1707 = vsel %vm1703, %v1701, %v1705
  %v1708 = vsel %vm1704, %v1702, %v1706
  %v1709 = vadd.f32 %v1707, %v44
  %v1710 = vadd.f32 %v1708, %v45
  %v1711 = vsel %vm283, %v1709, -inf
  %1712 = vmax.xlane.f32.xlu0 %v1711
  %v1713 = vpop.xlane.xlu0 %1712
  %v1714 = vsel %vm283, %v1710, -inf
  %1715 = vmax.xlane.f32.xlu0 %v1714
  %v1716 = vpop.xlane.xlu0 %1715
  %v1717 = vsub.f32 %v1709, %v1713
  %v1718 = vsub.f32 %v1710, %v1716
  %v1719 = vmul.f32 %v1717, 1.442695
  %v1720 = vpow.pop %v1719
  %v1721 = vmul.f32 %v1718, 1.442695
  %v1722 = vpow.pop %v1721
  %v1723 = vsel %vm283, %v1720, 0.0
  %1724 = vadd.xlane.f32.xlu0 %v1723
  %v1725 = vpop.xlane.xlu0 %1724
  %v1726 = vsel %vm283, %v1722, 0.0
  %1727 = vadd.xlane.f32.xlu0 %v1726
  %v1728 = vpop.xlane.xlu0 %1727
  %v1729 = vrcp.pop %v1725
  %v1730 = vmul.f32 %v1720, %v1729
  %v1731 = vrcp.pop %v1728
  %v1732 = vmul.f32 %v1722, %v1731
  %1733 = vrot.lane.b32.xlu0 %v1565, 126
  %v1734 = vpop.permute.xlu0 %1733
  %1735 = vrot.lane.b32.xlu0 %v1570, 126
  %v1736 = vpop.permute.xlu0 %1735
  %1739 = vxpose.xlu0.b32.start [1/16] %v1734, 128
  %1740 = vxpose.xlu0.b32.cont [2/16] %v1736, 128
  %1741 = vxpose.xlu0.b32.cont [3/16] 0.0, 128
  %1742 = vxpose.xlu0.b32.cont [4/16] 0.0, 128
  %1743 = vxpose.xlu0.b32.cont [5/16] 0.0, 128
  %1744 = vxpose.xlu0.b32.cont [6/16] 0.0, 128
  %1745 = vxpose.xlu0.b32.cont [7/16] 0.0, 128
  %1746 = vxpose.xlu0.b32.cont [8/16] 0.0, 128
  %1747 = vxpose.xlu0.b32.cont [9/16] 0.0, 128
  %1748 = vxpose.xlu0.b32.cont [10/16] 0.0, 128
  %1749 = vxpose.xlu0.b32.cont [11/16] 0.0, 128
  %1750 = vxpose.xlu0.b32.cont [12/16] 0.0, 128
  %1751 = vxpose.xlu0.b32.cont [13/16] 0.0, 128
  %1752 = vxpose.xlu0.b32.cont [14/16] 0.0, 128
  %1753 = vxpose.xlu0.b32.cont [15/16] 0.0, 128
  %1754 = vxpose.xlu0.b32.end [16/16] 0.0, 128
  %v1755 = vpop.trf.xlu0
  %v1756 = vpop.trf.xlu0
  %v1757 = vpop.trf.xlu0
  %v1758 = vpop.trf.xlu0
  %v1759 = vpop.trf.xlu0
  %v1760 = vpop.trf.xlu0
  %v1761 = vpop.trf.xlu0
  %v1762 = vpop.trf.xlu0
  %v1763 = vpop.trf.xlu0
  %v1764 = vpop.trf.xlu0
  %v1765 = vpop.trf.xlu0
  %v1766 = vpop.trf.xlu0
  %v1767 = vpop.trf.xlu0
  %v1768 = vpop.trf.xlu0
  %v1769 = vpop.trf.xlu0
  %v1770 = vpop.trf.xlu0
  %1771 = vset.pattern.permute.xlu0 6
  %1772 = vperm.xlu0 %1771, %v1565
  %v1773 = vpop.permute.xlu0 %1772
  %1775 = vset.pattern.permute.xlu0 6
  %1776 = vperm.xlu0 %1775, %v1570
  %v1777 = vpop.permute.xlu0 %1776
  %v1779 = vlaneseq
  %v1780 = vshrl.u32 %v1779, 7
  %v1781 = vsub.s32 0, %v1780
  %v1782 = vrot.slane %v1755, %v1781
  %v1783 = vadd.f32 %v1773, %v1782
  %v1784 = vadd.f32 %v1777, %v1782
  %vm1785 = vcmp.gt.f32.partialorder %v1783, 0.0
  %vm1786 = vcmp.gt.f32.partialorder %v1784, 0.0
  %v1787 = vmul.f32 %v1783, 0.2
  %v1788 = vmul.f32 %v1784, 0.2
  %v1789 = vsel %vm1785, %v1783, %v1787
  %v1790 = vsel %vm1786, %v1784, %v1788
  %v1791 = vadd.f32 %v1789, %v44
  %v1792 = vadd.f32 %v1790, %v45
  %v1793 = vsel %vm283, %v1791, -inf
  %1794 = vmax.xlane.f32.xlu0 %v1793
  %v1795 = vpop.xlane.xlu0 %1794
  %v1796 = vsel %vm283, %v1792, -inf
  %1797 = vmax.xlane.f32.xlu0 %v1796
  %v1798 = vpop.xlane.xlu0 %1797
  %v1799 = vsub.f32 %v1791, %v1795
  %v1800 = vsub.f32 %v1792, %v1798
  %v1801 = vmul.f32 %v1799, 1.442695
  %v1802 = vpow.pop %v1801
  %v1803 = vmul.f32 %v1800, 1.442695
  %v1804 = vpow.pop %v1803
  %v1805 = vsel %vm283, %v1802, 0.0
  %1806 = vadd.xlane.f32.xlu0 %v1805
  %v1807 = vpop.xlane.xlu0 %1806
  %v1808 = vsel %vm283, %v1804, 0.0
  %1809 = vadd.xlane.f32.xlu0 %v1808
  %v1810 = vpop.xlane.xlu0 %1809
  %v1811 = vrcp.pop %v1807
  %v1812 = vmul.f32 %v1802, %v1811
  %v1813 = vrcp.pop %v1810
  %v1814 = vmul.f32 %v1804, %v1813
  %1815 = vrot.lane.b32.xlu0 %v1565, 125
  %v1816 = vpop.permute.xlu0 %1815
  %1817 = vrot.lane.b32.xlu0 %v1570, 125
  %v1818 = vpop.permute.xlu0 %1817
  %1821 = vxpose.xlu0.b32.start [1/16] %v1816, 128
  %1822 = vxpose.xlu0.b32.cont [2/16] %v1818, 128
  %1823 = vxpose.xlu0.b32.cont [3/16] 0.0, 128
  %1824 = vxpose.xlu0.b32.cont [4/16] 0.0, 128
  %1825 = vxpose.xlu0.b32.cont [5/16] 0.0, 128
  %1826 = vxpose.xlu0.b32.cont [6/16] 0.0, 128
  %1827 = vxpose.xlu0.b32.cont [7/16] 0.0, 128
  %1828 = vxpose.xlu0.b32.cont [8/16] 0.0, 128
  %1829 = vxpose.xlu0.b32.cont [9/16] 0.0, 128
  %1830 = vxpose.xlu0.b32.cont [10/16] 0.0, 128
  %1831 = vxpose.xlu0.b32.cont [11/16] 0.0, 128
  %1832 = vxpose.xlu0.b32.cont [12/16] 0.0, 128
  %1833 = vxpose.xlu0.b32.cont [13/16] 0.0, 128
  %1834 = vxpose.xlu0.b32.cont [14/16] 0.0, 128
  %1835 = vxpose.xlu0.b32.cont [15/16] 0.0, 128
  %1836 = vxpose.xlu0.b32.end [16/16] 0.0, 128
  %v1837 = vpop.trf.xlu0
  %v1838 = vpop.trf.xlu0
  %v1839 = vpop.trf.xlu0
  %v1840 = vpop.trf.xlu0
  %v1841 = vpop.trf.xlu0
  %v1842 = vpop.trf.xlu0
  %v1843 = vpop.trf.xlu0
  %v1844 = vpop.trf.xlu0
  %v1845 = vpop.trf.xlu0
  %v1846 = vpop.trf.xlu0
  %v1847 = vpop.trf.xlu0
  %v1848 = vpop.trf.xlu0
  %v1849 = vpop.trf.xlu0
  %v1850 = vpop.trf.xlu0
  %v1851 = vpop.trf.xlu0
  %v1852 = vpop.trf.xlu0
  %1853 = vset.pattern.permute.xlu0 7
  %1854 = vperm.xlu0 %1853, %v1565
  %v1855 = vpop.permute.xlu0 %1854
  %1857 = vset.pattern.permute.xlu0 7
  %1858 = vperm.xlu0 %1857, %v1570
  %v1859 = vpop.permute.xlu0 %1858
  %v1861 = vlaneseq
  %v1862 = vshrl.u32 %v1861, 7
  %v1863 = vsub.s32 0, %v1862
  %v1864 = vrot.slane %v1837, %v1863
  %v1865 = vadd.f32 %v1855, %v1864
  %v1866 = vadd.f32 %v1859, %v1864
  %vm1867 = vcmp.gt.f32.partialorder %v1865, 0.0
  %vm1868 = vcmp.gt.f32.partialorder %v1866, 0.0
  %v1869 = vmul.f32 %v1865, 0.2
  %v1870 = vmul.f32 %v1866, 0.2
  %v1871 = vsel %vm1867, %v1865, %v1869
  %v1872 = vsel %vm1868, %v1866, %v1870
  %v1873 = vadd.f32 %v1871, %v44
  %v1874 = vadd.f32 %v1872, %v45
  %v1875 = vsel %vm283, %v1873, -inf
  %1876 = vmax.xlane.f32.xlu0 %v1875
  %v1877 = vpop.xlane.xlu0 %1876
  %v1878 = vsel %vm283, %v1874, -inf
  %1879 = vmax.xlane.f32.xlu0 %v1878
  %v1880 = vpop.xlane.xlu0 %1879
  %v1881 = vsub.f32 %v1873, %v1877
  %v1882 = vsub.f32 %v1874, %v1880
  %v1883 = vmul.f32 %v1881, 1.442695
  %v1884 = vpow.pop %v1883
  %v1885 = vmul.f32 %v1882, 1.442695
  %v1886 = vpow.pop %v1885
  %v1887 = vsel %vm283, %v1884, 0.0
  %1888 = vadd.xlane.f32.xlu0 %v1887
  %v1889 = vpop.xlane.xlu0 %1888
  %v1890 = vsel %vm283, %v1886, 0.0
  %1891 = vadd.xlane.f32.xlu0 %v1890
  %v1892 = vpop.xlane.xlu0 %1891
  %v1893 = vrcp.pop %v1889
  %v1894 = vmul.f32 %v1884, %v1893
  %v1895 = vrcp.pop %v1892
  %v1896 = vmul.f32 %v1886, %v1895
  %v1898 = vsel %vm283, %v1648, 0
  %v1901 = vsel %vm283, %v1650, 0
  %v1904 = vsel %vm283, %v1730, 0
  %v1907 = vsel %vm283, %v1732, 0
  %v1910 = vsel %vm283, %v1812, 0
  %v1913 = vsel %vm283, %v1814, 0
  %v1916 = vsel %vm283, %v1894, 0
  %v1919 = vsel %vm283, %v1896, 0
  %1921 = vmatprep.subr.mxu0 0.0
  %1922 = vmatpush1.msra.mxu0 %v1490
  %1923 = vmatprep.subr.mxu0 0.0
  %1924 = vmatpush1.msra.mxu0 %v1495
  %1925 = vmatprep.subr.mxu0 0.0
  %1926 = vmatpush1.msra.mxu0 0.0
  %1927 = vmatprep.subr.mxu0 0.0
  %1928 = vmatpush1.msra.mxu0 0.0
  %1929 = vmatprep.subr.mxu0 0.0
  %1930 = vmatpush1.msra.mxu0 0.0
  %1931 = vmatprep.subr.mxu0 0.0
  %1932 = vmatpush1.msra.mxu0 0.0
  %1933 = vmatprep.subr.mxu0 0.0
  %1934 = vmatpush1.msra.mxu0 0.0
  %1935 = vmatprep.subr.mxu0 0.0
  %1936 = vmatpush1.msra.mxu0 0.0
  %1937 = vmatprep.subr.mxu0 0.0
  %1938 = vmatpush1.msra.mxu0 0.0
  %1939 = vmatprep.subr.mxu0 0.0
  %1940 = vmatpush1.msra.mxu0 0.0
  %1941 = vmatprep.subr.mxu0 0.0
  %1942 = vmatpush1.msra.mxu0 0.0
  %1943 = vmatprep.subr.mxu0 0.0
  %1944 = vmatpush1.msra.mxu0 0.0
  %1945 = vmatprep.subr.mxu0 0.0
  %1946 = vmatpush1.msra.mxu0 0.0
  %1947 = vmatprep.subr.mxu0 0.0
  %1948 = vmatpush1.msra.mxu0 0.0
  %1949 = vmatprep.subr.mxu0 0.0
  %1950 = vmatpush1.msra.mxu0 0.0
  %1951 = vmatprep.subr.mxu0 0.0
  %1952 = vmatpush1.msra.mxu0 0.0
  %1953 = vmatprep.subr.mxu0 0.0
  %1954 = vmatpush1.msra.mxu0 0.0
  %1955 = vmatprep.subr.mxu0 0.0
  %1956 = vmatpush1.msra.mxu0 0.0
  %1957 = vmatprep.subr.mxu0 0.0
  %1958 = vmatpush1.msra.mxu0 0.0
  %1959 = vmatprep.subr.mxu0 0.0
  %1960 = vmatpush1.msra.mxu0 0.0
  %1961 = vmatprep.subr.mxu0 0.0
  %1962 = vmatpush1.msra.mxu0 0.0
  %1963 = vmatprep.subr.mxu0 0.0
  %1964 = vmatpush1.msra.mxu0 0.0
  %1965 = vmatprep.subr.mxu0 0.0
  %1966 = vmatpush1.msra.mxu0 0.0
  %1967 = vmatprep.subr.mxu0 0.0
  %1968 = vmatpush1.msra.mxu0 0.0
  %1969 = vmatprep.subr.mxu0 0.0
  %1970 = vmatpush1.msra.mxu0 0.0
  %1971 = vmatprep.subr.mxu0 0.0
  %1972 = vmatpush1.msra.mxu0 0.0
  %1973 = vmatprep.subr.mxu0 0.0
  %1974 = vmatpush1.msra.mxu0 0.0
  %1975 = vmatprep.subr.mxu0 0.0
  %1976 = vmatpush1.msra.mxu0 0.0
  %1977 = vmatprep.subr.mxu0 0.0
  %1978 = vmatpush1.msra.mxu0 0.0
  %1979 = vmatprep.subr.mxu0 0.0
  %1980 = vmatpush1.msra.mxu0 0.0
  %1981 = vmatprep.subr.mxu0 0.0
  %1982 = vmatpush1.msra.mxu0 0.0
  %1983 = vmatprep.subr.mxu0 0.0
  %1984 = vmatpush1.msra.mxu0 0.0
  %1985 = vmatprep.mubr.f32.mxu0 0.0
  %1986 = vmatmul.mubr.f32.gmra.mrb[0].mxu0 %v1898
  %v1987 = vpop.f32.mrb[0].mxu0
  %v1988 = vadd.f32 0.0, %v1987
  %v1989 = vpop.f32.mrb[0].mxu0
  %1990 = vmatprep.mubr.f32.mxu0 0.0
  %1991 = vmatmul.mubr.f32.gmra.mrb[0].mxu0 %v1901
  %v1992 = vpop.f32.mrb[0].mxu0
  %v1993 = vadd.f32 0.0, %v1992
  %v1994 = vpop.f32.mrb[0].mxu0
  %1995 = vmatprep.mubr.f32.mxu0 0.0
  %1996 = vmatmul.mubr.f32.gmra.mrb[0].mxu0 %v1904
  %v1997 = vpop.f32.mrb[0].mxu0
  %v1998 = vadd.f32 0.0, %v1997
  %v1999 = vpop.f32.mrb[0].mxu0
  %2000 = vmatprep.mubr.f32.mxu0 0.0
  %2001 = vmatmul.mubr.f32.gmra.mrb[0].mxu0 %v1907
  %v2002 = vpop.f32.mrb[0].mxu0
  %v2003 = vadd.f32 0.0, %v2002
  %v2004 = vpop.f32.mrb[0].mxu0
  %2005 = vmatprep.mubr.f32.mxu0 0.0
  %2006 = vmatmul.mubr.f32.gmra.mrb[0].mxu0 %v1910
  %v2007 = vpop.f32.mrb[0].mxu0
  %v2008 = vadd.f32 0.0, %v2007
  %v2009 = vpop.f32.mrb[0].mxu0
  %2010 = vmatprep.mubr.f32.mxu0 0.0
  %2011 = vmatmul.mubr.f32.gmra.mrb[0].mxu0 %v1913
  %v2012 = vpop.f32.mrb[0].mxu0
  %v2013 = vadd.f32 0.0, %v2012
  %v2014 = vpop.f32.mrb[0].mxu0
  %2015 = vmatprep.mubr.f32.mxu0 0.0
  %2016 = vmatmul.mubr.f32.gmra.mrb[0].mxu0 %v1916
  %v2017 = vpop.f32.mrb[0].mxu0
  %v2018 = vadd.f32 0.0, %v2017
  %v2019 = vpop.f32.mrb[0].mxu0
  %2020 = vmatprep.mubr.f32.mxu0 0.0
  %2021 = vmatmul.mubr.f32.gmra.mrb[0].mxu0 %v1919
  %v2022 = vpop.f32.mrb[0].mxu0
  %v2023 = vadd.f32 0.0, %v2022
  %v2024 = vpop.f32.mrb[0].mxu0
  %2025 = vdwg.mxu0
  %v2026 = vmul.f32 %v1988, %v685
  %v2027 = vmul.f32 %v1993, %v685
  %v2029 = vlaneseq
  %v2030 = vshrl.u32 %v2029, 7
  %v2031 = vsub.s32 0, %v2030
  %v2032 = vrot.slane %v1422, %v2031
  %v2034 = vadd.f32 %v2032, %v2026
  %v2035 = vadd.f32 %v2032, %v2027
  %v2036 = vmul.f32 %v1998, %v701
  %v2037 = vmul.f32 %v2003, %v701
  %v2038 = vadd.f32 %v2034, %v2036
  %v2039 = vadd.f32 %v2035, %v2037
  %v2040 = vmul.f32 %v2008, %v711
  %v2041 = vmul.f32 %v2013, %v711
  %v2042 = vadd.f32 %v2038, %v2040
  %v2043 = vadd.f32 %v2039, %v2041
  %v2044 = vmul.f32 %v2018, %v721
  %v2045 = vmul.f32 %v2023, %v721
  %v2046 = vadd.f32 %v2042, %v2044
  %v2047 = vadd.f32 %v2043, %v2045
  %v2048 = vld [vmem:[%s11] sm:$0x3]
  %v2050 = vsel %vm283, %v2048, 0
  %2052 = vmatprep.subr.mxu0 0.0
  %2053 = vmatpush1.msra.mxu0 %v2046
  %2054 = vmatprep.subr.mxu0 0.0
  %2055 = vmatpush1.msra.mxu0 %v2047
  %2056 = vmatprep.subr.mxu0 0.0
  %2057 = vmatpush1.msra.mxu0 0.0
  %2058 = vmatprep.subr.mxu0 0.0
  %2059 = vmatpush1.msra.mxu0 0.0
  %2060 = vmatprep.subr.mxu0 0.0
  %2061 = vmatpush1.msra.mxu0 0.0
  %2062 = vmatprep.subr.mxu0 0.0
  %2063 = vmatpush1.msra.mxu0 0.0
  %2064 = vmatprep.subr.mxu0 0.0
  %2065 = vmatpush1.msra.mxu0 0.0
  %2066 = vmatprep.subr.mxu0 0.0
  %2067 = vmatpush1.msra.mxu0 0.0
  %2068 = vmatprep.subr.mxu0 0.0
  %2069 = vmatpush1.msra.mxu0 0.0
  %2070 = vmatprep.subr.mxu0 0.0
  %2071 = vmatpush1.msra.mxu0 0.0
  %2072 = vmatprep.subr.mxu0 0.0
  %2073 = vmatpush1.msra.mxu0 0.0
  %2074 = vmatprep.subr.mxu0 0.0
  %2075 = vmatpush1.msra.mxu0 0.0
  %2076 = vmatprep.subr.mxu0 0.0
  %2077 = vmatpush1.msra.mxu0 0.0
  %2078 = vmatprep.subr.mxu0 0.0
  %2079 = vmatpush1.msra.mxu0 0.0
  %2080 = vmatprep.subr.mxu0 0.0
  %2081 = vmatpush1.msra.mxu0 0.0
  %2082 = vmatprep.subr.mxu0 0.0
  %2083 = vmatpush1.msra.mxu0 0.0
  %2084 = vmatprep.subr.mxu0 0.0
  %2085 = vmatpush1.msra.mxu0 0.0
  %2086 = vmatprep.subr.mxu0 0.0
  %2087 = vmatpush1.msra.mxu0 0.0
  %2088 = vmatprep.subr.mxu0 0.0
  %2089 = vmatpush1.msra.mxu0 0.0
  %2090 = vmatprep.subr.mxu0 0.0
  %2091 = vmatpush1.msra.mxu0 0.0
  %2092 = vmatprep.subr.mxu0 0.0
  %2093 = vmatpush1.msra.mxu0 0.0
  %2094 = vmatprep.subr.mxu0 0.0
  %2095 = vmatpush1.msra.mxu0 0.0
  %2096 = vmatprep.subr.mxu0 0.0
  %2097 = vmatpush1.msra.mxu0 0.0
  %2098 = vmatprep.subr.mxu0 0.0
  %2099 = vmatpush1.msra.mxu0 0.0
  %2100 = vmatprep.subr.mxu0 0.0
  %2101 = vmatpush1.msra.mxu0 0.0
  %2102 = vmatprep.subr.mxu0 0.0
  %2103 = vmatpush1.msra.mxu0 0.0
  %2104 = vmatprep.subr.mxu0 0.0
  %2105 = vmatpush1.msra.mxu0 0.0
  %2106 = vmatprep.subr.mxu0 0.0
  %2107 = vmatpush1.msra.mxu0 0.0
  %2108 = vmatprep.subr.mxu0 0.0
  %2109 = vmatpush1.msra.mxu0 0.0
  %2110 = vmatprep.subr.mxu0 0.0
  %2111 = vmatpush1.msra.mxu0 0.0
  %2112 = vmatprep.subr.mxu0 0.0
  %2113 = vmatpush1.msra.mxu0 0.0
  %2114 = vmatprep.subr.mxu0 0.0
  %2115 = vmatpush1.msra.mxu0 0.0
  %2116 = vmatprep.mubr.f32.mxu0 0.0
  %2117 = vmatmul.mubr.f32.gmra.mrb[0].mxu0 %v2050
  %v2118 = vpop.f32.mrb[0].mxu0
  %v2119 = vadd.f32 0.0, %v2118
  %v2120 = vpop.f32.mrb[0].mxu0
  %2121 = vdwg.mxu0
  %v2122 = vld [vmem:[%s8 + $0x8] sm:$0xff]
  %v2123 = vld [vmem:[%s8 + $0x10] sm:$0xff]
  %v2124 = vld [vmem:[%s8 + $0x18] sm:$0xff]
  %v2125 = vld [vmem:[%s8 + $0x20] sm:$0xff]
  %v2126 = vld [vmem:[%s8 + $0x28] sm:$0xff]
  %v2127 = vld [vmem:[%s8 + $0x30] sm:$0xff]
  %v2128 = vld [vmem:[%s8 + $0x38] sm:$0xff]
  %v2129 = vld [vmem:[%s8 + $0x40] sm:$0xff]
  %v2130 = vld [vmem:[%s8 + $0x48] sm:$0xff]
  %v2131 = vld [vmem:[%s8 + $0x50] sm:$0xff]
  %v2132 = vld [vmem:[%s8 + $0x58] sm:$0xff]
  %v2133 = vld [vmem:[%s8 + $0x60] sm:$0xff]
  %v2134 = vld [vmem:[%s8 + $0x68] sm:$0xff]
  %v2135 = vld [vmem:[%s8 + $0x70] sm:$0xff]
  %v2136 = vld [vmem:[%s8 + $0x78] sm:$0xff]
  %v2137 = vld [vmem:[%s8 + $0x80] sm:$0xff]
  %v2138 = vld [vmem:[%s9 + $0x1] sm:$0x1]
  %v2139 = vlaneseq
  %v2140 = vshrl.u32 %v2139, 7
  %v2141 = vsub.s32 0, %v2140
  %v2142 = vrot.slane %v2138, %v2141
  %2143 = vmatprep.subr.mxu0 0.0
  %2144 = vmatpush1.msra.mxu0 %v2122
  %2145 = vmatprep.subr.mxu0 0.0
  %2146 = vmatpush1.msra.mxu0 %v2123
  %2147 = vmatprep.subr.mxu0 0.0
  %2148 = vmatpush1.msra.mxu0 %v2124
  %2149 = vmatprep.subr.mxu0 0.0
  %2150 = vmatpush1.msra.mxu0 %v2125
  %2151 = vmatprep.subr.mxu0 0.0
  %2152 = vmatpush1.msra.mxu0 %v2126
  %2153 = vmatprep.subr.mxu0 0.0
  %2154 = vmatpush1.msra.mxu0 %v2127
  %2155 = vmatprep.subr.mxu0 0.0
  %2156 = vmatpush1.msra.mxu0 %v2128
  %2157 = vmatprep.subr.mxu0 0.0
  %2158 = vmatpush1.msra.mxu0 %v2129
  %2159 = vmatprep.subr.mxu0 0.0
  %2160 = vmatpush1.msra.mxu0 %v2130
  %2161 = vmatprep.subr.mxu0 0.0
  %2162 = vmatpush1.msra.mxu0 %v2131
  %2163 = vmatprep.subr.mxu0 0.0
  %2164 = vmatpush1.msra.mxu0 %v2132
  %2165 = vmatprep.subr.mxu0 0.0
  %2166 = vmatpush1.msra.mxu0 %v2133
  %2167 = vmatprep.subr.mxu0 0.0
  %2168 = vmatpush1.msra.mxu0 %v2134
  %2169 = vmatprep.subr.mxu0 0.0
  %2170 = vmatpush1.msra.mxu0 %v2135
  %2171 = vmatprep.subr.mxu0 0.0
  %2172 = vmatpush1.msra.mxu0 %v2136
  %2173 = vmatprep.subr.mxu0 0.0
  %2174 = vmatpush1.msra.mxu0 %v2137
  %2175 = vmatprep.subr.mxu0 0.0
  %2176 = vmatpush1.msra.mxu0 0.0
  %2177 = vmatprep.subr.mxu0 0.0
  %2178 = vmatpush1.msra.mxu0 0.0
  %2179 = vmatprep.subr.mxu0 0.0
  %2180 = vmatpush1.msra.mxu0 0.0
  %2181 = vmatprep.subr.mxu0 0.0
  %2182 = vmatpush1.msra.mxu0 0.0
  %2183 = vmatprep.subr.mxu0 0.0
  %2184 = vmatpush1.msra.mxu0 0.0
  %2185 = vmatprep.subr.mxu0 0.0
  %2186 = vmatpush1.msra.mxu0 0.0
  %2187 = vmatprep.subr.mxu0 0.0
  %2188 = vmatpush1.msra.mxu0 0.0
  %2189 = vmatprep.subr.mxu0 0.0
  %2190 = vmatpush1.msra.mxu0 0.0
  %2191 = vmatprep.subr.mxu0 0.0
  %2192 = vmatpush1.msra.mxu0 0.0
  %2193 = vmatprep.subr.mxu0 0.0
  %2194 = vmatpush1.msra.mxu0 0.0
  %2195 = vmatprep.subr.mxu0 0.0
  %2196 = vmatpush1.msra.mxu0 0.0
  %2197 = vmatprep.subr.mxu0 0.0
  %2198 = vmatpush1.msra.mxu0 0.0
  %2199 = vmatprep.subr.mxu0 0.0
  %2200 = vmatpush1.msra.mxu0 0.0
  %2201 = vmatprep.subr.mxu0 0.0
  %2202 = vmatpush1.msra.mxu0 0.0
  %2203 = vmatprep.subr.mxu0 0.0
  %2204 = vmatpush1.msra.mxu0 0.0
  %2205 = vmatprep.subr.mxu0 0.0
  %2206 = vmatpush1.msra.mxu0 0.0
  %2207 = vmatprep.mubr.f32.mxu0 0.0
  %2208 = vmatmul.mubr.f32.gmra.mrb[0].mxu0 %v2119
  %v2209 = vpop.f32.mrb[0].mxu0
  %v2210 = vadd.f32 %v2142, %v2209
  %v2211 = vpop.f32.mrb[0].mxu0
  %2212 = vdwg.mxu0
  %v2213 = vld [vmem:[%s0] sm:$0xff]
  %v2214 = vld [vmem:[%s0 + $0x8] sm:$0xff]
  %v2215 = vld [vmem:[%s8] sm:$0xff]
  %v2216 = vld [vmem:[%s9] sm:$0x1]
  %v2217 = vlaneseq
  %v2218 = vshrl.u32 %v2217, 7
  %v2219 = vsub.s32 0, %v2218
  %v2220 = vrot.slane %v2216, %v2219
  %v2222 = vsel %vm70, %v2213, 0
  %v2225 = vsel %vm70, %v2214, 0
  %2227 = vmatprep.subr.mxu0 0.0
  %2228 = vmatpush1.msra.mxu0 %v2215
  %2229 = vmatprep.subr.mxu0 0.0
  %2230 = vmatpush1.msra.mxu0 0.0
  %2231 = vmatprep.subr.mxu0 0.0
  %2232 = vmatpush1.msra.mxu0 0.0
  %2233 = vmatprep.subr.mxu0 0.0
  %2234 = vmatpush1.msra.mxu0 0.0
  %2235 = vmatprep.subr.mxu0 0.0
  %2236 = vmatpush1.msra.mxu0 0.0
  %2237 = vmatprep.subr.mxu0 0.0
  %2238 = vmatpush1.msra.mxu0 0.0
  %2239 = vmatprep.subr.mxu0 0.0
  %2240 = vmatpush1.msra.mxu0 0.0
  %2241 = vmatprep.subr.mxu0 0.0
  %2242 = vmatpush1.msra.mxu0 0.0
  %2243 = vmatprep.subr.mxu0 0.0
  %2244 = vmatpush1.msra.mxu0 0.0
  %2245 = vmatprep.subr.mxu0 0.0
  %2246 = vmatpush1.msra.mxu0 0.0
  %2247 = vmatprep.subr.mxu0 0.0
  %2248 = vmatpush1.msra.mxu0 0.0
  %2249 = vmatprep.subr.mxu0 0.0
  %2250 = vmatpush1.msra.mxu0 0.0
  %2251 = vmatprep.subr.mxu0 0.0
  %2252 = vmatpush1.msra.mxu0 0.0
  %2253 = vmatprep.subr.mxu0 0.0
  %2254 = vmatpush1.msra.mxu0 0.0
  %2255 = vmatprep.subr.mxu0 0.0
  %2256 = vmatpush1.msra.mxu0 0.0
  %2257 = vmatprep.subr.mxu0 0.0
  %2258 = vmatpush1.msra.mxu0 0.0
  %2259 = vmatprep.subr.mxu0 0.0
  %2260 = vmatpush1.msra.mxu0 0.0
  %2261 = vmatprep.subr.mxu0 0.0
  %2262 = vmatpush1.msra.mxu0 0.0
  %2263 = vmatprep.subr.mxu0 0.0
  %2264 = vmatpush1.msra.mxu0 0.0
  %2265 = vmatprep.subr.mxu0 0.0
  %2266 = vmatpush1.msra.mxu0 0.0
  %2267 = vmatprep.subr.mxu0 0.0
  %2268 = vmatpush1.msra.mxu0 0.0
  %2269 = vmatprep.subr.mxu0 0.0
  %2270 = vmatpush1.msra.mxu0 0.0
  %2271 = vmatprep.subr.mxu0 0.0
  %2272 = vmatpush1.msra.mxu0 0.0
  %2273 = vmatprep.subr.mxu0 0.0
  %2274 = vmatpush1.msra.mxu0 0.0
  %2275 = vmatprep.subr.mxu0 0.0
  %2276 = vmatpush1.msra.mxu0 0.0
  %2277 = vmatprep.subr.mxu0 0.0
  %2278 = vmatpush1.msra.mxu0 0.0
  %2279 = vmatprep.subr.mxu0 0.0
  %2280 = vmatpush1.msra.mxu0 0.0
  %2281 = vmatprep.subr.mxu0 0.0
  %2282 = vmatpush1.msra.mxu0 0.0
  %2283 = vmatprep.subr.mxu0 0.0
  %2284 = vmatpush1.msra.mxu0 0.0
  %2285 = vmatprep.subr.mxu0 0.0
  %2286 = vmatpush1.msra.mxu0 0.0
  %2287 = vmatprep.subr.mxu0 0.0
  %2288 = vmatpush1.msra.mxu0 0.0
  %2289 = vmatprep.subr.mxu0 0.0
  %2290 = vmatpush1.msra.mxu0 0.0
  %2291 = vmatprep.mubr.f32.mxu0 0.0
  %2292 = vmatmul.mubr.f32.gmra.mrb[0].mxu0 %v2222
  %v2293 = vpop.f32.mrb[0].mxu0
  %v2294 = vadd.f32 %v2220, %v2293
  %v2295 = vpop.f32.mrb[0].mxu0
  %2296 = vmatprep.mubr.f32.mxu0 0.0
  %2297 = vmatmul.mubr.f32.gmra.mrb[0].mxu0 %v2225
  %v2298 = vpop.f32.mrb[0].mxu0
  %v2299 = vadd.f32 %v2220, %v2298
  %v2300 = vpop.f32.mrb[0].mxu0
  %2301 = vdwg.mxu0
  %v2302 = vld [vmem:[%s10] sm:$0xff]
  %v2303 = vld [vmem:[%s10 + $0x8] sm:$0xff]
  %v2304 = vld [vmem:[%s10 + $0x10] sm:$0xff]
  %v2305 = vld [vmem:[%s10 + $0x18] sm:$0xff]
  %v2306 = vld [vmem:[%s10 + $0x20] sm:$0xff]
  %v2307 = vld [vmem:[%s10 + $0x28] sm:$0xff]
  %v2308 = vld [vmem:[%s10 + $0x30] sm:$0xff]
  %v2309 = vld [vmem:[%s10 + $0x38] sm:$0xff]
  %v2310 = vld [vmem:[%s10 + $0x40] sm:$0x1]
  %s2311 = scalar_lea.vmem %s10, 72
  %v2312 = vld [vmem:[%s2311] sm:$0xff]
  %v2313 = vld [vmem:[%s2311 + $0x8] sm:$0xff]
  %v2314 = vld [vmem:[%s2311 + $0x10] sm:$0xff]
  %v2315 = vld [vmem:[%s2311 + $0x18] sm:$0xff]
  %v2316 = vld [vmem:[%s2311 + $0x20] sm:$0xff]
  %v2317 = vld [vmem:[%s2311 + $0x28] sm:$0xff]
  %v2318 = vld [vmem:[%s2311 + $0x30] sm:$0xff]
  %v2319 = vld [vmem:[%s2311 + $0x38] sm:$0xff]
  %v2320 = vld [vmem:[%s2311 + $0x40] sm:$0x1]
  %v2321 = vlaneseq
  %v2322 = vshrl.u32 %v2321, 7
  %v2323 = vsub.s32 0, %v2322
  %v2324 = vrot.slane %v2310, %v2323
  %vm2325 = vcmask 261120
  %v2327 = vsel %vm2325, %v2294, 0
  %v2330 = vsel %vm2325, %v2299, 0
  %2332 = vmatprep.subr.mxu0 0.0
  %2333 = vmatpush1.msra.mxu0 %v2302
  %2334 = vmatprep.subr.mxu0 0.0
  %2335 = vmatpush1.msra.mxu0 %v2303
  %2336 = vmatprep.subr.mxu0 0.0
  %2337 = vmatpush1.msra.mxu0 %v2304
  %2338 = vmatprep.subr.mxu0 0.0
  %2339 = vmatpush1.msra.mxu0 %v2305
  %2340 = vmatprep.subr.mxu0 0.0
  %2341 = vmatpush1.msra.mxu0 0.0
  %2342 = vmatprep.subr.mxu0 0.0
  %2343 = vmatpush1.msra.mxu0 0.0
  %2344 = vmatprep.subr.mxu0 0.0
  %2345 = vmatpush1.msra.mxu0 0.0
  %2346 = vmatprep.subr.mxu0 0.0
  %2347 = vmatpush1.msra.mxu0 0.0
  %2348 = vmatprep.subr.mxu0 0.0
  %2349 = vmatpush1.msra.mxu0 0.0
  %2350 = vmatprep.subr.mxu0 0.0
  %2351 = vmatpush1.msra.mxu0 0.0
  %2352 = vmatprep.subr.mxu0 0.0
  %2353 = vmatpush1.msra.mxu0 0.0
  %2354 = vmatprep.subr.mxu0 0.0
  %2355 = vmatpush1.msra.mxu0 0.0
  %2356 = vmatprep.subr.mxu0 0.0
  %2357 = vmatpush1.msra.mxu0 0.0
  %2358 = vmatprep.subr.mxu0 0.0
  %2359 = vmatpush1.msra.mxu0 0.0
  %2360 = vmatprep.subr.mxu0 0.0
  %2361 = vmatpush1.msra.mxu0 0.0
  %2362 = vmatprep.subr.mxu0 0.0
  %2363 = vmatpush1.msra.mxu0 0.0
  %2364 = vmatprep.subr.mxu0 0.0
  %2365 = vmatpush1.msra.mxu0 0.0
  %2366 = vmatprep.subr.mxu0 0.0
  %2367 = vmatpush1.msra.mxu0 0.0
  %2368 = vmatprep.subr.mxu0 0.0
  %2369 = vmatpush1.msra.mxu0 0.0
  %2370 = vmatprep.subr.mxu0 0.0
  %2371 = vmatpush1.msra.mxu0 0.0
  %2372 = vmatprep.subr.mxu0 0.0
  %2373 = vmatpush1.msra.mxu0 0.0
  %2374 = vmatprep.subr.mxu0 0.0
  %2375 = vmatpush1.msra.mxu0 0.0
  %2376 = vmatprep.subr.mxu0 0.0
  %2377 = vmatpush1.msra.mxu0 0.0
  %2378 = vmatprep.subr.mxu0 0.0
  %2379 = vmatpush1.msra.mxu0 0.0
  %2380 = vmatprep.subr.mxu0 0.0
  %2381 = vmatpush1.msra.mxu0 0.0
  %2382 = vmatprep.subr.mxu0 0.0
  %2383 = vmatpush1.msra.mxu0 0.0
  %2384 = vmatprep.subr.mxu0 0.0
  %2385 = vmatpush1.msra.mxu0 0.0
  %2386 = vmatprep.subr.mxu0 0.0
  %2387 = vmatpush1.msra.mxu0 0.0
  %2388 = vmatprep.subr.mxu0 0.0
  %2389 = vmatpush1.msra.mxu0 0.0
  %2390 = vmatprep.subr.mxu0 0.0
  %2391 = vmatpush1.msra.mxu0 0.0
  %2392 = vmatprep.subr.mxu0 0.0
  %2393 = vmatpush1.msra.mxu0 0.0
  %2394 = vmatprep.subr.mxu0 0.0
  %2395 = vmatpush1.msra.mxu0 0.0
  %2396 = vmatprep.mubr.f32.mxu0 0.0
  %2397 = vmatmul.mubr.f32.gmra.mrb[0].mxu0 %v2327
  %v2398 = vpop.f32.mrb[0].mxu0
  %v2399 = vadd.f32 %v2324, %v2398
  %v2400 = vpop.f32.mrb[0].mxu0
  %2401 = vmatprep.mubr.f32.mxu0 0.0
  %2402 = vmatmul.mubr.f32.gmra.mrb[0].mxu0 %v2330
  %v2403 = vpop.f32.mrb[0].mxu0
  %v2404 = vadd.f32 %v2324, %v2403
  %v2405 = vpop.f32.mrb[0].mxu0
  %2406 = vdwg.mxu0
  %v2408 = vsel %vm2325, 0.0, 0
  %2410 = vmatprep.subr.mxu0 0.0
  %2411 = vmatpush1.msra.mxu0 %v2306
  %2412 = vmatprep.subr.mxu0 0.0
  %2413 = vmatpush1.msra.mxu0 %v2307
  %2414 = vmatprep.subr.mxu0 0.0
  %2415 = vmatpush1.msra.mxu0 %v2308
  %2416 = vmatprep.subr.mxu0 0.0
  %2417 = vmatpush1.msra.mxu0 %v2309
  %2418 = vmatprep.subr.mxu0 0.0
  %2419 = vmatpush1.msra.mxu0 0.0
  %2420 = vmatprep.subr.mxu0 0.0
  %2421 = vmatpush1.msra.mxu0 0.0
  %2422 = vmatprep.subr.mxu0 0.0
  %2423 = vmatpush1.msra.mxu0 0.0
  %2424 = vmatprep.subr.mxu0 0.0
  %2425 = vmatpush1.msra.mxu0 0.0
  %2426 = vmatprep.subr.mxu0 0.0
  %2427 = vmatpush1.msra.mxu0 0.0
  %2428 = vmatprep.subr.mxu0 0.0
  %2429 = vmatpush1.msra.mxu0 0.0
  %2430 = vmatprep.subr.mxu0 0.0
  %2431 = vmatpush1.msra.mxu0 0.0
  %2432 = vmatprep.subr.mxu0 0.0
  %2433 = vmatpush1.msra.mxu0 0.0
  %2434 = vmatprep.subr.mxu0 0.0
  %2435 = vmatpush1.msra.mxu0 0.0
  %2436 = vmatprep.subr.mxu0 0.0
  %2437 = vmatpush1.msra.mxu0 0.0
  %2438 = vmatprep.subr.mxu0 0.0
  %2439 = vmatpush1.msra.mxu0 0.0
  %2440 = vmatprep.subr.mxu0 0.0
  %2441 = vmatpush1.msra.mxu0 0.0
  %2442 = vmatprep.subr.mxu0 0.0
  %2443 = vmatpush1.msra.mxu0 0.0
  %2444 = vmatprep.subr.mxu0 0.0
  %2445 = vmatpush1.msra.mxu0 0.0
  %2446 = vmatprep.subr.mxu0 0.0
  %2447 = vmatpush1.msra.mxu0 0.0
  %2448 = vmatprep.subr.mxu0 0.0
  %2449 = vmatpush1.msra.mxu0 0.0
  %2450 = vmatprep.subr.mxu0 0.0
  %2451 = vmatpush1.msra.mxu0 0.0
  %2452 = vmatprep.subr.mxu0 0.0
  %2453 = vmatpush1.msra.mxu0 0.0
  %2454 = vmatprep.subr.mxu0 0.0
  %2455 = vmatpush1.msra.mxu0 0.0
  %2456 = vmatprep.subr.mxu0 0.0
  %2457 = vmatpush1.msra.mxu0 0.0
  %2458 = vmatprep.subr.mxu0 0.0
  %2459 = vmatpush1.msra.mxu0 0.0
  %2460 = vmatprep.subr.mxu0 0.0
  %2461 = vmatpush1.msra.mxu0 0.0
  %2462 = vmatprep.subr.mxu0 0.0
  %2463 = vmatpush1.msra.mxu0 0.0
  %2464 = vmatprep.subr.mxu0 0.0
  %2465 = vmatpush1.msra.mxu0 0.0
  %2466 = vmatprep.subr.mxu0 0.0
  %2467 = vmatpush1.msra.mxu0 0.0
  %2468 = vmatprep.subr.mxu0 0.0
  %2469 = vmatpush1.msra.mxu0 0.0
  %2470 = vmatprep.subr.mxu0 0.0
  %2471 = vmatpush1.msra.mxu0 0.0
  %2472 = vmatprep.subr.mxu0 0.0
  %2473 = vmatpush1.msra.mxu0 0.0
  %2474 = vmatprep.mubr.f32.mxu0 0.0
  %2475 = vmatmul.mubr.f32.gmra.mrb[0].mxu0 %v2408
  %v2476 = vpop.f32.mrb[0].mxu0
  %v2477 = vadd.f32 0.0, %v2476
  %v2478 = vpop.f32.mrb[0].mxu0
  %2479 = vdwg.mxu0
  %v2480 = vadd.f32 %v2399, %v2477
  %v2481 = vxor.u32 %v2480, 2147483648
  %v2482 = vmul.f32 %v2481, 1.442695
  %v2483 = vpow.pop %v2482
  %v2484 = vadd.f32 %v2483, 1.0
  %v2485 = vrcp.pop %v2484
  %v2486 = vmul.f32 1.0, %v2485
  %v2487 = vtanh.pop %v2480
  %v2488 = vmul.f32 %v2486, 0.0
  %2490 = vrot.lane.b32.xlu0 %v2487, 64
  %v2491 = vpop.permute.xlu0 %2490
  %v2493 = vmul.f32 %v2486, %v2491
  %2495 = vrot.lane.b32.xlu0 %v2493, 32
  %v2496 = vpop.permute.xlu0 %2495
  %v2498 = vadd.f32 %v2488, %v2496
  %v2499 = vtanh.pop %v2498
  %2501 = vrot.lane.b32.xlu0 %v2499, 64
  %v2502 = vpop.permute.xlu0 %2501
  %v2504 = vmul.f32 %v2486, %v2502
  %2505 = vmatprep.subr.mxu0 0.0
  %2506 = vmatpush1.msra.mxu0 %v2316
  %2507 = vmatprep.subr.mxu0 0.0
  %2508 = vmatpush1.msra.mxu0 %v2317
  %2509 = vmatprep.subr.mxu0 0.0
  %2510 = vmatpush1.msra.mxu0 %v2318
  %2511 = vmatprep.subr.mxu0 0.0
  %2512 = vmatpush1.msra.mxu0 %v2319
  %2513 = vmatprep.subr.mxu0 0.0
  %2514 = vmatpush1.msra.mxu0 0.0
  %2515 = vmatprep.subr.mxu0 0.0
  %2516 = vmatpush1.msra.mxu0 0.0
  %2517 = vmatprep.subr.mxu0 0.0
  %2518 = vmatpush1.msra.mxu0 0.0
  %2519 = vmatprep.subr.mxu0 0.0
  %2520 = vmatpush1.msra.mxu0 0.0
  %2521 = vmatprep.subr.mxu0 0.0
  %2522 = vmatpush1.msra.mxu0 0.0
  %2523 = vmatprep.subr.mxu0 0.0
  %2524 = vmatpush1.msra.mxu0 0.0
  %2525 = vmatprep.subr.mxu0 0.0
  %2526 = vmatpush1.msra.mxu0 0.0
  %2527 = vmatprep.subr.mxu0 0.0
  %2528 = vmatpush1.msra.mxu0 0.0
  %2529 = vmatprep.subr.mxu0 0.0
  %2530 = vmatpush1.msra.mxu0 0.0
  %2531 = vmatprep.subr.mxu0 0.0
  %2532 = vmatpush1.msra.mxu0 0.0
  %2533 = vmatprep.subr.mxu0 0.0
  %2534 = vmatpush1.msra.mxu0 0.0
  %2535 = vmatprep.subr.mxu0 0.0
  %2536 = vmatpush1.msra.mxu0 0.0
  %2537 = vmatprep.subr.mxu0 0.0
  %2538 = vmatpush1.msra.mxu0 0.0
  %2539 = vmatprep.subr.mxu0 0.0
  %2540 = vmatpush1.msra.mxu0 0.0
  %2541 = vmatprep.subr.mxu0 0.0
  %2542 = vmatpush1.msra.mxu0 0.0
  %2543 = vmatprep.subr.mxu0 0.0
  %2544 = vmatpush1.msra.mxu0 0.0
  %2545 = vmatprep.subr.mxu0 0.0
  %2546 = vmatpush1.msra.mxu0 0.0
  %2547 = vmatprep.subr.mxu0 0.0
  %2548 = vmatpush1.msra.mxu0 0.0
  %2549 = vmatprep.subr.mxu0 0.0
  %2550 = vmatpush1.msra.mxu0 0.0
  %2551 = vmatprep.subr.mxu0 0.0
  %2552 = vmatpush1.msra.mxu0 0.0
  %2553 = vmatprep.subr.mxu0 0.0
  %2554 = vmatpush1.msra.mxu0 0.0
  %2555 = vmatprep.subr.mxu0 0.0
  %2556 = vmatpush1.msra.mxu0 0.0
  %2557 = vmatprep.subr.mxu0 0.0
  %2558 = vmatpush1.msra.mxu0 0.0
  %2559 = vmatprep.subr.mxu0 0.0
  %2560 = vmatpush1.msra.mxu0 0.0
  %2561 = vmatprep.subr.mxu0 0.0
  %2562 = vmatpush1.msra.mxu0 0.0
  %2563 = vmatprep.subr.mxu0 0.0
  %2564 = vmatpush1.msra.mxu0 0.0
  %2565 = vmatprep.subr.mxu0 0.0
  %2566 = vmatpush1.msra.mxu0 0.0
  %2567 = vmatprep.subr.mxu0 0.0
  %2568 = vmatpush1.msra.mxu0 0.0
  %2569 = vmatprep.mubr.f32.mxu0 0.0
  %2570 = vmatmul.mubr.f32.gmra.mrb[0].mxu0 %v2408
  %v2571 = vpop.f32.mrb[0].mxu0
  %v2572 = vadd.f32 0.0, %v2571
  %v2573 = vpop.f32.mrb[0].mxu0
  %2574 = vdwg.mxu0
  %2576 = vrot.lane.b32.xlu0 %v2504, 32
  %v2577 = vpop.permute.xlu0 %2576
  %v2578 = vsel %vm2325, %v2577, 0
  %2580 = vmatprep.subr.mxu0 0.0
  %2581 = vmatpush1.msra.mxu0 %v2312
  %2582 = vmatprep.subr.mxu0 0.0
  %2583 = vmatpush1.msra.mxu0 %v2313
  %2584 = vmatprep.subr.mxu0 0.0
  %2585 = vmatpush1.msra.mxu0 %v2314
  %2586 = vmatprep.subr.mxu0 0.0
  %2587 = vmatpush1.msra.mxu0 %v2315
  %2588 = vmatprep.subr.mxu0 0.0
  %2589 = vmatpush1.msra.mxu0 0.0
  %2590 = vmatprep.subr.mxu0 0.0
  %2591 = vmatpush1.msra.mxu0 0.0
  %2592 = vmatprep.subr.mxu0 0.0
  %2593 = vmatpush1.msra.mxu0 0.0
  %2594 = vmatprep.subr.mxu0 0.0
  %2595 = vmatpush1.msra.mxu0 0.0
  %2596 = vmatprep.subr.mxu0 0.0
  %2597 = vmatpush1.msra.mxu0 0.0
  %2598 = vmatprep.subr.mxu0 0.0
  %2599 = vmatpush1.msra.mxu0 0.0
  %2600 = vmatprep.subr.mxu0 0.0
  %2601 = vmatpush1.msra.mxu0 0.0
  %2602 = vmatprep.subr.mxu0 0.0
  %2603 = vmatpush1.msra.mxu0 0.0
  %2604 = vmatprep.subr.mxu0 0.0
  %2605 = vmatpush1.msra.mxu0 0.0
  %2606 = vmatprep.subr.mxu0 0.0
  %2607 = vmatpush1.msra.mxu0 0.0
  %2608 = vmatprep.subr.mxu0 0.0
  %2609 = vmatpush1.msra.mxu0 0.0
  %2610 = vmatprep.subr.mxu0 0.0
  %2611 = vmatpush1.msra.mxu0 0.0
  %2612 = vmatprep.subr.mxu0 0.0
  %2613 = vmatpush1.msra.mxu0 0.0
  %2614 = vmatprep.subr.mxu0 0.0
  %2615 = vmatpush1.msra.mxu0 0.0
  %2616 = vmatprep.subr.mxu0 0.0
  %2617 = vmatpush1.msra.mxu0 0.0
  %2618 = vmatprep.subr.mxu0 0.0
  %2619 = vmatpush1.msra.mxu0 0.0
  %2620 = vmatprep.subr.mxu0 0.0
  %2621 = vmatpush1.msra.mxu0 0.0
  %2622 = vmatprep.subr.mxu0 0.0
  %2623 = vmatpush1.msra.mxu0 0.0
  %2624 = vmatprep.subr.mxu0 0.0
  %2625 = vmatpush1.msra.mxu0 0.0
  %2626 = vmatprep.subr.mxu0 0.0
  %2627 = vmatpush1.msra.mxu0 0.0
  %2628 = vmatprep.subr.mxu0 0.0
  %2629 = vmatpush1.msra.mxu0 0.0
  %2630 = vmatprep.subr.mxu0 0.0
  %2631 = vmatpush1.msra.mxu0 0.0
  %2632 = vmatprep.subr.mxu0 0.0
  %2633 = vmatpush1.msra.mxu0 0.0
  %2634 = vmatprep.subr.mxu0 0.0
  %2635 = vmatpush1.msra.mxu0 0.0
  %2636 = vmatprep.subr.mxu0 0.0
  %2637 = vmatpush1.msra.mxu0 0.0
  %2638 = vmatprep.subr.mxu0 0.0
  %2639 = vmatpush1.msra.mxu0 0.0
  %2640 = vmatprep.subr.mxu0 0.0
  %2641 = vmatpush1.msra.mxu0 0.0
  %2642 = vmatprep.subr.mxu0 0.0
  %2643 = vmatpush1.msra.mxu0 0.0
  %2644 = vmatprep.mubr.f32.mxu0 0.0
  %2645 = vmatmul.mubr.f32.gmra.mrb[0].mxu0 %v2578
  %v2646 = vpop.f32.mrb[0].mxu0
  %v2647 = vadd.f32 %v2572, %v2646
  %v2648 = vpop.f32.mrb[0].mxu0
  %2649 = vdwg.mxu0
  %v2650 = vlaneseq
  %v2651 = vshrl.u32 %v2650, 7
  %v2652 = vsub.s32 0, %v2651
  %v2653 = vrot.slane %v2320, %v2652
  %v2654 = vadd.f32 %v2647, %v2653
  %v2655 = vxor.u32 %v2654, 2147483648
  %v2656 = vmul.f32 %v2655, 1.442695
  %v2657 = vpow.pop %v2656
  %v2658 = vadd.f32 %v2657, 1.0
  %v2659 = vrcp.pop %v2658
  %v2660 = vmul.f32 1.0, %v2659
  %v2661 = vtanh.pop %v2654
  %v2662 = vmul.f32 %v2660, 0.0
  %2664 = vrot.lane.b32.xlu0 %v2661, 64
  %v2665 = vpop.permute.xlu0 %2664
  %v2667 = vmul.f32 %v2660, %v2665
  %2669 = vrot.lane.b32.xlu0 %v2667, 32
  %v2670 = vpop.permute.xlu0 %2669
  %v2672 = vadd.f32 %v2662, %v2670
  %v2673 = vtanh.pop %v2672
  %2675 = vrot.lane.b32.xlu0 %v2673, 64
  %v2676 = vpop.permute.xlu0 %2675
  %v2678 = vmul.f32 %v2660, %v2676
  %2680 = vrot.lane.b32.xlu0 %v2678, 32
  %v2681 = vpop.permute.xlu0 %2680
  %vm2683 = vcmask 254976
  %2684 = vst.msk [vmem:[#allocation2] sm:$0x3] %vm2683, %v2681
  %2685 = vmatprep.subr.mxu0 0.0
  %2686 = vmatpush1.msra.mxu0 %v2306
  %2687 = vmatprep.subr.mxu0 0.0
  %2688 = vmatpush1.msra.mxu0 %v2307
  %2689 = vmatprep.subr.mxu0 0.0
  %2690 = vmatpush1.msra.mxu0 %v2308
  %2691 = vmatprep.subr.mxu0 0.0
  %2692 = vmatpush1.msra.mxu0 %v2309
  %2693 = vmatprep.subr.mxu0 0.0
  %2694 = vmatpush1.msra.mxu0 0.0
  %2695 = vmatprep.subr.mxu0 0.0
  %2696 = vmatpush1.msra.mxu0 0.0
  %2697 = vmatprep.subr.mxu0 0.0
  %2698 = vmatpush1.msra.mxu0 0.0
  %2699 = vmatprep.subr.mxu0 0.0
  %2700 = vmatpush1.msra.mxu0 0.0
  %2701 = vmatprep.subr.mxu0 0.0
  %2702 = vmatpush1.msra.mxu0 0.0
  %2703 = vmatprep.subr.mxu0 0.0
  %2704 = vmatpush1.msra.mxu0 0.0
  %2705 = vmatprep.subr.mxu0 0.0
  %2706 = vmatpush1.msra.mxu0 0.0
  %2707 = vmatprep.subr.mxu0 0.0
  %2708 = vmatpush1.msra.mxu0 0.0
  %2709 = vmatprep.subr.mxu0 0.0
  %2710 = vmatpush1.msra.mxu0 0.0
  %2711 = vmatprep.subr.mxu0 0.0
  %2712 = vmatpush1.msra.mxu0 0.0
  %2713 = vmatprep.subr.mxu0 0.0
  %2714 = vmatpush1.msra.mxu0 0.0
  %2715 = vmatprep.subr.mxu0 0.0
  %2716 = vmatpush1.msra.mxu0 0.0
  %2717 = vmatprep.subr.mxu0 0.0
  %2718 = vmatpush1.msra.mxu0 0.0
  %2719 = vmatprep.subr.mxu0 0.0
  %2720 = vmatpush1.msra.mxu0 0.0
  %2721 = vmatprep.subr.mxu0 0.0
  %2722 = vmatpush1.msra.mxu0 0.0
  %2723 = vmatprep.subr.mxu0 0.0
  %2724 = vmatpush1.msra.mxu0 0.0
  %2725 = vmatprep.subr.mxu0 0.0
  %2726 = vmatpush1.msra.mxu0 0.0
  %2727 = vmatprep.subr.mxu0 0.0
  %2728 = vmatpush1.msra.mxu0 0.0
  %2729 = vmatprep.subr.mxu0 0.0
  %2730 = vmatpush1.msra.mxu0 0.0
  %2731 = vmatprep.subr.mxu0 0.0
  %2732 = vmatpush1.msra.mxu0 0.0
  %2733 = vmatprep.subr.mxu0 0.0
  %2734 = vmatpush1.msra.mxu0 0.0
  %2735 = vmatprep.subr.mxu0 0.0
  %2736 = vmatpush1.msra.mxu0 0.0
  %2737 = vmatprep.subr.mxu0 0.0
  %2738 = vmatpush1.msra.mxu0 0.0
  %2739 = vmatprep.subr.mxu0 0.0
  %2740 = vmatpush1.msra.mxu0 0.0
  %2741 = vmatprep.subr.mxu0 0.0
  %2742 = vmatpush1.msra.mxu0 0.0
  %2743 = vmatprep.subr.mxu0 0.0
  %2744 = vmatpush1.msra.mxu0 0.0
  %2745 = vmatprep.subr.mxu0 0.0
  %2746 = vmatpush1.msra.mxu0 0.0
  %2747 = vmatprep.subr.mxu0 0.0
  %2748 = vmatpush1.msra.mxu0 0.0
  %2749 = vmatprep.mubr.f32.mxu0 0.0
  %2750 = vmatmul.mubr.f32.gmra.mrb[0].mxu0 %v2578
  %v2751 = vpop.f32.mrb[0].mxu0
  %v2752 = vadd.f32 0.0, %v2751
  %v2753 = vpop.f32.mrb[0].mxu0
  %2754 = vdwg.mxu0
  %v2756 = vrot.slane %v2752, 6
  %v2758 = vadd.f32 %v2399, %v2756
  %v2759 = vxor.u32 %v2758, 2147483648
  %v2760 = vmul.f32 %v2759, 1.442695
  %v2761 = vpow.pop %v2760
  %v2762 = vadd.f32 %v2761, 1.0
  %v2763 = vrcp.pop %v2762
  %v2764 = vmul.f32 1.0, %v2763
  %v2765 = vtanh.pop %v2758
  %v2767 = vrot.slane %v2498, 6
  %v2769 = vmul.f32 %v2764, %v2767
  %2771 = vrot.lane.b32.xlu0 %v2765, 64
  %v2772 = vpop.permute.xlu0 %2771
  %v2774 = vmul.f32 %v2764, %v2772
  %2776 = vrot.lane.b32.xlu0 %v2774, 32
  %v2777 = vpop.permute.xlu0 %2776
  %v2779 = vadd.f32 %v2769, %v2777
  %v2780 = vtanh.pop %v2779
  %2782 = vrot.lane.b32.xlu0 %v2780, 64
  %v2783 = vpop.permute.xlu0 %2782
  %v2785 = vmul.f32 %v2764, %v2783
  %v2786 = vsel %vm2325, %v2681, 0
  %2788 = vmatprep.subr.mxu0 0.0
  %2789 = vmatpush1.msra.mxu0 %v2316
  %2790 = vmatprep.subr.mxu0 0.0
  %2791 = vmatpush1.msra.mxu0 %v2317
  %2792 = vmatprep.subr.mxu0 0.0
  %2793 = vmatpush1.msra.mxu0 %v2318
  %2794 = vmatprep.subr.mxu0 0.0
  %2795 = vmatpush1.msra.mxu0 %v2319
  %2796 = vmatprep.subr.mxu0 0.0
  %2797 = vmatpush1.msra.mxu0 0.0
  %2798 = vmatprep.subr.mxu0 0.0
  %2799 = vmatpush1.msra.mxu0 0.0
  %2800 = vmatprep.subr.mxu0 0.0
  %2801 = vmatpush1.msra.mxu0 0.0
  %2802 = vmatprep.subr.mxu0 0.0
  %2803 = vmatpush1.msra.mxu0 0.0
  %2804 = vmatprep.subr.mxu0 0.0
  %2805 = vmatpush1.msra.mxu0 0.0
  %2806 = vmatprep.subr.mxu0 0.0
  %2807 = vmatpush1.msra.mxu0 0.0
  %2808 = vmatprep.subr.mxu0 0.0
  %2809 = vmatpush1.msra.mxu0 0.0
  %2810 = vmatprep.subr.mxu0 0.0
  %2811 = vmatpush1.msra.mxu0 0.0
  %2812 = vmatprep.subr.mxu0 0.0
  %2813 = vmatpush1.msra.mxu0 0.0
  %2814 = vmatprep.subr.mxu0 0.0
  %2815 = vmatpush1.msra.mxu0 0.0
  %2816 = vmatprep.subr.mxu0 0.0
  %2817 = vmatpush1.msra.mxu0 0.0
  %2818 = vmatprep.subr.mxu0 0.0
  %2819 = vmatpush1.msra.mxu0 0.0
  %2820 = vmatprep.subr.mxu0 0.0
  %2821 = vmatpush1.msra.mxu0 0.0
  %2822 = vmatprep.subr.mxu0 0.0
  %2823 = vmatpush1.msra.mxu0 0.0
  %2824 = vmatprep.subr.mxu0 0.0
  %2825 = vmatpush1.msra.mxu0 0.0
  %2826 = vmatprep.subr.mxu0 0.0
  %2827 = vmatpush1.msra.mxu0 0.0
  %2828 = vmatprep.subr.mxu0 0.0
  %2829 = vmatpush1.msra.mxu0 0.0
  %2830 = vmatprep.subr.mxu0 0.0
  %2831 = vmatpush1.msra.mxu0 0.0
  %2832 = vmatprep.subr.mxu0 0.0
  %2833 = vmatpush1.msra.mxu0 0.0
  %2834 = vmatprep.subr.mxu0 0.0
  %2835 = vmatpush1.msra.mxu0 0.0
  %2836 = vmatprep.subr.mxu0 0.0
  %2837 = vmatpush1.msra.mxu0 0.0
  %2838 = vmatprep.subr.mxu0 0.0
  %2839 = vmatpush1.msra.mxu0 0.0
  %2840 = vmatprep.subr.mxu0 0.0
  %2841 = vmatpush1.msra.mxu0 0.0
  %2842 = vmatprep.subr.mxu0 0.0
  %2843 = vmatpush1.msra.mxu0 0.0
  %2844 = vmatprep.subr.mxu0 0.0
  %2845 = vmatpush1.msra.mxu0 0.0
  %2846 = vmatprep.subr.mxu0 0.0
  %2847 = vmatpush1.msra.mxu0 0.0
  %2848 = vmatprep.subr.mxu0 0.0
  %2849 = vmatpush1.msra.mxu0 0.0
  %2850 = vmatprep.subr.mxu0 0.0
  %2851 = vmatpush1.msra.mxu0 0.0
  %2852 = vmatprep.mubr.f32.mxu0 0.0
  %2853 = vmatmul.mubr.f32.gmra.mrb[0].mxu0 %v2786
  %v2854 = vpop.f32.mrb[0].mxu0
  %v2855 = vadd.f32 0.0, %v2854
  %v2856 = vpop.f32.mrb[0].mxu0
  %2857 = vdwg.mxu0
  %v2859 = vrot.slane %v2785, 2
  %2860 = vrot.lane.b32.xlu0 %v2859, 32
  %v2861 = vpop.permute.xlu0 %2860
  %v2862 = vsel %vm2325, %v2861, 0
  %2864 = vmatprep.subr.mxu0 0.0
  %2865 = vmatpush1.msra.mxu0 %v2312
  %2866 = vmatprep.subr.mxu0 0.0
  %2867 = vmatpush1.msra.mxu0 %v2313
  %2868 = vmatprep.subr.mxu0 0.0
  %2869 = vmatpush1.msra.mxu0 %v2314
  %2870 = vmatprep.subr.mxu0 0.0
  %2871 = vmatpush1.msra.mxu0 %v2315
  %2872 = vmatprep.subr.mxu0 0.0
  %2873 = vmatpush1.msra.mxu0 0.0
  %2874 = vmatprep.subr.mxu0 0.0
  %2875 = vmatpush1.msra.mxu0 0.0
  %2876 = vmatprep.subr.mxu0 0.0
  %2877 = vmatpush1.msra.mxu0 0.0
  %2878 = vmatprep.subr.mxu0 0.0
  %2879 = vmatpush1.msra.mxu0 0.0
  %2880 = vmatprep.subr.mxu0 0.0
  %2881 = vmatpush1.msra.mxu0 0.0
  %2882 = vmatprep.subr.mxu0 0.0
  %2883 = vmatpush1.msra.mxu0 0.0
  %2884 = vmatprep.subr.mxu0 0.0
  %2885 = vmatpush1.msra.mxu0 0.0
  %2886 = vmatprep.subr.mxu0 0.0
  %2887 = vmatpush1.msra.mxu0 0.0
  %2888 = vmatprep.subr.mxu0 0.0
  %2889 = vmatpush1.msra.mxu0 0.0
  %2890 = vmatprep.subr.mxu0 0.0
  %2891 = vmatpush1.msra.mxu0 0.0
  %2892 = vmatprep.subr.mxu0 0.0
  %2893 = vmatpush1.msra.mxu0 0.0
  %2894 = vmatprep.subr.mxu0 0.0
  %2895 = vmatpush1.msra.mxu0 0.0
  %2896 = vmatprep.subr.mxu0 0.0
  %2897 = vmatpush1.msra.mxu0 0.0
  %2898 = vmatprep.subr.mxu0 0.0
  %2899 = vmatpush1.msra.mxu0 0.0
  %2900 = vmatprep.subr.mxu0 0.0
  %2901 = vmatpush1.msra.mxu0 0.0
  %2902 = vmatprep.subr.mxu0 0.0
  %2903 = vmatpush1.msra.mxu0 0.0
  %2904 = vmatprep.subr.mxu0 0.0
  %2905 = vmatpush1.msra.mxu0 0.0
  %2906 = vmatprep.subr.mxu0 0.0
  %2907 = vmatpush1.msra.mxu0 0.0
  %2908 = vmatprep.subr.mxu0 0.0
  %2909 = vmatpush1.msra.mxu0 0.0
  %2910 = vmatprep.subr.mxu0 0.0
  %2911 = vmatpush1.msra.mxu0 0.0
  %2912 = vmatprep.subr.mxu0 0.0
  %2913 = vmatpush1.msra.mxu0 0.0
  %2914 = vmatprep.subr.mxu0 0.0
  %2915 = vmatpush1.msra.mxu0 0.0
  %2916 = vmatprep.subr.mxu0 0.0
  %2917 = vmatpush1.msra.mxu0 0.0
  %2918 = vmatprep.subr.mxu0 0.0
  %2919 = vmatpush1.msra.mxu0 0.0
  %2920 = vmatprep.subr.mxu0 0.0
  %2921 = vmatpush1.msra.mxu0 0.0
  %2922 = vmatprep.subr.mxu0 0.0
  %2923 = vmatpush1.msra.mxu0 0.0
  %2924 = vmatprep.subr.mxu0 0.0
  %2925 = vmatpush1.msra.mxu0 0.0
  %2926 = vmatprep.subr.mxu0 0.0
  %2927 = vmatpush1.msra.mxu0 0.0
  %2928 = vmatprep.mubr.f32.mxu0 0.0
  %2929 = vmatmul.mubr.f32.gmra.mrb[0].mxu0 %v2862
  %v2930 = vpop.f32.mrb[0].mxu0
  %v2931 = vadd.f32 %v2855, %v2930
  %v2932 = vpop.f32.mrb[0].mxu0
  %2933 = vdwg.mxu0
  %v2934 = vadd.f32 %v2931, %v2653
  %v2935 = vxor.u32 %v2934, 2147483648
  %v2936 = vmul.f32 %v2935, 1.442695
  %v2937 = vpow.pop %v2936
  %v2938 = vadd.f32 %v2937, 1.0
  %v2939 = vrcp.pop %v2938
  %v2940 = vmul.f32 1.0, %v2939
  %v2941 = vtanh.pop %v2934
  %v2942 = vmul.f32 %v2940, %v2672
  %2944 = vrot.lane.b32.xlu0 %v2941, 64
  %v2945 = vpop.permute.xlu0 %2944
  %v2947 = vmul.f32 %v2940, %v2945
  %2949 = vrot.lane.b32.xlu0 %v2947, 32
  %v2950 = vpop.permute.xlu0 %2949
  %v2952 = vadd.f32 %v2942, %v2950
  %v2953 = vtanh.pop %v2952
  %2955 = vrot.lane.b32.xlu0 %v2953, 64
  %v2956 = vpop.permute.xlu0 %2955
  %v2958 = vmul.f32 %v2940, %v2956
  %2960 = vrot.lane.b32.xlu0 %v2958, 32
  %v2961 = vpop.permute.xlu0 %2960
  %2963 = vst.msk [vmem:[#allocation2 + $0x2] sm:$0x3] %vm2683, %v2961
  %2964 = vmatprep.subr.mxu0 0.0
  %2965 = vmatpush1.msra.mxu0 %v2306
  %2966 = vmatprep.subr.mxu0 0.0
  %2967 = vmatpush1.msra.mxu0 %v2307
  %2968 = vmatprep.subr.mxu0 0.0
  %2969 = vmatpush1.msra.mxu0 %v2308
  %2970 = vmatprep.subr.mxu0 0.0
  %2971 = vmatpush1.msra.mxu0 %v2309
  %2972 = vmatprep.subr.mxu0 0.0
  %2973 = vmatpush1.msra.mxu0 0.0
  %2974 = vmatprep.subr.mxu0 0.0
  %2975 = vmatpush1.msra.mxu0 0.0
  %2976 = vmatprep.subr.mxu0 0.0
  %2977 = vmatpush1.msra.mxu0 0.0
  %2978 = vmatprep.subr.mxu0 0.0
  %2979 = vmatpush1.msra.mxu0 0.0
  %2980 = vmatprep.subr.mxu0 0.0
  %2981 = vmatpush1.msra.mxu0 0.0
  %2982 = vmatprep.subr.mxu0 0.0
  %2983 = vmatpush1.msra.mxu0 0.0
  %2984 = vmatprep.subr.mxu0 0.0
  %2985 = vmatpush1.msra.mxu0 0.0
  %2986 = vmatprep.subr.mxu0 0.0
  %2987 = vmatpush1.msra.mxu0 0.0
  %2988 = vmatprep.subr.mxu0 0.0
  %2989 = vmatpush1.msra.mxu0 0.0
  %2990 = vmatprep.subr.mxu0 0.0
  %2991 = vmatpush1.msra.mxu0 0.0
  %2992 = vmatprep.subr.mxu0 0.0
  %2993 = vmatpush1.msra.mxu0 0.0
  %2994 = vmatprep.subr.mxu0 0.0
  %2995 = vmatpush1.msra.mxu0 0.0
  %2996 = vmatprep.subr.mxu0 0.0
  %2997 = vmatpush1.msra.mxu0 0.0
  %2998 = vmatprep.subr.mxu0 0.0
  %2999 = vmatpush1.msra.mxu0 0.0
  %3000 = vmatprep.subr.mxu0 0.0
  %3001 = vmatpush1.msra.mxu0 0.0
  %3002 = vmatprep.subr.mxu0 0.0
  %3003 = vmatpush1.msra.mxu0 0.0
  %3004 = vmatprep.subr.mxu0 0.0
  %3005 = vmatpush1.msra.mxu0 0.0
  %3006 = vmatprep.subr.mxu0 0.0
  %3007 = vmatpush1.msra.mxu0 0.0
  %3008 = vmatprep.subr.mxu0 0.0
  %3009 = vmatpush1.msra.mxu0 0.0
  %3010 = vmatprep.subr.mxu0 0.0
  %3011 = vmatpush1.msra.mxu0 0.0
  %3012 = vmatprep.subr.mxu0 0.0
  %3013 = vmatpush1.msra.mxu0 0.0
  %3014 = vmatprep.subr.mxu0 0.0
  %3015 = vmatpush1.msra.mxu0 0.0
  %3016 = vmatprep.subr.mxu0 0.0
  %3017 = vmatpush1.msra.mxu0 0.0
  %3018 = vmatprep.subr.mxu0 0.0
  %3019 = vmatpush1.msra.mxu0 0.0
  %3020 = vmatprep.subr.mxu0 0.0
  %3021 = vmatpush1.msra.mxu0 0.0
  %3022 = vmatprep.subr.mxu0 0.0
  %3023 = vmatpush1.msra.mxu0 0.0
  %3024 = vmatprep.subr.mxu0 0.0
  %3025 = vmatpush1.msra.mxu0 0.0
  %3026 = vmatprep.subr.mxu0 0.0
  %3027 = vmatpush1.msra.mxu0 0.0
  %3028 = vmatprep.mubr.f32.mxu0 0.0
  %3029 = vmatmul.mubr.f32.gmra.mrb[0].mxu0 %v2862
  %v3030 = vpop.f32.mrb[0].mxu0
  %v3031 = vadd.f32 0.0, %v3030
  %v3032 = vpop.f32.mrb[0].mxu0
  %3033 = vdwg.mxu0
  %v3035 = vrot.slane %v3031, 4
  %v3037 = vadd.f32 %v2399, %v3035
  %v3038 = vxor.u32 %v3037, 2147483648
  %v3039 = vmul.f32 %v3038, 1.442695
  %v3040 = vpow.pop %v3039
  %v3041 = vadd.f32 %v3040, 1.0
  %v3042 = vrcp.pop %v3041
  %v3043 = vmul.f32 1.0, %v3042
  %v3044 = vtanh.pop %v3037
  %v3046 = vrot.slane %v2779, 6
  %v3048 = vmul.f32 %v3043, %v3046
  %3050 = vrot.lane.b32.xlu0 %v3044, 64
  %v3051 = vpop.permute.xlu0 %3050
  %v3053 = vmul.f32 %v3043, %v3051
  %3055 = vrot.lane.b32.xlu0 %v3053, 32
  %v3056 = vpop.permute.xlu0 %3055
  %v3058 = vadd.f32 %v3048, %v3056
  %v3059 = vtanh.pop %v3058
  %3061 = vrot.lane.b32.xlu0 %v3059, 64
  %v3062 = vpop.permute.xlu0 %3061
  %v3064 = vmul.f32 %v3043, %v3062
  %v3065 = vsel %vm2325, %v2961, 0
  %3067 = vmatprep.subr.mxu0 0.0
  %3068 = vmatpush1.msra.mxu0 %v2316
  %3069 = vmatprep.subr.mxu0 0.0
  %3070 = vmatpush1.msra.mxu0 %v2317
  %3071 = vmatprep.subr.mxu0 0.0
  %3072 = vmatpush1.msra.mxu0 %v2318
  %3073 = vmatprep.subr.mxu0 0.0
  %3074 = vmatpush1.msra.mxu0 %v2319
  %3075 = vmatprep.subr.mxu0 0.0
  %3076 = vmatpush1.msra.mxu0 0.0
  %3077 = vmatprep.subr.mxu0 0.0
  %3078 = vmatpush1.msra.mxu0 0.0
  %3079 = vmatprep.subr.mxu0 0.0
  %3080 = vmatpush1.msra.mxu0 0.0
  %3081 = vmatprep.subr.mxu0 0.0
  %3082 = vmatpush1.msra.mxu0 0.0
  %3083 = vmatprep.subr.mxu0 0.0
  %3084 = vmatpush1.msra.mxu0 0.0
  %3085 = vmatprep.subr.mxu0 0.0
  %3086 = vmatpush1.msra.mxu0 0.0
  %3087 = vmatprep.subr.mxu0 0.0
  %3088 = vmatpush1.msra.mxu0 0.0
  %3089 = vmatprep.subr.mxu0 0.0
  %3090 = vmatpush1.msra.mxu0 0.0
  %3091 = vmatprep.subr.mxu0 0.0
  %3092 = vmatpush1.msra.mxu0 0.0
  %3093 = vmatprep.subr.mxu0 0.0
  %3094 = vmatpush1.msra.mxu0 0.0
  %3095 = vmatprep.subr.mxu0 0.0
  %3096 = vmatpush1.msra.mxu0 0.0
  %3097 = vmatprep.subr.mxu0 0.0
  %3098 = vmatpush1.msra.mxu0 0.0
  %3099 = vmatprep.subr.mxu0 0.0
  %3100 = vmatpush1.msra.mxu0 0.0
  %3101 = vmatprep.subr.mxu0 0.0
  %3102 = vmatpush1.msra.mxu0 0.0
  %3103 = vmatprep.subr.mxu0 0.0
  %3104 = vmatpush1.msra.mxu0 0.0
  %3105 = vmatprep.subr.mxu0 0.0
  %3106 = vmatpush1.msra.mxu0 0.0
  %3107 = vmatprep.subr.mxu0 0.0
  %3108 = vmatpush1.msra.mxu0 0.0
  %3109 = vmatprep.subr.mxu0 0.0
  %3110 = vmatpush1.msra.mxu0 0.0
  %3111 = vmatprep.subr.mxu0 0.0
  %3112 = vmatpush1.msra.mxu0 0.0
  %3113 = vmatprep.subr.mxu0 0.0
  %3114 = vmatpush1.msra.mxu0 0.0
  %3115 = vmatprep.subr.mxu0 0.0
  %3116 = vmatpush1.msra.mxu0 0.0
  %3117 = vmatprep.subr.mxu0 0.0
  %3118 = vmatpush1.msra.mxu0 0.0
  %3119 = vmatprep.subr.mxu0 0.0
  %3120 = vmatpush1.msra.mxu0 0.0
  %3121 = vmatprep.subr.mxu0 0.0
  %3122 = vmatpush1.msra.mxu0 0.0
  %3123 = vmatprep.subr.mxu0 0.0
  %3124 = vmatpush1.msra.mxu0 0.0
  %3125 = vmatprep.subr.mxu0 0.0
  %3126 = vmatpush1.msra.mxu0 0.0
  %3127 = vmatprep.subr.mxu0 0.0
  %3128 = vmatpush1.msra.mxu0 0.0
  %3129 = vmatprep.subr.mxu0 0.0
  %3130 = vmatpush1.msra.mxu0 0.0
  %3131 = vmatprep.mubr.f32.mxu0 0.0
  %3132 = vmatmul.mubr.f32.gmra.mrb[0].mxu0 %v3065
  %v3133 = vpop.f32.mrb[0].mxu0
  %v3134 = vadd.f32 0.0, %v3133
  %v3135 = vpop.f32.mrb[0].mxu0
  %3136 = vdwg.mxu0
  %v3138 = vrot.slane %v3064, 4
  %3139 = vrot.lane.b32.xlu0 %v3138, 32
  %v3140 = vpop.permute.xlu0 %3139
  %v3141 = vsel %vm2325, %v3140, 0
  %3143 = vmatprep.subr.mxu0 0.0
  %3144 = vmatpush1.msra.mxu0 %v2312
  %3145 = vmatprep.subr.mxu0 0.0
  %3146 = vmatpush1.msra.mxu0 %v2313
  %3147 = vmatprep.subr.mxu0 0.0
  %3148 = vmatpush1.msra.mxu0 %v2314
  %3149 = vmatprep.subr.mxu0 0.0
  %3150 = vmatpush1.msra.mxu0 %v2315
  %3151 = vmatprep.subr.mxu0 0.0
  %3152 = vmatpush1.msra.mxu0 0.0
  %3153 = vmatprep.subr.mxu0 0.0
  %3154 = vmatpush1.msra.mxu0 0.0
  %3155 = vmatprep.subr.mxu0 0.0
  %3156 = vmatpush1.msra.mxu0 0.0
  %3157 = vmatprep.subr.mxu0 0.0
  %3158 = vmatpush1.msra.mxu0 0.0
  %3159 = vmatprep.subr.mxu0 0.0
  %3160 = vmatpush1.msra.mxu0 0.0
  %3161 = vmatprep.subr.mxu0 0.0
  %3162 = vmatpush1.msra.mxu0 0.0
  %3163 = vmatprep.subr.mxu0 0.0
  %3164 = vmatpush1.msra.mxu0 0.0
  %3165 = vmatprep.subr.mxu0 0.0
  %3166 = vmatpush1.msra.mxu0 0.0
  %3167 = vmatprep.subr.mxu0 0.0
  %3168 = vmatpush1.msra.mxu0 0.0
  %3169 = vmatprep.subr.mxu0 0.0
  %3170 = vmatpush1.msra.mxu0 0.0
  %3171 = vmatprep.subr.mxu0 0.0
  %3172 = vmatpush1.msra.mxu0 0.0
  %3173 = vmatprep.subr.mxu0 0.0
  %3174 = vmatpush1.msra.mxu0 0.0
  %3175 = vmatprep.subr.mxu0 0.0
  %3176 = vmatpush1.msra.mxu0 0.0
  %3177 = vmatprep.subr.mxu0 0.0
  %3178 = vmatpush1.msra.mxu0 0.0
  %3179 = vmatprep.subr.mxu0 0.0
  %3180 = vmatpush1.msra.mxu0 0.0
  %3181 = vmatprep.subr.mxu0 0.0
  %3182 = vmatpush1.msra.mxu0 0.0
  %3183 = vmatprep.subr.mxu0 0.0
  %3184 = vmatpush1.msra.mxu0 0.0
  %3185 = vmatprep.subr.mxu0 0.0
  %3186 = vmatpush1.msra.mxu0 0.0
  %3187 = vmatprep.subr.mxu0 0.0
  %3188 = vmatpush1.msra.mxu0 0.0
  %3189 = vmatprep.subr.mxu0 0.0
  %3190 = vmatpush1.msra.mxu0 0.0
  %3191 = vmatprep.subr.mxu0 0.0
  %3192 = vmatpush1.msra.mxu0 0.0
  %3193 = vmatprep.subr.mxu0 0.0
  %3194 = vmatpush1.msra.mxu0 0.0
  %3195 = vmatprep.subr.mxu0 0.0
  %3196 = vmatpush1.msra.mxu0 0.0
  %3197 = vmatprep.subr.mxu0 0.0
  %3198 = vmatpush1.msra.mxu0 0.0
  %3199 = vmatprep.subr.mxu0 0.0
  %3200 = vmatpush1.msra.mxu0 0.0
  %3201 = vmatprep.subr.mxu0 0.0
  %3202 = vmatpush1.msra.mxu0 0.0
  %3203 = vmatprep.subr.mxu0 0.0
  %3204 = vmatpush1.msra.mxu0 0.0
  %3205 = vmatprep.subr.mxu0 0.0
  %3206 = vmatpush1.msra.mxu0 0.0
  %3207 = vmatprep.mubr.f32.mxu0 0.0
  %3208 = vmatmul.mubr.f32.gmra.mrb[0].mxu0 %v3141
  %v3209 = vpop.f32.mrb[0].mxu0
  %v3210 = vadd.f32 %v3134, %v3209
  %v3211 = vpop.f32.mrb[0].mxu0
  %3212 = vdwg.mxu0
  %v3213 = vadd.f32 %v3210, %v2653
  %v3214 = vxor.u32 %v3213, 2147483648
  %v3215 = vmul.f32 %v3214, 1.442695
  %v3216 = vpow.pop %v3215
  %v3217 = vadd.f32 %v3216, 1.0
  %v3218 = vrcp.pop %v3217
  %v3219 = vmul.f32 1.0, %v3218
  %v3220 = vtanh.pop %v3213
  %v3221 = vmul.f32 %v3219, %v2952
  %3223 = vrot.lane.b32.xlu0 %v3220, 64
  %v3224 = vpop.permute.xlu0 %3223
  %v3226 = vmul.f32 %v3219, %v3224
  %3228 = vrot.lane.b32.xlu0 %v3226, 32
  %v3229 = vpop.permute.xlu0 %3228
  %v3231 = vadd.f32 %v3221, %v3229
  %v3232 = vtanh.pop %v3231
  %3234 = vrot.lane.b32.xlu0 %v3232, 64
  %v3235 = vpop.permute.xlu0 %3234
  %v3237 = vmul.f32 %v3219, %v3235
  %3239 = vrot.lane.b32.xlu0 %v3237, 32
  %v3240 = vpop.permute.xlu0 %3239
  %3242 = vst.msk [vmem:[#allocation2 + $0x4] sm:$0x3] %vm2683, %v3240
  %3243 = vmatprep.subr.mxu0 0.0
  %3244 = vmatpush1.msra.mxu0 %v2306
  %3245 = vmatprep.subr.mxu0 0.0
  %3246 = vmatpush1.msra.mxu0 %v2307
  %3247 = vmatprep.subr.mxu0 0.0
  %3248 = vmatpush1.msra.mxu0 %v2308
  %3249 = vmatprep.subr.mxu0 0.0
  %3250 = vmatpush1.msra.mxu0 %v2309
  %3251 = vmatprep.subr.mxu0 0.0
  %3252 = vmatpush1.msra.mxu0 0.0
  %3253 = vmatprep.subr.mxu0 0.0
  %3254 = vmatpush1.msra.mxu0 0.0
  %3255 = vmatprep.subr.mxu0 0.0
  %3256 = vmatpush1.msra.mxu0 0.0
  %3257 = vmatprep.subr.mxu0 0.0
  %3258 = vmatpush1.msra.mxu0 0.0
  %3259 = vmatprep.subr.mxu0 0.0
  %3260 = vmatpush1.msra.mxu0 0.0
  %3261 = vmatprep.subr.mxu0 0.0
  %3262 = vmatpush1.msra.mxu0 0.0
  %3263 = vmatprep.subr.mxu0 0.0
  %3264 = vmatpush1.msra.mxu0 0.0
  %3265 = vmatprep.subr.mxu0 0.0
  %3266 = vmatpush1.msra.mxu0 0.0
  %3267 = vmatprep.subr.mxu0 0.0
  %3268 = vmatpush1.msra.mxu0 0.0
  %3269 = vmatprep.subr.mxu0 0.0
  %3270 = vmatpush1.msra.mxu0 0.0
  %3271 = vmatprep.subr.mxu0 0.0
  %3272 = vmatpush1.msra.mxu0 0.0
  %3273 = vmatprep.subr.mxu0 0.0
  %3274 = vmatpush1.msra.mxu0 0.0
  %3275 = vmatprep.subr.mxu0 0.0
  %3276 = vmatpush1.msra.mxu0 0.0
  %3277 = vmatprep.subr.mxu0 0.0
  %3278 = vmatpush1.msra.mxu0 0.0
  %3279 = vmatprep.subr.mxu0 0.0
  %3280 = vmatpush1.msra.mxu0 0.0
  %3281 = vmatprep.subr.mxu0 0.0
  %3282 = vmatpush1.msra.mxu0 0.0
  %3283 = vmatprep.subr.mxu0 0.0
  %3284 = vmatpush1.msra.mxu0 0.0
  %3285 = vmatprep.subr.mxu0 0.0
  %3286 = vmatpush1.msra.mxu0 0.0
  %3287 = vmatprep.subr.mxu0 0.0
  %3288 = vmatpush1.msra.mxu0 0.0
  %3289 = vmatprep.subr.mxu0 0.0
  %3290 = vmatpush1.msra.mxu0 0.0
  %3291 = vmatprep.subr.mxu0 0.0
  %3292 = vmatpush1.msra.mxu0 0.0
  %3293 = vmatprep.subr.mxu0 0.0
  %3294 = vmatpush1.msra.mxu0 0.0
  %3295 = vmatprep.subr.mxu0 0.0
  %3296 = vmatpush1.msra.mxu0 0.0
  %3297 = vmatprep.subr.mxu0 0.0
  %3298 = vmatpush1.msra.mxu0 0.0
  %3299 = vmatprep.subr.mxu0 0.0
  %3300 = vmatpush1.msra.mxu0 0.0
  %3301 = vmatprep.subr.mxu0 0.0
  %3302 = vmatpush1.msra.mxu0 0.0
  %3303 = vmatprep.subr.mxu0 0.0
  %3304 = vmatpush1.msra.mxu0 0.0
  %3305 = vmatprep.subr.mxu0 0.0
  %3306 = vmatpush1.msra.mxu0 0.0
  %3307 = vmatprep.mubr.f32.mxu0 0.0
  %3308 = vmatmul.mubr.f32.gmra.mrb[0].mxu0 %v3141
  %v3309 = vpop.f32.mrb[0].mxu0
  %v3310 = vadd.f32 0.0, %v3309
  %v3311 = vpop.f32.mrb[0].mxu0
  %3312 = vdwg.mxu0
  %v3314 = vrot.slane %v3310, 2
  %v3316 = vadd.f32 %v2399, %v3314
  %v3317 = vxor.u32 %v3316, 2147483648
  %v3318 = vmul.f32 %v3317, 1.442695
  %v3319 = vpow.pop %v3318
  %v3320 = vadd.f32 %v3319, 1.0
  %v3321 = vrcp.pop %v3320
  %v3322 = vmul.f32 1.0, %v3321
  %v3323 = vtanh.pop %v3316
  %v3325 = vrot.slane %v3058, 6
  %v3327 = vmul.f32 %v3322, %v3325
  %3329 = vrot.lane.b32.xlu0 %v3323, 64
  %v3330 = vpop.permute.xlu0 %3329
  %v3332 = vmul.f32 %v3322, %v3330
  %3334 = vrot.lane.b32.xlu0 %v3332, 32
  %v3335 = vpop.permute.xlu0 %3334
  %v3337 = vadd.f32 %v3327, %v3335
  %v3338 = vtanh.pop %v3337
  %3340 = vrot.lane.b32.xlu0 %v3338, 64
  %v3341 = vpop.permute.xlu0 %3340
  %v3343 = vmul.f32 %v3322, %v3341
  %v3344 = vsel %vm2325, %v3240, 0
  %3346 = vmatprep.subr.mxu0 0.0
  %3347 = vmatpush1.msra.mxu0 %v2316
  %3348 = vmatprep.subr.mxu0 0.0
  %3349 = vmatpush1.msra.mxu0 %v2317
  %3350 = vmatprep.subr.mxu0 0.0
  %3351 = vmatpush1.msra.mxu0 %v2318
  %3352 = vmatprep.subr.mxu0 0.0
  %3353 = vmatpush1.msra.mxu0 %v2319
  %3354 = vmatprep.subr.mxu0 0.0
  %3355 = vmatpush1.msra.mxu0 0.0
  %3356 = vmatprep.subr.mxu0 0.0
  %3357 = vmatpush1.msra.mxu0 0.0
  %3358 = vmatprep.subr.mxu0 0.0
  %3359 = vmatpush1.msra.mxu0 0.0
  %3360 = vmatprep.subr.mxu0 0.0
  %3361 = vmatpush1.msra.mxu0 0.0
  %3362 = vmatprep.subr.mxu0 0.0
  %3363 = vmatpush1.msra.mxu0 0.0
  %3364 = vmatprep.subr.mxu0 0.0
  %3365 = vmatpush1.msra.mxu0 0.0
  %3366 = vmatprep.subr.mxu0 0.0
  %3367 = vmatpush1.msra.mxu0 0.0
  %3368 = vmatprep.subr.mxu0 0.0
  %3369 = vmatpush1.msra.mxu0 0.0
  %3370 = vmatprep.subr.mxu0 0.0
  %3371 = vmatpush1.msra.mxu0 0.0
  %3372 = vmatprep.subr.mxu0 0.0
  %3373 = vmatpush1.msra.mxu0 0.0
  %3374 = vmatprep.subr.mxu0 0.0
  %3375 = vmatpush1.msra.mxu0 0.0
  %3376 = vmatprep.subr.mxu0 0.0
  %3377 = vmatpush1.msra.mxu0 0.0
  %3378 = vmatprep.subr.mxu0 0.0
  %3379 = vmatpush1.msra.mxu0 0.0
  %3380 = vmatprep.subr.mxu0 0.0
  %3381 = vmatpush1.msra.mxu0 0.0
  %3382 = vmatprep.subr.mxu0 0.0
  %3383 = vmatpush1.msra.mxu0 0.0
  %3384 = vmatprep.subr.mxu0 0.0
  %3385 = vmatpush1.msra.mxu0 0.0
  %3386 = vmatprep.subr.mxu0 0.0
  %3387 = vmatpush1.msra.mxu0 0.0
  %3388 = vmatprep.subr.mxu0 0.0
  %3389 = vmatpush1.msra.mxu0 0.0
  %3390 = vmatprep.subr.mxu0 0.0
  %3391 = vmatpush1.msra.mxu0 0.0
  %3392 = vmatprep.subr.mxu0 0.0
  %3393 = vmatpush1.msra.mxu0 0.0
  %3394 = vmatprep.subr.mxu0 0.0
  %3395 = vmatpush1.msra.mxu0 0.0
  %3396 = vmatprep.subr.mxu0 0.0
  %3397 = vmatpush1.msra.mxu0 0.0
  %3398 = vmatprep.subr.mxu0 0.0
  %3399 = vmatpush1.msra.mxu0 0.0
  %3400 = vmatprep.subr.mxu0 0.0
  %3401 = vmatpush1.msra.mxu0 0.0
  %3402 = vmatprep.subr.mxu0 0.0
  %3403 = vmatpush1.msra.mxu0 0.0
  %3404 = vmatprep.subr.mxu0 0.0
  %3405 = vmatpush1.msra.mxu0 0.0
  %3406 = vmatprep.subr.mxu0 0.0
  %3407 = vmatpush1.msra.mxu0 0.0
  %3408 = vmatprep.subr.mxu0 0.0
  %3409 = vmatpush1.msra.mxu0 0.0
  %3410 = vmatprep.mubr.f32.mxu0 0.0
  %3411 = vmatmul.mubr.f32.gmra.mrb[0].mxu0 %v3344
  %v3412 = vpop.f32.mrb[0].mxu0
  %v3413 = vadd.f32 0.0, %v3412
  %v3414 = vpop.f32.mrb[0].mxu0
  %3415 = vdwg.mxu0
  %v3417 = vrot.slane %v3343, 6
  %3418 = vrot.lane.b32.xlu0 %v3417, 32
  %v3419 = vpop.permute.xlu0 %3418
  %v3420 = vsel %vm2325, %v3419, 0
  %3422 = vmatprep.subr.mxu0 0.0
  %3423 = vmatpush1.msra.mxu0 %v2312
  %3424 = vmatprep.subr.mxu0 0.0
  %3425 = vmatpush1.msra.mxu0 %v2313
  %3426 = vmatprep.subr.mxu0 0.0
  %3427 = vmatpush1.msra.mxu0 %v2314
  %3428 = vmatprep.subr.mxu0 0.0
  %3429 = vmatpush1.msra.mxu0 %v2315
  %3430 = vmatprep.subr.mxu0 0.0
  %3431 = vmatpush1.msra.mxu0 0.0
  %3432 = vmatprep.subr.mxu0 0.0
  %3433 = vmatpush1.msra.mxu0 0.0
  %3434 = vmatprep.subr.mxu0 0.0
  %3435 = vmatpush1.msra.mxu0 0.0
  %3436 = vmatprep.subr.mxu0 0.0
  %3437 = vmatpush1.msra.mxu0 0.0
  %3438 = vmatprep.subr.mxu0 0.0
  %3439 = vmatpush1.msra.mxu0 0.0
  %3440 = vmatprep.subr.mxu0 0.0
  %3441 = vmatpush1.msra.mxu0 0.0
  %3442 = vmatprep.subr.mxu0 0.0
  %3443 = vmatpush1.msra.mxu0 0.0
  %3444 = vmatprep.subr.mxu0 0.0
  %3445 = vmatpush1.msra.mxu0 0.0
  %3446 = vmatprep.subr.mxu0 0.0
  %3447 = vmatpush1.msra.mxu0 0.0
  %3448 = vmatprep.subr.mxu0 0.0
  %3449 = vmatpush1.msra.mxu0 0.0
  %3450 = vmatprep.subr.mxu0 0.0
  %3451 = vmatpush1.msra.mxu0 0.0
  %3452 = vmatprep.subr.mxu0 0.0
  %3453 = vmatpush1.msra.mxu0 0.0
  %3454 = vmatprep.subr.mxu0 0.0
  %3455 = vmatpush1.msra.mxu0 0.0
  %3456 = vmatprep.subr.mxu0 0.0
  %3457 = vmatpush1.msra.mxu0 0.0
  %3458 = vmatprep.subr.mxu0 0.0
  %3459 = vmatpush1.msra.mxu0 0.0
  %3460 = vmatprep.subr.mxu0 0.0
  %3461 = vmatpush1.msra.mxu0 0.0
  %3462 = vmatprep.subr.mxu0 0.0
  %3463 = vmatpush1.msra.mxu0 0.0
  %3464 = vmatprep.subr.mxu0 0.0
  %3465 = vmatpush1.msra.mxu0 0.0
  %3466 = vmatprep.subr.mxu0 0.0
  %3467 = vmatpush1.msra.mxu0 0.0
  %3468 = vmatprep.subr.mxu0 0.0
  %3469 = vmatpush1.msra.mxu0 0.0
  %3470 = vmatprep.subr.mxu0 0.0
  %3471 = vmatpush1.msra.mxu0 0.0
  %3472 = vmatprep.subr.mxu0 0.0
  %3473 = vmatpush1.msra.mxu0 0.0
  %3474 = vmatprep.subr.mxu0 0.0
  %3475 = vmatpush1.msra.mxu0 0.0
  %3476 = vmatprep.subr.mxu0 0.0
  %3477 = vmatpush1.msra.mxu0 0.0
  %3478 = vmatprep.subr.mxu0 0.0
  %3479 = vmatpush1.msra.mxu0 0.0
  %3480 = vmatprep.subr.mxu0 0.0
  %3481 = vmatpush1.msra.mxu0 0.0
  %3482 = vmatprep.subr.mxu0 0.0
  %3483 = vmatpush1.msra.mxu0 0.0
  %3484 = vmatprep.subr.mxu0 0.0
  %3485 = vmatpush1.msra.mxu0 0.0
  %3486 = vmatprep.mubr.f32.mxu0 0.0
  %3487 = vmatmul.mubr.f32.gmra.mrb[0].mxu0 %v3420
  %v3488 = vpop.f32.mrb[0].mxu0
  %v3489 = vadd.f32 %v3413, %v3488
  %v3490 = vpop.f32.mrb[0].mxu0
  %3491 = vdwg.mxu0
  %v3492 = vadd.f32 %v3489, %v2653
  %v3493 = vxor.u32 %v3492, 2147483648
  %v3494 = vmul.f32 %v3493, 1.442695
  %v3495 = vpow.pop %v3494
  %v3496 = vadd.f32 %v3495, 1.0
  %v3497 = vrcp.pop %v3496
  %v3498 = vmul.f32 1.0, %v3497
  %v3499 = vtanh.pop %v3492
  %v3500 = vmul.f32 %v3498, %v3231
  %3502 = vrot.lane.b32.xlu0 %v3499, 64
  %v3503 = vpop.permute.xlu0 %3502
  %v3505 = vmul.f32 %v3498, %v3503
  %3507 = vrot.lane.b32.xlu0 %v3505, 32
  %v3508 = vpop.permute.xlu0 %3507
  %v3510 = vadd.f32 %v3500, %v3508
  %v3511 = vtanh.pop %v3510
  %3513 = vrot.lane.b32.xlu0 %v3511, 64
  %v3514 = vpop.permute.xlu0 %3513
  %v3516 = vmul.f32 %v3498, %v3514
  %3518 = vrot.lane.b32.xlu0 %v3516, 32
  %v3519 = vpop.permute.xlu0 %3518
  %3521 = vst.msk [vmem:[#allocation2 + $0x6] sm:$0x3] %vm2683, %v3519
  %3522 = vmatprep.subr.mxu0 0.0
  %3523 = vmatpush1.msra.mxu0 %v2306
  %3524 = vmatprep.subr.mxu0 0.0
  %3525 = vmatpush1.msra.mxu0 %v2307
  %3526 = vmatprep.subr.mxu0 0.0
  %3527 = vmatpush1.msra.mxu0 %v2308
  %3528 = vmatprep.subr.mxu0 0.0
  %3529 = vmatpush1.msra.mxu0 %v2309
  %3530 = vmatprep.subr.mxu0 0.0
  %3531 = vmatpush1.msra.mxu0 0.0
  %3532 = vmatprep.subr.mxu0 0.0
  %3533 = vmatpush1.msra.mxu0 0.0
  %3534 = vmatprep.subr.mxu0 0.0
  %3535 = vmatpush1.msra.mxu0 0.0
  %3536 = vmatprep.subr.mxu0 0.0
  %3537 = vmatpush1.msra.mxu0 0.0
  %3538 = vmatprep.subr.mxu0 0.0
  %3539 = vmatpush1.msra.mxu0 0.0
  %3540 = vmatprep.subr.mxu0 0.0
  %3541 = vmatpush1.msra.mxu0 0.0
  %3542 = vmatprep.subr.mxu0 0.0
  %3543 = vmatpush1.msra.mxu0 0.0
  %3544 = vmatprep.subr.mxu0 0.0
  %3545 = vmatpush1.msra.mxu0 0.0
  %3546 = vmatprep.subr.mxu0 0.0
  %3547 = vmatpush1.msra.mxu0 0.0
  %3548 = vmatprep.subr.mxu0 0.0
  %3549 = vmatpush1.msra.mxu0 0.0
  %3550 = vmatprep.subr.mxu0 0.0
  %3551 = vmatpush1.msra.mxu0 0.0
  %3552 = vmatprep.subr.mxu0 0.0
  %3553 = vmatpush1.msra.mxu0 0.0
  %3554 = vmatprep.subr.mxu0 0.0
  %3555 = vmatpush1.msra.mxu0 0.0
  %3556 = vmatprep.subr.mxu0 0.0
  %3557 = vmatpush1.msra.mxu0 0.0
  %3558 = vmatprep.subr.mxu0 0.0
  %3559 = vmatpush1.msra.mxu0 0.0
  %3560 = vmatprep.subr.mxu0 0.0
  %3561 = vmatpush1.msra.mxu0 0.0
  %3562 = vmatprep.subr.mxu0 0.0
  %3563 = vmatpush1.msra.mxu0 0.0
  %3564 = vmatprep.subr.mxu0 0.0
  %3565 = vmatpush1.msra.mxu0 0.0
  %3566 = vmatprep.subr.mxu0 0.0
  %3567 = vmatpush1.msra.mxu0 0.0
  %3568 = vmatprep.subr.mxu0 0.0
  %3569 = vmatpush1.msra.mxu0 0.0
  %3570 = vmatprep.subr.mxu0 0.0
  %3571 = vmatpush1.msra.mxu0 0.0
  %3572 = vmatprep.subr.mxu0 0.0
  %3573 = vmatpush1.msra.mxu0 0.0
  %3574 = vmatprep.subr.mxu0 0.0
  %3575 = vmatpush1.msra.mxu0 0.0
  %3576 = vmatprep.subr.mxu0 0.0
  %3577 = vmatpush1.msra.mxu0 0.0
  %3578 = vmatprep.subr.mxu0 0.0
  %3579 = vmatpush1.msra.mxu0 0.0
  %3580 = vmatprep.subr.mxu0 0.0
  %3581 = vmatpush1.msra.mxu0 0.0
  %3582 = vmatprep.subr.mxu0 0.0
  %3583 = vmatpush1.msra.mxu0 0.0
  %3584 = vmatprep.subr.mxu0 0.0
  %3585 = vmatpush1.msra.mxu0 0.0
  %3586 = vmatprep.mubr.f32.mxu0 0.0
  %3587 = vmatmul.mubr.f32.gmra.mrb[0].mxu0 %v3420
  %v3588 = vpop.f32.mrb[0].mxu0
  %v3589 = vadd.f32 0.0, %v3588
  %v3590 = vpop.f32.mrb[0].mxu0
  %3591 = vdwg.mxu0
  %v3592 = vadd.f32 %v2404, %v3589
  %v3593 = vxor.u32 %v3592, 2147483648
  %v3594 = vmul.f32 %v3593, 1.442695
  %v3595 = vpow.pop %v3594
  %v3596 = vadd.f32 %v3595, 1.0
  %v3597 = vrcp.pop %v3596
  %v3598 = vmul.f32 1.0, %v3597
  %v3599 = vtanh.pop %v3592
  %v3601 = vrot.slane %v3337, 6
  %v3603 = vmul.f32 %v3598, %v3601
  %3605 = vrot.lane.b32.xlu0 %v3599, 64
  %v3606 = vpop.permute.xlu0 %3605
  %v3608 = vmul.f32 %v3598, %v3606
  %3610 = vrot.lane.b32.xlu0 %v3608, 32
  %v3611 = vpop.permute.xlu0 %3610
  %v3613 = vadd.f32 %v3603, %v3611
  %v3614 = vtanh.pop %v3613
  %3616 = vrot.lane.b32.xlu0 %v3614, 64
  %v3617 = vpop.permute.xlu0 %3616
  %v3619 = vmul.f32 %v3598, %v3617
  %v3620 = vsel %vm2325, %v3519, 0
  %3622 = vmatprep.subr.mxu0 0.0
  %3623 = vmatpush1.msra.mxu0 %v2316
  %3624 = vmatprep.subr.mxu0 0.0
  %3625 = vmatpush1.msra.mxu0 %v2317
  %3626 = vmatprep.subr.mxu0 0.0
  %3627 = vmatpush1.msra.mxu0 %v2318
  %3628 = vmatprep.subr.mxu0 0.0
  %3629 = vmatpush1.msra.mxu0 %v2319
  %3630 = vmatprep.subr.mxu0 0.0
  %3631 = vmatpush1.msra.mxu0 0.0
  %3632 = vmatprep.subr.mxu0 0.0
  %3633 = vmatpush1.msra.mxu0 0.0
  %3634 = vmatprep.subr.mxu0 0.0
  %3635 = vmatpush1.msra.mxu0 0.0
  %3636 = vmatprep.subr.mxu0 0.0
  %3637 = vmatpush1.msra.mxu0 0.0
  %3638 = vmatprep.subr.mxu0 0.0
  %3639 = vmatpush1.msra.mxu0 0.0
  %3640 = vmatprep.subr.mxu0 0.0
  %3641 = vmatpush1.msra.mxu0 0.0
  %3642 = vmatprep.subr.mxu0 0.0
  %3643 = vmatpush1.msra.mxu0 0.0
  %3644 = vmatprep.subr.mxu0 0.0
  %3645 = vmatpush1.msra.mxu0 0.0
  %3646 = vmatprep.subr.mxu0 0.0
  %3647 = vmatpush1.msra.mxu0 0.0
  %3648 = vmatprep.subr.mxu0 0.0
  %3649 = vmatpush1.msra.mxu0 0.0
  %3650 = vmatprep.subr.mxu0 0.0
  %3651 = vmatpush1.msra.mxu0 0.0
  %3652 = vmatprep.subr.mxu0 0.0
  %3653 = vmatpush1.msra.mxu0 0.0
  %3654 = vmatprep.subr.mxu0 0.0
  %3655 = vmatpush1.msra.mxu0 0.0
  %3656 = vmatprep.subr.mxu0 0.0
  %3657 = vmatpush1.msra.mxu0 0.0
  %3658 = vmatprep.subr.mxu0 0.0
  %3659 = vmatpush1.msra.mxu0 0.0
  %3660 = vmatprep.subr.mxu0 0.0
  %3661 = vmatpush1.msra.mxu0 0.0
  %3662 = vmatprep.subr.mxu0 0.0
  %3663 = vmatpush1.msra.mxu0 0.0
  %3664 = vmatprep.subr.mxu0 0.0
  %3665 = vmatpush1.msra.mxu0 0.0
  %3666 = vmatprep.subr.mxu0 0.0
  %3667 = vmatpush1.msra.mxu0 0.0
  %3668 = vmatprep.subr.mxu0 0.0
  %3669 = vmatpush1.msra.mxu0 0.0
  %3670 = vmatprep.subr.mxu0 0.0
  %3671 = vmatpush1.msra.mxu0 0.0
  %3672 = vmatprep.subr.mxu0 0.0
  %3673 = vmatpush1.msra.mxu0 0.0
  %3674 = vmatprep.subr.mxu0 0.0
  %3675 = vmatpush1.msra.mxu0 0.0
  %3676 = vmatprep.subr.mxu0 0.0
  %3677 = vmatpush1.msra.mxu0 0.0
  %3678 = vmatprep.subr.mxu0 0.0
  %3679 = vmatpush1.msra.mxu0 0.0
  %3680 = vmatprep.subr.mxu0 0.0
  %3681 = vmatpush1.msra.mxu0 0.0
  %3682 = vmatprep.subr.mxu0 0.0
  %3683 = vmatpush1.msra.mxu0 0.0
  %3684 = vmatprep.subr.mxu0 0.0
  %3685 = vmatpush1.msra.mxu0 0.0
  %3686 = vmatprep.mubr.f32.mxu0 0.0
  %3687 = vmatmul.mubr.f32.gmra.mrb[0].mxu0 %v3620
  %v3688 = vpop.f32.mrb[0].mxu0
  %v3689 = vadd.f32 0.0, %v3688
  %v3690 = vpop.f32.mrb[0].mxu0
  %3691 = vdwg.mxu0
  %3693 = vrot.lane.b32.xlu0 %v3619, 32
  %v3694 = vpop.permute.xlu0 %3693
  %v3695 = vsel %vm2325, %v3694, 0
  %3697 = vmatprep.subr.mxu0 0.0
  %3698 = vmatpush1.msra.mxu0 %v2312
  %3699 = vmatprep.subr.mxu0 0.0
  %3700 = vmatpush1.msra.mxu0 %v2313
  %3701 = vmatprep.subr.mxu0 0.0
  %3702 = vmatpush1.msra.mxu0 %v2314
  %3703 = vmatprep.subr.mxu0 0.0
  %3704 = vmatpush1.msra.mxu0 %v2315
  %3705 = vmatprep.subr.mxu0 0.0
  %3706 = vmatpush1.msra.mxu0 0.0
  %3707 = vmatprep.subr.mxu0 0.0
  %3708 = vmatpush1.msra.mxu0 0.0
  %3709 = vmatprep.subr.mxu0 0.0
  %3710 = vmatpush1.msra.mxu0 0.0
  %3711 = vmatprep.subr.mxu0 0.0
  %3712 = vmatpush1.msra.mxu0 0.0
  %3713 = vmatprep.subr.mxu0 0.0
  %3714 = vmatpush1.msra.mxu0 0.0
  %3715 = vmatprep.subr.mxu0 0.0
  %3716 = vmatpush1.msra.mxu0 0.0
  %3717 = vmatprep.subr.mxu0 0.0
  %3718 = vmatpush1.msra.mxu0 0.0
  %3719 = vmatprep.subr.mxu0 0.0
  %3720 = vmatpush1.msra.mxu0 0.0
  %3721 = vmatprep.subr.mxu0 0.0
  %3722 = vmatpush1.msra.mxu0 0.0
  %3723 = vmatprep.subr.mxu0 0.0
  %3724 = vmatpush1.msra.mxu0 0.0
  %3725 = vmatprep.subr.mxu0 0.0
  %3726 = vmatpush1.msra.mxu0 0.0
  %3727 = vmatprep.subr.mxu0 0.0
  %3728 = vmatpush1.msra.mxu0 0.0
  %3729 = vmatprep.subr.mxu0 0.0
  %3730 = vmatpush1.msra.mxu0 0.0
  %3731 = vmatprep.subr.mxu0 0.0
  %3732 = vmatpush1.msra.mxu0 0.0
  %3733 = vmatprep.subr.mxu0 0.0
  %3734 = vmatpush1.msra.mxu0 0.0
  %3735 = vmatprep.subr.mxu0 0.0
  %3736 = vmatpush1.msra.mxu0 0.0
  %3737 = vmatprep.subr.mxu0 0.0
  %3738 = vmatpush1.msra.mxu0 0.0
  %3739 = vmatprep.subr.mxu0 0.0
  %3740 = vmatpush1.msra.mxu0 0.0
  %3741 = vmatprep.subr.mxu0 0.0
  %3742 = vmatpush1.msra.mxu0 0.0
  %3743 = vmatprep.subr.mxu0 0.0
  %3744 = vmatpush1.msra.mxu0 0.0
  %3745 = vmatprep.subr.mxu0 0.0
  %3746 = vmatpush1.msra.mxu0 0.0
  %3747 = vmatprep.subr.mxu0 0.0
  %3748 = vmatpush1.msra.mxu0 0.0
  %3749 = vmatprep.subr.mxu0 0.0
  %3750 = vmatpush1.msra.mxu0 0.0
  %3751 = vmatprep.subr.mxu0 0.0
  %3752 = vmatpush1.msra.mxu0 0.0
  %3753 = vmatprep.subr.mxu0 0.0
  %3754 = vmatpush1.msra.mxu0 0.0
  %3755 = vmatprep.subr.mxu0 0.0
  %3756 = vmatpush1.msra.mxu0 0.0
  %3757 = vmatprep.subr.mxu0 0.0
  %3758 = vmatpush1.msra.mxu0 0.0
  %3759 = vmatprep.subr.mxu0 0.0
  %3760 = vmatpush1.msra.mxu0 0.0
  %3761 = vmatprep.mubr.f32.mxu0 0.0
  %3762 = vmatmul.mubr.f32.gmra.mrb[0].mxu0 %v3695
  %v3763 = vpop.f32.mrb[0].mxu0
  %v3764 = vadd.f32 %v3689, %v3763
  %v3765 = vpop.f32.mrb[0].mxu0
  %3766 = vdwg.mxu0
  %v3767 = vadd.f32 %v3764, %v2653
  %v3768 = vxor.u32 %v3767, 2147483648
  %v3769 = vmul.f32 %v3768, 1.442695
  %v3770 = vpow.pop %v3769
  %v3771 = vadd.f32 %v3770, 1.0
  %v3772 = vrcp.pop %v3771
  %v3773 = vmul.f32 1.0, %v3772
  %v3774 = vtanh.pop %v3767
  %v3775 = vmul.f32 %v3773, %v3510
  %3777 = vrot.lane.b32.xlu0 %v3774, 64
  %v3778 = vpop.permute.xlu0 %3777
  %v3780 = vmul.f32 %v3773, %v3778
  %3782 = vrot.lane.b32.xlu0 %v3780, 32
  %v3783 = vpop.permute.xlu0 %3782
  %v3785 = vadd.f32 %v3775, %v3783
  %v3786 = vtanh.pop %v3785
  %3788 = vrot.lane.b32.xlu0 %v3786, 64
  %v3789 = vpop.permute.xlu0 %3788
  %v3791 = vmul.f32 %v3773, %v3789
  %3793 = vrot.lane.b32.xlu0 %v3791, 32
  %v3794 = vpop.permute.xlu0 %3793
  %3796 = vst.msk [vmem:[#allocation2 + $0x8] sm:$0x3] %vm2683, %v3794
  %3797 = vmatprep.subr.mxu0 0.0
  %3798 = vmatpush1.msra.mxu0 %v2306
  %3799 = vmatprep.subr.mxu0 0.0
  %3800 = vmatpush1.msra.mxu0 %v2307
  %3801 = vmatprep.subr.mxu0 0.0
  %3802 = vmatpush1.msra.mxu0 %v2308
  %3803 = vmatprep.subr.mxu0 0.0
  %3804 = vmatpush1.msra.mxu0 %v2309
  %3805 = vmatprep.subr.mxu0 0.0
  %3806 = vmatpush1.msra.mxu0 0.0
  %3807 = vmatprep.subr.mxu0 0.0
  %3808 = vmatpush1.msra.mxu0 0.0
  %3809 = vmatprep.subr.mxu0 0.0
  %3810 = vmatpush1.msra.mxu0 0.0
  %3811 = vmatprep.subr.mxu0 0.0
  %3812 = vmatpush1.msra.mxu0 0.0
  %3813 = vmatprep.subr.mxu0 0.0
  %3814 = vmatpush1.msra.mxu0 0.0
  %3815 = vmatprep.subr.mxu0 0.0
  %3816 = vmatpush1.msra.mxu0 0.0
  %3817 = vmatprep.subr.mxu0 0.0
  %3818 = vmatpush1.msra.mxu0 0.0
  %3819 = vmatprep.subr.mxu0 0.0
  %3820 = vmatpush1.msra.mxu0 0.0
  %3821 = vmatprep.subr.mxu0 0.0
  %3822 = vmatpush1.msra.mxu0 0.0
  %3823 = vmatprep.subr.mxu0 0.0
  %3824 = vmatpush1.msra.mxu0 0.0
  %3825 = vmatprep.subr.mxu0 0.0
  %3826 = vmatpush1.msra.mxu0 0.0
  %3827 = vmatprep.subr.mxu0 0.0
  %3828 = vmatpush1.msra.mxu0 0.0
  %3829 = vmatprep.subr.mxu0 0.0
  %3830 = vmatpush1.msra.mxu0 0.0
  %3831 = vmatprep.subr.mxu0 0.0
  %3832 = vmatpush1.msra.mxu0 0.0
  %3833 = vmatprep.subr.mxu0 0.0
  %3834 = vmatpush1.msra.mxu0 0.0
  %3835 = vmatprep.subr.mxu0 0.0
  %3836 = vmatpush1.msra.mxu0 0.0
  %3837 = vmatprep.subr.mxu0 0.0
  %3838 = vmatpush1.msra.mxu0 0.0
  %3839 = vmatprep.subr.mxu0 0.0
  %3840 = vmatpush1.msra.mxu0 0.0
  %3841 = vmatprep.subr.mxu0 0.0
  %3842 = vmatpush1.msra.mxu0 0.0
  %3843 = vmatprep.subr.mxu0 0.0
  %3844 = vmatpush1.msra.mxu0 0.0
  %3845 = vmatprep.subr.mxu0 0.0
  %3846 = vmatpush1.msra.mxu0 0.0
  %3847 = vmatprep.subr.mxu0 0.0
  %3848 = vmatpush1.msra.mxu0 0.0
  %3849 = vmatprep.subr.mxu0 0.0
  %3850 = vmatpush1.msra.mxu0 0.0
  %3851 = vmatprep.subr.mxu0 0.0
  %3852 = vmatpush1.msra.mxu0 0.0
  %3853 = vmatprep.subr.mxu0 0.0
  %3854 = vmatpush1.msra.mxu0 0.0
  %3855 = vmatprep.subr.mxu0 0.0
  %3856 = vmatpush1.msra.mxu0 0.0
  %3857 = vmatprep.subr.mxu0 0.0
  %3858 = vmatpush1.msra.mxu0 0.0
  %3859 = vmatprep.subr.mxu0 0.0
  %3860 = vmatpush1.msra.mxu0 0.0
  %3861 = vmatprep.mubr.f32.mxu0 0.0
  %3862 = vmatmul.mubr.f32.gmra.mrb[0].mxu0 %v3695
  %v3863 = vpop.f32.mrb[0].mxu0
  %v3864 = vadd.f32 0.0, %v3863
  %v3865 = vpop.f32.mrb[0].mxu0
  %3866 = vdwg.mxu0
  %v3868 = vrot.slane %v3864, 6
  %v3870 = vadd.f32 %v2404, %v3868
  %v3871 = vxor.u32 %v3870, 2147483648
  %v3872 = vmul.f32 %v3871, 1.442695
  %v3873 = vpow.pop %v3872
  %v3874 = vadd.f32 %v3873, 1.0
  %v3875 = vrcp.pop %v3874
  %v3876 = vmul.f32 1.0, %v3875
  %v3877 = vtanh.pop %v3870
  %v3879 = vrot.slane %v3613, 6
  %v3881 = vmul.f32 %v3876, %v3879
  %3883 = vrot.lane.b32.xlu0 %v3877, 64
  %v3884 = vpop.permute.xlu0 %3883
  %v3886 = vmul.f32 %v3876, %v3884
  %3888 = vrot.lane.b32.xlu0 %v3886, 32
  %v3889 = vpop.permute.xlu0 %3888
  %v3891 = vadd.f32 %v3881, %v3889
  %v3892 = vtanh.pop %v3891
  %3894 = vrot.lane.b32.xlu0 %v3892, 64
  %v3895 = vpop.permute.xlu0 %3894
  %v3897 = vmul.f32 %v3876, %v3895
  %v3898 = vsel %vm2325, %v3794, 0
  %3900 = vmatprep.subr.mxu0 0.0
  %3901 = vmatpush1.msra.mxu0 %v2316
  %3902 = vmatprep.subr.mxu0 0.0
  %3903 = vmatpush1.msra.mxu0 %v2317
  %3904 = vmatprep.subr.mxu0 0.0
  %3905 = vmatpush1.msra.mxu0 %v2318
  %3906 = vmatprep.subr.mxu0 0.0
  %3907 = vmatpush1.msra.mxu0 %v2319
  %3908 = vmatprep.subr.mxu0 0.0
  %3909 = vmatpush1.msra.mxu0 0.0
  %3910 = vmatprep.subr.mxu0 0.0
  %3911 = vmatpush1.msra.mxu0 0.0
  %3912 = vmatprep.subr.mxu0 0.0
  %3913 = vmatpush1.msra.mxu0 0.0
  %3914 = vmatprep.subr.mxu0 0.0
  %3915 = vmatpush1.msra.mxu0 0.0
  %3916 = vmatprep.subr.mxu0 0.0
  %3917 = vmatpush1.msra.mxu0 0.0
  %3918 = vmatprep.subr.mxu0 0.0
  %3919 = vmatpush1.msra.mxu0 0.0
  %3920 = vmatprep.subr.mxu0 0.0
  %3921 = vmatpush1.msra.mxu0 0.0
  %3922 = vmatprep.subr.mxu0 0.0
  %3923 = vmatpush1.msra.mxu0 0.0
  %3924 = vmatprep.subr.mxu0 0.0
  %3925 = vmatpush1.msra.mxu0 0.0
  %3926 = vmatprep.subr.mxu0 0.0
  %3927 = vmatpush1.msra.mxu0 0.0
  %3928 = vmatprep.subr.mxu0 0.0
  %3929 = vmatpush1.msra.mxu0 0.0
  %3930 = vmatprep.subr.mxu0 0.0
  %3931 = vmatpush1.msra.mxu0 0.0
  %3932 = vmatprep.subr.mxu0 0.0
  %3933 = vmatpush1.msra.mxu0 0.0
  %3934 = vmatprep.subr.mxu0 0.0
  %3935 = vmatpush1.msra.mxu0 0.0
  %3936 = vmatprep.subr.mxu0 0.0
  %3937 = vmatpush1.msra.mxu0 0.0
  %3938 = vmatprep.subr.mxu0 0.0
  %3939 = vmatpush1.msra.mxu0 0.0
  %3940 = vmatprep.subr.mxu0 0.0
  %3941 = vmatpush1.msra.mxu0 0.0
  %3942 = vmatprep.subr.mxu0 0.0
  %3943 = vmatpush1.msra.mxu0 0.0
  %3944 = vmatprep.subr.mxu0 0.0
  %3945 = vmatpush1.msra.mxu0 0.0
  %3946 = vmatprep.subr.mxu0 0.0
  %3947 = vmatpush1.msra.mxu0 0.0
  %3948 = vmatprep.subr.mxu0 0.0
  %3949 = vmatpush1.msra.mxu0 0.0
  %3950 = vmatprep.subr.mxu0 0.0
  %3951 = vmatpush1.msra.mxu0 0.0
  %3952 = vmatprep.subr.mxu0 0.0
  %3953 = vmatpush1.msra.mxu0 0.0
  %3954 = vmatprep.subr.mxu0 0.0
  %3955 = vmatpush1.msra.mxu0 0.0
  %3956 = vmatprep.subr.mxu0 0.0
  %3957 = vmatpush1.msra.mxu0 0.0
  %3958 = vmatprep.subr.mxu0 0.0
  %3959 = vmatpush1.msra.mxu0 0.0
  %3960 = vmatprep.subr.mxu0 0.0
  %3961 = vmatpush1.msra.mxu0 0.0
  %3962 = vmatprep.subr.mxu0 0.0
  %3963 = vmatpush1.msra.mxu0 0.0
  %3964 = vmatprep.mubr.f32.mxu0 0.0
  %3965 = vmatmul.mubr.f32.gmra.mrb[0].mxu0 %v3898
  %v3966 = vpop.f32.mrb[0].mxu0
  %v3967 = vadd.f32 0.0, %v3966
  %v3968 = vpop.f32.mrb[0].mxu0
  %3969 = vdwg.mxu0
  %v3971 = vrot.slane %v3897, 2
  %3972 = vrot.lane.b32.xlu0 %v3971, 32
  %v3973 = vpop.permute.xlu0 %3972
  %v3974 = vsel %vm2325, %v3973, 0
  %3976 = vmatprep.subr.mxu0 0.0
  %3977 = vmatpush1.msra.mxu0 %v2312
  %3978 = vmatprep.subr.mxu0 0.0
  %3979 = vmatpush1.msra.mxu0 %v2313
  %3980 = vmatprep.subr.mxu0 0.0
  %3981 = vmatpush1.msra.mxu0 %v2314
  %3982 = vmatprep.subr.mxu0 0.0
  %3983 = vmatpush1.msra.mxu0 %v2315
  %3984 = vmatprep.subr.mxu0 0.0
  %3985 = vmatpush1.msra.mxu0 0.0
  %3986 = vmatprep.subr.mxu0 0.0
  %3987 = vmatpush1.msra.mxu0 0.0
  %3988 = vmatprep.subr.mxu0 0.0
  %3989 = vmatpush1.msra.mxu0 0.0
  %3990 = vmatprep.subr.mxu0 0.0
  %3991 = vmatpush1.msra.mxu0 0.0
  %3992 = vmatprep.subr.mxu0 0.0
  %3993 = vmatpush1.msra.mxu0 0.0
  %3994 = vmatprep.subr.mxu0 0.0
  %3995 = vmatpush1.msra.mxu0 0.0
  %3996 = vmatprep.subr.mxu0 0.0
  %3997 = vmatpush1.msra.mxu0 0.0
  %3998 = vmatprep.subr.mxu0 0.0
  %3999 = vmatpush1.msra.mxu0 0.0
  %4000 = vmatprep.subr.mxu0 0.0
  %4001 = vmatpush1.msra.mxu0 0.0
  %4002 = vmatprep.subr.mxu0 0.0
  %4003 = vmatpush1.msra.mxu0 0.0
  %4004 = vmatprep.subr.mxu0 0.0
  %4005 = vmatpush1.msra.mxu0 0.0
  %4006 = vmatprep.subr.mxu0 0.0
  %4007 = vmatpush1.msra.mxu0 0.0
  %4008 = vmatprep.subr.mxu0 0.0
  %4009 = vmatpush1.msra.mxu0 0.0
  %4010 = vmatprep.subr.mxu0 0.0
  %4011 = vmatpush1.msra.mxu0 0.0
  %4012 = vmatprep.subr.mxu0 0.0
  %4013 = vmatpush1.msra.mxu0 0.0
  %4014 = vmatprep.subr.mxu0 0.0
  %4015 = vmatpush1.msra.mxu0 0.0
  %4016 = vmatprep.subr.mxu0 0.0
  %4017 = vmatpush1.msra.mxu0 0.0
  %4018 = vmatprep.subr.mxu0 0.0
  %4019 = vmatpush1.msra.mxu0 0.0
  %4020 = vmatprep.subr.mxu0 0.0
  %4021 = vmatpush1.msra.mxu0 0.0
  %4022 = vmatprep.subr.mxu0 0.0
  %4023 = vmatpush1.msra.mxu0 0.0
  %4024 = vmatprep.subr.mxu0 0.0
  %4025 = vmatpush1.msra.mxu0 0.0
  %4026 = vmatprep.subr.mxu0 0.0
  %4027 = vmatpush1.msra.mxu0 0.0
  %4028 = vmatprep.subr.mxu0 0.0
  %4029 = vmatpush1.msra.mxu0 0.0
  %4030 = vmatprep.subr.mxu0 0.0
  %4031 = vmatpush1.msra.mxu0 0.0
  %4032 = vmatprep.subr.mxu0 0.0
  %4033 = vmatpush1.msra.mxu0 0.0
  %4034 = vmatprep.subr.mxu0 0.0
  %4035 = vmatpush1.msra.mxu0 0.0
  %4036 = vmatprep.subr.mxu0 0.0
  %4037 = vmatpush1.msra.mxu0 0.0
  %4038 = vmatprep.subr.mxu0 0.0
  %4039 = vmatpush1.msra.mxu0 0.0
  %4040 = vmatprep.mubr.f32.mxu0 0.0
  %4041 = vmatmul.mubr.f32.gmra.mrb[0].mxu0 %v3974
  %v4042 = vpop.f32.mrb[0].mxu0
  %v4043 = vadd.f32 %v3967, %v4042
  %v4044 = vpop.f32.mrb[0].mxu0
  %4045 = vdwg.mxu0
  %v4046 = vadd.f32 %v4043, %v2653
  %v4047 = vxor.u32 %v4046, 2147483648
  %v4048 = vmul.f32 %v4047, 1.442695
  %v4049 = vpow.pop %v4048
  %v4050 = vadd.f32 %v4049, 1.0
  %v4051 = vrcp.pop %v4050
  %v4052 = vmul.f32 1.0, %v4051
  %v4053 = vtanh.pop %v4046
  %v4054 = vmul.f32 %v4052, %v3785
  %4056 = vrot.lane.b32.xlu0 %v4053, 64
  %v4057 = vpop.permute.xlu0 %4056
  %v4059 = vmul.f32 %v4052, %v4057
  %4061 = vrot.lane.b32.xlu0 %v4059, 32
  %v4062 = vpop.permute.xlu0 %4061
  %v4064 = vadd.f32 %v4054, %v4062
  %v4065 = vtanh.pop %v4064
  %4067 = vrot.lane.b32.xlu0 %v4065, 64
  %v4068 = vpop.permute.xlu0 %4067
  %v4070 = vmul.f32 %v4052, %v4068
  %4072 = vrot.lane.b32.xlu0 %v4070, 32
  %v4073 = vpop.permute.xlu0 %4072
  %4075 = vst.msk [vmem:[#allocation2 + $0xa] sm:$0x3] %vm2683, %v4073
  %4076 = vmatprep.subr.mxu0 0.0
  %4077 = vmatpush1.msra.mxu0 %v2306
  %4078 = vmatprep.subr.mxu0 0.0
  %4079 = vmatpush1.msra.mxu0 %v2307
  %4080 = vmatprep.subr.mxu0 0.0
  %4081 = vmatpush1.msra.mxu0 %v2308
  %4082 = vmatprep.subr.mxu0 0.0
  %4083 = vmatpush1.msra.mxu0 %v2309
  %4084 = vmatprep.subr.mxu0 0.0
  %4085 = vmatpush1.msra.mxu0 0.0
  %4086 = vmatprep.subr.mxu0 0.0
  %4087 = vmatpush1.msra.mxu0 0.0
  %4088 = vmatprep.subr.mxu0 0.0
  %4089 = vmatpush1.msra.mxu0 0.0
  %4090 = vmatprep.subr.mxu0 0.0
  %4091 = vmatpush1.msra.mxu0 0.0
  %4092 = vmatprep.subr.mxu0 0.0
  %4093 = vmatpush1.msra.mxu0 0.0
  %4094 = vmatprep.subr.mxu0 0.0
  %4095 = vmatpush1.msra.mxu0 0.0
  %4096 = vmatprep.subr.mxu0 0.0
  %4097 = vmatpush1.msra.mxu0 0.0
  %4098 = vmatprep.subr.mxu0 0.0
  %4099 = vmatpush1.msra.mxu0 0.0
  %4100 = vmatprep.subr.mxu0 0.0
  %4101 = vmatpush1.msra.mxu0 0.0
  %4102 = vmatprep.subr.mxu0 0.0
  %4103 = vmatpush1.msra.mxu0 0.0
  %4104 = vmatprep.subr.mxu0 0.0
  %4105 = vmatpush1.msra.mxu0 0.0
  %4106 = vmatprep.subr.mxu0 0.0
  %4107 = vmatpush1.msra.mxu0 0.0
  %4108 = vmatprep.subr.mxu0 0.0
  %4109 = vmatpush1.msra.mxu0 0.0
  %4110 = vmatprep.subr.mxu0 0.0
  %4111 = vmatpush1.msra.mxu0 0.0
  %4112 = vmatprep.subr.mxu0 0.0
  %4113 = vmatpush1.msra.mxu0 0.0
  %4114 = vmatprep.subr.mxu0 0.0
  %4115 = vmatpush1.msra.mxu0 0.0
  %4116 = vmatprep.subr.mxu0 0.0
  %4117 = vmatpush1.msra.mxu0 0.0
  %4118 = vmatprep.subr.mxu0 0.0
  %4119 = vmatpush1.msra.mxu0 0.0
  %4120 = vmatprep.subr.mxu0 0.0
  %4121 = vmatpush1.msra.mxu0 0.0
  %4122 = vmatprep.subr.mxu0 0.0
  %4123 = vmatpush1.msra.mxu0 0.0
  %4124 = vmatprep.subr.mxu0 0.0
  %4125 = vmatpush1.msra.mxu0 0.0
  %4126 = vmatprep.subr.mxu0 0.0
  %4127 = vmatpush1.msra.mxu0 0.0
  %4128 = vmatprep.subr.mxu0 0.0
  %4129 = vmatpush1.msra.mxu0 0.0
  %4130 = vmatprep.subr.mxu0 0.0
  %4131 = vmatpush1.msra.mxu0 0.0
  %4132 = vmatprep.subr.mxu0 0.0
  %4133 = vmatpush1.msra.mxu0 0.0
  %4134 = vmatprep.subr.mxu0 0.0
  %4135 = vmatpush1.msra.mxu0 0.0
  %4136 = vmatprep.subr.mxu0 0.0
  %4137 = vmatpush1.msra.mxu0 0.0
  %4138 = vmatprep.subr.mxu0 0.0
  %4139 = vmatpush1.msra.mxu0 0.0
  %4140 = vmatprep.mubr.f32.mxu0 0.0
  %4141 = vmatmul.mubr.f32.gmra.mrb[0].mxu0 %v3974
  %v4142 = vpop.f32.mrb[0].mxu0
  %v4143 = vadd.f32 0.0, %v4142
  %v4144 = vpop.f32.mrb[0].mxu0
  %4145 = vdwg.mxu0
  %v4147 = vrot.slane %v4143, 4
  %v4149 = vadd.f32 %v2404, %v4147
  %v4150 = vxor.u32 %v4149, 2147483648
  %v4151 = vmul.f32 %v4150, 1.442695
  %v4152 = vpow.pop %v4151
  %v4153 = vadd.f32 %v4152, 1.0
  %v4154 = vrcp.pop %v4153
  %v4155 = vmul.f32 1.0, %v4154
  %v4156 = vtanh.pop %v4149
  %v4158 = vrot.slane %v3891, 6
  %v4160 = vmul.f32 %v4155, %v4158
  %4162 = vrot.lane.b32.xlu0 %v4156, 64
  %v4163 = vpop.permute.xlu0 %4162
  %v4165 = vmul.f32 %v4155, %v4163
  %4167 = vrot.lane.b32.xlu0 %v4165, 32
  %v4168 = vpop.permute.xlu0 %4167
  %v4170 = vadd.f32 %v4160, %v4168
  %v4171 = vtanh.pop %v4170
  %4173 = vrot.lane.b32.xlu0 %v4171, 64
  %v4174 = vpop.permute.xlu0 %4173
  %v4176 = vmul.f32 %v4155, %v4174
  %v4177 = vsel %vm2325, %v4073, 0
  %4179 = vmatprep.subr.mxu0 0.0
  %4180 = vmatpush1.msra.mxu0 %v2316
  %4181 = vmatprep.subr.mxu0 0.0
  %4182 = vmatpush1.msra.mxu0 %v2317
  %4183 = vmatprep.subr.mxu0 0.0
  %4184 = vmatpush1.msra.mxu0 %v2318
  %4185 = vmatprep.subr.mxu0 0.0
  %4186 = vmatpush1.msra.mxu0 %v2319
  %4187 = vmatprep.subr.mxu0 0.0
  %4188 = vmatpush1.msra.mxu0 0.0
  %4189 = vmatprep.subr.mxu0 0.0
  %4190 = vmatpush1.msra.mxu0 0.0
  %4191 = vmatprep.subr.mxu0 0.0
  %4192 = vmatpush1.msra.mxu0 0.0
  %4193 = vmatprep.subr.mxu0 0.0
  %4194 = vmatpush1.msra.mxu0 0.0
  %4195 = vmatprep.subr.mxu0 0.0
  %4196 = vmatpush1.msra.mxu0 0.0
  %4197 = vmatprep.subr.mxu0 0.0
  %4198 = vmatpush1.msra.mxu0 0.0
  %4199 = vmatprep.subr.mxu0 0.0
  %4200 = vmatpush1.msra.mxu0 0.0
  %4201 = vmatprep.subr.mxu0 0.0
  %4202 = vmatpush1.msra.mxu0 0.0
  %4203 = vmatprep.subr.mxu0 0.0
  %4204 = vmatpush1.msra.mxu0 0.0
  %4205 = vmatprep.subr.mxu0 0.0
  %4206 = vmatpush1.msra.mxu0 0.0
  %4207 = vmatprep.subr.mxu0 0.0
  %4208 = vmatpush1.msra.mxu0 0.0
  %4209 = vmatprep.subr.mxu0 0.0
  %4210 = vmatpush1.msra.mxu0 0.0
  %4211 = vmatprep.subr.mxu0 0.0
  %4212 = vmatpush1.msra.mxu0 0.0
  %4213 = vmatprep.subr.mxu0 0.0
  %4214 = vmatpush1.msra.mxu0 0.0
  %4215 = vmatprep.subr.mxu0 0.0
  %4216 = vmatpush1.msra.mxu0 0.0
  %4217 = vmatprep.subr.mxu0 0.0
  %4218 = vmatpush1.msra.mxu0 0.0
  %4219 = vmatprep.subr.mxu0 0.0
  %4220 = vmatpush1.msra.mxu0 0.0
  %4221 = vmatprep.subr.mxu0 0.0
  %4222 = vmatpush1.msra.mxu0 0.0
  %4223 = vmatprep.subr.mxu0 0.0
  %4224 = vmatpush1.msra.mxu0 0.0
  %4225 = vmatprep.subr.mxu0 0.0
  %4226 = vmatpush1.msra.mxu0 0.0
  %4227 = vmatprep.subr.mxu0 0.0
  %4228 = vmatpush1.msra.mxu0 0.0
  %4229 = vmatprep.subr.mxu0 0.0
  %4230 = vmatpush1.msra.mxu0 0.0
  %4231 = vmatprep.subr.mxu0 0.0
  %4232 = vmatpush1.msra.mxu0 0.0
  %4233 = vmatprep.subr.mxu0 0.0
  %4234 = vmatpush1.msra.mxu0 0.0
  %4235 = vmatprep.subr.mxu0 0.0
  %4236 = vmatpush1.msra.mxu0 0.0
  %4237 = vmatprep.subr.mxu0 0.0
  %4238 = vmatpush1.msra.mxu0 0.0
  %4239 = vmatprep.subr.mxu0 0.0
  %4240 = vmatpush1.msra.mxu0 0.0
  %4241 = vmatprep.subr.mxu0 0.0
  %4242 = vmatpush1.msra.mxu0 0.0
  %4243 = vmatprep.mubr.f32.mxu0 0.0
  %4244 = vmatmul.mubr.f32.gmra.mrb[0].mxu0 %v4177
  %v4245 = vpop.f32.mrb[0].mxu0
  %v4246 = vadd.f32 0.0, %v4245
  %v4247 = vpop.f32.mrb[0].mxu0
  %4248 = vdwg.mxu0
  %v4250 = vrot.slane %v4176, 4
  %4251 = vrot.lane.b32.xlu0 %v4250, 32
  %v4252 = vpop.permute.xlu0 %4251
  %v4253 = vsel %vm2325, %v4252, 0
  %4255 = vmatprep.subr.mxu0 0.0
  %4256 = vmatpush1.msra.mxu0 %v2312
  %4257 = vmatprep.subr.mxu0 0.0
  %4258 = vmatpush1.msra.mxu0 %v2313
  %4259 = vmatprep.subr.mxu0 0.0
  %4260 = vmatpush1.msra.mxu0 %v2314
  %4261 = vmatprep.subr.mxu0 0.0
  %4262 = vmatpush1.msra.mxu0 %v2315
  %4263 = vmatprep.subr.mxu0 0.0
  %4264 = vmatpush1.msra.mxu0 0.0
  %4265 = vmatprep.subr.mxu0 0.0
  %4266 = vmatpush1.msra.mxu0 0.0
  %4267 = vmatprep.subr.mxu0 0.0
  %4268 = vmatpush1.msra.mxu0 0.0
  %4269 = vmatprep.subr.mxu0 0.0
  %4270 = vmatpush1.msra.mxu0 0.0
  %4271 = vmatprep.subr.mxu0 0.0
  %4272 = vmatpush1.msra.mxu0 0.0
  %4273 = vmatprep.subr.mxu0 0.0
  %4274 = vmatpush1.msra.mxu0 0.0
  %4275 = vmatprep.subr.mxu0 0.0
  %4276 = vmatpush1.msra.mxu0 0.0
  %4277 = vmatprep.subr.mxu0 0.0
  %4278 = vmatpush1.msra.mxu0 0.0
  %4279 = vmatprep.subr.mxu0 0.0
  %4280 = vmatpush1.msra.mxu0 0.0
  %4281 = vmatprep.subr.mxu0 0.0
  %4282 = vmatpush1.msra.mxu0 0.0
  %4283 = vmatprep.subr.mxu0 0.0
  %4284 = vmatpush1.msra.mxu0 0.0
  %4285 = vmatprep.subr.mxu0 0.0
  %4286 = vmatpush1.msra.mxu0 0.0
  %4287 = vmatprep.subr.mxu0 0.0
  %4288 = vmatpush1.msra.mxu0 0.0
  %4289 = vmatprep.subr.mxu0 0.0
  %4290 = vmatpush1.msra.mxu0 0.0
  %4291 = vmatprep.subr.mxu0 0.0
  %4292 = vmatpush1.msra.mxu0 0.0
  %4293 = vmatprep.subr.mxu0 0.0
  %4294 = vmatpush1.msra.mxu0 0.0
  %4295 = vmatprep.subr.mxu0 0.0
  %4296 = vmatpush1.msra.mxu0 0.0
  %4297 = vmatprep.subr.mxu0 0.0
  %4298 = vmatpush1.msra.mxu0 0.0
  %4299 = vmatprep.subr.mxu0 0.0
  %4300 = vmatpush1.msra.mxu0 0.0
  %4301 = vmatprep.subr.mxu0 0.0
  %4302 = vmatpush1.msra.mxu0 0.0
  %4303 = vmatprep.subr.mxu0 0.0
  %4304 = vmatpush1.msra.mxu0 0.0
  %4305 = vmatprep.subr.mxu0 0.0
  %4306 = vmatpush1.msra.mxu0 0.0
  %4307 = vmatprep.subr.mxu0 0.0
  %4308 = vmatpush1.msra.mxu0 0.0
  %4309 = vmatprep.subr.mxu0 0.0
  %4310 = vmatpush1.msra.mxu0 0.0
  %4311 = vmatprep.subr.mxu0 0.0
  %4312 = vmatpush1.msra.mxu0 0.0
  %4313 = vmatprep.subr.mxu0 0.0
  %4314 = vmatpush1.msra.mxu0 0.0
  %4315 = vmatprep.subr.mxu0 0.0
  %4316 = vmatpush1.msra.mxu0 0.0
  %4317 = vmatprep.subr.mxu0 0.0
  %4318 = vmatpush1.msra.mxu0 0.0
  %4319 = vmatprep.mubr.f32.mxu0 0.0
  %4320 = vmatmul.mubr.f32.gmra.mrb[0].mxu0 %v4253
  %v4321 = vpop.f32.mrb[0].mxu0
  %v4322 = vadd.f32 %v4246, %v4321
  %v4323 = vpop.f32.mrb[0].mxu0
  %4324 = vdwg.mxu0
  %v4325 = vadd.f32 %v4322, %v2653
  %v4326 = vxor.u32 %v4325, 2147483648
  %v4327 = vmul.f32 %v4326, 1.442695
  %v4328 = vpow.pop %v4327
  %v4329 = vadd.f32 %v4328, 1.0
  %v4330 = vrcp.pop %v4329
  %v4331 = vmul.f32 1.0, %v4330
  %v4332 = vtanh.pop %v4325
  %v4333 = vmul.f32 %v4331, %v4064
  %4335 = vrot.lane.b32.xlu0 %v4332, 64
  %v4336 = vpop.permute.xlu0 %4335
  %v4338 = vmul.f32 %v4331, %v4336
  %4340 = vrot.lane.b32.xlu0 %v4338, 32
  %v4341 = vpop.permute.xlu0 %4340
  %v4343 = vadd.f32 %v4333, %v4341
  %v4344 = vtanh.pop %v4343
  %4346 = vrot.lane.b32.xlu0 %v4344, 64
  %v4347 = vpop.permute.xlu0 %4346
  %v4349 = vmul.f32 %v4331, %v4347
  %4351 = vrot.lane.b32.xlu0 %v4349, 32
  %v4352 = vpop.permute.xlu0 %4351
  %4354 = vst.msk [vmem:[#allocation2 + $0xc] sm:$0x3] %vm2683, %v4352
  %4355 = vmatprep.subr.mxu0 0.0
  %4356 = vmatpush1.msra.mxu0 %v2306
  %4357 = vmatprep.subr.mxu0 0.0
  %4358 = vmatpush1.msra.mxu0 %v2307
  %4359 = vmatprep.subr.mxu0 0.0
  %4360 = vmatpush1.msra.mxu0 %v2308
  %4361 = vmatprep.subr.mxu0 0.0
  %4362 = vmatpush1.msra.mxu0 %v2309
  %4363 = vmatprep.subr.mxu0 0.0
  %4364 = vmatpush1.msra.mxu0 0.0
  %4365 = vmatprep.subr.mxu0 0.0
  %4366 = vmatpush1.msra.mxu0 0.0
  %4367 = vmatprep.subr.mxu0 0.0
  %4368 = vmatpush1.msra.mxu0 0.0
  %4369 = vmatprep.subr.mxu0 0.0
  %4370 = vmatpush1.msra.mxu0 0.0
  %4371 = vmatprep.subr.mxu0 0.0
  %4372 = vmatpush1.msra.mxu0 0.0
  %4373 = vmatprep.subr.mxu0 0.0
  %4374 = vmatpush1.msra.mxu0 0.0
  %4375 = vmatprep.subr.mxu0 0.0
  %4376 = vmatpush1.msra.mxu0 0.0
  %4377 = vmatprep.subr.mxu0 0.0
  %4378 = vmatpush1.msra.mxu0 0.0
  %4379 = vmatprep.subr.mxu0 0.0
  %4380 = vmatpush1.msra.mxu0 0.0
  %4381 = vmatprep.subr.mxu0 0.0
  %4382 = vmatpush1.msra.mxu0 0.0
  %4383 = vmatprep.subr.mxu0 0.0
  %4384 = vmatpush1.msra.mxu0 0.0
  %4385 = vmatprep.subr.mxu0 0.0
  %4386 = vmatpush1.msra.mxu0 0.0
  %4387 = vmatprep.subr.mxu0 0.0
  %4388 = vmatpush1.msra.mxu0 0.0
  %4389 = vmatprep.subr.mxu0 0.0
  %4390 = vmatpush1.msra.mxu0 0.0
  %4391 = vmatprep.subr.mxu0 0.0
  %4392 = vmatpush1.msra.mxu0 0.0
  %4393 = vmatprep.subr.mxu0 0.0
  %4394 = vmatpush1.msra.mxu0 0.0
  %4395 = vmatprep.subr.mxu0 0.0
  %4396 = vmatpush1.msra.mxu0 0.0
  %4397 = vmatprep.subr.mxu0 0.0
  %4398 = vmatpush1.msra.mxu0 0.0
  %4399 = vmatprep.subr.mxu0 0.0
  %4400 = vmatpush1.msra.mxu0 0.0
  %4401 = vmatprep.subr.mxu0 0.0
  %4402 = vmatpush1.msra.mxu0 0.0
  %4403 = vmatprep.subr.mxu0 0.0
  %4404 = vmatpush1.msra.mxu0 0.0
  %4405 = vmatprep.subr.mxu0 0.0
  %4406 = vmatpush1.msra.mxu0 0.0
  %4407 = vmatprep.subr.mxu0 0.0
  %4408 = vmatpush1.msra.mxu0 0.0
  %4409 = vmatprep.subr.mxu0 0.0
  %4410 = vmatpush1.msra.mxu0 0.0
  %4411 = vmatprep.subr.mxu0 0.0
  %4412 = vmatpush1.msra.mxu0 0.0
  %4413 = vmatprep.subr.mxu0 0.0
  %4414 = vmatpush1.msra.mxu0 0.0
  %4415 = vmatprep.subr.mxu0 0.0
  %4416 = vmatpush1.msra.mxu0 0.0
  %4417 = vmatprep.subr.mxu0 0.0
  %4418 = vmatpush1.msra.mxu0 0.0
  %4419 = vmatprep.mubr.f32.mxu0 0.0
  %4420 = vmatmul.mubr.f32.gmra.mrb[0].mxu0 %v4253
  %v4421 = vpop.f32.mrb[0].mxu0
  %v4422 = vadd.f32 0.0, %v4421
  %v4423 = vpop.f32.mrb[0].mxu0
  %4424 = vdwg.mxu0
  %v4426 = vrot.slane %v4422, 2
  %v4428 = vadd.f32 %v2404, %v4426
  %v4429 = vxor.u32 %v4428, 2147483648
  %v4430 = vmul.f32 %v4429, 1.442695
  %v4431 = vpow.pop %v4430
  %v4432 = vadd.f32 %v4431, 1.0
  %v4433 = vrcp.pop %v4432
  %v4434 = vmul.f32 1.0, %v4433
  %v4435 = vtanh.pop %v4428
  %v4437 = vrot.slane %v4170, 6
  %v4439 = vmul.f32 %v4434, %v4437
  %4441 = vrot.lane.b32.xlu0 %v4435, 64
  %v4442 = vpop.permute.xlu0 %4441
  %v4444 = vmul.f32 %v4434, %v4442
  %4446 = vrot.lane.b32.xlu0 %v4444, 32
  %v4447 = vpop.permute.xlu0 %4446
  %v4449 = vadd.f32 %v4439, %v4447
  %v4450 = vtanh.pop %v4449
  %4452 = vrot.lane.b32.xlu0 %v4450, 64
  %v4453 = vpop.permute.xlu0 %4452
  %v4455 = vmul.f32 %v4434, %v4453
  %v4456 = vsel %vm2325, %v4352, 0
  %4458 = vmatprep.subr.mxu0 0.0
  %4459 = vmatpush1.msra.mxu0 %v2316
  %4460 = vmatprep.subr.mxu0 0.0
  %4461 = vmatpush1.msra.mxu0 %v2317
  %4462 = vmatprep.subr.mxu0 0.0
  %4463 = vmatpush1.msra.mxu0 %v2318
  %4464 = vmatprep.subr.mxu0 0.0
  %4465 = vmatpush1.msra.mxu0 %v2319
  %4466 = vmatprep.subr.mxu0 0.0
  %4467 = vmatpush1.msra.mxu0 0.0
  %4468 = vmatprep.subr.mxu0 0.0
  %4469 = vmatpush1.msra.mxu0 0.0
  %4470 = vmatprep.subr.mxu0 0.0
  %4471 = vmatpush1.msra.mxu0 0.0
  %4472 = vmatprep.subr.mxu0 0.0
  %4473 = vmatpush1.msra.mxu0 0.0
  %4474 = vmatprep.subr.mxu0 0.0
  %4475 = vmatpush1.msra.mxu0 0.0
  %4476 = vmatprep.subr.mxu0 0.0
  %4477 = vmatpush1.msra.mxu0 0.0
  %4478 = vmatprep.subr.mxu0 0.0
  %4479 = vmatpush1.msra.mxu0 0.0
  %4480 = vmatprep.subr.mxu0 0.0
  %4481 = vmatpush1.msra.mxu0 0.0
  %4482 = vmatprep.subr.mxu0 0.0
  %4483 = vmatpush1.msra.mxu0 0.0
  %4484 = vmatprep.subr.mxu0 0.0
  %4485 = vmatpush1.msra.mxu0 0.0
  %4486 = vmatprep.subr.mxu0 0.0
  %4487 = vmatpush1.msra.mxu0 0.0
  %4488 = vmatprep.subr.mxu0 0.0
  %4489 = vmatpush1.msra.mxu0 0.0
  %4490 = vmatprep.subr.mxu0 0.0
  %4491 = vmatpush1.msra.mxu0 0.0
  %4492 = vmatprep.subr.mxu0 0.0
  %4493 = vmatpush1.msra.mxu0 0.0
  %4494 = vmatprep.subr.mxu0 0.0
  %4495 = vmatpush1.msra.mxu0 0.0
  %4496 = vmatprep.subr.mxu0 0.0
  %4497 = vmatpush1.msra.mxu0 0.0
  %4498 = vmatprep.subr.mxu0 0.0
  %4499 = vmatpush1.msra.mxu0 0.0
  %4500 = vmatprep.subr.mxu0 0.0
  %4501 = vmatpush1.msra.mxu0 0.0
  %4502 = vmatprep.subr.mxu0 0.0
  %4503 = vmatpush1.msra.mxu0 0.0
  %4504 = vmatprep.subr.mxu0 0.0
  %4505 = vmatpush1.msra.mxu0 0.0
  %4506 = vmatprep.subr.mxu0 0.0
  %4507 = vmatpush1.msra.mxu0 0.0
  %4508 = vmatprep.subr.mxu0 0.0
  %4509 = vmatpush1.msra.mxu0 0.0
  %4510 = vmatprep.subr.mxu0 0.0
  %4511 = vmatpush1.msra.mxu0 0.0
  %4512 = vmatprep.subr.mxu0 0.0
  %4513 = vmatpush1.msra.mxu0 0.0
  %4514 = vmatprep.subr.mxu0 0.0
  %4515 = vmatpush1.msra.mxu0 0.0
  %4516 = vmatprep.subr.mxu0 0.0
  %4517 = vmatpush1.msra.mxu0 0.0
  %4518 = vmatprep.subr.mxu0 0.0
  %4519 = vmatpush1.msra.mxu0 0.0
  %4520 = vmatprep.subr.mxu0 0.0
  %4521 = vmatpush1.msra.mxu0 0.0
  %4522 = vmatprep.mubr.f32.mxu0 0.0
  %4523 = vmatmul.mubr.f32.gmra.mrb[0].mxu0 %v4456
  %v4524 = vpop.f32.mrb[0].mxu0
  %v4525 = vadd.f32 0.0, %v4524
  %v4526 = vpop.f32.mrb[0].mxu0
  %4527 = vdwg.mxu0
  %v4529 = vrot.slane %v4455, 6
  %4530 = vrot.lane.b32.xlu0 %v4529, 32
  %v4531 = vpop.permute.xlu0 %4530
  %v4532 = vsel %vm2325, %v4531, 0
  %4534 = vmatprep.subr.mxu0 0.0
  %4535 = vmatpush1.msra.mxu0 %v2312
  %4536 = vmatprep.subr.mxu0 0.0
  %4537 = vmatpush1.msra.mxu0 %v2313
  %4538 = vmatprep.subr.mxu0 0.0
  %4539 = vmatpush1.msra.mxu0 %v2314
  %4540 = vmatprep.subr.mxu0 0.0
  %4541 = vmatpush1.msra.mxu0 %v2315
  %4542 = vmatprep.subr.mxu0 0.0
  %4543 = vmatpush1.msra.mxu0 0.0
  %4544 = vmatprep.subr.mxu0 0.0
  %4545 = vmatpush1.msra.mxu0 0.0
  %4546 = vmatprep.subr.mxu0 0.0
  %4547 = vmatpush1.msra.mxu0 0.0
  %4548 = vmatprep.subr.mxu0 0.0
  %4549 = vmatpush1.msra.mxu0 0.0
  %4550 = vmatprep.subr.mxu0 0.0
  %4551 = vmatpush1.msra.mxu0 0.0
  %4552 = vmatprep.subr.mxu0 0.0
  %4553 = vmatpush1.msra.mxu0 0.0
  %4554 = vmatprep.subr.mxu0 0.0
  %4555 = vmatpush1.msra.mxu0 0.0
  %4556 = vmatprep.subr.mxu0 0.0
  %4557 = vmatpush1.msra.mxu0 0.0
  %4558 = vmatprep.subr.mxu0 0.0
  %4559 = vmatpush1.msra.mxu0 0.0
  %4560 = vmatprep.subr.mxu0 0.0
  %4561 = vmatpush1.msra.mxu0 0.0
  %4562 = vmatprep.subr.mxu0 0.0
  %4563 = vmatpush1.msra.mxu0 0.0
  %4564 = vmatprep.subr.mxu0 0.0
  %4565 = vmatpush1.msra.mxu0 0.0
  %4566 = vmatprep.subr.mxu0 0.0
  %4567 = vmatpush1.msra.mxu0 0.0
  %4568 = vmatprep.subr.mxu0 0.0
  %4569 = vmatpush1.msra.mxu0 0.0
  %4570 = vmatprep.subr.mxu0 0.0
  %4571 = vmatpush1.msra.mxu0 0.0
  %4572 = vmatprep.subr.mxu0 0.0
  %4573 = vmatpush1.msra.mxu0 0.0
  %4574 = vmatprep.subr.mxu0 0.0
  %4575 = vmatpush1.msra.mxu0 0.0
  %4576 = vmatprep.subr.mxu0 0.0
  %4577 = vmatpush1.msra.mxu0 0.0
  %4578 = vmatprep.subr.mxu0 0.0
  %4579 = vmatpush1.msra.mxu0 0.0
  %4580 = vmatprep.subr.mxu0 0.0
  %4581 = vmatpush1.msra.mxu0 0.0
  %4582 = vmatprep.subr.mxu0 0.0
  %4583 = vmatpush1.msra.mxu0 0.0
  %4584 = vmatprep.subr.mxu0 0.0
  %4585 = vmatpush1.msra.mxu0 0.0
  %4586 = vmatprep.subr.mxu0 0.0
  %4587 = vmatpush1.msra.mxu0 0.0
  %4588 = vmatprep.subr.mxu0 0.0
  %4589 = vmatpush1.msra.mxu0 0.0
  %4590 = vmatprep.subr.mxu0 0.0
  %4591 = vmatpush1.msra.mxu0 0.0
  %4592 = vmatprep.subr.mxu0 0.0
  %4593 = vmatpush1.msra.mxu0 0.0
  %4594 = vmatprep.subr.mxu0 0.0
  %4595 = vmatpush1.msra.mxu0 0.0
  %4596 = vmatprep.subr.mxu0 0.0
  %4597 = vmatpush1.msra.mxu0 0.0
  %4598 = vmatprep.mubr.f32.mxu0 0.0
  %4599 = vmatmul.mubr.f32.gmra.mrb[0].mxu0 %v4532
  %v4600 = vpop.f32.mrb[0].mxu0
  %v4601 = vadd.f32 %v4525, %v4600
  %v4602 = vpop.f32.mrb[0].mxu0
  %4603 = vdwg.mxu0
  %v4604 = vadd.f32 %v4601, %v2653
  %v4605 = vxor.u32 %v4604, 2147483648
  %v4606 = vmul.f32 %v4605, 1.442695
  %v4607 = vpow.pop %v4606
  %v4608 = vadd.f32 %v4607, 1.0
  %v4609 = vrcp.pop %v4608
  %v4610 = vmul.f32 1.0, %v4609
  %v4611 = vtanh.pop %v4604
  %v4612 = vmul.f32 %v4610, %v4343
  %4614 = vrot.lane.b32.xlu0 %v4611, 64
  %v4615 = vpop.permute.xlu0 %4614
  %v4617 = vmul.f32 %v4610, %v4615
  %4619 = vrot.lane.b32.xlu0 %v4617, 32
  %v4620 = vpop.permute.xlu0 %4619
  %v4622 = vadd.f32 %v4612, %v4620
  %v4623 = vtanh.pop %v4622
  %4625 = vrot.lane.b32.xlu0 %v4623, 64
  %v4626 = vpop.permute.xlu0 %4625
  %v4628 = vmul.f32 %v4610, %v4626
  %4630 = vrot.lane.b32.xlu0 %v4628, 32
  %v4631 = vpop.permute.xlu0 %4630
  %4633 = vst.msk [vmem:[#allocation2 + $0xe] sm:$0x3] %vm2683, %v4631
  %v4634 = vld [vmem:[#allocation2] sm:$0xff]
  %v4635 = vld [vmem:[#allocation2 + $0x8] sm:$0xff]
  %v4637 = vcombine.low %v2210, %v2210
  %v4639 = vunpack.c.l.s4 1983009808
  %v4640 = vunpack.c.0.s8 %v4639
  %v4641 = vlaneseq
  %v4642 = vshrl.u32 %v4641, 7
  %v4643 = vsub.s32 %v4640, %v4642
  %v4644 = vrot.slane %v4637, %v4643
  %v4645 = vcombine.low %v4644, %v4644
  %v4647 = vadd.f32 %v4634, %v4645
  %v4648 = vadd.f32 %v4635, %v4645
  %v4649 = vsel %vm2325, %v4647, 0.0
  %4650 = vadd.xlane.f32.xlu0 %v4649
  %v4651 = vpop.xlane.xlu0 %4650
  %v4652 = vsel %vm2325, %v4648, 0.0
  %4653 = vadd.xlane.f32.xlu0 %v4652
  %v4654 = vpop.xlane.xlu0 %4653
  %v4655 = vrcp.pop 32.0
  %v4656 = vmul.f32 %v4651, %v4655
  %v4657 = vmul.f32 %v4654, %v4655
  %v4658 = vsub.f32 %v4647, %v4656
  %v4659 = vsub.f32 %v4648, %v4657
  %v4660 = vmul.f32 %v4658, %v4658
  %v4661 = vmul.f32 %v4659, %v4659
  %v4662 = vsel %vm2325, %v4660, 0.0
  %4663 = vadd.xlane.f32.xlu0 %v4662
  %v4664 = vpop.xlane.xlu0 %4663
  %v4665 = vsel %vm2325, %v4661, 0.0
  %4666 = vadd.xlane.f32.xlu0 %v4665
  %v4667 = vpop.xlane.xlu0 %4666
  %v4668 = vmul.f32 %v4664, %v4655
  %v4669 = vmul.f32 %v4667, %v4655
  %v4670 = vadd.f32 %v4668, 1e-05
  %v4671 = vadd.f32 %v4669, 1e-05
  %v4672 = vrsqrt.pop %v4670
  %v4673 = vrsqrt.pop %v4671
  %v4674 = vmul.f32 %v4658, %v4672
  %v4675 = vmul.f32 %v4659, %v4673
  %v4676 = vld [vmem:[%s9 + $0x2] sm:$0x1]
  %v4677 = vlaneseq
  %v4678 = vshrl.u32 %v4677, 7
  %v4679 = vsub.s32 0, %v4678
  %v4680 = vrot.slane %v4676, %v4679
  %v4681 = vmul.f32 %v4674, %v4680
  %v4682 = vmul.f32 %v4675, %v4680
  %v4683 = vld [vmem:[%s9 + $0x3] sm:$0x1]
  %v4684 = vlaneseq
  %v4685 = vshrl.u32 %v4684, 7
  %v4686 = vsub.s32 0, %v4685
  %v4687 = vrot.slane %v4683, %v4686
  %v4688 = vadd.f32 %v4681, %v4687
  %v4689 = vadd.f32 %v4682, %v4687
  %v4690 = vld [vmem:[%s12] sm:$0xff]
  %v4691 = vld [vmem:[%s12 + $0x8] sm:$0xff]
  %v4692 = vld [vmem:[%s12 + $0x10] sm:$0xff]
  %v4693 = vld [vmem:[%s12 + $0x18] sm:$0xff]
  %v4694 = vld [vmem:[%s12 + $0x20] sm:$0x1]
  %v4695 = vlaneseq
  %v4696 = vshrl.u32 %v4695, 7
  %v4697 = vsub.s32 0, %v4696
  %v4698 = vrot.slane %v4694, %v4697
  %v4700 = vsel %vm2325, %v4688, 0
  %v4703 = vsel %vm2325, %v4689, 0
  %4705 = vmatprep.subr.mxu0 0.0
  %4706 = vmatpush1.msra.mxu0 %v4690
  %4707 = vmatprep.subr.mxu0 0.0
  %4708 = vmatpush1.msra.mxu0 %v4691
  %4709 = vmatprep.subr.mxu0 0.0
  %4710 = vmatpush1.msra.mxu0 %v4692
  %4711 = vmatprep.subr.mxu0 0.0
  %4712 = vmatpush1.msra.mxu0 %v4693
  %4713 = vmatprep.subr.mxu0 0.0
  %4714 = vmatpush1.msra.mxu0 0.0
  %4715 = vmatprep.subr.mxu0 0.0
  %4716 = vmatpush1.msra.mxu0 0.0
  %4717 = vmatprep.subr.mxu0 0.0
  %4718 = vmatpush1.msra.mxu0 0.0
  %4719 = vmatprep.subr.mxu0 0.0
  %4720 = vmatpush1.msra.mxu0 0.0
  %4721 = vmatprep.subr.mxu0 0.0
  %4722 = vmatpush1.msra.mxu0 0.0
  %4723 = vmatprep.subr.mxu0 0.0
  %4724 = vmatpush1.msra.mxu0 0.0
  %4725 = vmatprep.subr.mxu0 0.0
  %4726 = vmatpush1.msra.mxu0 0.0
  %4727 = vmatprep.subr.mxu0 0.0
  %4728 = vmatpush1.msra.mxu0 0.0
  %4729 = vmatprep.subr.mxu0 0.0
  %4730 = vmatpush1.msra.mxu0 0.0
  %4731 = vmatprep.subr.mxu0 0.0
  %4732 = vmatpush1.msra.mxu0 0.0
  %4733 = vmatprep.subr.mxu0 0.0
  %4734 = vmatpush1.msra.mxu0 0.0
  %4735 = vmatprep.subr.mxu0 0.0
  %4736 = vmatpush1.msra.mxu0 0.0
  %4737 = vmatprep.subr.mxu0 0.0
  %4738 = vmatpush1.msra.mxu0 0.0
  %4739 = vmatprep.subr.mxu0 0.0
  %4740 = vmatpush1.msra.mxu0 0.0
  %4741 = vmatprep.subr.mxu0 0.0
  %4742 = vmatpush1.msra.mxu0 0.0
  %4743 = vmatprep.subr.mxu0 0.0
  %4744 = vmatpush1.msra.mxu0 0.0
  %4745 = vmatprep.subr.mxu0 0.0
  %4746 = vmatpush1.msra.mxu0 0.0
  %4747 = vmatprep.subr.mxu0 0.0
  %4748 = vmatpush1.msra.mxu0 0.0
  %4749 = vmatprep.subr.mxu0 0.0
  %4750 = vmatpush1.msra.mxu0 0.0
  %4751 = vmatprep.subr.mxu0 0.0
  %4752 = vmatpush1.msra.mxu0 0.0
  %4753 = vmatprep.subr.mxu0 0.0
  %4754 = vmatpush1.msra.mxu0 0.0
  %4755 = vmatprep.subr.mxu0 0.0
  %4756 = vmatpush1.msra.mxu0 0.0
  %4757 = vmatprep.subr.mxu0 0.0
  %4758 = vmatpush1.msra.mxu0 0.0
  %4759 = vmatprep.subr.mxu0 0.0
  %4760 = vmatpush1.msra.mxu0 0.0
  %4761 = vmatprep.subr.mxu0 0.0
  %4762 = vmatpush1.msra.mxu0 0.0
  %4763 = vmatprep.subr.mxu0 0.0
  %4764 = vmatpush1.msra.mxu0 0.0
  %4765 = vmatprep.subr.mxu0 0.0
  %4766 = vmatpush1.msra.mxu0 0.0
  %4767 = vmatprep.subr.mxu0 0.0
  %4768 = vmatpush1.msra.mxu0 0.0
  %4769 = vmatprep.mubr.f32.mxu0 0.0
  %4770 = vmatmul.mubr.f32.gmra.mrb[0].mxu0 %v4700
  %v4771 = vpop.f32.mrb[0].mxu0
  %v4772 = vadd.f32 %v4698, %v4771
  %v4773 = vpop.f32.mrb[0].mxu0
  %4774 = vmatprep.mubr.f32.mxu0 0.0
  %4775 = vmatmul.mubr.f32.gmra.mrb[0].mxu0 %v4703
  %v4776 = vpop.f32.mrb[0].mxu0
  %v4777 = vadd.f32 %v4698, %v4776
  %v4778 = vpop.f32.mrb[0].mxu0
  %4779 = vdwg.mxu0
  %4780 = vst [vmem:[%s13] sm:$0xff] %v4772
  %4781 = vst [vmem:[%s13 + $0x8] sm:$0xff] %v4777
  // Predicated region
  $region54: #{custom_graph_lstm_forward.1} parent=0 // pred_check
    _
  $region55: #{custom_graph_lstm_forward.1} parent=0 // pred_check_branch
    %4783 = sbr.rel (0) target = $region57
  $region56: #{custom_graph_lstm_forward.1} parent=0 // pred_region
    _
  $region57: #{custom_graph_lstm_forward.1} parent=0 // pred_fallthru
    _
  // Predicated region
  $region58: #{custom_graph_lstm_forward.1} parent=0 // pred_check
    _
  $region59: #{custom_graph_lstm_forward.1} parent=0 // pred_check_branch
    %4785 = sbr.rel (0) target = $region61
  $region60: #{custom_graph_lstm_forward.1} parent=0 // pred_region
    _
  $region61: #{custom_graph_lstm_forward.1} parent=0 // pred_fallthru
    _

</llo_original>
